<compile_context>
chip_gen: v7x
topology: tpu7x:2x2x1
jax: 0.10.0
libtpu: 0.0.40
codegen_flags: <defaults>
</compile_context>

<pallas_src>
import functools

import jax
import jax.numpy as jnp
import numpy as np
from jax import lax
from jax.experimental import pallas as pl
from jax.experimental.pallas import tpu as pltpu

EPS = 1e-5

# Static geometry implied by Linear(64*8*8, 128) after two /2 pools of a 32x32 input.
H1 = W1 = 32          # conv1 spatial
C1 = 32               # conv1 out channels
H2 = W2 = 16          # conv2 spatial (after pool1)
C2 = 64               # conv2 out channels
H3 = W3 = 8           # spatial after pool2
K1 = 16               # conv1 im2col depth (9 real taps, zero padded to 16)
K2 = 9 * C1           # conv2 im2col depth = 288
DH = 128              # fc1 width
DOUT = 9              # real logits
DOUT_PAD = 128        # lane-dense padded logits


# ---------------------------------------------------------------------------
# Fused forward kernel: one grid step processes `bt` images end to end.
# ---------------------------------------------------------------------------
def _ocr_cnn_kernel(p1_ref, w1_ref, t1_ref, w2_ref, t2_ref,
                    fc1w_ref, fc1b_ref, fc2w_ref, fc2b_ref,
                    o_ref,
                    y1_scr, a1p_scr, im2_scr, y2_scr, a2_scr, flat_scr,
                    *, bt, use_softmax):
    f32 = jnp.float32
    bf16 = jnp.bfloat16

    # ---- conv1: one im2col matmul (M=bt*1024, K=16, N=32).  BN scale is already
    # folded into w1, so the matmul output is the scaled pre-activation.
    lhs1 = p1_ref[...].reshape(bt * H1 * W1, K1)                         # bf16
    y1_scr[...] = jnp.dot(lhs1, w1_ref[...], preferred_element_type=f32)  # (bt*1024, 32)

    # ---- 2x2 max-pool #1 BEFORE shift+ReLU (max commutes exactly with both).
    # Rows are (b, h, w) raster order, so width neighbours are adjacent rows:
    # stride-2 row reads give the w-pairs, the h-pairs are a major-axis split.
    n1 = bt * H1 * W1 // 2
    pw = jnp.maximum(y1_scr[pl.ds(0, n1, 2), :], y1_scr[pl.ds(1, n1, 2), :])
    ph = pw.reshape(bt, H2, 2, W2, C1)
    pooled1 = jnp.maximum(ph[:, :, 0], ph[:, :, 1])                      # (bt,16,16,32)
    act1 = jnp.maximum(pooled1 + t1_ref[...], 0.0)                       # shift + ReLU

    # ---- zero-bordered buffer for conv2's "same" padding (border only; the
    # interior is fully overwritten every step).
    zrow = jnp.zeros((bt, W2 + 2, C1), f32)
    a1p_scr[:, 0, :, :] = zrow
    a1p_scr[:, H2 + 1, :, :] = zrow
    a1p_scr[:, :, 0, :] = zrow
    a1p_scr[:, :, W2 + 1, :] = zrow
    a1p_scr[:, 1:H2 + 1, 1:W2 + 1, :] = act1

    # ---- conv2: assemble the (bt*256, 288) im2col in VMEM, then ONE matmul
    # (K=288, N=64); BN scale folded into w2.
    for dy in range(3):
        for dx in range(3):
            k = dy * 3 + dx
            patch = a1p_scr[:, dy:dy + H2, dx:dx + W2, :]                # (bt,16,16,32)
            im2_scr[:, k * C1:(k + 1) * C1] = (
                patch.reshape(bt * H2 * W2, C1).astype(bf16))
    y2_scr[...] = jnp.dot(im2_scr[...], w2_ref[...], preferred_element_type=f32)

    # ---- 2x2 max-pool #2, then shift + ReLU on the 4x smaller tensor.
    n2 = bt * H2 * W2 // 2
    pw2 = jnp.maximum(y2_scr[pl.ds(0, n2, 2), :], y2_scr[pl.ds(1, n2, 2), :])
    ph2 = pw2.reshape(bt, H3, 2, W3, C2)
    pooled2 = jnp.maximum(ph2[:, :, 0], ph2[:, :, 1])                    # (bt,8,8,64)
    a2_scr[...] = jnp.maximum(pooled2 + t2_ref[...], 0.0).astype(bf16)

    # ---- flatten (NHWC order, matching the permuted fc1 weight) into a
    # lane-dense (bt, 4096) bf16 row per image.
    for io in range(H3):
        for jo in range(W3):
            off = (io * W3 + jo) * C2
            flat_scr[:, off:off + C2] = a2_scr[:, io, jo, :]

    # ---- classifier head: fc1 + ReLU (+ Dropout = identity in eval) + fc2.
    h = jnp.dot(flat_scr[...], fc1w_ref[...], preferred_element_type=f32)
    h = jnp.maximum(h + fc1b_ref[...], 0.0)                              # (bt, 128)
    logits = jnp.dot(h.astype(bf16), fc2w_ref[...], preferred_element_type=f32)
    logits = logits + fc2b_ref[...]                                      # (bt, 128)

    if use_softmax:
        col = lax.broadcasted_iota(jnp.int32, (bt, DOUT_PAD), 1)
        masked = jnp.where(col < DOUT, logits, -jnp.inf)                 # pad cols -> 0 prob
        m = jnp.max(masked, axis=1, keepdims=True)
        e = jnp.exp(masked - m)
        logits = e / jnp.sum(e, axis=1, keepdims=True)

    o_ref[:, 0, :] = logits


def _choose_batch_tile(b):
    # Largest tile in {8, 4, 2, 1} that divides B while keeping >=2 grid steps
    # (so both v7x TensorCores get work via the "parallel" grid axis).
    for bt in (8, 4, 2, 1):
        if b % bt == 0 and b // bt >= 2:
            return bt
    return 1


# ---------------------------------------------------------------------------
# Full model forward (wrapper: layout permutations, im2col for conv1, BN fold).
# ---------------------------------------------------------------------------
def ocr_cnn_forward(x_nchw, params, use_softmax=False):
    b = x_nchw.shape[0]
    bt = _choose_batch_tile(b)
    nb = b // bt

    # conv1 im2col built by XLA: (B, 1024, 9) -> padded to K1=16, bf16.
    x = jnp.transpose(x_nchw, (0, 2, 3, 1)).astype(jnp.float32)          # NCHW -> NHWC
    xp = jnp.pad(x, ((0, 0), (1, 1), (1, 1), (0, 0)))                    # (B,34,34,1)
    taps = [xp[:, dy:dy + H1, dx:dx + W1, 0] for dy in range(3) for dx in range(3)]
    p1 = jnp.stack(taps, axis=-1).reshape(b, H1 * W1, 9)
    p1 = jnp.pad(p1, ((0, 0), (0, 0), (0, K1 - 9))).astype(jnp.bfloat16)

    # BatchNorm (eval) + conv bias folded into per-channel scale/shift.
    s1 = params["bn1_gamma"] / jnp.sqrt(params["bn1_var"] + EPS)
    t1 = params["bn1_beta"] + (params["conv1_b"] - params["bn1_mean"]) * s1
    s2 = params["bn2_gamma"] / jnp.sqrt(params["bn2_var"] + EPS)
    t2 = params["bn2_beta"] + (params["conv2_b"] - params["bn2_mean"]) * s2

    # Conv weights -> (K, Cout) bf16, rows ordered (dy, dx, cin); BN scale folded in.
    w1 = jnp.transpose(params["conv1_w"], (2, 3, 1, 0)).reshape(9, C1) * s1[None, :]
    w1 = jnp.pad(w1, ((0, K1 - 9), (0, 0))).astype(jnp.bfloat16)
    w2 = (jnp.transpose(params["conv2_w"], (2, 3, 1, 0)).reshape(K2, C2)
          * s2[None, :]).astype(jnp.bfloat16)

    # fc weights: permute the PyTorch (out, c*h*w) layout to the kernel's NHWC
    # flatten order; pad fc2 to a lane-dense 128-wide output slab.
    fc1w = params["fc1_w"].reshape(DH, C2, H3, W3)
    fc1w = jnp.transpose(fc1w, (2, 3, 1, 0)).reshape(H3 * W3 * C2, DH).astype(jnp.bfloat16)
    fc1b = params["fc1_b"].reshape(1, DH).astype(jnp.float32)
    fc2w = jnp.pad(params["fc2_w"].T, ((0, 0), (0, DOUT_PAD - DOUT))).astype(jnp.bfloat16)
    fc2b = jnp.pad(params["fc2_b"], (0, DOUT_PAD - DOUT)).reshape(1, DOUT_PAD).astype(jnp.float32)

    # Advisory cost estimate for XLA scheduling around the custom call.
    flops = int(2 * b * (H1 * W1 * K1 * C1 + H2 * W2 * K2 * C2
                         + H3 * W3 * C2 * DH + DH * DOUT_PAD))
    bytes_accessed = int(b * H1 * W1 * K1 * 2 + b * DOUT_PAD * 4
                         + (K1 * C1 + K2 * C2 + H3 * W3 * C2 * DH + DH * DOUT_PAD) * 2
                         + (C1 + C2 + DH + DOUT_PAD) * 4)
    transcendentals = int(b * DOUT_PAD) if use_softmax else 0

    kernel = functools.partial(_ocr_cnn_kernel, bt=bt, use_softmax=use_softmax)
    out = pl.pallas_call(
        kernel,
        out_shape=jax.ShapeDtypeStruct((b, 1, DOUT_PAD), jnp.float32),
        grid=(nb,),
        in_specs=[
            pl.BlockSpec((bt, H1 * W1, K1), lambda i: (i, 0, 0)),        # conv1 im2col
            pl.BlockSpec((K1, C1), lambda i: (0, 0)),                    # w1 (scale folded)
            pl.BlockSpec((1, C1), lambda i: (0, 0)),                     # shift1
            pl.BlockSpec((K2, C2), lambda i: (0, 0)),                    # w2 (scale folded)
            pl.BlockSpec((1, C2), lambda i: (0, 0)),                     # shift2
            pl.BlockSpec((H3 * W3 * C2, DH), lambda i: (0, 0)),          # fc1 w
            pl.BlockSpec((1, DH), lambda i: (0, 0)),                     # fc1 b
            pl.BlockSpec((DH, DOUT_PAD), lambda i: (0, 0)),              # fc2 w (padded)
            pl.BlockSpec((1, DOUT_PAD), lambda i: (0, 0)),               # fc2 b (padded)
        ],
        out_specs=pl.BlockSpec((bt, 1, DOUT_PAD), lambda i: (i, 0, 0)),
        scratch_shapes=[
            pltpu.VMEM((bt * H1 * W1, C1), jnp.float32),                 # y1 (pre-pool)
            pltpu.VMEM((bt, H2 + 2, W2 + 2, C1), jnp.float32),           # pooled1, padded
            pltpu.VMEM((bt * H2 * W2, K2), jnp.bfloat16),                # conv2 im2col
            pltpu.VMEM((bt * H2 * W2, C2), jnp.float32),                 # y2 (pre-pool)
            pltpu.VMEM((bt, H3, W3, C2), jnp.bfloat16),                  # pooled2 activation
            pltpu.VMEM((bt, H3 * W3 * C2), jnp.bfloat16),                # flattened features
        ],
        compiler_params=pltpu.CompilerParams(dimension_semantics=("parallel",)),
        cost_estimate=pl.CostEstimate(flops=flops, transcendentals=transcendentals,
                                      bytes_accessed=bytes_accessed),
    )(p1, w1,
      t1.reshape(1, C1).astype(jnp.float32),
      w2,
      t2.reshape(1, C2).astype(jnp.float32),
      fc1w, fc1b, fc2w, fc2b)

    return out[:, 0, :DOUT]


# ---------------------------------------------------------------------------
# Deterministic synthetic parameters (shapes from OCR_CNN.__init__).
# ---------------------------------------------------------------------------
def init_params(key):
    ks = jax.random.split(key, 16)
    n, u = jax.random.normal, jax.random.uniform
    return {
        "conv1_w": n(ks[0], (32, 1, 3, 3), jnp.float32) / 3.0,
        "conv1_b": 0.1 * n(ks[1], (32,), jnp.float32),
        "bn1_gamma": 1.0 + 0.1 * n(ks[2], (32,), jnp.float32),
        "bn1_beta": 0.1 * n(ks[3], (32,), jnp.float32),
        "bn1_mean": 0.1 * n(ks[4], (32,), jnp.float32),
        "bn1_var": u(ks[5], (32,), jnp.float32, 0.5, 1.5),
        "conv2_w": n(ks[6], (64, 32, 3, 3), jnp.float32) / 17.0,
        "conv2_b": 0.1 * n(ks[7], (64,), jnp.float32),
        "bn2_gamma": 1.0 + 0.1 * n(ks[8], (64,), jnp.float32),
        "bn2_beta": 0.1 * n(ks[9], (64,), jnp.float32),
        "bn2_mean": 0.1 * n(ks[10], (64,), jnp.float32),
        "bn2_var": u(ks[11], (64,), jnp.float32, 0.5, 1.5),
        "fc1_w": n(ks[12], (128, 64 * 8 * 8), jnp.float32) / 64.0,
        "fc1_b": 0.1 * n(ks[13], (128,), jnp.float32),
        "fc2_w": n(ks[14], (9, 128), jnp.float32) / 11.3,
        "fc2_b": 0.1 * n(ks[15], (9,), jnp.float32),
    }


# ---------------------------------------------------------------------------
# Pure-JAX f32 reference (eval-mode semantics) for verification.
# ---------------------------------------------------------------------------
def reference_forward(x_nchw, params, use_softmax=False):
    x = jnp.transpose(x_nchw, (0, 2, 3, 1)).astype(jnp.float32)

    def block(x, w_oihw, bias, gamma, beta, mean, var):
        w = jnp.transpose(w_oihw, (2, 3, 1, 0))
        y = jax.lax.conv_general_dilated(
            x, w, window_strides=(1, 1), padding="SAME",
            dimension_numbers=("NHWC", "HWIO", "NHWC")) + bias
        y = (y - mean) / jnp.sqrt(var + EPS) * gamma + beta
        y = jnp.maximum(y, 0.0)
        return jax.lax.reduce_window(y, -jnp.inf, jax.lax.max,
                                     (1, 2, 2, 1), (1, 2, 2, 1), "VALID")

    x = block(x, params["conv1_w"], params["conv1_b"], params["bn1_gamma"],
              params["bn1_beta"], params["bn1_mean"], params["bn1_var"])
    x = block(x, params["conv2_w"], params["conv2_b"], params["bn2_gamma"],
              params["bn2_beta"], params["bn2_mean"], params["bn2_var"])
    flat = x.reshape(x.shape[0], -1)
    fc1_w = params["fc1_w"].reshape(128, 64, 8, 8)
    fc1_w = jnp.transpose(fc1_w, (2, 3, 1, 0)).reshape(8 * 8 * 64, 128)
    h = jnp.maximum(flat @ fc1_w + params["fc1_b"], 0.0)
    logits = h @ params["fc2_w"].T + params["fc2_b"]
    if use_softmax:
        logits = jax.nn.softmax(logits, axis=1)
    return logits


if __name__ == "__main__":
    key = jax.random.PRNGKey(0)
    pkey, xkey, xkey2 = jax.random.split(key, 3)
    params = init_params(pkey)

    # Input shape implied by the classifier (Linear(64*8*8) after two /2 pools):
    # NCHW (batch, 1, 32, 32) like the PyTorch module.
    x = jax.random.normal(xkey, (2, 1, 32, 32), jnp.float32)

    # Tolerances account for bf16 MXU operands (f32 accumulation) in the kernel.
    RTOL, ATOL = 1e-2, 1e-2

    out = jax.block_until_ready(ocr_cnn_forward(x, params, use_softmax=False))
    ref = reference_forward(x, params, use_softmax=False)
    assert out.shape == (2, 9) and out.dtype == jnp.float32
    np.testing.assert_allclose(np.asarray(out), np.asarray(ref), rtol=RTOL, atol=ATOL)

    out_sm = jax.block_until_ready(ocr_cnn_forward(x, params, use_softmax=True))
    ref_sm = reference_forward(x, params, use_softmax=True)
    np.testing.assert_allclose(np.asarray(out_sm), np.asarray(ref_sm), rtol=RTOL, atol=ATOL)

    # Larger batch exercises the batch-tiled path (4 images per grid step, 2 steps).
    x8 = jax.random.normal(xkey2, (8, 1, 32, 32), jnp.float32)
    out8 = jax.block_until_ready(ocr_cnn_forward(x8, params, use_softmax=False))
    ref8 = reference_forward(x8, params, use_softmax=False)
    assert out8.shape == (8, 9)
    np.testing.assert_allclose(np.asarray(out8), np.asarray(ref8), rtol=RTOL, atol=ATOL)

    print("KERNEL_OK")
</pallas_src>

<mosaic_0001>
module attributes {stable_mosaic.version = 11 : i64} {
  func.func @_ocr_cnn_kernel(%arg0: i32, %arg1: memref<1x1024x16xbf16, #tpu.memory_space<vmem>>, %arg2: memref<16x32xbf16, #tpu.memory_space<vmem>>, %arg3: memref<1x32xf32, #tpu.memory_space<vmem>>, %arg4: memref<288x64xbf16, #tpu.memory_space<vmem>>, %arg5: memref<1x64xf32, #tpu.memory_space<vmem>>, %arg6: memref<4096x128xbf16, #tpu.memory_space<vmem>>, %arg7: memref<1x128xf32, #tpu.memory_space<vmem>>, %arg8: memref<128x128xbf16, #tpu.memory_space<vmem>>, %arg9: memref<1x128xf32, #tpu.memory_space<vmem>>, %arg10: memref<1x1x128xf32, #tpu.memory_space<vmem>>, %arg11: memref<1024x32xf32, #tpu.memory_space<vmem>>, %arg12: memref<1x18x18x32xf32, #tpu.memory_space<vmem>>, %arg13: memref<256x288xbf16, #tpu.memory_space<vmem>>, %arg14: memref<256x64xf32, #tpu.memory_space<vmem>>, %arg15: memref<1x8x8x64xbf16, #tpu.memory_space<vmem>>, %arg16: memref<1x4096xbf16, #tpu.memory_space<vmem>>) attributes {dimension_semantics = [#tpu.dimension_semantics<parallel>], iteration_bounds = array<i64: 2>, scalar_prefetch = 0 : i64, scratch_operands = 6 : i64, tpu.core_type = #tpu.core_type<tc>, window_params = [{transform_indices = @transform_0, window_bounds = array<i64: 1, 1024, 16>}, {pipeline_mode = #tpu.pipeline_mode<synchronous>, transform_indices = @transform_1, window_bounds = array<i64: 16, 32>}, {pipeline_mode = #tpu.pipeline_mode<synchronous>, transform_indices = @transform_2, window_bounds = array<i64: 1, 32>}, {pipeline_mode = #tpu.pipeline_mode<synchronous>, transform_indices = @transform_3, window_bounds = array<i64: 288, 64>}, {pipeline_mode = #tpu.pipeline_mode<synchronous>, transform_indices = @transform_4, window_bounds = array<i64: 1, 64>}, {pipeline_mode = #tpu.pipeline_mode<synchronous>, transform_indices = @transform_5, window_bounds = array<i64: 4096, 128>}, {pipeline_mode = #tpu.pipeline_mode<synchronous>, transform_indices = @transform_6, window_bounds = array<i64: 1, 128>}, {pipeline_mode = #tpu.pipeline_mode<synchronous>, transform_indices = @transform_7, window_bounds = array<i64: 128, 128>}, {pipeline_mode = #tpu.pipeline_mode<synchronous>, transform_indices = @transform_8, window_bounds = array<i64: 1, 128>}, {transform_indices = @transform_9, window_bounds = array<i64: 1, 1, 128>}]} {
    %c0 = arith.constant 0 : index
    %c0_0 = arith.constant 0 : index
    %c0_1 = arith.constant 0 : index
    %0 = vector.load %arg1[%c0, %c0_0, %c0_1] : memref<1x1024x16xbf16, #tpu.memory_space<vmem>>, vector<1x1024x16xbf16>
    %1 = vector.shape_cast %0 : vector<1x1024x16xbf16> to vector<1024x16xbf16>
    %c0_2 = arith.constant 0 : index
    %c0_3 = arith.constant 0 : index
    %2 = vector.load %arg2[%c0_2, %c0_3] : memref<16x32xbf16, #tpu.memory_space<vmem>>, vector<16x32xbf16>
    %cst = arith.constant dense<0.000000e+00> : vector<1024x32xf32>
    %3 = tpu.matmul %1, %2, %cst {dimension_numbers = #tpu.dot_dimension_numbers<[1], [0], [0], [1], [0, 0, 1, 1], [], []>} : vector<1024x16xbf16>, vector<16x32xbf16>, vector<1024x32xf32> -> vector<1024x32xf32>
    %c0_4 = arith.constant 0 : index
    %c0_5 = arith.constant 0 : index
    %4 = vector.load %arg11[%c0_4, %c0_5] : memref<1024x32xf32, #tpu.memory_space<vmem>>, vector<1024x32xf32>
    tpu.vector_store %arg11[%c0_4, %c0_5], %3 {strides = array<i32>} : memref<1024x32xf32, #tpu.memory_space<vmem>>, vector<1024x32xf32>,
    %c0_6 = arith.constant 0 : index
    %c0_7 = arith.constant 0 : index
    %5 = tpu.strided_load %arg11[%c0_6, %c0_7] {strides = array<i32: 2, 1>} : memref<1024x32xf32, #tpu.memory_space<vmem>>, vector<512x32xf32>
    %c1 = arith.constant 1 : index
    %c0_8 = arith.constant 0 : index
    %6 = tpu.strided_load %arg11[%c1, %c0_8] {strides = array<i32: 2, 1>} : memref<1024x32xf32, #tpu.memory_space<vmem>>, vector<512x32xf32>
    %7 = arith.maximumf %5, %6 : vector<512x32xf32>
    %8 = vector.shape_cast %7 : vector<512x32xf32> to vector<1x16x2x16x32xf32>
    %9 = vector.extract_strided_slice %8 {offsets = [0, 0, 0, 0, 0], sizes = [1, 16, 1, 16, 32], strides = [1, 1, 1, 1, 1]} : vector<1x16x2x16x32xf32> to vector<1x16x1x16x32xf32>
    %10 = vector.shape_cast %9 : vector<1x16x1x16x32xf32> to vector<1x16x16x32xf32>
    %11 = vector.extract_strided_slice %8 {offsets = [0, 0, 1, 0, 0], sizes = [1, 16, 1, 16, 32], strides = [1, 1, 1, 1, 1]} : vector<1x16x2x16x32xf32> to vector<1x16x1x16x32xf32>
    %12 = vector.shape_cast %11 : vector<1x16x1x16x32xf32> to vector<1x16x16x32xf32>
    %13 = arith.maximumf %10, %12 : vector<1x16x16x32xf32>
    %c0_9 = arith.constant 0 : index
    %c0_10 = arith.constant 0 : index
    %14 = vector.load %arg3[%c0_9, %c0_10] : memref<1x32xf32, #tpu.memory_space<vmem>>, vector<1x32xf32>
    %15 = vector.shape_cast %14 : vector<1x32xf32> to vector<1x1x1x32xf32>
    %16 = vector.broadcast %15 : vector<1x1x1x32xf32> to vector<1x16x16x32xf32>
    %17 = arith.addf %13, %16 : vector<1x16x16x32xf32>
    %cst_11 = arith.constant 0.000000e+00 : f32
    %18 = vector.broadcast %cst_11 : f32 to vector<1x16x16x32xf32>
    %19 = arith.maximumf %17, %18 : vector<1x16x16x32xf32>
    %cst_12 = arith.constant 0.000000e+00 : f32
    %20 = vector.broadcast %cst_12 : f32 to vector<1x18x32xf32>
    %c0_13 = arith.constant 0 : index
    %c0_14 = arith.constant 0 : index
    %c0_15 = arith.constant 0 : index
    %c0_16 = arith.constant 0 : index
    %21 = vector.load %arg12[%c0_13, %c0_14, %c0_15, %c0_16] : memref<1x18x18x32xf32, #tpu.memory_space<vmem>>, vector<1x1x18x32xf32>
    %22 = vector.shape_cast %21 : vector<1x1x18x32xf32> to vector<1x18x32xf32>
    %23 = vector.shape_cast %20 : vector<1x18x32xf32> to vector<1x1x18x32xf32>
    tpu.vector_store %arg12[%c0_13, %c0_14, %c0_15, %c0_16], %23 {strides = array<i32>} : memref<1x18x18x32xf32, #tpu.memory_space<vmem>>, vector<1x1x18x32xf32>,
    %c0_17 = arith.constant 0 : index
    %c17 = arith.constant 17 : index
    %c0_18 = arith.constant 0 : index
    %c0_19 = arith.constant 0 : index
    %24 = vector.load %arg12[%c0_17, %c17, %c0_18, %c0_19] : memref<1x18x18x32xf32, #tpu.memory_space<vmem>>, vector<1x1x18x32xf32>
    %25 = vector.shape_cast %24 : vector<1x1x18x32xf32> to vector<1x18x32xf32>
    %26 = vector.shape_cast %20 : vector<1x18x32xf32> to vector<1x1x18x32xf32>
    tpu.vector_store %arg12[%c0_17, %c17, %c0_18, %c0_19], %26 {strides = array<i32>} : memref<1x18x18x32xf32, #tpu.memory_space<vmem>>, vector<1x1x18x32xf32>,
    %c0_20 = arith.constant 0 : index
    %c0_21 = arith.constant 0 : index
    %c0_22 = arith.constant 0 : index
    %c0_23 = arith.constant 0 : index
    %27 = vector.load %arg12[%c0_20, %c0_21, %c0_22, %c0_23] : memref<1x18x18x32xf32, #tpu.memory_space<vmem>>, vector<1x18x1x32xf32>
    %28 = vector.shape_cast %27 : vector<1x18x1x32xf32> to vector<1x18x32xf32>
    %29 = vector.shape_cast %20 : vector<1x18x32xf32> to vector<1x18x1x32xf32>
    tpu.vector_store %arg12[%c0_20, %c0_21, %c0_22, %c0_23], %29 {strides = array<i32>} : memref<1x18x18x32xf32, #tpu.memory_space<vmem>>, vector<1x18x1x32xf32>,
    %c0_24 = arith.constant 0 : index
    %c0_25 = arith.constant 0 : index
    %c17_26 = arith.constant 17 : index
    %c0_27 = arith.constant 0 : index
    %30 = vector.load %arg12[%c0_24, %c0_25, %c17_26, %c0_27] : memref<1x18x18x32xf32, #tpu.memory_space<vmem>>, vector<1x18x1x32xf32>
    %31 = vector.shape_cast %30 : vector<1x18x1x32xf32> to vector<1x18x32xf32>
    %32 = vector.shape_cast %20 : vector<1x18x32xf32> to vector<1x18x1x32xf32>
    tpu.vector_store %arg12[%c0_24, %c0_25, %c17_26, %c0_27], %32 {strides = array<i32>} : memref<1x18x18x32xf32, #tpu.memory_space<vmem>>, vector<1x18x1x32xf32>,
    %c0_28 = arith.constant 0 : index
    %c1_29 = arith.constant 1 : index
    %c1_30 = arith.constant 1 : index
    %c0_31 = arith.constant 0 : index
    %33 = vector.load %arg12[%c0_28, %c1_29, %c1_30, %c0_31] : memref<1x18x18x32xf32, #tpu.memory_space<vmem>>, vector<1x16x16x32xf32>
    tpu.vector_store %arg12[%c0_28, %c1_29, %c1_30, %c0_31], %19 {strides = array<i32>} : memref<1x18x18x32xf32, #tpu.memory_space<vmem>>, vector<1x16x16x32xf32>,
    %c0_32 = arith.constant 0 : index
    %c0_33 = arith.constant 0 : index
    %c0_34 = arith.constant 0 : index
    %c0_35 = arith.constant 0 : index
    %34 = vector.load %arg12[%c0_32, %c0_33, %c0_34, %c0_35] : memref<1x18x18x32xf32, #tpu.memory_space<vmem>>, vector<1x16x16x32xf32>
    %35 = vector.shape_cast %34 : vector<1x16x16x32xf32> to vector<256x32xf32>
    %36 = arith.truncf %35 : vector<256x32xf32> to vector<256x32xbf16>
    %c0_36 = arith.constant 0 : index
    %c0_37 = arith.constant 0 : index
    %37 = vector.load %arg13[%c0_36, %c0_37] : memref<256x288xbf16, #tpu.memory_space<vmem>>, vector<256x32xbf16>
    tpu.vector_store %arg13[%c0_36, %c0_37], %36 {strides = array<i32>} : memref<256x288xbf16, #tpu.memory_space<vmem>>, vector<256x32xbf16>,
    %c0_38 = arith.constant 0 : index
    %c0_39 = arith.constant 0 : index
    %c1_40 = arith.constant 1 : index
    %c0_41 = arith.constant 0 : index
    %38 = vector.load %arg12[%c0_38, %c0_39, %c1_40, %c0_41] : memref<1x18x18x32xf32, #tpu.memory_space<vmem>>, vector<1x16x16x32xf32>
    %39 = vector.shape_cast %38 : vector<1x16x16x32xf32> to vector<256x32xf32>
    %40 = arith.truncf %39 : vector<256x32xf32> to vector<256x32xbf16>
    %c0_42 = arith.constant 0 : index
    %c32 = arith.constant 32 : index
    %41 = vector.load %arg13[%c0_42, %c32] : memref<256x288xbf16, #tpu.memory_space<vmem>>, vector<256x32xbf16>
    tpu.vector_store %arg13[%c0_42, %c32], %40 {strides = array<i32>} : memref<256x288xbf16, #tpu.memory_space<vmem>>, vector<256x32xbf16>,
    %c0_43 = arith.constant 0 : index
    %c0_44 = arith.constant 0 : index
    %c2 = arith.constant 2 : index
    %c0_45 = arith.constant 0 : index
    %42 = vector.load %arg12[%c0_43, %c0_44, %c2, %c0_45] : memref<1x18x18x32xf32, #tpu.memory_space<vmem>>, vector<1x16x16x32xf32>
    %43 = vector.shape_cast %42 : vector<1x16x16x32xf32> to vector<256x32xf32>
    %44 = arith.truncf %43 : vector<256x32xf32> to vector<256x32xbf16>
    %c0_46 = arith.constant 0 : index
    %c64 = arith.constant 64 : index
    %45 = vector.load %arg13[%c0_46, %c64] : memref<256x288xbf16, #tpu.memory_space<vmem>>, vector<256x32xbf16>
    tpu.vector_store %arg13[%c0_46, %c64], %44 {strides = array<i32>} : memref<256x288xbf16, #tpu.memory_space<vmem>>, vector<256x32xbf16>,
    %c0_47 = arith.constant 0 : index
    %c1_48 = arith.constant 1 : index
    %c0_49 = arith.constant 0 : index
    %c0_50 = arith.constant 0 : index
    %46 = vector.load %arg12[%c0_47, %c1_48, %c0_49, %c0_50] : memref<1x18x18x32xf32, #tpu.memory_space<vmem>>, vector<1x16x16x32xf32>
    %47 = vector.shape_cast %46 : vector<1x16x16x32xf32> to vector<256x32xf32>
    %48 = arith.truncf %47 : vector<256x32xf32> to vector<256x32xbf16>
    %c0_51 = arith.constant 0 : index
    %c96 = arith.constant 96 : index
    %49 = vector.load %arg13[%c0_51, %c96] : memref<256x288xbf16, #tpu.memory_space<vmem>>, vector<256x32xbf16>
    tpu.vector_store %arg13[%c0_51, %c96], %48 {strides = array<i32>} : memref<256x288xbf16, #tpu.memory_space<vmem>>, vector<256x32xbf16>,
    %c0_52 = arith.constant 0 : index
    %c1_53 = arith.constant 1 : index
    %c1_54 = arith.constant 1 : index
    %c0_55 = arith.constant 0 : index
    %50 = vector.load %arg12[%c0_52, %c1_53, %c1_54, %c0_55] : memref<1x18x18x32xf32, #tpu.memory_space<vmem>>, vector<1x16x16x32xf32>
    %51 = vector.shape_cast %50 : vector<1x16x16x32xf32> to vector<256x32xf32>
    %52 = arith.truncf %51 : vector<256x32xf32> to vector<256x32xbf16>
    %c0_56 = arith.constant 0 : index
    %c128 = arith.constant 128 : index
    %53 = vector.load %arg13[%c0_56, %c128] : memref<256x288xbf16, #tpu.memory_space<vmem>>, vector<256x32xbf16>
    tpu.vector_store %arg13[%c0_56, %c128], %52 {strides = array<i32>} : memref<256x288xbf16, #tpu.memory_space<vmem>>, vector<256x32xbf16>,
    %c0_57 = arith.constant 0 : index
    %c1_58 = arith.constant 1 : index
    %c2_59 = arith.constant 2 : index
    %c0_60 = arith.constant 0 : index
    %54 = vector.load %arg12[%c0_57, %c1_58, %c2_59, %c0_60] : memref<1x18x18x32xf32, #tpu.memory_space<vmem>>, vector<1x16x16x32xf32>
    %55 = vector.shape_cast %54 : vector<1x16x16x32xf32> to vector<256x32xf32>
    %56 = arith.truncf %55 : vector<256x32xf32> to vector<256x32xbf16>
    %c0_61 = arith.constant 0 : index
    %c160 = arith.constant 160 : index
    %57 = vector.load %arg13[%c0_61, %c160] : memref<256x288xbf16, #tpu.memory_space<vmem>>, vector<256x32xbf16>
    tpu.vector_store %arg13[%c0_61, %c160], %56 {strides = array<i32>} : memref<256x288xbf16, #tpu.memory_space<vmem>>, vector<256x32xbf16>,
    %c0_62 = arith.constant 0 : index
    %c2_63 = arith.constant 2 : index
    %c0_64 = arith.constant 0 : index
    %c0_65 = arith.constant 0 : index
    %58 = vector.load %arg12[%c0_62, %c2_63, %c0_64, %c0_65] : memref<1x18x18x32xf32, #tpu.memory_space<vmem>>, vector<1x16x16x32xf32>
    %59 = vector.shape_cast %58 : vector<1x16x16x32xf32> to vector<256x32xf32>
    %60 = arith.truncf %59 : vector<256x32xf32> to vector<256x32xbf16>
    %c0_66 = arith.constant 0 : index
    %c192 = arith.constant 192 : index
    %61 = vector.load %arg13[%c0_66, %c192] : memref<256x288xbf16, #tpu.memory_space<vmem>>, vector<256x32xbf16>
    tpu.vector_store %arg13[%c0_66, %c192], %60 {strides = array<i32>} : memref<256x288xbf16, #tpu.memory_space<vmem>>, vector<256x32xbf16>,
    %c0_67 = arith.constant 0 : index
    %c2_68 = arith.constant 2 : index
    %c1_69 = arith.constant 1 : index
    %c0_70 = arith.constant 0 : index
    %62 = vector.load %arg12[%c0_67, %c2_68, %c1_69, %c0_70] : memref<1x18x18x32xf32, #tpu.memory_space<vmem>>, vector<1x16x16x32xf32>
    %63 = vector.shape_cast %62 : vector<1x16x16x32xf32> to vector<256x32xf32>
    %64 = arith.truncf %63 : vector<256x32xf32> to vector<256x32xbf16>
    %c0_71 = arith.constant 0 : index
    %c224 = arith.constant 224 : index
    %65 = vector.load %arg13[%c0_71, %c224] : memref<256x288xbf16, #tpu.memory_space<vmem>>, vector<256x32xbf16>
    tpu.vector_store %arg13[%c0_71, %c224], %64 {strides = array<i32>} : memref<256x288xbf16, #tpu.memory_space<vmem>>, vector<256x32xbf16>,
    %c0_72 = arith.constant 0 : index
    %c2_73 = arith.constant 2 : index
    %c2_74 = arith.constant 2 : index
    %c0_75 = arith.constant 0 : index
    %66 = vector.load %arg12[%c0_72, %c2_73, %c2_74, %c0_75] : memref<1x18x18x32xf32, #tpu.memory_space<vmem>>, vector<1x16x16x32xf32>
    %67 = vector.shape_cast %66 : vector<1x16x16x32xf32> to vector<256x32xf32>
    %68 = arith.truncf %67 : vector<256x32xf32> to vector<256x32xbf16>
    %c0_76 = arith.constant 0 : index
    %c256 = arith.constant 256 : index
    %69 = vector.load %arg13[%c0_76, %c256] : memref<256x288xbf16, #tpu.memory_space<vmem>>, vector<256x32xbf16>
    tpu.vector_store %arg13[%c0_76, %c256], %68 {strides = array<i32>} : memref<256x288xbf16, #tpu.memory_space<vmem>>, vector<256x32xbf16>,
    %c0_77 = arith.constant 0 : index
    %c0_78 = arith.constant 0 : index
    %70 = vector.load %arg13[%c0_77, %c0_78] : memref<256x288xbf16, #tpu.memory_space<vmem>>, vector<256x288xbf16>
    %c0_79 = arith.constant 0 : index
    %c0_80 = arith.constant 0 : index
    %71 = vector.load %arg4[%c0_79, %c0_80] : memref<288x64xbf16, #tpu.memory_space<vmem>>, vector<288x64xbf16>
    %cst_81 = arith.constant dense<0.000000e+00> : vector<256x64xf32>
    %72 = tpu.matmul %70, %71, %cst_81 {dimension_numbers = #tpu.dot_dimension_numbers<[1], [0], [0], [1], [0, 0, 1, 1], [], []>} : vector<256x288xbf16>, vector<288x64xbf16>, vector<256x64xf32> -> vector<256x64xf32>
    %c0_82 = arith.constant 0 : index
    %c0_83 = arith.constant 0 : index
    %73 = vector.load %arg14[%c0_82, %c0_83] : memref<256x64xf32, #tpu.memory_space<vmem>>, vector<256x64xf32>
    tpu.vector_store %arg14[%c0_82, %c0_83], %72 {strides = array<i32>} : memref<256x64xf32, #tpu.memory_space<vmem>>, vector<256x64xf32>,
    %c0_84 = arith.constant 0 : index
    %c0_85 = arith.constant 0 : index
    %74 = tpu.strided_load %arg14[%c0_84, %c0_85] {strides = array<i32: 2, 1>} : memref<256x64xf32, #tpu.memory_space<vmem>>, vector<128x64xf32>
    %c1_86 = arith.constant 1 : index
    %c0_87 = arith.constant 0 : index
    %75 = tpu.strided_load %arg14[%c1_86, %c0_87] {strides = array<i32: 2, 1>} : memref<256x64xf32, #tpu.memory_space<vmem>>, vector<128x64xf32>
    %76 = arith.maximumf %74, %75 : vector<128x64xf32>
    %77 = vector.shape_cast %76 : vector<128x64xf32> to vector<1x8x2x8x64xf32>
    %78 = vector.extract_strided_slice %77 {offsets = [0, 0, 0, 0, 0], sizes = [1, 8, 1, 8, 64], strides = [1, 1, 1, 1, 1]} : vector<1x8x2x8x64xf32> to vector<1x8x1x8x64xf32>
    %79 = vector.shape_cast %78 : vector<1x8x1x8x64xf32> to vector<1x8x8x64xf32>
    %80 = vector.extract_strided_slice %77 {offsets = [0, 0, 1, 0, 0], sizes = [1, 8, 1, 8, 64], strides = [1, 1, 1, 1, 1]} : vector<1x8x2x8x64xf32> to vector<1x8x1x8x64xf32>
    %81 = vector.shape_cast %80 : vector<1x8x1x8x64xf32> to vector<1x8x8x64xf32>
    %82 = arith.maximumf %79, %81 : vector<1x8x8x64xf32>
    %c0_88 = arith.constant 0 : index
    %c0_89 = arith.constant 0 : index
    %83 = vector.load %arg5[%c0_88, %c0_89] : memref<1x64xf32, #tpu.memory_space<vmem>>, vector<1x64xf32>
    %84 = vector.shape_cast %83 : vector<1x64xf32> to vector<1x1x1x64xf32>
    %85 = vector.broadcast %84 : vector<1x1x1x64xf32> to vector<1x8x8x64xf32>
    %86 = arith.addf %82, %85 : vector<1x8x8x64xf32>
    %cst_90 = arith.constant 0.000000e+00 : f32
    %87 = vector.broadcast %cst_90 : f32 to vector<1x8x8x64xf32>
    %88 = arith.maximumf %86, %87 : vector<1x8x8x64xf32>
    %89 = arith.truncf %88 : vector<1x8x8x64xf32> to vector<1x8x8x64xbf16>
    %c0_91 = arith.constant 0 : index
    %c0_92 = arith.constant 0 : index
    %c0_93 = arith.constant 0 : index
    %c0_94 = arith.constant 0 : index
    %90 = vector.load %arg15[%c0_91, %c0_92, %c0_93, %c0_94] : memref<1x8x8x64xbf16, #tpu.memory_space<vmem>>, vector<1x8x8x64xbf16>
    tpu.vector_store %arg15[%c0_91, %c0_92, %c0_93, %c0_94], %89 {strides = array<i32>} : memref<1x8x8x64xbf16, #tpu.memory_space<vmem>>, vector<1x8x8x64xbf16>,
    %c0_95 = arith.constant 0 : index
    %c0_96 = arith.constant 0 : index
    %c0_97 = arith.constant 0 : index
    %c0_98 = arith.constant 0 : index
    %91 = vector.load %arg15[%c0_95, %c0_96, %c0_97, %c0_98] : memref<1x8x8x64xbf16, #tpu.memory_space<vmem>>, vector<1x1x1x64xbf16>
    %92 = vector.shape_cast %91 : vector<1x1x1x64xbf16> to vector<1x64xbf16>
    %c0_99 = arith.constant 0 : index
    %c0_100 = arith.constant 0 : index
    %93 = vector.load %arg16[%c0_99, %c0_100] : memref<1x4096xbf16, #tpu.memory_space<vmem>>, vector<1x64xbf16>
    tpu.vector_store %arg16[%c0_99, %c0_100], %92 {strides = array<i32>} : memref<1x4096xbf16, #tpu.memory_space<vmem>>, vector<1x64xbf16>,
    %c0_101 = arith.constant 0 : index
    %c0_102 = arith.constant 0 : index
    %c1_103 = arith.constant 1 : index
    %c0_104 = arith.constant 0 : index
    %94 = vector.load %arg15[%c0_101, %c0_102, %c1_103, %c0_104] : memref<1x8x8x64xbf16, #tpu.memory_space<vmem>>, vector<1x1x1x64xbf16>
    %95 = vector.shape_cast %94 : vector<1x1x1x64xbf16> to vector<1x64xbf16>
    %c0_105 = arith.constant 0 : index
    %c64_106 = arith.constant 64 : index
    %96 = vector.load %arg16[%c0_105, %c64_106] : memref<1x4096xbf16, #tpu.memory_space<vmem>>, vector<1x64xbf16>
    tpu.vector_store %arg16[%c0_105, %c64_106], %95 {strides = array<i32>} : memref<1x4096xbf16, #tpu.memory_space<vmem>>, vector<1x64xbf16>,
    %c0_107 = arith.constant 0 : index
    %c0_108 = arith.constant 0 : index
    %c2_109 = arith.constant 2 : index
    %c0_110 = arith.constant 0 : index
    %97 = vector.load %arg15[%c0_107, %c0_108, %c2_109, %c0_110] : memref<1x8x8x64xbf16, #tpu.memory_space<vmem>>, vector<1x1x1x64xbf16>
    %98 = vector.shape_cast %97 : vector<1x1x1x64xbf16> to vector<1x64xbf16>
    %c0_111 = arith.constant 0 : index
    %c128_112 = arith.constant 128 : index
    %99 = vector.load %arg16[%c0_111, %c128_112] : memref<1x4096xbf16, #tpu.memory_space<vmem>>, vector<1x64xbf16>
    tpu.vector_store %arg16[%c0_111, %c128_112], %98 {strides = array<i32>} : memref<1x4096xbf16, #tpu.memory_space<vmem>>, vector<1x64xbf16>,
    %c0_113 = arith.constant 0 : index
    %c0_114 = arith.constant 0 : index
    %c3 = arith.constant 3 : index
    %c0_115 = arith.constant 0 : index
    %100 = vector.load %arg15[%c0_113, %c0_114, %c3, %c0_115] : memref<1x8x8x64xbf16, #tpu.memory_space<vmem>>, vector<1x1x1x64xbf16>
    %101 = vector.shape_cast %100 : vector<1x1x1x64xbf16> to vector<1x64xbf16>
    %c0_116 = arith.constant 0 : index
    %c192_117 = arith.constant 192 : index
    %102 = vector.load %arg16[%c0_116, %c192_117] : memref<1x4096xbf16, #tpu.memory_space<vmem>>, vector<1x64xbf16>
    tpu.vector_store %arg16[%c0_116, %c192_117], %101 {strides = array<i32>} : memref<1x4096xbf16, #tpu.memory_space<vmem>>, vector<1x64xbf16>,
    %c0_118 = arith.constant 0 : index
    %c0_119 = arith.constant 0 : index
    %c4 = arith.constant 4 : index
    %c0_120 = arith.constant 0 : index
    %103 = vector.load %arg15[%c0_118, %c0_119, %c4, %c0_120] : memref<1x8x8x64xbf16, #tpu.memory_space<vmem>>, vector<1x1x1x64xbf16>
    %104 = vector.shape_cast %103 : vector<1x1x1x64xbf16> to vector<1x64xbf16>
    %c0_121 = arith.constant 0 : index
    %c256_122 = arith.constant 256 : index
    %105 = vector.load %arg16[%c0_121, %c256_122] : memref<1x4096xbf16, #tpu.memory_space<vmem>>, vector<1x64xbf16>
    tpu.vector_store %arg16[%c0_121, %c256_122], %104 {strides = array<i32>} : memref<1x4096xbf16, #tpu.memory_space<vmem>>, vector<1x64xbf16>,
    %c0_123 = arith.constant 0 : index
    %c0_124 = arith.constant 0 : index
    %c5 = arith.constant 5 : index
    %c0_125 = arith.constant 0 : index
    %106 = vector.load %arg15[%c0_123, %c0_124, %c5, %c0_125] : memref<1x8x8x64xbf16, #tpu.memory_space<vmem>>, vector<1x1x1x64xbf16>
    %107 = vector.shape_cast %106 : vector<1x1x1x64xbf16> to vector<1x64xbf16>
    %c0_126 = arith.constant 0 : index
    %c320 = arith.constant 320 : index
    %108 = vector.load %arg16[%c0_126, %c320] : memref<1x4096xbf16, #tpu.memory_space<vmem>>, vector<1x64xbf16>
    tpu.vector_store %arg16[%c0_126, %c320], %107 {strides = array<i32>} : memref<1x4096xbf16, #tpu.memory_space<vmem>>, vector<1x64xbf16>,
    %c0_127 = arith.constant 0 : index
    %c0_128 = arith.constant 0 : index
    %c6 = arith.constant 6 : index
    %c0_129 = arith.constant 0 : index
    %109 = vector.load %arg15[%c0_127, %c0_128, %c6, %c0_129] : memref<1x8x8x64xbf16, #tpu.memory_space<vmem>>, vector<1x1x1x64xbf16>
    %110 = vector.shape_cast %109 : vector<1x1x1x64xbf16> to vector<1x64xbf16>
    %c0_130 = arith.constant 0 : index
    %c384 = arith.constant 384 : index
    %111 = vector.load %arg16[%c0_130, %c384] : memref<1x4096xbf16, #tpu.memory_space<vmem>>, vector<1x64xbf16>
    tpu.vector_store %arg16[%c0_130, %c384], %110 {strides = array<i32>} : memref<1x4096xbf16, #tpu.memory_space<vmem>>, vector<1x64xbf16>,
    %c0_131 = arith.constant 0 : index
    %c0_132 = arith.constant 0 : index
    %c7 = arith.constant 7 : index
    %c0_133 = arith.constant 0 : index
    %112 = vector.load %arg15[%c0_131, %c0_132, %c7, %c0_133] : memref<1x8x8x64xbf16, #tpu.memory_space<vmem>>, vector<1x1x1x64xbf16>
    %113 = vector.shape_cast %112 : vector<1x1x1x64xbf16> to vector<1x64xbf16>
    %c0_134 = arith.constant 0 : index
    %c448 = arith.constant 448 : index
    %114 = vector.load %arg16[%c0_134, %c448] : memref<1x4096xbf16, #tpu.memory_space<vmem>>, vector<1x64xbf16>
    tpu.vector_store %arg16[%c0_134, %c448], %113 {strides = array<i32>} : memref<1x4096xbf16, #tpu.memory_space<vmem>>, vector<1x64xbf16>,
    %c0_135 = arith.constant 0 : index
    %c1_136 = arith.constant 1 : index
    %c0_137 = arith.constant 0 : index
    %c0_138 = arith.constant 0 : index
    %115 = vector.load %arg15[%c0_135, %c1_136, %c0_137, %c0_138] : memref<1x8x8x64xbf16, #tpu.memory_space<vmem>>, vector<1x1x1x64xbf16>
    %116 = vector.shape_cast %115 : vector<1x1x1x64xbf16> to vector<1x64xbf16>
    %c0_139 = arith.constant 0 : index
    %c512 = arith.constant 512 : index
    %117 = vector.load %arg16[%c0_139, %c512] : memref<1x4096xbf16, #tpu.memory_space<vmem>>, vector<1x64xbf16>
    tpu.vector_store %arg16[%c0_139, %c512], %116 {strides = array<i32>} : memref<1x4096xbf16, #tpu.memory_space<vmem>>, vector<1x64xbf16>,
    %c0_140 = arith.constant 0 : index
    %c1_141 = arith.constant 1 : index
    %c1_142 = arith.constant 1 : index
    %c0_143 = arith.constant 0 : index
    %118 = vector.load %arg15[%c0_140, %c1_141, %c1_142, %c0_143] : memref<1x8x8x64xbf16, #tpu.memory_space<vmem>>, vector<1x1x1x64xbf16>
    %119 = vector.shape_cast %118 : vector<1x1x1x64xbf16> to vector<1x64xbf16>
    %c0_144 = arith.constant 0 : index
    %c576 = arith.constant 576 : index
    %120 = vector.load %arg16[%c0_144, %c576] : memref<1x4096xbf16, #tpu.memory_space<vmem>>, vector<1x64xbf16>
    tpu.vector_store %arg16[%c0_144, %c576], %119 {strides = array<i32>} : memref<1x4096xbf16, #tpu.memory_space<vmem>>, vector<1x64xbf16>,
    %c0_145 = arith.constant 0 : index
    %c1_146 = arith.constant 1 : index
    %c2_147 = arith.constant 2 : index
    %c0_148 = arith.constant 0 : index
    %121 = vector.load %arg15[%c0_145, %c1_146, %c2_147, %c0_148] : memref<1x8x8x64xbf16, #tpu.memory_space<vmem>>, vector<1x1x1x64xbf16>
    %122 = vector.shape_cast %121 : vector<1x1x1x64xbf16> to vector<1x64xbf16>
    %c0_149 = arith.constant 0 : index
    %c640 = arith.constant 640 : index
    %123 = vector.load %arg16[%c0_149, %c640] : memref<1x4096xbf16, #tpu.memory_space<vmem>>, vector<1x64xbf16>
    tpu.vector_store %arg16[%c0_149, %c640], %122 {strides = array<i32>} : memref<1x4096xbf16, #tpu.memory_space<vmem>>, vector<1x64xbf16>,
    %c0_150 = arith.constant 0 : index
    %c1_151 = arith.constant 1 : index
    %c3_152 = arith.constant 3 : index
    %c0_153 = arith.constant 0 : index
    %124 = vector.load %arg15[%c0_150, %c1_151, %c3_152, %c0_153] : memref<1x8x8x64xbf16, #tpu.memory_space<vmem>>, vector<1x1x1x64xbf16>
    %125 = vector.shape_cast %124 : vector<1x1x1x64xbf16> to vector<1x64xbf16>
    %c0_154 = arith.constant 0 : index
    %c704 = arith.constant 704 : index
    %126 = vector.load %arg16[%c0_154, %c704] : memref<1x4096xbf16, #tpu.memory_space<vmem>>, vector<1x64xbf16>
    tpu.vector_store %arg16[%c0_154, %c704], %125 {strides = array<i32>} : memref<1x4096xbf16, #tpu.memory_space<vmem>>, vector<1x64xbf16>,
    %c0_155 = arith.constant 0 : index
    %c1_156 = arith.constant 1 : index
    %c4_157 = arith.constant 4 : index
    %c0_158 = arith.constant 0 : index
    %127 = vector.load %arg15[%c0_155, %c1_156, %c4_157, %c0_158] : memref<1x8x8x64xbf16, #tpu.memory_space<vmem>>, vector<1x1x1x64xbf16>
    %128 = vector.shape_cast %127 : vector<1x1x1x64xbf16> to vector<1x64xbf16>
    %c0_159 = arith.constant 0 : index
    %c768 = arith.constant 768 : index
    %129 = vector.load %arg16[%c0_159, %c768] : memref<1x4096xbf16, #tpu.memory_space<vmem>>, vector<1x64xbf16>
    tpu.vector_store %arg16[%c0_159, %c768], %128 {strides = array<i32>} : memref<1x4096xbf16, #tpu.memory_space<vmem>>, vector<1x64xbf16>,
    %c0_160 = arith.constant 0 : index
    %c1_161 = arith.constant 1 : index
    %c5_162 = arith.constant 5 : index
    %c0_163 = arith.constant 0 : index
    %130 = vector.load %arg15[%c0_160, %c1_161, %c5_162, %c0_163] : memref<1x8x8x64xbf16, #tpu.memory_space<vmem>>, vector<1x1x1x64xbf16>
    %131 = vector.shape_cast %130 : vector<1x1x1x64xbf16> to vector<1x64xbf16>
    %c0_164 = arith.constant 0 : index
    %c832 = arith.constant 832 : index
    %132 = vector.load %arg16[%c0_164, %c832] : memref<1x4096xbf16, #tpu.memory_space<vmem>>, vector<1x64xbf16>
    tpu.vector_store %arg16[%c0_164, %c832], %131 {strides = array<i32>} : memref<1x4096xbf16, #tpu.memory_space<vmem>>, vector<1x64xbf16>,
    %c0_165 = arith.constant 0 : index
    %c1_166 = arith.constant 1 : index
    %c6_167 = arith.constant 6 : index
    %c0_168 = arith.constant 0 : index
    %133 = vector.load %arg15[%c0_165, %c1_166, %c6_167, %c0_168] : memref<1x8x8x64xbf16, #tpu.memory_space<vmem>>, vector<1x1x1x64xbf16>
    %134 = vector.shape_cast %133 : vector<1x1x1x64xbf16> to vector<1x64xbf16>
    %c0_169 = arith.constant 0 : index
    %c896 = arith.constant 896 : index
    %135 = vector.load %arg16[%c0_169, %c896] : memref<1x4096xbf16, #tpu.memory_space<vmem>>, vector<1x64xbf16>
    tpu.vector_store %arg16[%c0_169, %c896], %134 {strides = array<i32>} : memref<1x4096xbf16, #tpu.memory_space<vmem>>, vector<1x64xbf16>,
    %c0_170 = arith.constant 0 : index
    %c1_171 = arith.constant 1 : index
    %c7_172 = arith.constant 7 : index
    %c0_173 = arith.constant 0 : index
    %136 = vector.load %arg15[%c0_170, %c1_171, %c7_172, %c0_173] : memref<1x8x8x64xbf16, #tpu.memory_space<vmem>>, vector<1x1x1x64xbf16>
    %137 = vector.shape_cast %136 : vector<1x1x1x64xbf16> to vector<1x64xbf16>
    %c0_174 = arith.constant 0 : index
    %c960 = arith.constant 960 : index
    %138 = vector.load %arg16[%c0_174, %c960] : memref<1x4096xbf16, #tpu.memory_space<vmem>>, vector<1x64xbf16>
    tpu.vector_store %arg16[%c0_174, %c960], %137 {strides = array<i32>} : memref<1x4096xbf16, #tpu.memory_space<vmem>>, vector<1x64xbf16>,
    %c0_175 = arith.constant 0 : index
    %c2_176 = arith.constant 2 : index
    %c0_177 = arith.constant 0 : index
    %c0_178 = arith.constant 0 : index
    %139 = vector.load %arg15[%c0_175, %c2_176, %c0_177, %c0_178] : memref<1x8x8x64xbf16, #tpu.memory_space<vmem>>, vector<1x1x1x64xbf16>
    %140 = vector.shape_cast %139 : vector<1x1x1x64xbf16> to vector<1x64xbf16>
    %c0_179 = arith.constant 0 : index
    %c1024 = arith.constant 1024 : index
    %141 = vector.load %arg16[%c0_179, %c1024] : memref<1x4096xbf16, #tpu.memory_space<vmem>>, vector<1x64xbf16>
    tpu.vector_store %arg16[%c0_179, %c1024], %140 {strides = array<i32>} : memref<1x4096xbf16, #tpu.memory_space<vmem>>, vector<1x64xbf16>,
    %c0_180 = arith.constant 0 : index
    %c2_181 = arith.constant 2 : index
    %c1_182 = arith.constant 1 : index
    %c0_183 = arith.constant 0 : index
    %142 = vector.load %arg15[%c0_180, %c2_181, %c1_182, %c0_183] : memref<1x8x8x64xbf16, #tpu.memory_space<vmem>>, vector<1x1x1x64xbf16>
    %143 = vector.shape_cast %142 : vector<1x1x1x64xbf16> to vector<1x64xbf16>
    %c0_184 = arith.constant 0 : index
    %c1088 = arith.constant 1088 : index
    %144 = vector.load %arg16[%c0_184, %c1088] : memref<1x4096xbf16, #tpu.memory_space<vmem>>, vector<1x64xbf16>
    tpu.vector_store %arg16[%c0_184, %c1088], %143 {strides = array<i32>} : memref<1x4096xbf16, #tpu.memory_space<vmem>>, vector<1x64xbf16>,
    %c0_185 = arith.constant 0 : index
    %c2_186 = arith.constant 2 : index
    %c2_187 = arith.constant 2 : index
    %c0_188 = arith.constant 0 : index
    %145 = vector.load %arg15[%c0_185, %c2_186, %c2_187, %c0_188] : memref<1x8x8x64xbf16, #tpu.memory_space<vmem>>, vector<1x1x1x64xbf16>
    %146 = vector.shape_cast %145 : vector<1x1x1x64xbf16> to vector<1x64xbf16>
    %c0_189 = arith.constant 0 : index
    %c1152 = arith.constant 1152 : index
    %147 = vector.load %arg16[%c0_189, %c1152] : memref<1x4096xbf16, #tpu.memory_space<vmem>>, vector<1x64xbf16>
    tpu.vector_store %arg16[%c0_189, %c1152], %146 {strides = array<i32>} : memref<1x4096xbf16, #tpu.memory_space<vmem>>, vector<1x64xbf16>,
    %c0_190 = arith.constant 0 : index
    %c2_191 = arith.constant 2 : index
    %c3_192 = arith.constant 3 : index
    %c0_193 = arith.constant 0 : index
    %148 = vector.load %arg15[%c0_190, %c2_191, %c3_192, %c0_193] : memref<1x8x8x64xbf16, #tpu.memory_space<vmem>>, vector<1x1x1x64xbf16>
    %149 = vector.shape_cast %148 : vector<1x1x1x64xbf16> to vector<1x64xbf16>
    %c0_194 = arith.constant 0 : index
    %c1216 = arith.constant 1216 : index
    %150 = vector.load %arg16[%c0_194, %c1216] : memref<1x4096xbf16, #tpu.memory_space<vmem>>, vector<1x64xbf16>
    tpu.vector_store %arg16[%c0_194, %c1216], %149 {strides = array<i32>} : memref<1x4096xbf16, #tpu.memory_space<vmem>>, vector<1x64xbf16>,
    %c0_195 = arith.constant 0 : index
    %c2_196 = arith.constant 2 : index
    %c4_197 = arith.constant 4 : index
    %c0_198 = arith.constant 0 : index
    %151 = vector.load %arg15[%c0_195, %c2_196, %c4_197, %c0_198] : memref<1x8x8x64xbf16, #tpu.memory_space<vmem>>, vector<1x1x1x64xbf16>
    %152 = vector.shape_cast %151 : vector<1x1x1x64xbf16> to vector<1x64xbf16>
    %c0_199 = arith.constant 0 : index
    %c1280 = arith.constant 1280 : index
    %153 = vector.load %arg16[%c0_199, %c1280] : memref<1x4096xbf16, #tpu.memory_space<vmem>>, vector<1x64xbf16>
    tpu.vector_store %arg16[%c0_199, %c1280], %152 {strides = array<i32>} : memref<1x4096xbf16, #tpu.memory_space<vmem>>, vector<1x64xbf16>,
    %c0_200 = arith.constant 0 : index
    %c2_201 = arith.constant 2 : index
    %c5_202 = arith.constant 5 : index
    %c0_203 = arith.constant 0 : index
    %154 = vector.load %arg15[%c0_200, %c2_201, %c5_202, %c0_203] : memref<1x8x8x64xbf16, #tpu.memory_space<vmem>>, vector<1x1x1x64xbf16>
    %155 = vector.shape_cast %154 : vector<1x1x1x64xbf16> to vector<1x64xbf16>
    %c0_204 = arith.constant 0 : index
    %c1344 = arith.constant 1344 : index
    %156 = vector.load %arg16[%c0_204, %c1344] : memref<1x4096xbf16, #tpu.memory_space<vmem>>, vector<1x64xbf16>
    tpu.vector_store %arg16[%c0_204, %c1344], %155 {strides = array<i32>} : memref<1x4096xbf16, #tpu.memory_space<vmem>>, vector<1x64xbf16>,
    %c0_205 = arith.constant 0 : index
    %c2_206 = arith.constant 2 : index
    %c6_207 = arith.constant 6 : index
    %c0_208 = arith.constant 0 : index
    %157 = vector.load %arg15[%c0_205, %c2_206, %c6_207, %c0_208] : memref<1x8x8x64xbf16, #tpu.memory_space<vmem>>, vector<1x1x1x64xbf16>
    %158 = vector.shape_cast %157 : vector<1x1x1x64xbf16> to vector<1x64xbf16>
    %c0_209 = arith.constant 0 : index
    %c1408 = arith.constant 1408 : index
    %159 = vector.load %arg16[%c0_209, %c1408] : memref<1x4096xbf16, #tpu.memory_space<vmem>>, vector<1x64xbf16>
    tpu.vector_store %arg16[%c0_209, %c1408], %158 {strides = array<i32>} : memref<1x4096xbf16, #tpu.memory_space<vmem>>, vector<1x64xbf16>,
    %c0_210 = arith.constant 0 : index
    %c2_211 = arith.constant 2 : index
    %c7_212 = arith.constant 7 : index
    %c0_213 = arith.constant 0 : index
    %160 = vector.load %arg15[%c0_210, %c2_211, %c7_212, %c0_213] : memref<1x8x8x64xbf16, #tpu.memory_space<vmem>>, vector<1x1x1x64xbf16>
    %161 = vector.shape_cast %160 : vector<1x1x1x64xbf16> to vector<1x64xbf16>
    %c0_214 = arith.constant 0 : index
    %c1472 = arith.constant 1472 : index
    %162 = vector.load %arg16[%c0_214, %c1472] : memref<1x4096xbf16, #tpu.memory_space<vmem>>, vector<1x64xbf16>
    tpu.vector_store %arg16[%c0_214, %c1472], %161 {strides = array<i32>} : memref<1x4096xbf16, #tpu.memory_space<vmem>>, vector<1x64xbf16>,
    %c0_215 = arith.constant 0 : index
    %c3_216 = arith.constant 3 : index
    %c0_217 = arith.constant 0 : index
    %c0_218 = arith.constant 0 : index
    %163 = vector.load %arg15[%c0_215, %c3_216, %c0_217, %c0_218] : memref<1x8x8x64xbf16, #tpu.memory_space<vmem>>, vector<1x1x1x64xbf16>
    %164 = vector.shape_cast %163 : vector<1x1x1x64xbf16> to vector<1x64xbf16>
    %c0_219 = arith.constant 0 : index
    %c1536 = arith.constant 1536 : index
    %165 = vector.load %arg16[%c0_219, %c1536] : memref<1x4096xbf16, #tpu.memory_space<vmem>>, vector<1x64xbf16>
    tpu.vector_store %arg16[%c0_219, %c1536], %164 {strides = array<i32>} : memref<1x4096xbf16, #tpu.memory_space<vmem>>, vector<1x64xbf16>,
    %c0_220 = arith.constant 0 : index
    %c3_221 = arith.constant 3 : index
    %c1_222 = arith.constant 1 : index
    %c0_223 = arith.constant 0 : index
    %166 = vector.load %arg15[%c0_220, %c3_221, %c1_222, %c0_223] : memref<1x8x8x64xbf16, #tpu.memory_space<vmem>>, vector<1x1x1x64xbf16>
    %167 = vector.shape_cast %166 : vector<1x1x1x64xbf16> to vector<1x64xbf16>
    %c0_224 = arith.constant 0 : index
    %c1600 = arith.constant 1600 : index
    %168 = vector.load %arg16[%c0_224, %c1600] : memref<1x4096xbf16, #tpu.memory_space<vmem>>, vector<1x64xbf16>
    tpu.vector_store %arg16[%c0_224, %c1600], %167 {strides = array<i32>} : memref<1x4096xbf16, #tpu.memory_space<vmem>>, vector<1x64xbf16>,
    %c0_225 = arith.constant 0 : index
    %c3_226 = arith.constant 3 : index
    %c2_227 = arith.constant 2 : index
    %c0_228 = arith.constant 0 : index
    %169 = vector.load %arg15[%c0_225, %c3_226, %c2_227, %c0_228] : memref<1x8x8x64xbf16, #tpu.memory_space<vmem>>, vector<1x1x1x64xbf16>
    %170 = vector.shape_cast %169 : vector<1x1x1x64xbf16> to vector<1x64xbf16>
    %c0_229 = arith.constant 0 : index
    %c1664 = arith.constant 1664 : index
    %171 = vector.load %arg16[%c0_229, %c1664] : memref<1x4096xbf16, #tpu.memory_space<vmem>>, vector<1x64xbf16>
    tpu.vector_store %arg16[%c0_229, %c1664], %170 {strides = array<i32>} : memref<1x4096xbf16, #tpu.memory_space<vmem>>, vector<1x64xbf16>,
    %c0_230 = arith.constant 0 : index
    %c3_231 = arith.constant 3 : index
    %c3_232 = arith.constant 3 : index
    %c0_233 = arith.constant 0 : index
    %172 = vector.load %arg15[%c0_230, %c3_231, %c3_232, %c0_233] : memref<1x8x8x64xbf16, #tpu.memory_space<vmem>>, vector<1x1x1x64xbf16>
    %173 = vector.shape_cast %172 : vector<1x1x1x64xbf16> to vector<1x64xbf16>
    %c0_234 = arith.constant 0 : index
    %c1728 = arith.constant 1728 : index
    %174 = vector.load %arg16[%c0_234, %c1728] : memref<1x4096xbf16, #tpu.memory_space<vmem>>, vector<1x64xbf16>
    tpu.vector_store %arg16[%c0_234, %c1728], %173 {strides = array<i32>} : memref<1x4096xbf16, #tpu.memory_space<vmem>>, vector<1x64xbf16>,
    %c0_235 = arith.constant 0 : index
    %c3_236 = arith.constant 3 : index
    %c4_237 = arith.constant 4 : index
    %c0_238 = arith.constant 0 : index
    %175 = vector.load %arg15[%c0_235, %c3_236, %c4_237, %c0_238] : memref<1x8x8x64xbf16, #tpu.memory_space<vmem>>, vector<1x1x1x64xbf16>
    %176 = vector.shape_cast %175 : vector<1x1x1x64xbf16> to vector<1x64xbf16>
    %c0_239 = arith.constant 0 : index
    %c1792 = arith.constant 1792 : index
    %177 = vector.load %arg16[%c0_239, %c1792] : memref<1x4096xbf16, #tpu.memory_space<vmem>>, vector<1x64xbf16>
    tpu.vector_store %arg16[%c0_239, %c1792], %176 {strides = array<i32>} : memref<1x4096xbf16, #tpu.memory_space<vmem>>, vector<1x64xbf16>,
    %c0_240 = arith.constant 0 : index
    %c3_241 = arith.constant 3 : index
    %c5_242 = arith.constant 5 : index
    %c0_243 = arith.constant 0 : index
    %178 = vector.load %arg15[%c0_240, %c3_241, %c5_242, %c0_243] : memref<1x8x8x64xbf16, #tpu.memory_space<vmem>>, vector<1x1x1x64xbf16>
    %179 = vector.shape_cast %178 : vector<1x1x1x64xbf16> to vector<1x64xbf16>
    %c0_244 = arith.constant 0 : index
    %c1856 = arith.constant 1856 : index
    %180 = vector.load %arg16[%c0_244, %c1856] : memref<1x4096xbf16, #tpu.memory_space<vmem>>, vector<1x64xbf16>
    tpu.vector_store %arg16[%c0_244, %c1856], %179 {strides = array<i32>} : memref<1x4096xbf16, #tpu.memory_space<vmem>>, vector<1x64xbf16>,
    %c0_245 = arith.constant 0 : index
    %c3_246 = arith.constant 3 : index
    %c6_247 = arith.constant 6 : index
    %c0_248 = arith.constant 0 : index
    %181 = vector.load %arg15[%c0_245, %c3_246, %c6_247, %c0_248] : memref<1x8x8x64xbf16, #tpu.memory_space<vmem>>, vector<1x1x1x64xbf16>
    %182 = vector.shape_cast %181 : vector<1x1x1x64xbf16> to vector<1x64xbf16>
    %c0_249 = arith.constant 0 : index
    %c1920 = arith.constant 1920 : index
    %183 = vector.load %arg16[%c0_249, %c1920] : memref<1x4096xbf16, #tpu.memory_space<vmem>>, vector<1x64xbf16>
    tpu.vector_store %arg16[%c0_249, %c1920], %182 {strides = array<i32>} : memref<1x4096xbf16, #tpu.memory_space<vmem>>, vector<1x64xbf16>,
    %c0_250 = arith.constant 0 : index
    %c3_251 = arith.constant 3 : index
    %c7_252 = arith.constant 7 : index
    %c0_253 = arith.constant 0 : index
    %184 = vector.load %arg15[%c0_250, %c3_251, %c7_252, %c0_253] : memref<1x8x8x64xbf16, #tpu.memory_space<vmem>>, vector<1x1x1x64xbf16>
    %185 = vector.shape_cast %184 : vector<1x1x1x64xbf16> to vector<1x64xbf16>
    %c0_254 = arith.constant 0 : index
    %c1984 = arith.constant 1984 : index
    %186 = vector.load %arg16[%c0_254, %c1984] : memref<1x4096xbf16, #tpu.memory_space<vmem>>, vector<1x64xbf16>
    tpu.vector_store %arg16[%c0_254, %c1984], %185 {strides = array<i32>} : memref<1x4096xbf16, #tpu.memory_space<vmem>>, vector<1x64xbf16>,
    %c0_255 = arith.constant 0 : index
    %c4_256 = arith.constant 4 : index
    %c0_257 = arith.constant 0 : index
    %c0_258 = arith.constant 0 : index
    %187 = vector.load %arg15[%c0_255, %c4_256, %c0_257, %c0_258] : memref<1x8x8x64xbf16, #tpu.memory_space<vmem>>, vector<1x1x1x64xbf16>
    %188 = vector.shape_cast %187 : vector<1x1x1x64xbf16> to vector<1x64xbf16>
    %c0_259 = arith.constant 0 : index
    %c2048 = arith.constant 2048 : index
    %189 = vector.load %arg16[%c0_259, %c2048] : memref<1x4096xbf16, #tpu.memory_space<vmem>>, vector<1x64xbf16>
    tpu.vector_store %arg16[%c0_259, %c2048], %188 {strides = array<i32>} : memref<1x4096xbf16, #tpu.memory_space<vmem>>, vector<1x64xbf16>,
    %c0_260 = arith.constant 0 : index
    %c4_261 = arith.constant 4 : index
    %c1_262 = arith.constant 1 : index
    %c0_263 = arith.constant 0 : index
    %190 = vector.load %arg15[%c0_260, %c4_261, %c1_262, %c0_263] : memref<1x8x8x64xbf16, #tpu.memory_space<vmem>>, vector<1x1x1x64xbf16>
    %191 = vector.shape_cast %190 : vector<1x1x1x64xbf16> to vector<1x64xbf16>
    %c0_264 = arith.constant 0 : index
    %c2112 = arith.constant 2112 : index
    %192 = vector.load %arg16[%c0_264, %c2112] : memref<1x4096xbf16, #tpu.memory_space<vmem>>, vector<1x64xbf16>
    tpu.vector_store %arg16[%c0_264, %c2112], %191 {strides = array<i32>} : memref<1x4096xbf16, #tpu.memory_space<vmem>>, vector<1x64xbf16>,
    %c0_265 = arith.constant 0 : index
    %c4_266 = arith.constant 4 : index
    %c2_267 = arith.constant 2 : index
    %c0_268 = arith.constant 0 : index
    %193 = vector.load %arg15[%c0_265, %c4_266, %c2_267, %c0_268] : memref<1x8x8x64xbf16, #tpu.memory_space<vmem>>, vector<1x1x1x64xbf16>
    %194 = vector.shape_cast %193 : vector<1x1x1x64xbf16> to vector<1x64xbf16>
    %c0_269 = arith.constant 0 : index
    %c2176 = arith.constant 2176 : index
    %195 = vector.load %arg16[%c0_269, %c2176] : memref<1x4096xbf16, #tpu.memory_space<vmem>>, vector<1x64xbf16>
    tpu.vector_store %arg16[%c0_269, %c2176], %194 {strides = array<i32>} : memref<1x4096xbf16, #tpu.memory_space<vmem>>, vector<1x64xbf16>,
    %c0_270 = arith.constant 0 : index
    %c4_271 = arith.constant 4 : index
    %c3_272 = arith.constant 3 : index
    %c0_273 = arith.constant 0 : index
    %196 = vector.load %arg15[%c0_270, %c4_271, %c3_272, %c0_273] : memref<1x8x8x64xbf16, #tpu.memory_space<vmem>>, vector<1x1x1x64xbf16>
    %197 = vector.shape_cast %196 : vector<1x1x1x64xbf16> to vector<1x64xbf16>
    %c0_274 = arith.constant 0 : index
    %c2240 = arith.constant 2240 : index
    %198 = vector.load %arg16[%c0_274, %c2240] : memref<1x4096xbf16, #tpu.memory_space<vmem>>, vector<1x64xbf16>
    tpu.vector_store %arg16[%c0_274, %c2240], %197 {strides = array<i32>} : memref<1x4096xbf16, #tpu.memory_space<vmem>>, vector<1x64xbf16>,
    %c0_275 = arith.constant 0 : index
    %c4_276 = arith.constant 4 : index
    %c4_277 = arith.constant 4 : index
    %c0_278 = arith.constant 0 : index
    %199 = vector.load %arg15[%c0_275, %c4_276, %c4_277, %c0_278] : memref<1x8x8x64xbf16, #tpu.memory_space<vmem>>, vector<1x1x1x64xbf16>
    %200 = vector.shape_cast %199 : vector<1x1x1x64xbf16> to vector<1x64xbf16>
    %c0_279 = arith.constant 0 : index
    %c2304 = arith.constant 2304 : index
    %201 = vector.load %arg16[%c0_279, %c2304] : memref<1x4096xbf16, #tpu.memory_space<vmem>>, vector<1x64xbf16>
    tpu.vector_store %arg16[%c0_279, %c2304], %200 {strides = array<i32>} : memref<1x4096xbf16, #tpu.memory_space<vmem>>, vector<1x64xbf16>,
    %c0_280 = arith.constant 0 : index
    %c4_281 = arith.constant 4 : index
    %c5_282 = arith.constant 5 : index
    %c0_283 = arith.constant 0 : index
    %202 = vector.load %arg15[%c0_280, %c4_281, %c5_282, %c0_283] : memref<1x8x8x64xbf16, #tpu.memory_space<vmem>>, vector<1x1x1x64xbf16>
    %203 = vector.shape_cast %202 : vector<1x1x1x64xbf16> to vector<1x64xbf16>
    %c0_284 = arith.constant 0 : index
    %c2368 = arith.constant 2368 : index
    %204 = vector.load %arg16[%c0_284, %c2368] : memref<1x4096xbf16, #tpu.memory_space<vmem>>, vector<1x64xbf16>
    tpu.vector_store %arg16[%c0_284, %c2368], %203 {strides = array<i32>} : memref<1x4096xbf16, #tpu.memory_space<vmem>>, vector<1x64xbf16>,
    %c0_285 = arith.constant 0 : index
    %c4_286 = arith.constant 4 : index
    %c6_287 = arith.constant 6 : index
    %c0_288 = arith.constant 0 : index
    %205 = vector.load %arg15[%c0_285, %c4_286, %c6_287, %c0_288] : memref<1x8x8x64xbf16, #tpu.memory_space<vmem>>, vector<1x1x1x64xbf16>
    %206 = vector.shape_cast %205 : vector<1x1x1x64xbf16> to vector<1x64xbf16>
    %c0_289 = arith.constant 0 : index
    %c2432 = arith.constant 2432 : index
    %207 = vector.load %arg16[%c0_289, %c2432] : memref<1x4096xbf16, #tpu.memory_space<vmem>>, vector<1x64xbf16>
    tpu.vector_store %arg16[%c0_289, %c2432], %206 {strides = array<i32>} : memref<1x4096xbf16, #tpu.memory_space<vmem>>, vector<1x64xbf16>,
    %c0_290 = arith.constant 0 : index
    %c4_291 = arith.constant 4 : index
    %c7_292 = arith.constant 7 : index
    %c0_293 = arith.constant 0 : index
    %208 = vector.load %arg15[%c0_290, %c4_291, %c7_292, %c0_293] : memref<1x8x8x64xbf16, #tpu.memory_space<vmem>>, vector<1x1x1x64xbf16>
    %209 = vector.shape_cast %208 : vector<1x1x1x64xbf16> to vector<1x64xbf16>
    %c0_294 = arith.constant 0 : index
    %c2496 = arith.constant 2496 : index
    %210 = vector.load %arg16[%c0_294, %c2496] : memref<1x4096xbf16, #tpu.memory_space<vmem>>, vector<1x64xbf16>
    tpu.vector_store %arg16[%c0_294, %c2496], %209 {strides = array<i32>} : memref<1x4096xbf16, #tpu.memory_space<vmem>>, vector<1x64xbf16>,
    %c0_295 = arith.constant 0 : index
    %c5_296 = arith.constant 5 : index
    %c0_297 = arith.constant 0 : index
    %c0_298 = arith.constant 0 : index
    %211 = vector.load %arg15[%c0_295, %c5_296, %c0_297, %c0_298] : memref<1x8x8x64xbf16, #tpu.memory_space<vmem>>, vector<1x1x1x64xbf16>
    %212 = vector.shape_cast %211 : vector<1x1x1x64xbf16> to vector<1x64xbf16>
    %c0_299 = arith.constant 0 : index
    %c2560 = arith.constant 2560 : index
    %213 = vector.load %arg16[%c0_299, %c2560] : memref<1x4096xbf16, #tpu.memory_space<vmem>>, vector<1x64xbf16>
    tpu.vector_store %arg16[%c0_299, %c2560], %212 {strides = array<i32>} : memref<1x4096xbf16, #tpu.memory_space<vmem>>, vector<1x64xbf16>,
    %c0_300 = arith.constant 0 : index
    %c5_301 = arith.constant 5 : index
    %c1_302 = arith.constant 1 : index
    %c0_303 = arith.constant 0 : index
    %214 = vector.load %arg15[%c0_300, %c5_301, %c1_302, %c0_303] : memref<1x8x8x64xbf16, #tpu.memory_space<vmem>>, vector<1x1x1x64xbf16>
    %215 = vector.shape_cast %214 : vector<1x1x1x64xbf16> to vector<1x64xbf16>
    %c0_304 = arith.constant 0 : index
    %c2624 = arith.constant 2624 : index
    %216 = vector.load %arg16[%c0_304, %c2624] : memref<1x4096xbf16, #tpu.memory_space<vmem>>, vector<1x64xbf16>
    tpu.vector_store %arg16[%c0_304, %c2624], %215 {strides = array<i32>} : memref<1x4096xbf16, #tpu.memory_space<vmem>>, vector<1x64xbf16>,
    %c0_305 = arith.constant 0 : index
    %c5_306 = arith.constant 5 : index
    %c2_307 = arith.constant 2 : index
    %c0_308 = arith.constant 0 : index
    %217 = vector.load %arg15[%c0_305, %c5_306, %c2_307, %c0_308] : memref<1x8x8x64xbf16, #tpu.memory_space<vmem>>, vector<1x1x1x64xbf16>
    %218 = vector.shape_cast %217 : vector<1x1x1x64xbf16> to vector<1x64xbf16>
    %c0_309 = arith.constant 0 : index
    %c2688 = arith.constant 2688 : index
    %219 = vector.load %arg16[%c0_309, %c2688] : memref<1x4096xbf16, #tpu.memory_space<vmem>>, vector<1x64xbf16>
    tpu.vector_store %arg16[%c0_309, %c2688], %218 {strides = array<i32>} : memref<1x4096xbf16, #tpu.memory_space<vmem>>, vector<1x64xbf16>,
    %c0_310 = arith.constant 0 : index
    %c5_311 = arith.constant 5 : index
    %c3_312 = arith.constant 3 : index
    %c0_313 = arith.constant 0 : index
    %220 = vector.load %arg15[%c0_310, %c5_311, %c3_312, %c0_313] : memref<1x8x8x64xbf16, #tpu.memory_space<vmem>>, vector<1x1x1x64xbf16>
    %221 = vector.shape_cast %220 : vector<1x1x1x64xbf16> to vector<1x64xbf16>
    %c0_314 = arith.constant 0 : index
    %c2752 = arith.constant 2752 : index
    %222 = vector.load %arg16[%c0_314, %c2752] : memref<1x4096xbf16, #tpu.memory_space<vmem>>, vector<1x64xbf16>
    tpu.vector_store %arg16[%c0_314, %c2752], %221 {strides = array<i32>} : memref<1x4096xbf16, #tpu.memory_space<vmem>>, vector<1x64xbf16>,
    %c0_315 = arith.constant 0 : index
    %c5_316 = arith.constant 5 : index
    %c4_317 = arith.constant 4 : index
    %c0_318 = arith.constant 0 : index
    %223 = vector.load %arg15[%c0_315, %c5_316, %c4_317, %c0_318] : memref<1x8x8x64xbf16, #tpu.memory_space<vmem>>, vector<1x1x1x64xbf16>
    %224 = vector.shape_cast %223 : vector<1x1x1x64xbf16> to vector<1x64xbf16>
    %c0_319 = arith.constant 0 : index
    %c2816 = arith.constant 2816 : index
    %225 = vector.load %arg16[%c0_319, %c2816] : memref<1x4096xbf16, #tpu.memory_space<vmem>>, vector<1x64xbf16>
    tpu.vector_store %arg16[%c0_319, %c2816], %224 {strides = array<i32>} : memref<1x4096xbf16, #tpu.memory_space<vmem>>, vector<1x64xbf16>,
    %c0_320 = arith.constant 0 : index
    %c5_321 = arith.constant 5 : index
    %c5_322 = arith.constant 5 : index
    %c0_323 = arith.constant 0 : index
    %226 = vector.load %arg15[%c0_320, %c5_321, %c5_322, %c0_323] : memref<1x8x8x64xbf16, #tpu.memory_space<vmem>>, vector<1x1x1x64xbf16>
    %227 = vector.shape_cast %226 : vector<1x1x1x64xbf16> to vector<1x64xbf16>
    %c0_324 = arith.constant 0 : index
    %c2880 = arith.constant 2880 : index
    %228 = vector.load %arg16[%c0_324, %c2880] : memref<1x4096xbf16, #tpu.memory_space<vmem>>, vector<1x64xbf16>
    tpu.vector_store %arg16[%c0_324, %c2880], %227 {strides = array<i32>} : memref<1x4096xbf16, #tpu.memory_space<vmem>>, vector<1x64xbf16>,
    %c0_325 = arith.constant 0 : index
    %c5_326 = arith.constant 5 : index
    %c6_327 = arith.constant 6 : index
    %c0_328 = arith.constant 0 : index
    %229 = vector.load %arg15[%c0_325, %c5_326, %c6_327, %c0_328] : memref<1x8x8x64xbf16, #tpu.memory_space<vmem>>, vector<1x1x1x64xbf16>
    %230 = vector.shape_cast %229 : vector<1x1x1x64xbf16> to vector<1x64xbf16>
    %c0_329 = arith.constant 0 : index
    %c2944 = arith.constant 2944 : index
    %231 = vector.load %arg16[%c0_329, %c2944] : memref<1x4096xbf16, #tpu.memory_space<vmem>>, vector<1x64xbf16>
    tpu.vector_store %arg16[%c0_329, %c2944], %230 {strides = array<i32>} : memref<1x4096xbf16, #tpu.memory_space<vmem>>, vector<1x64xbf16>,
    %c0_330 = arith.constant 0 : index
    %c5_331 = arith.constant 5 : index
    %c7_332 = arith.constant 7 : index
    %c0_333 = arith.constant 0 : index
    %232 = vector.load %arg15[%c0_330, %c5_331, %c7_332, %c0_333] : memref<1x8x8x64xbf16, #tpu.memory_space<vmem>>, vector<1x1x1x64xbf16>
    %233 = vector.shape_cast %232 : vector<1x1x1x64xbf16> to vector<1x64xbf16>
    %c0_334 = arith.constant 0 : index
    %c3008 = arith.constant 3008 : index
    %234 = vector.load %arg16[%c0_334, %c3008] : memref<1x4096xbf16, #tpu.memory_space<vmem>>, vector<1x64xbf16>
    tpu.vector_store %arg16[%c0_334, %c3008], %233 {strides = array<i32>} : memref<1x4096xbf16, #tpu.memory_space<vmem>>, vector<1x64xbf16>,
    %c0_335 = arith.constant 0 : index
    %c6_336 = arith.constant 6 : index
    %c0_337 = arith.constant 0 : index
    %c0_338 = arith.constant 0 : index
    %235 = vector.load %arg15[%c0_335, %c6_336, %c0_337, %c0_338] : memref<1x8x8x64xbf16, #tpu.memory_space<vmem>>, vector<1x1x1x64xbf16>
    %236 = vector.shape_cast %235 : vector<1x1x1x64xbf16> to vector<1x64xbf16>
    %c0_339 = arith.constant 0 : index
    %c3072 = arith.constant 3072 : index
    %237 = vector.load %arg16[%c0_339, %c3072] : memref<1x4096xbf16, #tpu.memory_space<vmem>>, vector<1x64xbf16>
    tpu.vector_store %arg16[%c0_339, %c3072], %236 {strides = array<i32>} : memref<1x4096xbf16, #tpu.memory_space<vmem>>, vector<1x64xbf16>,
    %c0_340 = arith.constant 0 : index
    %c6_341 = arith.constant 6 : index
    %c1_342 = arith.constant 1 : index
    %c0_343 = arith.constant 0 : index
    %238 = vector.load %arg15[%c0_340, %c6_341, %c1_342, %c0_343] : memref<1x8x8x64xbf16, #tpu.memory_space<vmem>>, vector<1x1x1x64xbf16>
    %239 = vector.shape_cast %238 : vector<1x1x1x64xbf16> to vector<1x64xbf16>
    %c0_344 = arith.constant 0 : index
    %c3136 = arith.constant 3136 : index
    %240 = vector.load %arg16[%c0_344, %c3136] : memref<1x4096xbf16, #tpu.memory_space<vmem>>, vector<1x64xbf16>
    tpu.vector_store %arg16[%c0_344, %c3136], %239 {strides = array<i32>} : memref<1x4096xbf16, #tpu.memory_space<vmem>>, vector<1x64xbf16>,
    %c0_345 = arith.constant 0 : index
    %c6_346 = arith.constant 6 : index
    %c2_347 = arith.constant 2 : index
    %c0_348 = arith.constant 0 : index
    %241 = vector.load %arg15[%c0_345, %c6_346, %c2_347, %c0_348] : memref<1x8x8x64xbf16, #tpu.memory_space<vmem>>, vector<1x1x1x64xbf16>
    %242 = vector.shape_cast %241 : vector<1x1x1x64xbf16> to vector<1x64xbf16>
    %c0_349 = arith.constant 0 : index
    %c3200 = arith.constant 3200 : index
    %243 = vector.load %arg16[%c0_349, %c3200] : memref<1x4096xbf16, #tpu.memory_space<vmem>>, vector<1x64xbf16>
    tpu.vector_store %arg16[%c0_349, %c3200], %242 {strides = array<i32>} : memref<1x4096xbf16, #tpu.memory_space<vmem>>, vector<1x64xbf16>,
    %c0_350 = arith.constant 0 : index
    %c6_351 = arith.constant 6 : index
    %c3_352 = arith.constant 3 : index
    %c0_353 = arith.constant 0 : index
    %244 = vector.load %arg15[%c0_350, %c6_351, %c3_352, %c0_353] : memref<1x8x8x64xbf16, #tpu.memory_space<vmem>>, vector<1x1x1x64xbf16>
    %245 = vector.shape_cast %244 : vector<1x1x1x64xbf16> to vector<1x64xbf16>
    %c0_354 = arith.constant 0 : index
    %c3264 = arith.constant 3264 : index
    %246 = vector.load %arg16[%c0_354, %c3264] : memref<1x4096xbf16, #tpu.memory_space<vmem>>, vector<1x64xbf16>
    tpu.vector_store %arg16[%c0_354, %c3264], %245 {strides = array<i32>} : memref<1x4096xbf16, #tpu.memory_space<vmem>>, vector<1x64xbf16>,
    %c0_355 = arith.constant 0 : index
    %c6_356 = arith.constant 6 : index
    %c4_357 = arith.constant 4 : index
    %c0_358 = arith.constant 0 : index
    %247 = vector.load %arg15[%c0_355, %c6_356, %c4_357, %c0_358] : memref<1x8x8x64xbf16, #tpu.memory_space<vmem>>, vector<1x1x1x64xbf16>
    %248 = vector.shape_cast %247 : vector<1x1x1x64xbf16> to vector<1x64xbf16>
    %c0_359 = arith.constant 0 : index
    %c3328 = arith.constant 3328 : index
    %249 = vector.load %arg16[%c0_359, %c3328] : memref<1x4096xbf16, #tpu.memory_space<vmem>>, vector<1x64xbf16>
    tpu.vector_store %arg16[%c0_359, %c3328], %248 {strides = array<i32>} : memref<1x4096xbf16, #tpu.memory_space<vmem>>, vector<1x64xbf16>,
    %c0_360 = arith.constant 0 : index
    %c6_361 = arith.constant 6 : index
    %c5_362 = arith.constant 5 : index
    %c0_363 = arith.constant 0 : index
    %250 = vector.load %arg15[%c0_360, %c6_361, %c5_362, %c0_363] : memref<1x8x8x64xbf16, #tpu.memory_space<vmem>>, vector<1x1x1x64xbf16>
    %251 = vector.shape_cast %250 : vector<1x1x1x64xbf16> to vector<1x64xbf16>
    %c0_364 = arith.constant 0 : index
    %c3392 = arith.constant 3392 : index
    %252 = vector.load %arg16[%c0_364, %c3392] : memref<1x4096xbf16, #tpu.memory_space<vmem>>, vector<1x64xbf16>
    tpu.vector_store %arg16[%c0_364, %c3392], %251 {strides = array<i32>} : memref<1x4096xbf16, #tpu.memory_space<vmem>>, vector<1x64xbf16>,
    %c0_365 = arith.constant 0 : index
    %c6_366 = arith.constant 6 : index
    %c6_367 = arith.constant 6 : index
    %c0_368 = arith.constant 0 : index
    %253 = vector.load %arg15[%c0_365, %c6_366, %c6_367, %c0_368] : memref<1x8x8x64xbf16, #tpu.memory_space<vmem>>, vector<1x1x1x64xbf16>
    %254 = vector.shape_cast %253 : vector<1x1x1x64xbf16> to vector<1x64xbf16>
    %c0_369 = arith.constant 0 : index
    %c3456 = arith.constant 3456 : index
    %255 = vector.load %arg16[%c0_369, %c3456] : memref<1x4096xbf16, #tpu.memory_space<vmem>>, vector<1x64xbf16>
    tpu.vector_store %arg16[%c0_369, %c3456], %254 {strides = array<i32>} : memref<1x4096xbf16, #tpu.memory_space<vmem>>, vector<1x64xbf16>,
    %c0_370 = arith.constant 0 : index
    %c6_371 = arith.constant 6 : index
    %c7_372 = arith.constant 7 : index
    %c0_373 = arith.constant 0 : index
    %256 = vector.load %arg15[%c0_370, %c6_371, %c7_372, %c0_373] : memref<1x8x8x64xbf16, #tpu.memory_space<vmem>>, vector<1x1x1x64xbf16>
    %257 = vector.shape_cast %256 : vector<1x1x1x64xbf16> to vector<1x64xbf16>
    %c0_374 = arith.constant 0 : index
    %c3520 = arith.constant 3520 : index
    %258 = vector.load %arg16[%c0_374, %c3520] : memref<1x4096xbf16, #tpu.memory_space<vmem>>, vector<1x64xbf16>
    tpu.vector_store %arg16[%c0_374, %c3520], %257 {strides = array<i32>} : memref<1x4096xbf16, #tpu.memory_space<vmem>>, vector<1x64xbf16>,
    %c0_375 = arith.constant 0 : index
    %c7_376 = arith.constant 7 : index
    %c0_377 = arith.constant 0 : index
    %c0_378 = arith.constant 0 : index
    %259 = vector.load %arg15[%c0_375, %c7_376, %c0_377, %c0_378] : memref<1x8x8x64xbf16, #tpu.memory_space<vmem>>, vector<1x1x1x64xbf16>
    %260 = vector.shape_cast %259 : vector<1x1x1x64xbf16> to vector<1x64xbf16>
    %c0_379 = arith.constant 0 : index
    %c3584 = arith.constant 3584 : index
    %261 = vector.load %arg16[%c0_379, %c3584] : memref<1x4096xbf16, #tpu.memory_space<vmem>>, vector<1x64xbf16>
    tpu.vector_store %arg16[%c0_379, %c3584], %260 {strides = array<i32>} : memref<1x4096xbf16, #tpu.memory_space<vmem>>, vector<1x64xbf16>,
    %c0_380 = arith.constant 0 : index
    %c7_381 = arith.constant 7 : index
    %c1_382 = arith.constant 1 : index
    %c0_383 = arith.constant 0 : index
    %262 = vector.load %arg15[%c0_380, %c7_381, %c1_382, %c0_383] : memref<1x8x8x64xbf16, #tpu.memory_space<vmem>>, vector<1x1x1x64xbf16>
    %263 = vector.shape_cast %262 : vector<1x1x1x64xbf16> to vector<1x64xbf16>
    %c0_384 = arith.constant 0 : index
    %c3648 = arith.constant 3648 : index
    %264 = vector.load %arg16[%c0_384, %c3648] : memref<1x4096xbf16, #tpu.memory_space<vmem>>, vector<1x64xbf16>
    tpu.vector_store %arg16[%c0_384, %c3648], %263 {strides = array<i32>} : memref<1x4096xbf16, #tpu.memory_space<vmem>>, vector<1x64xbf16>,
    %c0_385 = arith.constant 0 : index
    %c7_386 = arith.constant 7 : index
    %c2_387 = arith.constant 2 : index
    %c0_388 = arith.constant 0 : index
    %265 = vector.load %arg15[%c0_385, %c7_386, %c2_387, %c0_388] : memref<1x8x8x64xbf16, #tpu.memory_space<vmem>>, vector<1x1x1x64xbf16>
    %266 = vector.shape_cast %265 : vector<1x1x1x64xbf16> to vector<1x64xbf16>
    %c0_389 = arith.constant 0 : index
    %c3712 = arith.constant 3712 : index
    %267 = vector.load %arg16[%c0_389, %c3712] : memref<1x4096xbf16, #tpu.memory_space<vmem>>, vector<1x64xbf16>
    tpu.vector_store %arg16[%c0_389, %c3712], %266 {strides = array<i32>} : memref<1x4096xbf16, #tpu.memory_space<vmem>>, vector<1x64xbf16>,
    %c0_390 = arith.constant 0 : index
    %c7_391 = arith.constant 7 : index
    %c3_392 = arith.constant 3 : index
    %c0_393 = arith.constant 0 : index
    %268 = vector.load %arg15[%c0_390, %c7_391, %c3_392, %c0_393] : memref<1x8x8x64xbf16, #tpu.memory_space<vmem>>, vector<1x1x1x64xbf16>
    %269 = vector.shape_cast %268 : vector<1x1x1x64xbf16> to vector<1x64xbf16>
    %c0_394 = arith.constant 0 : index
    %c3776 = arith.constant 3776 : index
    %270 = vector.load %arg16[%c0_394, %c3776] : memref<1x4096xbf16, #tpu.memory_space<vmem>>, vector<1x64xbf16>
    tpu.vector_store %arg16[%c0_394, %c3776], %269 {strides = array<i32>} : memref<1x4096xbf16, #tpu.memory_space<vmem>>, vector<1x64xbf16>,
    %c0_395 = arith.constant 0 : index
    %c7_396 = arith.constant 7 : index
    %c4_397 = arith.constant 4 : index
    %c0_398 = arith.constant 0 : index
    %271 = vector.load %arg15[%c0_395, %c7_396, %c4_397, %c0_398] : memref<1x8x8x64xbf16, #tpu.memory_space<vmem>>, vector<1x1x1x64xbf16>
    %272 = vector.shape_cast %271 : vector<1x1x1x64xbf16> to vector<1x64xbf16>
    %c0_399 = arith.constant 0 : index
    %c3840 = arith.constant 3840 : index
    %273 = vector.load %arg16[%c0_399, %c3840] : memref<1x4096xbf16, #tpu.memory_space<vmem>>, vector<1x64xbf16>
    tpu.vector_store %arg16[%c0_399, %c3840], %272 {strides = array<i32>} : memref<1x4096xbf16, #tpu.memory_space<vmem>>, vector<1x64xbf16>,
    %c0_400 = arith.constant 0 : index
    %c7_401 = arith.constant 7 : index
    %c5_402 = arith.constant 5 : index
    %c0_403 = arith.constant 0 : index
    %274 = vector.load %arg15[%c0_400, %c7_401, %c5_402, %c0_403] : memref<1x8x8x64xbf16, #tpu.memory_space<vmem>>, vector<1x1x1x64xbf16>
    %275 = vector.shape_cast %274 : vector<1x1x1x64xbf16> to vector<1x64xbf16>
    %c0_404 = arith.constant 0 : index
    %c3904 = arith.constant 3904 : index
    %276 = vector.load %arg16[%c0_404, %c3904] : memref<1x4096xbf16, #tpu.memory_space<vmem>>, vector<1x64xbf16>
    tpu.vector_store %arg16[%c0_404, %c3904], %275 {strides = array<i32>} : memref<1x4096xbf16, #tpu.memory_space<vmem>>, vector<1x64xbf16>,
    %c0_405 = arith.constant 0 : index
    %c7_406 = arith.constant 7 : index
    %c6_407 = arith.constant 6 : index
    %c0_408 = arith.constant 0 : index
    %277 = vector.load %arg15[%c0_405, %c7_406, %c6_407, %c0_408] : memref<1x8x8x64xbf16, #tpu.memory_space<vmem>>, vector<1x1x1x64xbf16>
    %278 = vector.shape_cast %277 : vector<1x1x1x64xbf16> to vector<1x64xbf16>
    %c0_409 = arith.constant 0 : index
    %c3968 = arith.constant 3968 : index
    %279 = vector.load %arg16[%c0_409, %c3968] : memref<1x4096xbf16, #tpu.memory_space<vmem>>, vector<1x64xbf16>
    tpu.vector_store %arg16[%c0_409, %c3968], %278 {strides = array<i32>} : memref<1x4096xbf16, #tpu.memory_space<vmem>>, vector<1x64xbf16>,
    %c0_410 = arith.constant 0 : index
    %c7_411 = arith.constant 7 : index
    %c7_412 = arith.constant 7 : index
    %c0_413 = arith.constant 0 : index
    %280 = vector.load %arg15[%c0_410, %c7_411, %c7_412, %c0_413] : memref<1x8x8x64xbf16, #tpu.memory_space<vmem>>, vector<1x1x1x64xbf16>
    %281 = vector.shape_cast %280 : vector<1x1x1x64xbf16> to vector<1x64xbf16>
    %c0_414 = arith.constant 0 : index
    %c4032 = arith.constant 4032 : index
    %282 = vector.load %arg16[%c0_414, %c4032] : memref<1x4096xbf16, #tpu.memory_space<vmem>>, vector<1x64xbf16>
    tpu.vector_store %arg16[%c0_414, %c4032], %281 {strides = array<i32>} : memref<1x4096xbf16, #tpu.memory_space<vmem>>, vector<1x64xbf16>,
    %c0_415 = arith.constant 0 : index
    %c0_416 = arith.constant 0 : index
    %283 = vector.load %arg16[%c0_415, %c0_416] : memref<1x4096xbf16, #tpu.memory_space<vmem>>, vector<1x4096xbf16>
    %c0_417 = arith.constant 0 : index
    %c0_418 = arith.constant 0 : index
    %284 = vector.load %arg6[%c0_417, %c0_418] : memref<4096x128xbf16, #tpu.memory_space<vmem>>, vector<4096x128xbf16>
    %cst_419 = arith.constant dense<0.000000e+00> : vector<1x128xf32>
    %285 = tpu.matmul %283, %284, %cst_419 {dimension_numbers = #tpu.dot_dimension_numbers<[1], [0], [0], [1], [0, 0, 1, 1], [], []>} : vector<1x4096xbf16>, vector<4096x128xbf16>, vector<1x128xf32> -> vector<1x128xf32>
    %c0_420 = arith.constant 0 : index
    %c0_421 = arith.constant 0 : index
    %286 = vector.load %arg7[%c0_420, %c0_421] : memref<1x128xf32, #tpu.memory_space<vmem>>, vector<1x128xf32>
    %287 = arith.addf %285, %286 : vector<1x128xf32>
    %cst_422 = arith.constant 0.000000e+00 : f32
    %288 = vector.broadcast %cst_422 : f32 to vector<1x128xf32>
    %289 = arith.maximumf %287, %288 : vector<1x128xf32>
    %290 = arith.truncf %289 : vector<1x128xf32> to vector<1x128xbf16>
    %c0_423 = arith.constant 0 : index
    %c0_424 = arith.constant 0 : index
    %291 = vector.load %arg8[%c0_423, %c0_424] : memref<128x128xbf16, #tpu.memory_space<vmem>>, vector<128x128xbf16>
    %cst_425 = arith.constant dense<0.000000e+00> : vector<1x128xf32>
    %292 = tpu.matmul %290, %291, %cst_425 {dimension_numbers = #tpu.dot_dimension_numbers<[1], [0], [0], [1], [0, 0, 1, 1], [], []>} : vector<1x128xbf16>, vector<128x128xbf16>, vector<1x128xf32> -> vector<1x128xf32>
    %c0_426 = arith.constant 0 : index
    %c0_427 = arith.constant 0 : index
    %293 = vector.load %arg9[%c0_426, %c0_427] : memref<1x128xf32, #tpu.memory_space<vmem>>, vector<1x128xf32>
    %294 = arith.addf %292, %293 : vector<1x128xf32>
    %c0_428 = arith.constant 0 : index
    %c0_429 = arith.constant 0 : index
    %c0_430 = arith.constant 0 : index
    %295 = vector.load %arg10[%c0_428, %c0_429, %c0_430] : memref<1x1x128xf32, #tpu.memory_space<vmem>>, vector<1x1x128xf32>
    %296 = vector.shape_cast %295 : vector<1x1x128xf32> to vector<1x128xf32>
    %297 = vector.shape_cast %294 : vector<1x128xf32> to vector<1x1x128xf32>
    tpu.vector_store %arg10[%c0_428, %c0_429, %c0_430], %297 {strides = array<i32>} : memref<1x1x128xf32, #tpu.memory_space<vmem>>, vector<1x1x128xf32>,
    return
  }
  func.func @transform_0(%arg0: i32) -> (i32, i32, i32) {
    %c0_i32 = arith.constant 0 : i32
    %c0_i32_0 = arith.constant 0 : i32
    %c0_i32_1 = arith.constant 0 : i32
    return %arg0, %c0_i32, %c0_i32_0 : i32, i32, i32
  }
  func.func @transform_1(%arg0: i32) -> (i32, i32) {
    %c0_i32 = arith.constant 0 : i32
    %c0_i32_0 = arith.constant 0 : i32
    %c0_i32_1 = arith.constant 0 : i32
    return %c0_i32, %c0_i32_0 : i32, i32
  }
  func.func @transform_2(%arg0: i32) -> (i32, i32) {
    %c0_i32 = arith.constant 0 : i32
    %c0_i32_0 = arith.constant 0 : i32
    %c0_i32_1 = arith.constant 0 : i32
    return %c0_i32, %c0_i32_0 : i32, i32
  }
  func.func @transform_3(%arg0: i32) -> (i32, i32) {
    %c0_i32 = arith.constant 0 : i32
    %c0_i32_0 = arith.constant 0 : i32
    %c0_i32_1 = arith.constant 0 : i32
    return %c0_i32, %c0_i32_0 : i32, i32
  }
  func.func @transform_4(%arg0: i32) -> (i32, i32) {
    %c0_i32 = arith.constant 0 : i32
    %c0_i32_0 = arith.constant 0 : i32
    %c0_i32_1 = arith.constant 0 : i32
    return %c0_i32, %c0_i32_0 : i32, i32
  }
  func.func @transform_5(%arg0: i32) -> (i32, i32) {
    %c0_i32 = arith.constant 0 : i32
    %c0_i32_0 = arith.constant 0 : i32
    %c0_i32_1 = arith.constant 0 : i32
    return %c0_i32, %c0_i32_0 : i32, i32
  }
  func.func @transform_6(%arg0: i32) -> (i32, i32) {
    %c0_i32 = arith.constant 0 : i32
    %c0_i32_0 = arith.constant 0 : i32
    %c0_i32_1 = arith.constant 0 : i32
    return %c0_i32, %c0_i32_0 : i32, i32
  }
  func.func @transform_7(%arg0: i32) -> (i32, i32) {
    %c0_i32 = arith.constant 0 : i32
    %c0_i32_0 = arith.constant 0 : i32
    %c0_i32_1 = arith.constant 0 : i32
    return %c0_i32, %c0_i32_0 : i32, i32
  }
  func.func @transform_8(%arg0: i32) -> (i32, i32) {
    %c0_i32 = arith.constant 0 : i32
    %c0_i32_0 = arith.constant 0 : i32
    %c0_i32_1 = arith.constant 0 : i32
    return %c0_i32, %c0_i32_0 : i32, i32
  }
  func.func @transform_9(%arg0: i32) -> (i32, i32, i32) {
    %c0_i32 = arith.constant 0 : i32
    %c0_i32_0 = arith.constant 0 : i32
    %c0_i32_1 = arith.constant 0 : i32
    return %arg0, %c0_i32, %c0_i32_0 : i32, i32, i32
  }
}

</mosaic_0001>

<llo_original>
// kernel: tpu_custom_call.1
$region0: #{tpu_custom_call.1}
  #allocation0 [shape = 'u32[]', space=smem, size = 0x4, offset = 0x4, fixed_abs, tag = 'smem constant byte address 0x4 - core index']
  #allocation1 [shape = 'u32[144,128]{1,0:T(1,128)}', space=vmem, size = 0x12000, scoped, tag = 'internal scratch']
  #allocation2 [shape = 'f32[1024,32]{1,0:T(8,128)}', space=vmem, size = 0x80000, scoped, tag = 'scratch operand']
  #allocation3 [shape = 'f32[1,18,18,32]{3,2,1,0:T(8,128)}', space=vmem, size = 0x36000, scoped, tag = 'scratch operand']
  #allocation4 [shape = 'bf16[256,288]{1,0:T(16,128)(2,1)}', space=vmem, size = 0x30000, scoped, tag = 'scratch operand']
  #allocation5 [shape = 'f32[256,64]{1,0:T(8,128)}', space=vmem, size = 0x20000, scoped, tag = 'scratch operand']
  #allocation6 [shape = 'bf16[1,8,8,64]{3,2,1,0:T(8,128)(2,1)}', space=vmem, size = 0x4000, scoped, tag = 'scratch operand']
  #allocation7 [shape = 'bf16[1,4096]{1,0:T(2,128)(2,1)}', space=vmem, size = 0x4000, scoped, tag = 'scratch operand']
  %s0 = inlined_call_operand.vmem [shape: bf16[2,1024,16], index: 0, kind: input, shape index: {}]
  %s1 = inlined_call_operand.vmem [shape: bf16[16,32], index: 1, kind: input, shape index: {}]
  %s2 = inlined_call_operand.vmem [shape: f32[1,32], index: 2, kind: input, shape index: {}]
  %s3 = inlined_call_operand.vmem [shape: bf16[288,64], index: 3, kind: input, shape index: {}]
  %s4 = inlined_call_operand.vmem [shape: f32[1,64], index: 4, kind: input, shape index: {}]
  %s5 = inlined_call_operand.hbm [shape: bf16[4096,128], index: 5, kind: input, shape index: {}]
  %s6 = inlined_call_operand.vmem [shape: f32[1,128], index: 6, kind: input, shape index: {}]
  %s7 = inlined_call_operand.vmem [shape: bf16[128,128], index: 7, kind: input, shape index: {}]
  %s8 = inlined_call_operand.vmem [shape: f32[1,128], index: 8, kind: input, shape index: {}]
  %s9 = inlined_call_operand.hbm [shape: f32[2,1,128], index: 9, kind: output, shape index: {}]
  %s10 = sld [smem:[#allocation0]]
  $region73: #{tpu_custom_call.1} parent=0
    _
  %s12 = ssub.s32 1, %s10
  %s13 = scalar_select 0, %s12, %s10
  $region1: #{tpu_custom_call.1} parent=0
    #allocation8 [shape = 'u8[1048576]{0}', space=vmem, size = 0x100000, scoped, tag = 'input window, operand 5, single buffered']
    #allocation9 [shape = 's32[2]{0}', space=sflag, size = 0x8, scoped, tag = 'scoped memory for tpu_custom_call.1']
    #allocation10 [shape = 's32[2]{0}', space=sflag, size = 0x8, scoped, tag = 'scoped memory for tpu_custom_call.1']
    #allocation11 [shape = 'u8[1024]{0}', space=vmem, size = 0x400, scoped, tag = 'output window, operand 0']
    %14 = vsyncpa [#allocation9], 0
    %15 = vsyncpa [#allocation10], 0
    %s16 = scalar_lea.sflag [#allocation10], 1
    %17 = vsyncpa %s16, 0
    loop: start=0, step=1, limit=4
    $region2: #{tpu_custom_call.1} parent=1 // loop_pre_header
      _
    $region3: #{tpu_custom_call.1} parent=1 // loop_header
      %s19 = sphi 0, %s23
      %p20 = scmp.ge.s32.totalorder %s19, 4
      %s29 = sphi 0, %s31
      %s32 = sphi 0, %s29
      %s33 = sphi 0, %s32
      %s49 = sphi 0, %s33
      %s53 = sphi 0, %s53
      %s55 = sphi 0, %s53
      %s56 = sphi 0, %s55
      %s70 = sphi 0, %s56
      %s74 = sphi 0, %s74
      %s76 = sphi 0, %s74
      %s77 = sphi 0, %s76
      %s91 = sphi 0, %s77
      %s95 = sphi 0, %s95
      %s97 = sphi 0, %s95
      %s98 = sphi 0, %s97
      %s112 = sphi 0, %s98
      %s116 = sphi 0, %s116
      %s118 = sphi 0, %s116
      %s119 = sphi 0, %s118
      %s133 = sphi 0, %s119
      %s137 = sphi 0, %s137
      %s139 = sphi 0, %s137
      %s140 = sphi 0, %s139
      %s154 = sphi 0, %s140
      %s158 = sphi 0, %s158
      %s160 = sphi 0, %s158
      %s161 = sphi 0, %s160
      %s175 = sphi 0, %s161
      %s179 = sphi 0, %s179
      %s181 = sphi 0, %s179
      %s182 = sphi 0, %s181
      %s196 = sphi 0, %s182
      %s200 = sphi 0, %s200
      %s202 = sphi 0, %s200
      %s203 = sphi 0, %s202
      %s217 = sphi 0, %s203
      %s223 = sphi 0, %s225
      %s226 = sphi 0, %s223
      %s227 = sphi 0, %s226
      %s243 = sphi 0, %s227
    $region4: #{tpu_custom_call.1} parent=1 // loop_header_branch
      %22 = sbr.rel (%p20) target = $region8
    $region5: #{tpu_custom_call.1} parent=1 // loop_body
      %s24 = ssub.s32 %s19, 1
      %s25 = ssub.s32 %s19, 2
      %s26 = sadd.s32 %s19, 1
      %s27 = ssub.s32 %s19, %s26
      %p28 = scmp.eq.s32.totalorder %s27, 0
      %s30 = sadd.s32 %s29, 1
      %s31 = scalar_select %p28, %s29, %s30
      %p34 = pneg %p28
      %p35 = scmp.eq.s32.totalorder %s19, 1
      %p36 = por %p34, %p35
      %p37 = scmp.ne.s32.totalorder %s29, %s32
      %p38 = scmp.eq.s32.totalorder %s19, 0
      %p39 = por %p37, %p38
      %p40 = scmp.ne.s32.totalorder %s29, %s32
      %p41 = scmp.eq.s32.totalorder %s24, 1
      %p42 = por %p40, %p41
      %p43 = scmp.ne.s32.totalorder %s32, %s33
      %p44 = scmp.eq.s32.totalorder %s24, 0
      %p45 = por %p43, %p44
      %p46 = scmp.ne.s32.totalorder %s32, %s33
      %p47 = scmp.eq.s32.totalorder %s25, 1
      %p48 = por %p46, %p47
      %p50 = scmp.ne.s32.totalorder %s33, %s49
      %p51 = scmp.eq.s32.totalorder %s25, 0
      %p52 = por %p50, %p51
      %s54 = sadd.s32 %s53, 1
      %p57 = scmp.eq.s32.totalorder %s19, 1
      %p58 = scmp.ne.s32.totalorder %s53, %s55
      %p59 = scmp.eq.s32.totalorder %s19, 0
      %p60 = por %p58, %p59
      %p61 = scmp.ne.s32.totalorder %s53, %s55
      %p62 = scmp.eq.s32.totalorder %s24, 1
      %p63 = por %p61, %p62
      %p64 = scmp.ne.s32.totalorder %s55, %s56
      %p65 = scmp.eq.s32.totalorder %s24, 0
      %p66 = por %p64, %p65
      %p67 = scmp.ne.s32.totalorder %s55, %s56
      %p68 = scmp.eq.s32.totalorder %s25, 1
      %p69 = por %p67, %p68
      %p71 = scmp.ne.s32.totalorder %s56, %s70
      %p72 = scmp.eq.s32.totalorder %s25, 0
      %p73 = por %p71, %p72
      %s75 = sadd.s32 %s74, 1
      %p78 = scmp.eq.s32.totalorder %s19, 1
      %p79 = scmp.ne.s32.totalorder %s74, %s76
      %p80 = scmp.eq.s32.totalorder %s19, 0
      %p81 = por %p79, %p80
      %p82 = scmp.ne.s32.totalorder %s74, %s76
      %p83 = scmp.eq.s32.totalorder %s24, 1
      %p84 = por %p82, %p83
      %p85 = scmp.ne.s32.totalorder %s76, %s77
      %p86 = scmp.eq.s32.totalorder %s24, 0
      %p87 = por %p85, %p86
      %p88 = scmp.ne.s32.totalorder %s76, %s77
      %p89 = scmp.eq.s32.totalorder %s25, 1
      %p90 = por %p88, %p89
      %p92 = scmp.ne.s32.totalorder %s77, %s91
      %p93 = scmp.eq.s32.totalorder %s25, 0
      %p94 = por %p92, %p93
      %s96 = sadd.s32 %s95, 1
      %p99 = scmp.eq.s32.totalorder %s19, 1
      %p100 = scmp.ne.s32.totalorder %s95, %s97
      %p101 = scmp.eq.s32.totalorder %s19, 0
      %p102 = por %p100, %p101
      %p103 = scmp.ne.s32.totalorder %s95, %s97
      %p104 = scmp.eq.s32.totalorder %s24, 1
      %p105 = por %p103, %p104
      %p106 = scmp.ne.s32.totalorder %s97, %s98
      %p107 = scmp.eq.s32.totalorder %s24, 0
      %p108 = por %p106, %p107
      %p109 = scmp.ne.s32.totalorder %s97, %s98
      %p110 = scmp.eq.s32.totalorder %s25, 1
      %p111 = por %p109, %p110
      %p113 = scmp.ne.s32.totalorder %s98, %s112
      %p114 = scmp.eq.s32.totalorder %s25, 0
      %p115 = por %p113, %p114
      %s117 = sadd.s32 %s116, 1
      %p120 = scmp.eq.s32.totalorder %s19, 1
      %p121 = scmp.ne.s32.totalorder %s116, %s118
      %p122 = scmp.eq.s32.totalorder %s19, 0
      %p123 = por %p121, %p122
      %p124 = scmp.ne.s32.totalorder %s116, %s118
      %p125 = scmp.eq.s32.totalorder %s24, 1
      %p126 = por %p124, %p125
      %p127 = scmp.ne.s32.totalorder %s118, %s119
      %p128 = scmp.eq.s32.totalorder %s24, 0
      %p129 = por %p127, %p128
      %p130 = scmp.ne.s32.totalorder %s118, %s119
      %p131 = scmp.eq.s32.totalorder %s25, 1
      %p132 = por %p130, %p131
      %p134 = scmp.ne.s32.totalorder %s119, %s133
      %p135 = scmp.eq.s32.totalorder %s25, 0
      %p136 = por %p134, %p135
      %s138 = sadd.s32 %s137, 1
      %p141 = scmp.eq.s32.totalorder %s19, 1
      %p142 = scmp.ne.s32.totalorder %s137, %s139
      %p143 = scmp.eq.s32.totalorder %s19, 0
      %p144 = por %p142, %p143
      %p145 = scmp.ne.s32.totalorder %s137, %s139
      %p146 = scmp.eq.s32.totalorder %s24, 1
      %p147 = por %p145, %p146
      %p148 = scmp.ne.s32.totalorder %s139, %s140
      %p149 = scmp.eq.s32.totalorder %s24, 0
      %p150 = por %p148, %p149
      %p151 = scmp.ne.s32.totalorder %s139, %s140
      %p152 = scmp.eq.s32.totalorder %s25, 1
      %p153 = por %p151, %p152
      %p155 = scmp.ne.s32.totalorder %s140, %s154
      %p156 = scmp.eq.s32.totalorder %s25, 0
      %p157 = por %p155, %p156
      %s159 = sadd.s32 %s158, 1
      %p162 = scmp.eq.s32.totalorder %s19, 1
      %p163 = scmp.ne.s32.totalorder %s158, %s160
      %p164 = scmp.eq.s32.totalorder %s19, 0
      %p165 = por %p163, %p164
      %p166 = scmp.ne.s32.totalorder %s158, %s160
      %p167 = scmp.eq.s32.totalorder %s24, 1
      %p168 = por %p166, %p167
      %p169 = scmp.ne.s32.totalorder %s160, %s161
      %p170 = scmp.eq.s32.totalorder %s24, 0
      %p171 = por %p169, %p170
      %p172 = scmp.ne.s32.totalorder %s160, %s161
      %p173 = scmp.eq.s32.totalorder %s25, 1
      %p174 = por %p172, %p173
      %p176 = scmp.ne.s32.totalorder %s161, %s175
      %p177 = scmp.eq.s32.totalorder %s25, 0
      %p178 = por %p176, %p177
      %s180 = sadd.s32 %s179, 1
      %p183 = scmp.eq.s32.totalorder %s19, 1
      %p184 = scmp.ne.s32.totalorder %s179, %s181
      %p185 = scmp.eq.s32.totalorder %s19, 0
      %p186 = por %p184, %p185
      %p187 = scmp.ne.s32.totalorder %s179, %s181
      %p188 = scmp.eq.s32.totalorder %s24, 1
      %p189 = por %p187, %p188
      %p190 = scmp.ne.s32.totalorder %s181, %s182
      %p191 = scmp.eq.s32.totalorder %s24, 0
      %p192 = por %p190, %p191
      %p193 = scmp.ne.s32.totalorder %s181, %s182
      %p194 = scmp.eq.s32.totalorder %s25, 1
      %p195 = por %p193, %p194
      %p197 = scmp.ne.s32.totalorder %s182, %s196
      %p198 = scmp.eq.s32.totalorder %s25, 0
      %p199 = por %p197, %p198
      %s201 = sadd.s32 %s200, 1
      %p204 = scmp.eq.s32.totalorder %s19, 1
      %p205 = scmp.ne.s32.totalorder %s200, %s202
      %p206 = scmp.eq.s32.totalorder %s19, 0
      %p207 = por %p205, %p206
      %p208 = scmp.ne.s32.totalorder %s200, %s202
      %p209 = scmp.eq.s32.totalorder %s24, 1
      %p210 = por %p208, %p209
      %p211 = scmp.ne.s32.totalorder %s202, %s203
      %p212 = scmp.eq.s32.totalorder %s24, 0
      %p213 = por %p211, %p212
      %p214 = scmp.ne.s32.totalorder %s202, %s203
      %p215 = scmp.eq.s32.totalorder %s25, 1
      %p216 = por %p214, %p215
      %p218 = scmp.ne.s32.totalorder %s203, %s217
      %p219 = scmp.eq.s32.totalorder %s25, 0
      %p220 = por %p218, %p219
      %s221 = ssub.s32 %s19, %s26
      %p222 = scmp.eq.s32.totalorder %s221, 0
      %s224 = sadd.s32 %s223, 1
      %s225 = scalar_select %p222, %s223, %s224
      %p228 = pneg %p222
      %p229 = scmp.eq.s32.totalorder %s19, 1
      %p230 = por %p228, %p229
      %p231 = scmp.ne.s32.totalorder %s223, %s226
      %p232 = scmp.eq.s32.totalorder %s19, 0
      %p233 = por %p231, %p232
      %p234 = scmp.ne.s32.totalorder %s223, %s226
      %p235 = scmp.eq.s32.totalorder %s24, 1
      %p236 = por %p234, %p235
      %p237 = scmp.ne.s32.totalorder %s226, %s227
      %p238 = scmp.eq.s32.totalorder %s24, 0
      %p239 = por %p237, %p238
      %p240 = scmp.ne.s32.totalorder %s226, %s227
      %p241 = scmp.eq.s32.totalorder %s25, 1
      %p242 = por %p240, %p241
      %p244 = scmp.ne.s32.totalorder %s227, %s243
      %p245 = scmp.eq.s32.totalorder %s25, 0
      %p246 = por %p244, %p245
      %p247 = scmp.le.s32.totalorder 1, %s19
      %p248 = scmp.lt.s32.totalorder %s19, 3
      %p249 = pnand %p247, %p248
      %p250 = pneg %p249
      // Predicated region
      $region9: #{tpu_custom_call.1} parent=5 // pred_check
        _
      $region10: #{tpu_custom_call.1} parent=5 // pred_check_branch
        %252 = sbr.rel (%p249) target = $region12
      $region11: #{tpu_custom_call.1} parent=5 // pred_region
        %s253 = ssub.s32 %s19, 1
        // Predicated region
        $region13: #{tpu_custom_call.1} parent=11 // pred_check
          %p254 = pneg %p66
        $region14: #{tpu_custom_call.1} parent=11 // pred_check_branch
          %256 = sbr.rel (%p254) target = $region16
        $region15: #{tpu_custom_call.1} parent=11 // pred_region
          _
        $region16: #{tpu_custom_call.1} parent=11 // pred_fallthru
          _
        // Predicated region
        $region17: #{tpu_custom_call.1} parent=11 // pred_check
          %p257 = pneg %p87
        $region18: #{tpu_custom_call.1} parent=11 // pred_check_branch
          %259 = sbr.rel (%p257) target = $region20
        $region19: #{tpu_custom_call.1} parent=11 // pred_region
          _
        $region20: #{tpu_custom_call.1} parent=11 // pred_fallthru
          _
        // Predicated region
        $region21: #{tpu_custom_call.1} parent=11 // pred_check
          %p260 = pneg %p108
        $region22: #{tpu_custom_call.1} parent=11 // pred_check_branch
          %262 = sbr.rel (%p260) target = $region24
        $region23: #{tpu_custom_call.1} parent=11 // pred_region
          _
        $region24: #{tpu_custom_call.1} parent=11 // pred_fallthru
          _
        // Predicated region
        $region25: #{tpu_custom_call.1} parent=11 // pred_check
          %p263 = pneg %p129
        $region26: #{tpu_custom_call.1} parent=11 // pred_check_branch
          %265 = sbr.rel (%p263) target = $region28
        $region27: #{tpu_custom_call.1} parent=11 // pred_region
          _
        $region28: #{tpu_custom_call.1} parent=11 // pred_fallthru
          _
        // Predicated region
        $region29: #{tpu_custom_call.1} parent=11 // pred_check
          %p266 = pneg %p150
        $region30: #{tpu_custom_call.1} parent=11 // pred_check_branch
          %268 = sbr.rel (%p266) target = $region32
        $region31: #{tpu_custom_call.1} parent=11 // pred_region
          %s270 = ssub.s32 32768, 32768
          %271 = vsyncadd [#allocation9], %s270
          %s272 = sshll.u32 [#allocation8], 4
          %s273 = int_to_ptr.vmem [resolvable:$true] %s272
          %278 = dma.hbm_to_vmem [thread:$0]  %s5, 32768, %s273, [#allocation9], 64, 64, 4
        $region32: #{tpu_custom_call.1} parent=11 // pred_fallthru
          _
        // Predicated region
        $region33: #{tpu_custom_call.1} parent=11 // pred_check
          %p279 = pneg %p171
        $region34: #{tpu_custom_call.1} parent=11 // pred_check_branch
          %281 = sbr.rel (%p279) target = $region36
        $region35: #{tpu_custom_call.1} parent=11 // pred_region
          _
        $region36: #{tpu_custom_call.1} parent=11 // pred_fallthru
          _
        // Predicated region
        $region37: #{tpu_custom_call.1} parent=11 // pred_check
          %p282 = pneg %p192
        $region38: #{tpu_custom_call.1} parent=11 // pred_check_branch
          %284 = sbr.rel (%p282) target = $region40
        $region39: #{tpu_custom_call.1} parent=11 // pred_region
          _
        $region40: #{tpu_custom_call.1} parent=11 // pred_fallthru
          _
        // Predicated region
        $region41: #{tpu_custom_call.1} parent=11 // pred_check
          %p285 = pneg %p213
        $region42: #{tpu_custom_call.1} parent=11 // pred_check_branch
          %287 = sbr.rel (%p285) target = $region44
        $region43: #{tpu_custom_call.1} parent=11 // pred_region
          _
        $region44: #{tpu_custom_call.1} parent=11 // pred_fallthru
          _
      $region12: #{tpu_custom_call.1} parent=5 // pred_fallthru
        _
      %p288 = scmp.lt.s32.totalorder %s19, 2
      // Predicated region
      $region45: #{tpu_custom_call.1} parent=5 // pred_check
        %p289 = pneg %p288
      $region46: #{tpu_custom_call.1} parent=5 // pred_check_branch
        %291 = sbr.rel (%p289) target = $region48
      $region47: #{tpu_custom_call.1} parent=5 // pred_region
        // Predicated region
        $region49: #{tpu_custom_call.1} parent=47 // pred_check
          %p292 = pneg %p39
        $region50: #{tpu_custom_call.1} parent=47 // pred_check_branch
          %294 = sbr.rel (%p292) target = $region52
        $region51: #{tpu_custom_call.1} parent=47 // pred_region
          %p295 = scmp.lt.s32.totalorder %s19, 1
          %s296 = scalar_select %p295, %s19, 1
          %s297 = smul.addr %s296, 128
          %s298 = smul.addr %s297, 4
          %s299 = scalar_lea.vmem %s0, %s298
        $region52: #{tpu_custom_call.1} parent=47 // pred_fallthru
          _
      $region48: #{tpu_custom_call.1} parent=5 // pred_fallthru
        _
      %p300 = scmp.le.s32.totalorder 1, %s19
      %p301 = scmp.lt.s32.totalorder %s19, 3
      %p302 = pnand %p300, %p301
      %p303 = pneg %p302
      // Predicated region
      $region53: #{tpu_custom_call.1} parent=5 // pred_check
        _
      $region54: #{tpu_custom_call.1} parent=5 // pred_check_branch
        %305 = sbr.rel (%p302) target = $region56
      $region55: #{tpu_custom_call.1} parent=5 // pred_region
        %s306 = ssub.s32 %s19, 1
        // Predicated region
        $region57: #{tpu_custom_call.1} parent=55 // pred_check
          %p307 = pneg %p150
        $region58: #{tpu_custom_call.1} parent=55 // pred_check_branch
          %309 = sbr.rel (%p307) target = $region60
        $region59: #{tpu_custom_call.1} parent=55 // pred_region
          %310 = dma.done [#allocation9], 32768
        $region60: #{tpu_custom_call.1} parent=55 // pred_fallthru
          _
        %p311 = scmp.lt.s32.totalorder %s24, 1
        %s312 = scalar_select %p311, %s24, 1
        %s313 = smul.addr %s312, 128
        %s314 = smul.addr %s313, 4
        %s315 = scalar_lea.vmem %s0, %s314
        %p316 = pneg %p45
        %p317 = pneg %p42
        %p318 = pneg %p66
        %p319 = pneg %p63
        %p320 = pneg %p87
        %p321 = pneg %p84
        %p322 = pneg %p108
        %p323 = pneg %p105
        %p324 = pneg %p129
        %p325 = pneg %p126
        %p326 = pneg %p150
        %p327 = pneg %p147
        %p328 = pneg %p171
        %p329 = pneg %p168
        %p330 = pneg %p192
        %p331 = pneg %p189
        %p332 = pneg %p213
        %p333 = pneg %p210
        %p334 = pneg %p239
        %p335 = pneg %p236
        %s336 = sand.u32 %s226, 1
        %s337 = scalar_lea.sflag [#allocation10], %s336
        %s338 = sand.u32 %s226, 1
        %s339 = scalar_lea.vmem [#allocation11], %s338
        %p340 = scmp.lt.s32.totalorder %s24, 1
        %s341 = scalar_select %p340, %s24, 1
        %s342 = smul.addr %s341, 128
        %s343 = smul.addr %s342, 4
        %s344 = scalar_lea.vmem %s0, %s343
        %v346 = vld [vmem:[%s344] sm:$0xf]
        %v347 = vld [vmem:[%s344 + $0x4] sm:$0xf]
        %v348 = vld [vmem:[%s344 + $0x8] sm:$0xf]
        %v349 = vld [vmem:[%s344 + $0xc] sm:$0xf]
        %v350 = vld [vmem:[%s344 + $0x10] sm:$0xf]
        %v351 = vld [vmem:[%s344 + $0x14] sm:$0xf]
        %v352 = vld [vmem:[%s344 + $0x18] sm:$0xf]
        %v353 = vld [vmem:[%s344 + $0x1c] sm:$0xf]
        %v354 = vld [vmem:[%s344 + $0x20] sm:$0xf]
        %v355 = vld [vmem:[%s344 + $0x24] sm:$0xf]
        %v356 = vld [vmem:[%s344 + $0x28] sm:$0xf]
        %v357 = vld [vmem:[%s344 + $0x2c] sm:$0xf]
        %v358 = vld [vmem:[%s344 + $0x30] sm:$0xf]
        %v359 = vld [vmem:[%s344 + $0x34] sm:$0xf]
        %v360 = vld [vmem:[%s344 + $0x38] sm:$0xf]
        %v361 = vld [vmem:[%s344 + $0x3c] sm:$0xf]
        %v362 = vld [vmem:[%s344 + $0x40] sm:$0xf]
        %v363 = vld [vmem:[%s344 + $0x44] sm:$0xf]
        %v364 = vld [vmem:[%s344 + $0x48] sm:$0xf]
        %v365 = vld [vmem:[%s344 + $0x4c] sm:$0xf]
        %v366 = vld [vmem:[%s344 + $0x50] sm:$0xf]
        %v367 = vld [vmem:[%s344 + $0x54] sm:$0xf]
        %v368 = vld [vmem:[%s344 + $0x58] sm:$0xf]
        %v369 = vld [vmem:[%s344 + $0x5c] sm:$0xf]
        %v370 = vld [vmem:[%s344 + $0x60] sm:$0xf]
        %v371 = vld [vmem:[%s344 + $0x64] sm:$0xf]
        %v372 = vld [vmem:[%s344 + $0x68] sm:$0xf]
        %v373 = vld [vmem:[%s344 + $0x6c] sm:$0xf]
        %v374 = vld [vmem:[%s344 + $0x70] sm:$0xf]
        %v375 = vld [vmem:[%s344 + $0x74] sm:$0xf]
        %v376 = vld [vmem:[%s344 + $0x78] sm:$0xf]
        %v377 = vld [vmem:[%s344 + $0x7c] sm:$0xf]
        %v378 = vld [vmem:[%s344 + $0x80] sm:$0xf]
        %v379 = vld [vmem:[%s344 + $0x84] sm:$0xf]
        %v380 = vld [vmem:[%s344 + $0x88] sm:$0xf]
        %v381 = vld [vmem:[%s344 + $0x8c] sm:$0xf]
        %v382 = vld [vmem:[%s344 + $0x90] sm:$0xf]
        %v383 = vld [vmem:[%s344 + $0x94] sm:$0xf]
        %v384 = vld [vmem:[%s344 + $0x98] sm:$0xf]
        %v385 = vld [vmem:[%s344 + $0x9c] sm:$0xf]
        %v386 = vld [vmem:[%s344 + $0xa0] sm:$0xf]
        %v387 = vld [vmem:[%s344 + $0xa4] sm:$0xf]
        %v388 = vld [vmem:[%s344 + $0xa8] sm:$0xf]
        %v389 = vld [vmem:[%s344 + $0xac] sm:$0xf]
        %v390 = vld [vmem:[%s344 + $0xb0] sm:$0xf]
        %v391 = vld [vmem:[%s344 + $0xb4] sm:$0xf]
        %v392 = vld [vmem:[%s344 + $0xb8] sm:$0xf]
        %v393 = vld [vmem:[%s344 + $0xbc] sm:$0xf]
        %v394 = vld [vmem:[%s344 + $0xc0] sm:$0xf]
        %v395 = vld [vmem:[%s344 + $0xc4] sm:$0xf]
        %v396 = vld [vmem:[%s344 + $0xc8] sm:$0xf]
        %v397 = vld [vmem:[%s344 + $0xcc] sm:$0xf]
        %v398 = vld [vmem:[%s344 + $0xd0] sm:$0xf]
        %v399 = vld [vmem:[%s344 + $0xd4] sm:$0xf]
        %v400 = vld [vmem:[%s344 + $0xd8] sm:$0xf]
        %v401 = vld [vmem:[%s344 + $0xdc] sm:$0xf]
        %v402 = vld [vmem:[%s344 + $0xe0] sm:$0xf]
        %v403 = vld [vmem:[%s344 + $0xe4] sm:$0xf]
        %v404 = vld [vmem:[%s344 + $0xe8] sm:$0xf]
        %v405 = vld [vmem:[%s344 + $0xec] sm:$0xf]
        %v406 = vld [vmem:[%s344 + $0xf0] sm:$0xf]
        %v407 = vld [vmem:[%s344 + $0xf4] sm:$0xf]
        %v408 = vld [vmem:[%s344 + $0xf8] sm:$0xf]
        %v409 = vld [vmem:[%s344 + $0xfc] sm:$0xf]
        %v410 = vld [vmem:[%s344 + $0x100] sm:$0xf]
        %v411 = vld [vmem:[%s344 + $0x104] sm:$0xf]
        %v412 = vld [vmem:[%s344 + $0x108] sm:$0xf]
        %v413 = vld [vmem:[%s344 + $0x10c] sm:$0xf]
        %v414 = vld [vmem:[%s344 + $0x110] sm:$0xf]
        %v415 = vld [vmem:[%s344 + $0x114] sm:$0xf]
        %v416 = vld [vmem:[%s344 + $0x118] sm:$0xf]
        %v417 = vld [vmem:[%s344 + $0x11c] sm:$0xf]
        %v418 = vld [vmem:[%s344 + $0x120] sm:$0xf]
        %v419 = vld [vmem:[%s344 + $0x124] sm:$0xf]
        %v420 = vld [vmem:[%s344 + $0x128] sm:$0xf]
        %v421 = vld [vmem:[%s344 + $0x12c] sm:$0xf]
        %v422 = vld [vmem:[%s344 + $0x130] sm:$0xf]
        %v423 = vld [vmem:[%s344 + $0x134] sm:$0xf]
        %v424 = vld [vmem:[%s344 + $0x138] sm:$0xf]
        %v425 = vld [vmem:[%s344 + $0x13c] sm:$0xf]
        %v426 = vld [vmem:[%s344 + $0x140] sm:$0xf]
        %v427 = vld [vmem:[%s344 + $0x144] sm:$0xf]
        %v428 = vld [vmem:[%s344 + $0x148] sm:$0xf]
        %v429 = vld [vmem:[%s344 + $0x14c] sm:$0xf]
        %v430 = vld [vmem:[%s344 + $0x150] sm:$0xf]
        %v431 = vld [vmem:[%s344 + $0x154] sm:$0xf]
        %v432 = vld [vmem:[%s344 + $0x158] sm:$0xf]
        %v433 = vld [vmem:[%s344 + $0x15c] sm:$0xf]
        %v434 = vld [vmem:[%s344 + $0x160] sm:$0xf]
        %v435 = vld [vmem:[%s344 + $0x164] sm:$0xf]
        %v436 = vld [vmem:[%s344 + $0x168] sm:$0xf]
        %v437 = vld [vmem:[%s344 + $0x16c] sm:$0xf]
        %v438 = vld [vmem:[%s344 + $0x170] sm:$0xf]
        %v439 = vld [vmem:[%s344 + $0x174] sm:$0xf]
        %v440 = vld [vmem:[%s344 + $0x178] sm:$0xf]
        %v441 = vld [vmem:[%s344 + $0x17c] sm:$0xf]
        %v442 = vld [vmem:[%s344 + $0x180] sm:$0xf]
        %v443 = vld [vmem:[%s344 + $0x184] sm:$0xf]
        %v444 = vld [vmem:[%s344 + $0x188] sm:$0xf]
        %v445 = vld [vmem:[%s344 + $0x18c] sm:$0xf]
        %v446 = vld [vmem:[%s344 + $0x190] sm:$0xf]
        %v447 = vld [vmem:[%s344 + $0x194] sm:$0xf]
        %v448 = vld [vmem:[%s344 + $0x198] sm:$0xf]
        %v449 = vld [vmem:[%s344 + $0x19c] sm:$0xf]
        %v450 = vld [vmem:[%s344 + $0x1a0] sm:$0xf]
        %v451 = vld [vmem:[%s344 + $0x1a4] sm:$0xf]
        %v452 = vld [vmem:[%s344 + $0x1a8] sm:$0xf]
        %v453 = vld [vmem:[%s344 + $0x1ac] sm:$0xf]
        %v454 = vld [vmem:[%s344 + $0x1b0] sm:$0xf]
        %v455 = vld [vmem:[%s344 + $0x1b4] sm:$0xf]
        %v456 = vld [vmem:[%s344 + $0x1b8] sm:$0xf]
        %v457 = vld [vmem:[%s344 + $0x1bc] sm:$0xf]
        %v458 = vld [vmem:[%s344 + $0x1c0] sm:$0xf]
        %v459 = vld [vmem:[%s344 + $0x1c4] sm:$0xf]
        %v460 = vld [vmem:[%s344 + $0x1c8] sm:$0xf]
        %v461 = vld [vmem:[%s344 + $0x1cc] sm:$0xf]
        %v462 = vld [vmem:[%s344 + $0x1d0] sm:$0xf]
        %v463 = vld [vmem:[%s344 + $0x1d4] sm:$0xf]
        %v464 = vld [vmem:[%s344 + $0x1d8] sm:$0xf]
        %v465 = vld [vmem:[%s344 + $0x1dc] sm:$0xf]
        %v466 = vld [vmem:[%s344 + $0x1e0] sm:$0xf]
        %v467 = vld [vmem:[%s344 + $0x1e4] sm:$0xf]
        %v468 = vld [vmem:[%s344 + $0x1e8] sm:$0xf]
        %v469 = vld [vmem:[%s344 + $0x1ec] sm:$0xf]
        %v470 = vld [vmem:[%s344 + $0x1f0] sm:$0xf]
        %v471 = vld [vmem:[%s344 + $0x1f4] sm:$0xf]
        %v472 = vld [vmem:[%s344 + $0x1f8] sm:$0xf]
        %v473 = vld [vmem:[%s344 + $0x1fc] sm:$0xf]
        %v474 = vld [vmem:[%s1] sm:$0xf]
        %v475 = vld [vmem:[%s1 + $0x4] sm:$0xf]
        %v604 = vunpack.c.l.b16 %v346
        %v605 = vunpack.c.l.b16 %v347
        %v606 = vunpack.c.l.b16 %v348
        %v607 = vunpack.c.l.b16 %v349
        %v608 = vunpack.c.l.b16 %v350
        %v609 = vunpack.c.l.b16 %v351
        %v610 = vunpack.c.l.b16 %v352
        %v611 = vunpack.c.l.b16 %v353
        %v612 = vunpack.c.l.b16 %v354
        %v613 = vunpack.c.l.b16 %v355
        %v614 = vunpack.c.l.b16 %v356
        %v615 = vunpack.c.l.b16 %v357
        %v616 = vunpack.c.l.b16 %v358
        %v617 = vunpack.c.l.b16 %v359
        %v618 = vunpack.c.l.b16 %v360
        %v619 = vunpack.c.l.b16 %v361
        %v620 = vunpack.c.l.b16 %v362
        %v621 = vunpack.c.l.b16 %v363
        %v622 = vunpack.c.l.b16 %v364
        %v623 = vunpack.c.l.b16 %v365
        %v624 = vunpack.c.l.b16 %v366
        %v625 = vunpack.c.l.b16 %v367
        %v626 = vunpack.c.l.b16 %v368
        %v627 = vunpack.c.l.b16 %v369
        %v628 = vunpack.c.l.b16 %v370
        %v629 = vunpack.c.l.b16 %v371
        %v630 = vunpack.c.l.b16 %v372
        %v631 = vunpack.c.l.b16 %v373
        %v632 = vunpack.c.l.b16 %v374
        %v633 = vunpack.c.l.b16 %v375
        %v634 = vunpack.c.l.b16 %v376
        %v635 = vunpack.c.l.b16 %v377
        %v636 = vunpack.c.l.b16 %v378
        %v637 = vunpack.c.l.b16 %v379
        %v638 = vunpack.c.l.b16 %v380
        %v639 = vunpack.c.l.b16 %v381
        %v640 = vunpack.c.l.b16 %v382
        %v641 = vunpack.c.l.b16 %v383
        %v642 = vunpack.c.l.b16 %v384
        %v643 = vunpack.c.l.b16 %v385
        %v644 = vunpack.c.l.b16 %v386
        %v645 = vunpack.c.l.b16 %v387
        %v646 = vunpack.c.l.b16 %v388
        %v647 = vunpack.c.l.b16 %v389
        %v648 = vunpack.c.l.b16 %v390
        %v649 = vunpack.c.l.b16 %v391
        %v650 = vunpack.c.l.b16 %v392
        %v651 = vunpack.c.l.b16 %v393
        %v652 = vunpack.c.l.b16 %v394
        %v653 = vunpack.c.l.b16 %v395
        %v654 = vunpack.c.l.b16 %v396
        %v655 = vunpack.c.l.b16 %v397
        %v656 = vunpack.c.l.b16 %v398
        %v657 = vunpack.c.l.b16 %v399
        %v658 = vunpack.c.l.b16 %v400
        %v659 = vunpack.c.l.b16 %v401
        %v660 = vunpack.c.l.b16 %v402
        %v661 = vunpack.c.l.b16 %v403
        %v662 = vunpack.c.l.b16 %v404
        %v663 = vunpack.c.l.b16 %v405
        %v664 = vunpack.c.l.b16 %v406
        %v665 = vunpack.c.l.b16 %v407
        %v666 = vunpack.c.l.b16 %v408
        %v667 = vunpack.c.l.b16 %v409
        %v668 = vunpack.c.l.b16 %v410
        %v669 = vunpack.c.l.b16 %v411
        %v670 = vunpack.c.l.b16 %v412
        %v671 = vunpack.c.l.b16 %v413
        %v672 = vunpack.c.l.b16 %v414
        %v673 = vunpack.c.l.b16 %v415
        %v674 = vunpack.c.l.b16 %v416
        %v675 = vunpack.c.l.b16 %v417
        %v676 = vunpack.c.l.b16 %v418
        %v677 = vunpack.c.l.b16 %v419
        %v678 = vunpack.c.l.b16 %v420
        %v679 = vunpack.c.l.b16 %v421
        %v680 = vunpack.c.l.b16 %v422
        %v681 = vunpack.c.l.b16 %v423
        %v682 = vunpack.c.l.b16 %v424
        %v683 = vunpack.c.l.b16 %v425
        %v684 = vunpack.c.l.b16 %v426
        %v685 = vunpack.c.l.b16 %v427
        %v686 = vunpack.c.l.b16 %v428
        %v687 = vunpack.c.l.b16 %v429
        %v688 = vunpack.c.l.b16 %v430
        %v689 = vunpack.c.l.b16 %v431
        %v690 = vunpack.c.l.b16 %v432
        %v691 = vunpack.c.l.b16 %v433
        %v692 = vunpack.c.l.b16 %v434
        %v693 = vunpack.c.l.b16 %v435
        %v694 = vunpack.c.l.b16 %v436
        %v695 = vunpack.c.l.b16 %v437
        %v696 = vunpack.c.l.b16 %v438
        %v697 = vunpack.c.l.b16 %v439
        %v698 = vunpack.c.l.b16 %v440
        %v699 = vunpack.c.l.b16 %v441
        %v700 = vunpack.c.l.b16 %v442
        %v701 = vunpack.c.l.b16 %v443
        %v702 = vunpack.c.l.b16 %v444
        %v703 = vunpack.c.l.b16 %v445
        %v704 = vunpack.c.l.b16 %v446
        %v705 = vunpack.c.l.b16 %v447
        %v706 = vunpack.c.l.b16 %v448
        %v707 = vunpack.c.l.b16 %v449
        %v708 = vunpack.c.l.b16 %v450
        %v709 = vunpack.c.l.b16 %v451
        %v710 = vunpack.c.l.b16 %v452
        %v711 = vunpack.c.l.b16 %v453
        %v712 = vunpack.c.l.b16 %v454
        %v713 = vunpack.c.l.b16 %v455
        %v714 = vunpack.c.l.b16 %v456
        %v715 = vunpack.c.l.b16 %v457
        %v716 = vunpack.c.l.b16 %v458
        %v717 = vunpack.c.l.b16 %v459
        %v718 = vunpack.c.l.b16 %v460
        %v719 = vunpack.c.l.b16 %v461
        %v720 = vunpack.c.l.b16 %v462
        %v721 = vunpack.c.l.b16 %v463
        %v722 = vunpack.c.l.b16 %v464
        %v723 = vunpack.c.l.b16 %v465
        %v724 = vunpack.c.l.b16 %v466
        %v725 = vunpack.c.l.b16 %v467
        %v726 = vunpack.c.l.b16 %v468
        %v727 = vunpack.c.l.b16 %v469
        %v728 = vunpack.c.l.b16 %v470
        %v729 = vunpack.c.l.b16 %v471
        %v730 = vunpack.c.l.b16 %v472
        %v731 = vunpack.c.l.b16 %v473
        %v732 = vpack.c.b16 %v605, %v604
        %v733 = vpack.c.b16 %v607, %v606
        %v734 = vpack.c.b16 %v609, %v608
        %v735 = vpack.c.b16 %v611, %v610
        %v736 = vpack.c.b16 %v613, %v612
        %v737 = vpack.c.b16 %v615, %v614
        %v738 = vpack.c.b16 %v617, %v616
        %v739 = vpack.c.b16 %v619, %v618
        %v740 = vpack.c.b16 %v621, %v620
        %v741 = vpack.c.b16 %v623, %v622
        %v742 = vpack.c.b16 %v625, %v624
        %v743 = vpack.c.b16 %v627, %v626
        %v744 = vpack.c.b16 %v629, %v628
        %v745 = vpack.c.b16 %v631, %v630
        %v746 = vpack.c.b16 %v633, %v632
        %v747 = vpack.c.b16 %v635, %v634
        %v748 = vpack.c.b16 %v637, %v636
        %v749 = vpack.c.b16 %v639, %v638
        %v750 = vpack.c.b16 %v641, %v640
        %v751 = vpack.c.b16 %v643, %v642
        %v752 = vpack.c.b16 %v645, %v644
        %v753 = vpack.c.b16 %v647, %v646
        %v754 = vpack.c.b16 %v649, %v648
        %v755 = vpack.c.b16 %v651, %v650
        %v756 = vpack.c.b16 %v653, %v652
        %v757 = vpack.c.b16 %v655, %v654
        %v758 = vpack.c.b16 %v657, %v656
        %v759 = vpack.c.b16 %v659, %v658
        %v760 = vpack.c.b16 %v661, %v660
        %v761 = vpack.c.b16 %v663, %v662
        %v762 = vpack.c.b16 %v665, %v664
        %v763 = vpack.c.b16 %v667, %v666
        %v764 = vpack.c.b16 %v669, %v668
        %v765 = vpack.c.b16 %v671, %v670
        %v766 = vpack.c.b16 %v673, %v672
        %v767 = vpack.c.b16 %v675, %v674
        %v768 = vpack.c.b16 %v677, %v676
        %v769 = vpack.c.b16 %v679, %v678
        %v770 = vpack.c.b16 %v681, %v680
        %v771 = vpack.c.b16 %v683, %v682
        %v772 = vpack.c.b16 %v685, %v684
        %v773 = vpack.c.b16 %v687, %v686
        %v774 = vpack.c.b16 %v689, %v688
        %v775 = vpack.c.b16 %v691, %v690
        %v776 = vpack.c.b16 %v693, %v692
        %v777 = vpack.c.b16 %v695, %v694
        %v778 = vpack.c.b16 %v697, %v696
        %v779 = vpack.c.b16 %v699, %v698
        %v780 = vpack.c.b16 %v701, %v700
        %v781 = vpack.c.b16 %v703, %v702
        %v782 = vpack.c.b16 %v705, %v704
        %v783 = vpack.c.b16 %v707, %v706
        %v784 = vpack.c.b16 %v709, %v708
        %v785 = vpack.c.b16 %v711, %v710
        %v786 = vpack.c.b16 %v713, %v712
        %v787 = vpack.c.b16 %v715, %v714
        %v788 = vpack.c.b16 %v717, %v716
        %v789 = vpack.c.b16 %v719, %v718
        %v790 = vpack.c.b16 %v721, %v720
        %v791 = vpack.c.b16 %v723, %v722
        %v792 = vpack.c.b16 %v725, %v724
        %v793 = vpack.c.b16 %v727, %v726
        %v794 = vpack.c.b16 %v729, %v728
        %v795 = vpack.c.b16 %v731, %v730
        %v798 = vunpack.c.l.b16 %v474
        %v799 = vunpack.c.l.b16 %v475
        %v800 = vpack.c.b16 %v799, %v798
        %vm802 = vcmask 130048
        %v804 = vsel %vm802, %v732, 0
        %v807 = vsel %vm802, %v733, 0
        %v810 = vsel %vm802, %v734, 0
        %v813 = vsel %vm802, %v735, 0
        %v816 = vsel %vm802, %v736, 0
        %v819 = vsel %vm802, %v737, 0
        %v822 = vsel %vm802, %v738, 0
        %v825 = vsel %vm802, %v739, 0
        %v828 = vsel %vm802, %v740, 0
        %v831 = vsel %vm802, %v741, 0
        %v834 = vsel %vm802, %v742, 0
        %v837 = vsel %vm802, %v743, 0
        %v840 = vsel %vm802, %v744, 0
        %v843 = vsel %vm802, %v745, 0
        %v846 = vsel %vm802, %v746, 0
        %v849 = vsel %vm802, %v747, 0
        %v852 = vsel %vm802, %v748, 0
        %v855 = vsel %vm802, %v749, 0
        %v858 = vsel %vm802, %v750, 0
        %v861 = vsel %vm802, %v751, 0
        %v864 = vsel %vm802, %v752, 0
        %v867 = vsel %vm802, %v753, 0
        %v870 = vsel %vm802, %v754, 0
        %v873 = vsel %vm802, %v755, 0
        %v876 = vsel %vm802, %v756, 0
        %v879 = vsel %vm802, %v757, 0
        %v882 = vsel %vm802, %v758, 0
        %v885 = vsel %vm802, %v759, 0
        %v888 = vsel %vm802, %v760, 0
        %v891 = vsel %vm802, %v761, 0
        %v894 = vsel %vm802, %v762, 0
        %v897 = vsel %vm802, %v763, 0
        %v900 = vsel %vm802, %v764, 0
        %v903 = vsel %vm802, %v765, 0
        %v906 = vsel %vm802, %v766, 0
        %v909 = vsel %vm802, %v767, 0
        %v912 = vsel %vm802, %v768, 0
        %v915 = vsel %vm802, %v769, 0
        %v918 = vsel %vm802, %v770, 0
        %v921 = vsel %vm802, %v771, 0
        %v924 = vsel %vm802, %v772, 0
        %v927 = vsel %vm802, %v773, 0
        %v930 = vsel %vm802, %v774, 0
        %v933 = vsel %vm802, %v775, 0
        %v936 = vsel %vm802, %v776, 0
        %v939 = vsel %vm802, %v777, 0
        %v942 = vsel %vm802, %v778, 0
        %v945 = vsel %vm802, %v779, 0
        %v948 = vsel %vm802, %v780, 0
        %v951 = vsel %vm802, %v781, 0
        %v954 = vsel %vm802, %v782, 0
        %v957 = vsel %vm802, %v783, 0
        %v960 = vsel %vm802, %v784, 0
        %v963 = vsel %vm802, %v785, 0
        %v966 = vsel %vm802, %v786, 0
        %v969 = vsel %vm802, %v787, 0
        %v972 = vsel %vm802, %v788, 0
        %v975 = vsel %vm802, %v789, 0
        %v978 = vsel %vm802, %v790, 0
        %v981 = vsel %vm802, %v791, 0
        %v984 = vsel %vm802, %v792, 0
        %v987 = vsel %vm802, %v793, 0
        %v990 = vsel %vm802, %v794, 0
        %v993 = vsel %vm802, %v795, 0
        %995 = vmatprep.subr.bf16.mxu0 0
        %996 = vmatpush1.bf16.msra.mxu0 %v800
        %997 = vmatprep.subr.bf16.mxu0 0
        %998 = vmatpush1.bf16.msra.mxu0 0
        %999 = vmatprep.subr.bf16.mxu0 0
        %1000 = vmatpush1.bf16.msra.mxu0 0
        %1001 = vmatprep.subr.bf16.mxu0 0
        %1002 = vmatpush1.bf16.msra.mxu0 0
        %1003 = vmatprep.subr.bf16.mxu0 0
        %1004 = vmatpush1.bf16.msra.mxu0 0
        %1005 = vmatprep.subr.bf16.mxu0 0
        %1006 = vmatpush1.bf16.msra.mxu0 0
        %1007 = vmatprep.subr.bf16.mxu0 0
        %1008 = vmatpush1.bf16.msra.mxu0 0
        %1009 = vmatprep.subr.bf16.mxu0 0
        %1010 = vmatpush1.bf16.msra.mxu0 0
        %1011 = vmatprep.subr.bf16.mxu0 0
        %1012 = vmatpush1.bf16.msra.mxu0 0
        %1013 = vmatprep.subr.bf16.mxu0 0
        %1014 = vmatpush1.bf16.msra.mxu0 0
        %1015 = vmatprep.subr.bf16.mxu0 0
        %1016 = vmatpush1.bf16.msra.mxu0 0
        %1017 = vmatprep.subr.bf16.mxu0 0
        %1018 = vmatpush1.bf16.msra.mxu0 0
        %1019 = vmatprep.subr.bf16.mxu0 0
        %1020 = vmatpush1.bf16.msra.mxu0 0
        %1021 = vmatprep.subr.bf16.mxu0 0
        %1022 = vmatpush1.bf16.msra.mxu0 0
        %1023 = vmatprep.subr.bf16.mxu0 0
        %1024 = vmatpush1.bf16.msra.mxu0 0
        %1025 = vmatprep.subr.bf16.mxu0 0
        %1026 = vmatpush1.bf16.msra.mxu0 0
        %1027 = vmatprep.mubr.bf16.mxu0 0
        %1028 = vmatmul.mubr.bf16.gmra.mrb[0].mxu0 %v804
        %v1029 = vpop.f32.mrb[0].mxu0
        %v1030 = vadd.f32 0.0, %v1029
        %v1031 = vpop.f32.mrb[0].mxu0
        %v1032 = vpop.f32.mrb[0].mxu0
        %v1033 = vadd.f32 0.0, %v1032
        %v1034 = vpop.f32.mrb[0].mxu0
        %1035 = vmatprep.mubr.bf16.mxu0 0
        %1036 = vmatmul.mubr.bf16.gmra.mrb[0].mxu0 %v807
        %v1037 = vpop.f32.mrb[0].mxu0
        %v1038 = vadd.f32 0.0, %v1037
        %v1039 = vpop.f32.mrb[0].mxu0
        %v1040 = vpop.f32.mrb[0].mxu0
        %v1041 = vadd.f32 0.0, %v1040
        %v1042 = vpop.f32.mrb[0].mxu0
        %1043 = vmatprep.mubr.bf16.mxu0 0
        %1044 = vmatmul.mubr.bf16.gmra.mrb[0].mxu0 %v810
        %v1045 = vpop.f32.mrb[0].mxu0
        %v1046 = vadd.f32 0.0, %v1045
        %v1047 = vpop.f32.mrb[0].mxu0
        %v1048 = vpop.f32.mrb[0].mxu0
        %v1049 = vadd.f32 0.0, %v1048
        %v1050 = vpop.f32.mrb[0].mxu0
        %1051 = vmatprep.mubr.bf16.mxu0 0
        %1052 = vmatmul.mubr.bf16.gmra.mrb[0].mxu0 %v813
        %v1053 = vpop.f32.mrb[0].mxu0
        %v1054 = vadd.f32 0.0, %v1053
        %v1055 = vpop.f32.mrb[0].mxu0
        %v1056 = vpop.f32.mrb[0].mxu0
        %v1057 = vadd.f32 0.0, %v1056
        %v1058 = vpop.f32.mrb[0].mxu0
        %1059 = vmatprep.mubr.bf16.mxu0 0
        %1060 = vmatmul.mubr.bf16.gmra.mrb[0].mxu0 %v816
        %v1061 = vpop.f32.mrb[0].mxu0
        %v1062 = vadd.f32 0.0, %v1061
        %v1063 = vpop.f32.mrb[0].mxu0
        %v1064 = vpop.f32.mrb[0].mxu0
        %v1065 = vadd.f32 0.0, %v1064
        %v1066 = vpop.f32.mrb[0].mxu0
        %1067 = vmatprep.mubr.bf16.mxu0 0
        %1068 = vmatmul.mubr.bf16.gmra.mrb[0].mxu0 %v819
        %v1069 = vpop.f32.mrb[0].mxu0
        %v1070 = vadd.f32 0.0, %v1069
        %v1071 = vpop.f32.mrb[0].mxu0
        %v1072 = vpop.f32.mrb[0].mxu0
        %v1073 = vadd.f32 0.0, %v1072
        %v1074 = vpop.f32.mrb[0].mxu0
        %1075 = vmatprep.mubr.bf16.mxu0 0
        %1076 = vmatmul.mubr.bf16.gmra.mrb[0].mxu0 %v822
        %v1077 = vpop.f32.mrb[0].mxu0
        %v1078 = vadd.f32 0.0, %v1077
        %v1079 = vpop.f32.mrb[0].mxu0
        %v1080 = vpop.f32.mrb[0].mxu0
        %v1081 = vadd.f32 0.0, %v1080
        %v1082 = vpop.f32.mrb[0].mxu0
        %1083 = vmatprep.mubr.bf16.mxu0 0
        %1084 = vmatmul.mubr.bf16.gmra.mrb[0].mxu0 %v825
        %v1085 = vpop.f32.mrb[0].mxu0
        %v1086 = vadd.f32 0.0, %v1085
        %v1087 = vpop.f32.mrb[0].mxu0
        %v1088 = vpop.f32.mrb[0].mxu0
        %v1089 = vadd.f32 0.0, %v1088
        %v1090 = vpop.f32.mrb[0].mxu0
        %1091 = vmatprep.mubr.bf16.mxu0 0
        %1092 = vmatmul.mubr.bf16.gmra.mrb[0].mxu0 %v828
        %v1093 = vpop.f32.mrb[0].mxu0
        %v1094 = vadd.f32 0.0, %v1093
        %v1095 = vpop.f32.mrb[0].mxu0
        %v1096 = vpop.f32.mrb[0].mxu0
        %v1097 = vadd.f32 0.0, %v1096
        %v1098 = vpop.f32.mrb[0].mxu0
        %1099 = vmatprep.mubr.bf16.mxu0 0
        %1100 = vmatmul.mubr.bf16.gmra.mrb[0].mxu0 %v831
        %v1101 = vpop.f32.mrb[0].mxu0
        %v1102 = vadd.f32 0.0, %v1101
        %v1103 = vpop.f32.mrb[0].mxu0
        %v1104 = vpop.f32.mrb[0].mxu0
        %v1105 = vadd.f32 0.0, %v1104
        %v1106 = vpop.f32.mrb[0].mxu0
        %1107 = vmatprep.mubr.bf16.mxu0 0
        %1108 = vmatmul.mubr.bf16.gmra.mrb[0].mxu0 %v834
        %v1109 = vpop.f32.mrb[0].mxu0
        %v1110 = vadd.f32 0.0, %v1109
        %v1111 = vpop.f32.mrb[0].mxu0
        %v1112 = vpop.f32.mrb[0].mxu0
        %v1113 = vadd.f32 0.0, %v1112
        %v1114 = vpop.f32.mrb[0].mxu0
        %1115 = vmatprep.mubr.bf16.mxu0 0
        %1116 = vmatmul.mubr.bf16.gmra.mrb[0].mxu0 %v837
        %v1117 = vpop.f32.mrb[0].mxu0
        %v1118 = vadd.f32 0.0, %v1117
        %v1119 = vpop.f32.mrb[0].mxu0
        %v1120 = vpop.f32.mrb[0].mxu0
        %v1121 = vadd.f32 0.0, %v1120
        %v1122 = vpop.f32.mrb[0].mxu0
        %1123 = vmatprep.mubr.bf16.mxu0 0
        %1124 = vmatmul.mubr.bf16.gmra.mrb[0].mxu0 %v840
        %v1125 = vpop.f32.mrb[0].mxu0
        %v1126 = vadd.f32 0.0, %v1125
        %v1127 = vpop.f32.mrb[0].mxu0
        %v1128 = vpop.f32.mrb[0].mxu0
        %v1129 = vadd.f32 0.0, %v1128
        %v1130 = vpop.f32.mrb[0].mxu0
        %1131 = vmatprep.mubr.bf16.mxu0 0
        %1132 = vmatmul.mubr.bf16.gmra.mrb[0].mxu0 %v843
        %v1133 = vpop.f32.mrb[0].mxu0
        %v1134 = vadd.f32 0.0, %v1133
        %v1135 = vpop.f32.mrb[0].mxu0
        %v1136 = vpop.f32.mrb[0].mxu0
        %v1137 = vadd.f32 0.0, %v1136
        %v1138 = vpop.f32.mrb[0].mxu0
        %1139 = vmatprep.mubr.bf16.mxu0 0
        %1140 = vmatmul.mubr.bf16.gmra.mrb[0].mxu0 %v846
        %v1141 = vpop.f32.mrb[0].mxu0
        %v1142 = vadd.f32 0.0, %v1141
        %v1143 = vpop.f32.mrb[0].mxu0
        %v1144 = vpop.f32.mrb[0].mxu0
        %v1145 = vadd.f32 0.0, %v1144
        %v1146 = vpop.f32.mrb[0].mxu0
        %1147 = vmatprep.mubr.bf16.mxu0 0
        %1148 = vmatmul.mubr.bf16.gmra.mrb[0].mxu0 %v849
        %v1149 = vpop.f32.mrb[0].mxu0
        %v1150 = vadd.f32 0.0, %v1149
        %v1151 = vpop.f32.mrb[0].mxu0
        %v1152 = vpop.f32.mrb[0].mxu0
        %v1153 = vadd.f32 0.0, %v1152
        %v1154 = vpop.f32.mrb[0].mxu0
        %1155 = vmatprep.mubr.bf16.mxu0 0
        %1156 = vmatmul.mubr.bf16.gmra.mrb[0].mxu0 %v852
        %v1157 = vpop.f32.mrb[0].mxu0
        %v1158 = vadd.f32 0.0, %v1157
        %v1159 = vpop.f32.mrb[0].mxu0
        %v1160 = vpop.f32.mrb[0].mxu0
        %v1161 = vadd.f32 0.0, %v1160
        %v1162 = vpop.f32.mrb[0].mxu0
        %1163 = vmatprep.mubr.bf16.mxu0 0
        %1164 = vmatmul.mubr.bf16.gmra.mrb[0].mxu0 %v855
        %v1165 = vpop.f32.mrb[0].mxu0
        %v1166 = vadd.f32 0.0, %v1165
        %v1167 = vpop.f32.mrb[0].mxu0
        %v1168 = vpop.f32.mrb[0].mxu0
        %v1169 = vadd.f32 0.0, %v1168
        %v1170 = vpop.f32.mrb[0].mxu0
        %1171 = vmatprep.mubr.bf16.mxu0 0
        %1172 = vmatmul.mubr.bf16.gmra.mrb[0].mxu0 %v858
        %v1173 = vpop.f32.mrb[0].mxu0
        %v1174 = vadd.f32 0.0, %v1173
        %v1175 = vpop.f32.mrb[0].mxu0
        %v1176 = vpop.f32.mrb[0].mxu0
        %v1177 = vadd.f32 0.0, %v1176
        %v1178 = vpop.f32.mrb[0].mxu0
        %1179 = vmatprep.mubr.bf16.mxu0 0
        %1180 = vmatmul.mubr.bf16.gmra.mrb[0].mxu0 %v861
        %v1181 = vpop.f32.mrb[0].mxu0
        %v1182 = vadd.f32 0.0, %v1181
        %v1183 = vpop.f32.mrb[0].mxu0
        %v1184 = vpop.f32.mrb[0].mxu0
        %v1185 = vadd.f32 0.0, %v1184
        %v1186 = vpop.f32.mrb[0].mxu0
        %1187 = vmatprep.mubr.bf16.mxu0 0
        %1188 = vmatmul.mubr.bf16.gmra.mrb[0].mxu0 %v864
        %v1189 = vpop.f32.mrb[0].mxu0
        %v1190 = vadd.f32 0.0, %v1189
        %v1191 = vpop.f32.mrb[0].mxu0
        %v1192 = vpop.f32.mrb[0].mxu0
        %v1193 = vadd.f32 0.0, %v1192
        %v1194 = vpop.f32.mrb[0].mxu0
        %1195 = vmatprep.mubr.bf16.mxu0 0
        %1196 = vmatmul.mubr.bf16.gmra.mrb[0].mxu0 %v867
        %v1197 = vpop.f32.mrb[0].mxu0
        %v1198 = vadd.f32 0.0, %v1197
        %v1199 = vpop.f32.mrb[0].mxu0
        %v1200 = vpop.f32.mrb[0].mxu0
        %v1201 = vadd.f32 0.0, %v1200
        %v1202 = vpop.f32.mrb[0].mxu0
        %1203 = vmatprep.mubr.bf16.mxu0 0
        %1204 = vmatmul.mubr.bf16.gmra.mrb[0].mxu0 %v870
        %v1205 = vpop.f32.mrb[0].mxu0
        %v1206 = vadd.f32 0.0, %v1205
        %v1207 = vpop.f32.mrb[0].mxu0
        %v1208 = vpop.f32.mrb[0].mxu0
        %v1209 = vadd.f32 0.0, %v1208
        %v1210 = vpop.f32.mrb[0].mxu0
        %1211 = vmatprep.mubr.bf16.mxu0 0
        %1212 = vmatmul.mubr.bf16.gmra.mrb[0].mxu0 %v873
        %v1213 = vpop.f32.mrb[0].mxu0
        %v1214 = vadd.f32 0.0, %v1213
        %v1215 = vpop.f32.mrb[0].mxu0
        %v1216 = vpop.f32.mrb[0].mxu0
        %v1217 = vadd.f32 0.0, %v1216
        %v1218 = vpop.f32.mrb[0].mxu0
        %1219 = vmatprep.mubr.bf16.mxu0 0
        %1220 = vmatmul.mubr.bf16.gmra.mrb[0].mxu0 %v876
        %v1221 = vpop.f32.mrb[0].mxu0
        %v1222 = vadd.f32 0.0, %v1221
        %v1223 = vpop.f32.mrb[0].mxu0
        %v1224 = vpop.f32.mrb[0].mxu0
        %v1225 = vadd.f32 0.0, %v1224
        %v1226 = vpop.f32.mrb[0].mxu0
        %1227 = vmatprep.mubr.bf16.mxu0 0
        %1228 = vmatmul.mubr.bf16.gmra.mrb[0].mxu0 %v879
        %v1229 = vpop.f32.mrb[0].mxu0
        %v1230 = vadd.f32 0.0, %v1229
        %v1231 = vpop.f32.mrb[0].mxu0
        %v1232 = vpop.f32.mrb[0].mxu0
        %v1233 = vadd.f32 0.0, %v1232
        %v1234 = vpop.f32.mrb[0].mxu0
        %1235 = vmatprep.mubr.bf16.mxu0 0
        %1236 = vmatmul.mubr.bf16.gmra.mrb[0].mxu0 %v882
        %v1237 = vpop.f32.mrb[0].mxu0
        %v1238 = vadd.f32 0.0, %v1237
        %v1239 = vpop.f32.mrb[0].mxu0
        %v1240 = vpop.f32.mrb[0].mxu0
        %v1241 = vadd.f32 0.0, %v1240
        %v1242 = vpop.f32.mrb[0].mxu0
        %1243 = vmatprep.mubr.bf16.mxu0 0
        %1244 = vmatmul.mubr.bf16.gmra.mrb[0].mxu0 %v885
        %v1245 = vpop.f32.mrb[0].mxu0
        %v1246 = vadd.f32 0.0, %v1245
        %v1247 = vpop.f32.mrb[0].mxu0
        %v1248 = vpop.f32.mrb[0].mxu0
        %v1249 = vadd.f32 0.0, %v1248
        %v1250 = vpop.f32.mrb[0].mxu0
        %1251 = vmatprep.mubr.bf16.mxu0 0
        %1252 = vmatmul.mubr.bf16.gmra.mrb[0].mxu0 %v888
        %v1253 = vpop.f32.mrb[0].mxu0
        %v1254 = vadd.f32 0.0, %v1253
        %v1255 = vpop.f32.mrb[0].mxu0
        %v1256 = vpop.f32.mrb[0].mxu0
        %v1257 = vadd.f32 0.0, %v1256
        %v1258 = vpop.f32.mrb[0].mxu0
        %1259 = vmatprep.mubr.bf16.mxu0 0
        %1260 = vmatmul.mubr.bf16.gmra.mrb[0].mxu0 %v891
        %v1261 = vpop.f32.mrb[0].mxu0
        %v1262 = vadd.f32 0.0, %v1261
        %v1263 = vpop.f32.mrb[0].mxu0
        %v1264 = vpop.f32.mrb[0].mxu0
        %v1265 = vadd.f32 0.0, %v1264
        %v1266 = vpop.f32.mrb[0].mxu0
        %1267 = vmatprep.mubr.bf16.mxu0 0
        %1268 = vmatmul.mubr.bf16.gmra.mrb[0].mxu0 %v894
        %v1269 = vpop.f32.mrb[0].mxu0
        %v1270 = vadd.f32 0.0, %v1269
        %v1271 = vpop.f32.mrb[0].mxu0
        %v1272 = vpop.f32.mrb[0].mxu0
        %v1273 = vadd.f32 0.0, %v1272
        %v1274 = vpop.f32.mrb[0].mxu0
        %1275 = vmatprep.mubr.bf16.mxu0 0
        %1276 = vmatmul.mubr.bf16.gmra.mrb[0].mxu0 %v897
        %v1277 = vpop.f32.mrb[0].mxu0
        %v1278 = vadd.f32 0.0, %v1277
        %v1279 = vpop.f32.mrb[0].mxu0
        %v1280 = vpop.f32.mrb[0].mxu0
        %v1281 = vadd.f32 0.0, %v1280
        %v1282 = vpop.f32.mrb[0].mxu0
        %1283 = vmatprep.mubr.bf16.mxu0 0
        %1284 = vmatmul.mubr.bf16.gmra.mrb[0].mxu0 %v900
        %v1285 = vpop.f32.mrb[0].mxu0
        %v1286 = vadd.f32 0.0, %v1285
        %v1287 = vpop.f32.mrb[0].mxu0
        %v1288 = vpop.f32.mrb[0].mxu0
        %v1289 = vadd.f32 0.0, %v1288
        %v1290 = vpop.f32.mrb[0].mxu0
        %1291 = vmatprep.mubr.bf16.mxu0 0
        %1292 = vmatmul.mubr.bf16.gmra.mrb[0].mxu0 %v903
        %v1293 = vpop.f32.mrb[0].mxu0
        %v1294 = vadd.f32 0.0, %v1293
        %v1295 = vpop.f32.mrb[0].mxu0
        %v1296 = vpop.f32.mrb[0].mxu0
        %v1297 = vadd.f32 0.0, %v1296
        %v1298 = vpop.f32.mrb[0].mxu0
        %1299 = vmatprep.mubr.bf16.mxu0 0
        %1300 = vmatmul.mubr.bf16.gmra.mrb[0].mxu0 %v906
        %v1301 = vpop.f32.mrb[0].mxu0
        %v1302 = vadd.f32 0.0, %v1301
        %v1303 = vpop.f32.mrb[0].mxu0
        %v1304 = vpop.f32.mrb[0].mxu0
        %v1305 = vadd.f32 0.0, %v1304
        %v1306 = vpop.f32.mrb[0].mxu0
        %1307 = vmatprep.mubr.bf16.mxu0 0
        %1308 = vmatmul.mubr.bf16.gmra.mrb[0].mxu0 %v909
        %v1309 = vpop.f32.mrb[0].mxu0
        %v1310 = vadd.f32 0.0, %v1309
        %v1311 = vpop.f32.mrb[0].mxu0
        %v1312 = vpop.f32.mrb[0].mxu0
        %v1313 = vadd.f32 0.0, %v1312
        %v1314 = vpop.f32.mrb[0].mxu0
        %1315 = vmatprep.mubr.bf16.mxu0 0
        %1316 = vmatmul.mubr.bf16.gmra.mrb[0].mxu0 %v912
        %v1317 = vpop.f32.mrb[0].mxu0
        %v1318 = vadd.f32 0.0, %v1317
        %v1319 = vpop.f32.mrb[0].mxu0
        %v1320 = vpop.f32.mrb[0].mxu0
        %v1321 = vadd.f32 0.0, %v1320
        %v1322 = vpop.f32.mrb[0].mxu0
        %1323 = vmatprep.mubr.bf16.mxu0 0
        %1324 = vmatmul.mubr.bf16.gmra.mrb[0].mxu0 %v915
        %v1325 = vpop.f32.mrb[0].mxu0
        %v1326 = vadd.f32 0.0, %v1325
        %v1327 = vpop.f32.mrb[0].mxu0
        %v1328 = vpop.f32.mrb[0].mxu0
        %v1329 = vadd.f32 0.0, %v1328
        %v1330 = vpop.f32.mrb[0].mxu0
        %1331 = vmatprep.mubr.bf16.mxu0 0
        %1332 = vmatmul.mubr.bf16.gmra.mrb[0].mxu0 %v918
        %v1333 = vpop.f32.mrb[0].mxu0
        %v1334 = vadd.f32 0.0, %v1333
        %v1335 = vpop.f32.mrb[0].mxu0
        %v1336 = vpop.f32.mrb[0].mxu0
        %v1337 = vadd.f32 0.0, %v1336
        %v1338 = vpop.f32.mrb[0].mxu0
        %1339 = vmatprep.mubr.bf16.mxu0 0
        %1340 = vmatmul.mubr.bf16.gmra.mrb[0].mxu0 %v921
        %v1341 = vpop.f32.mrb[0].mxu0
        %v1342 = vadd.f32 0.0, %v1341
        %v1343 = vpop.f32.mrb[0].mxu0
        %v1344 = vpop.f32.mrb[0].mxu0
        %v1345 = vadd.f32 0.0, %v1344
        %v1346 = vpop.f32.mrb[0].mxu0
        %1347 = vmatprep.mubr.bf16.mxu0 0
        %1348 = vmatmul.mubr.bf16.gmra.mrb[0].mxu0 %v924
        %v1349 = vpop.f32.mrb[0].mxu0
        %v1350 = vadd.f32 0.0, %v1349
        %v1351 = vpop.f32.mrb[0].mxu0
        %v1352 = vpop.f32.mrb[0].mxu0
        %v1353 = vadd.f32 0.0, %v1352
        %v1354 = vpop.f32.mrb[0].mxu0
        %1355 = vmatprep.mubr.bf16.mxu0 0
        %1356 = vmatmul.mubr.bf16.gmra.mrb[0].mxu0 %v927
        %v1357 = vpop.f32.mrb[0].mxu0
        %v1358 = vadd.f32 0.0, %v1357
        %v1359 = vpop.f32.mrb[0].mxu0
        %v1360 = vpop.f32.mrb[0].mxu0
        %v1361 = vadd.f32 0.0, %v1360
        %v1362 = vpop.f32.mrb[0].mxu0
        %1363 = vmatprep.mubr.bf16.mxu0 0
        %1364 = vmatmul.mubr.bf16.gmra.mrb[0].mxu0 %v930
        %v1365 = vpop.f32.mrb[0].mxu0
        %v1366 = vadd.f32 0.0, %v1365
        %v1367 = vpop.f32.mrb[0].mxu0
        %v1368 = vpop.f32.mrb[0].mxu0
        %v1369 = vadd.f32 0.0, %v1368
        %v1370 = vpop.f32.mrb[0].mxu0
        %1371 = vmatprep.mubr.bf16.mxu0 0
        %1372 = vmatmul.mubr.bf16.gmra.mrb[0].mxu0 %v933
        %v1373 = vpop.f32.mrb[0].mxu0
        %v1374 = vadd.f32 0.0, %v1373
        %v1375 = vpop.f32.mrb[0].mxu0
        %v1376 = vpop.f32.mrb[0].mxu0
        %v1377 = vadd.f32 0.0, %v1376
        %v1378 = vpop.f32.mrb[0].mxu0
        %1379 = vmatprep.mubr.bf16.mxu0 0
        %1380 = vmatmul.mubr.bf16.gmra.mrb[0].mxu0 %v936
        %v1381 = vpop.f32.mrb[0].mxu0
        %v1382 = vadd.f32 0.0, %v1381
        %v1383 = vpop.f32.mrb[0].mxu0
        %v1384 = vpop.f32.mrb[0].mxu0
        %v1385 = vadd.f32 0.0, %v1384
        %v1386 = vpop.f32.mrb[0].mxu0
        %1387 = vmatprep.mubr.bf16.mxu0 0
        %1388 = vmatmul.mubr.bf16.gmra.mrb[0].mxu0 %v939
        %v1389 = vpop.f32.mrb[0].mxu0
        %v1390 = vadd.f32 0.0, %v1389
        %v1391 = vpop.f32.mrb[0].mxu0
        %v1392 = vpop.f32.mrb[0].mxu0
        %v1393 = vadd.f32 0.0, %v1392
        %v1394 = vpop.f32.mrb[0].mxu0
        %1395 = vmatprep.mubr.bf16.mxu0 0
        %1396 = vmatmul.mubr.bf16.gmra.mrb[0].mxu0 %v942
        %v1397 = vpop.f32.mrb[0].mxu0
        %v1398 = vadd.f32 0.0, %v1397
        %v1399 = vpop.f32.mrb[0].mxu0
        %v1400 = vpop.f32.mrb[0].mxu0
        %v1401 = vadd.f32 0.0, %v1400
        %v1402 = vpop.f32.mrb[0].mxu0
        %1403 = vmatprep.mubr.bf16.mxu0 0
        %1404 = vmatmul.mubr.bf16.gmra.mrb[0].mxu0 %v945
        %v1405 = vpop.f32.mrb[0].mxu0
        %v1406 = vadd.f32 0.0, %v1405
        %v1407 = vpop.f32.mrb[0].mxu0
        %v1408 = vpop.f32.mrb[0].mxu0
        %v1409 = vadd.f32 0.0, %v1408
        %v1410 = vpop.f32.mrb[0].mxu0
        %1411 = vmatprep.mubr.bf16.mxu0 0
        %1412 = vmatmul.mubr.bf16.gmra.mrb[0].mxu0 %v948
        %v1413 = vpop.f32.mrb[0].mxu0
        %v1414 = vadd.f32 0.0, %v1413
        %v1415 = vpop.f32.mrb[0].mxu0
        %v1416 = vpop.f32.mrb[0].mxu0
        %v1417 = vadd.f32 0.0, %v1416
        %v1418 = vpop.f32.mrb[0].mxu0
        %1419 = vmatprep.mubr.bf16.mxu0 0
        %1420 = vmatmul.mubr.bf16.gmra.mrb[0].mxu0 %v951
        %v1421 = vpop.f32.mrb[0].mxu0
        %v1422 = vadd.f32 0.0, %v1421
        %v1423 = vpop.f32.mrb[0].mxu0
        %v1424 = vpop.f32.mrb[0].mxu0
        %v1425 = vadd.f32 0.0, %v1424
        %v1426 = vpop.f32.mrb[0].mxu0
        %1427 = vmatprep.mubr.bf16.mxu0 0
        %1428 = vmatmul.mubr.bf16.gmra.mrb[0].mxu0 %v954
        %v1429 = vpop.f32.mrb[0].mxu0
        %v1430 = vadd.f32 0.0, %v1429
        %v1431 = vpop.f32.mrb[0].mxu0
        %v1432 = vpop.f32.mrb[0].mxu0
        %v1433 = vadd.f32 0.0, %v1432
        %v1434 = vpop.f32.mrb[0].mxu0
        %1435 = vmatprep.mubr.bf16.mxu0 0
        %1436 = vmatmul.mubr.bf16.gmra.mrb[0].mxu0 %v957
        %v1437 = vpop.f32.mrb[0].mxu0
        %v1438 = vadd.f32 0.0, %v1437
        %v1439 = vpop.f32.mrb[0].mxu0
        %v1440 = vpop.f32.mrb[0].mxu0
        %v1441 = vadd.f32 0.0, %v1440
        %v1442 = vpop.f32.mrb[0].mxu0
        %1443 = vmatprep.mubr.bf16.mxu0 0
        %1444 = vmatmul.mubr.bf16.gmra.mrb[0].mxu0 %v960
        %v1445 = vpop.f32.mrb[0].mxu0
        %v1446 = vadd.f32 0.0, %v1445
        %v1447 = vpop.f32.mrb[0].mxu0
        %v1448 = vpop.f32.mrb[0].mxu0
        %v1449 = vadd.f32 0.0, %v1448
        %v1450 = vpop.f32.mrb[0].mxu0
        %1451 = vmatprep.mubr.bf16.mxu0 0
        %1452 = vmatmul.mubr.bf16.gmra.mrb[0].mxu0 %v963
        %v1453 = vpop.f32.mrb[0].mxu0
        %v1454 = vadd.f32 0.0, %v1453
        %v1455 = vpop.f32.mrb[0].mxu0
        %v1456 = vpop.f32.mrb[0].mxu0
        %v1457 = vadd.f32 0.0, %v1456
        %v1458 = vpop.f32.mrb[0].mxu0
        %1459 = vmatprep.mubr.bf16.mxu0 0
        %1460 = vmatmul.mubr.bf16.gmra.mrb[0].mxu0 %v966
        %v1461 = vpop.f32.mrb[0].mxu0
        %v1462 = vadd.f32 0.0, %v1461
        %v1463 = vpop.f32.mrb[0].mxu0
        %v1464 = vpop.f32.mrb[0].mxu0
        %v1465 = vadd.f32 0.0, %v1464
        %v1466 = vpop.f32.mrb[0].mxu0
        %1467 = vmatprep.mubr.bf16.mxu0 0
        %1468 = vmatmul.mubr.bf16.gmra.mrb[0].mxu0 %v969
        %v1469 = vpop.f32.mrb[0].mxu0
        %v1470 = vadd.f32 0.0, %v1469
        %v1471 = vpop.f32.mrb[0].mxu0
        %v1472 = vpop.f32.mrb[0].mxu0
        %v1473 = vadd.f32 0.0, %v1472
        %v1474 = vpop.f32.mrb[0].mxu0
        %1475 = vmatprep.mubr.bf16.mxu0 0
        %1476 = vmatmul.mubr.bf16.gmra.mrb[0].mxu0 %v972
        %v1477 = vpop.f32.mrb[0].mxu0
        %v1478 = vadd.f32 0.0, %v1477
        %v1479 = vpop.f32.mrb[0].mxu0
        %v1480 = vpop.f32.mrb[0].mxu0
        %v1481 = vadd.f32 0.0, %v1480
        %v1482 = vpop.f32.mrb[0].mxu0
        %1483 = vmatprep.mubr.bf16.mxu0 0
        %1484 = vmatmul.mubr.bf16.gmra.mrb[0].mxu0 %v975
        %v1485 = vpop.f32.mrb[0].mxu0
        %v1486 = vadd.f32 0.0, %v1485
        %v1487 = vpop.f32.mrb[0].mxu0
        %v1488 = vpop.f32.mrb[0].mxu0
        %v1489 = vadd.f32 0.0, %v1488
        %v1490 = vpop.f32.mrb[0].mxu0
        %1491 = vmatprep.mubr.bf16.mxu0 0
        %1492 = vmatmul.mubr.bf16.gmra.mrb[0].mxu0 %v978
        %v1493 = vpop.f32.mrb[0].mxu0
        %v1494 = vadd.f32 0.0, %v1493
        %v1495 = vpop.f32.mrb[0].mxu0
        %v1496 = vpop.f32.mrb[0].mxu0
        %v1497 = vadd.f32 0.0, %v1496
        %v1498 = vpop.f32.mrb[0].mxu0
        %1499 = vmatprep.mubr.bf16.mxu0 0
        %1500 = vmatmul.mubr.bf16.gmra.mrb[0].mxu0 %v981
        %v1501 = vpop.f32.mrb[0].mxu0
        %v1502 = vadd.f32 0.0, %v1501
        %v1503 = vpop.f32.mrb[0].mxu0
        %v1504 = vpop.f32.mrb[0].mxu0
        %v1505 = vadd.f32 0.0, %v1504
        %v1506 = vpop.f32.mrb[0].mxu0
        %1507 = vmatprep.mubr.bf16.mxu0 0
        %1508 = vmatmul.mubr.bf16.gmra.mrb[0].mxu0 %v984
        %v1509 = vpop.f32.mrb[0].mxu0
        %v1510 = vadd.f32 0.0, %v1509
        %v1511 = vpop.f32.mrb[0].mxu0
        %v1512 = vpop.f32.mrb[0].mxu0
        %v1513 = vadd.f32 0.0, %v1512
        %v1514 = vpop.f32.mrb[0].mxu0
        %1515 = vmatprep.mubr.bf16.mxu0 0
        %1516 = vmatmul.mubr.bf16.gmra.mrb[0].mxu0 %v987
        %v1517 = vpop.f32.mrb[0].mxu0
        %v1518 = vadd.f32 0.0, %v1517
        %v1519 = vpop.f32.mrb[0].mxu0
        %v1520 = vpop.f32.mrb[0].mxu0
        %v1521 = vadd.f32 0.0, %v1520
        %v1522 = vpop.f32.mrb[0].mxu0
        %1523 = vmatprep.mubr.bf16.mxu0 0
        %1524 = vmatmul.mubr.bf16.gmra.mrb[0].mxu0 %v990
        %v1525 = vpop.f32.mrb[0].mxu0
        %v1526 = vadd.f32 0.0, %v1525
        %v1527 = vpop.f32.mrb[0].mxu0
        %v1528 = vpop.f32.mrb[0].mxu0
        %v1529 = vadd.f32 0.0, %v1528
        %v1530 = vpop.f32.mrb[0].mxu0
        %1531 = vmatprep.mubr.bf16.mxu0 0
        %1532 = vmatmul.mubr.bf16.gmra.mrb[0].mxu0 %v993
        %v1533 = vpop.f32.mrb[0].mxu0
        %v1534 = vadd.f32 0.0, %v1533
        %v1535 = vpop.f32.mrb[0].mxu0
        %v1536 = vpop.f32.mrb[0].mxu0
        %v1537 = vadd.f32 0.0, %v1536
        %v1538 = vpop.f32.mrb[0].mxu0
        %1539 = vdwg.mxu0
        %vm1540 = vcmask 261120
        %1541 = vst.msk [vmem:[#allocation2] sm:$0xff] %vm1540, %v1030
        %1542 = vst.msk [vmem:[#allocation2 + $0x8] sm:$0xff] %vm1540, %v1033
        %1543 = vst.msk [vmem:[#allocation2 + $0x10] sm:$0xff] %vm1540, %v1038
        %1544 = vst.msk [vmem:[#allocation2 + $0x18] sm:$0xff] %vm1540, %v1041
        %1545 = vst.msk [vmem:[#allocation2 + $0x20] sm:$0xff] %vm1540, %v1046
        %1546 = vst.msk [vmem:[#allocation2 + $0x28] sm:$0xff] %vm1540, %v1049
        %1547 = vst.msk [vmem:[#allocation2 + $0x30] sm:$0xff] %vm1540, %v1054
        %1548 = vst.msk [vmem:[#allocation2 + $0x38] sm:$0xff] %vm1540, %v1057
        %1549 = vst.msk [vmem:[#allocation2 + $0x40] sm:$0xff] %vm1540, %v1062
        %1550 = vst.msk [vmem:[#allocation2 + $0x48] sm:$0xff] %vm1540, %v1065
        %1551 = vst.msk [vmem:[#allocation2 + $0x50] sm:$0xff] %vm1540, %v1070
        %1552 = vst.msk [vmem:[#allocation2 + $0x58] sm:$0xff] %vm1540, %v1073
        %1553 = vst.msk [vmem:[#allocation2 + $0x60] sm:$0xff] %vm1540, %v1078
        %1554 = vst.msk [vmem:[#allocation2 + $0x68] sm:$0xff] %vm1540, %v1081
        %1555 = vst.msk [vmem:[#allocation2 + $0x70] sm:$0xff] %vm1540, %v1086
        %1556 = vst.msk [vmem:[#allocation2 + $0x78] sm:$0xff] %vm1540, %v1089
        %1557 = vst.msk [vmem:[#allocation2 + $0x80] sm:$0xff] %vm1540, %v1094
        %1558 = vst.msk [vmem:[#allocation2 + $0x88] sm:$0xff] %vm1540, %v1097
        %1559 = vst.msk [vmem:[#allocation2 + $0x90] sm:$0xff] %vm1540, %v1102
        %1560 = vst.msk [vmem:[#allocation2 + $0x98] sm:$0xff] %vm1540, %v1105
        %1561 = vst.msk [vmem:[#allocation2 + $0xa0] sm:$0xff] %vm1540, %v1110
        %1562 = vst.msk [vmem:[#allocation2 + $0xa8] sm:$0xff] %vm1540, %v1113
        %1563 = vst.msk [vmem:[#allocation2 + $0xb0] sm:$0xff] %vm1540, %v1118
        %1564 = vst.msk [vmem:[#allocation2 + $0xb8] sm:$0xff] %vm1540, %v1121
        %1565 = vst.msk [vmem:[#allocation2 + $0xc0] sm:$0xff] %vm1540, %v1126
        %1566 = vst.msk [vmem:[#allocation2 + $0xc8] sm:$0xff] %vm1540, %v1129
        %1567 = vst.msk [vmem:[#allocation2 + $0xd0] sm:$0xff] %vm1540, %v1134
        %1568 = vst.msk [vmem:[#allocation2 + $0xd8] sm:$0xff] %vm1540, %v1137
        %1569 = vst.msk [vmem:[#allocation2 + $0xe0] sm:$0xff] %vm1540, %v1142
        %1570 = vst.msk [vmem:[#allocation2 + $0xe8] sm:$0xff] %vm1540, %v1145
        %1571 = vst.msk [vmem:[#allocation2 + $0xf0] sm:$0xff] %vm1540, %v1150
        %1572 = vst.msk [vmem:[#allocation2 + $0xf8] sm:$0xff] %vm1540, %v1153
        %1573 = vst.msk [vmem:[#allocation2 + $0x100] sm:$0xff] %vm1540, %v1158
        %1574 = vst.msk [vmem:[#allocation2 + $0x108] sm:$0xff] %vm1540, %v1161
        %1575 = vst.msk [vmem:[#allocation2 + $0x110] sm:$0xff] %vm1540, %v1166
        %1576 = vst.msk [vmem:[#allocation2 + $0x118] sm:$0xff] %vm1540, %v1169
        %1577 = vst.msk [vmem:[#allocation2 + $0x120] sm:$0xff] %vm1540, %v1174
        %1578 = vst.msk [vmem:[#allocation2 + $0x128] sm:$0xff] %vm1540, %v1177
        %1579 = vst.msk [vmem:[#allocation2 + $0x130] sm:$0xff] %vm1540, %v1182
        %1580 = vst.msk [vmem:[#allocation2 + $0x138] sm:$0xff] %vm1540, %v1185
        %1581 = vst.msk [vmem:[#allocation2 + $0x140] sm:$0xff] %vm1540, %v1190
        %1582 = vst.msk [vmem:[#allocation2 + $0x148] sm:$0xff] %vm1540, %v1193
        %1583 = vst.msk [vmem:[#allocation2 + $0x150] sm:$0xff] %vm1540, %v1198
        %1584 = vst.msk [vmem:[#allocation2 + $0x158] sm:$0xff] %vm1540, %v1201
        %1585 = vst.msk [vmem:[#allocation2 + $0x160] sm:$0xff] %vm1540, %v1206
        %1586 = vst.msk [vmem:[#allocation2 + $0x168] sm:$0xff] %vm1540, %v1209
        %1587 = vst.msk [vmem:[#allocation2 + $0x170] sm:$0xff] %vm1540, %v1214
        %1588 = vst.msk [vmem:[#allocation2 + $0x178] sm:$0xff] %vm1540, %v1217
        %1589 = vst.msk [vmem:[#allocation2 + $0x180] sm:$0xff] %vm1540, %v1222
        %1590 = vst.msk [vmem:[#allocation2 + $0x188] sm:$0xff] %vm1540, %v1225
        %1591 = vst.msk [vmem:[#allocation2 + $0x190] sm:$0xff] %vm1540, %v1230
        %1592 = vst.msk [vmem:[#allocation2 + $0x198] sm:$0xff] %vm1540, %v1233
        %1593 = vst.msk [vmem:[#allocation2 + $0x1a0] sm:$0xff] %vm1540, %v1238
        %1594 = vst.msk [vmem:[#allocation2 + $0x1a8] sm:$0xff] %vm1540, %v1241
        %1595 = vst.msk [vmem:[#allocation2 + $0x1b0] sm:$0xff] %vm1540, %v1246
        %1596 = vst.msk [vmem:[#allocation2 + $0x1b8] sm:$0xff] %vm1540, %v1249
        %1597 = vst.msk [vmem:[#allocation2 + $0x1c0] sm:$0xff] %vm1540, %v1254
        %1598 = vst.msk [vmem:[#allocation2 + $0x1c8] sm:$0xff] %vm1540, %v1257
        %1599 = vst.msk [vmem:[#allocation2 + $0x1d0] sm:$0xff] %vm1540, %v1262
        %1600 = vst.msk [vmem:[#allocation2 + $0x1d8] sm:$0xff] %vm1540, %v1265
        %1601 = vst.msk [vmem:[#allocation2 + $0x1e0] sm:$0xff] %vm1540, %v1270
        %1602 = vst.msk [vmem:[#allocation2 + $0x1e8] sm:$0xff] %vm1540, %v1273
        %1603 = vst.msk [vmem:[#allocation2 + $0x1f0] sm:$0xff] %vm1540, %v1278
        %1604 = vst.msk [vmem:[#allocation2 + $0x1f8] sm:$0xff] %vm1540, %v1281
        %1605 = vst.msk [vmem:[#allocation2 + $0x200] sm:$0xff] %vm1540, %v1286
        %1606 = vst.msk [vmem:[#allocation2 + $0x208] sm:$0xff] %vm1540, %v1289
        %1607 = vst.msk [vmem:[#allocation2 + $0x210] sm:$0xff] %vm1540, %v1294
        %1608 = vst.msk [vmem:[#allocation2 + $0x218] sm:$0xff] %vm1540, %v1297
        %1609 = vst.msk [vmem:[#allocation2 + $0x220] sm:$0xff] %vm1540, %v1302
        %1610 = vst.msk [vmem:[#allocation2 + $0x228] sm:$0xff] %vm1540, %v1305
        %1611 = vst.msk [vmem:[#allocation2 + $0x230] sm:$0xff] %vm1540, %v1310
        %1612 = vst.msk [vmem:[#allocation2 + $0x238] sm:$0xff] %vm1540, %v1313
        %1613 = vst.msk [vmem:[#allocation2 + $0x240] sm:$0xff] %vm1540, %v1318
        %1614 = vst.msk [vmem:[#allocation2 + $0x248] sm:$0xff] %vm1540, %v1321
        %1615 = vst.msk [vmem:[#allocation2 + $0x250] sm:$0xff] %vm1540, %v1326
        %1616 = vst.msk [vmem:[#allocation2 + $0x258] sm:$0xff] %vm1540, %v1329
        %1617 = vst.msk [vmem:[#allocation2 + $0x260] sm:$0xff] %vm1540, %v1334
        %1618 = vst.msk [vmem:[#allocation2 + $0x268] sm:$0xff] %vm1540, %v1337
        %1619 = vst.msk [vmem:[#allocation2 + $0x270] sm:$0xff] %vm1540, %v1342
        %1620 = vst.msk [vmem:[#allocation2 + $0x278] sm:$0xff] %vm1540, %v1345
        %1621 = vst.msk [vmem:[#allocation2 + $0x280] sm:$0xff] %vm1540, %v1350
        %1622 = vst.msk [vmem:[#allocation2 + $0x288] sm:$0xff] %vm1540, %v1353
        %1623 = vst.msk [vmem:[#allocation2 + $0x290] sm:$0xff] %vm1540, %v1358
        %1624 = vst.msk [vmem:[#allocation2 + $0x298] sm:$0xff] %vm1540, %v1361
        %1625 = vst.msk [vmem:[#allocation2 + $0x2a0] sm:$0xff] %vm1540, %v1366
        %1626 = vst.msk [vmem:[#allocation2 + $0x2a8] sm:$0xff] %vm1540, %v1369
        %1627 = vst.msk [vmem:[#allocation2 + $0x2b0] sm:$0xff] %vm1540, %v1374
        %1628 = vst.msk [vmem:[#allocation2 + $0x2b8] sm:$0xff] %vm1540, %v1377
        %1629 = vst.msk [vmem:[#allocation2 + $0x2c0] sm:$0xff] %vm1540, %v1382
        %1630 = vst.msk [vmem:[#allocation2 + $0x2c8] sm:$0xff] %vm1540, %v1385
        %1631 = vst.msk [vmem:[#allocation2 + $0x2d0] sm:$0xff] %vm1540, %v1390
        %1632 = vst.msk [vmem:[#allocation2 + $0x2d8] sm:$0xff] %vm1540, %v1393
        %1633 = vst.msk [vmem:[#allocation2 + $0x2e0] sm:$0xff] %vm1540, %v1398
        %1634 = vst.msk [vmem:[#allocation2 + $0x2e8] sm:$0xff] %vm1540, %v1401
        %1635 = vst.msk [vmem:[#allocation2 + $0x2f0] sm:$0xff] %vm1540, %v1406
        %1636 = vst.msk [vmem:[#allocation2 + $0x2f8] sm:$0xff] %vm1540, %v1409
        %1637 = vst.msk [vmem:[#allocation2 + $0x300] sm:$0xff] %vm1540, %v1414
        %1638 = vst.msk [vmem:[#allocation2 + $0x308] sm:$0xff] %vm1540, %v1417
        %1639 = vst.msk [vmem:[#allocation2 + $0x310] sm:$0xff] %vm1540, %v1422
        %1640 = vst.msk [vmem:[#allocation2 + $0x318] sm:$0xff] %vm1540, %v1425
        %1641 = vst.msk [vmem:[#allocation2 + $0x320] sm:$0xff] %vm1540, %v1430
        %1642 = vst.msk [vmem:[#allocation2 + $0x328] sm:$0xff] %vm1540, %v1433
        %1643 = vst.msk [vmem:[#allocation2 + $0x330] sm:$0xff] %vm1540, %v1438
        %1644 = vst.msk [vmem:[#allocation2 + $0x338] sm:$0xff] %vm1540, %v1441
        %1645 = vst.msk [vmem:[#allocation2 + $0x340] sm:$0xff] %vm1540, %v1446
        %1646 = vst.msk [vmem:[#allocation2 + $0x348] sm:$0xff] %vm1540, %v1449
        %1647 = vst.msk [vmem:[#allocation2 + $0x350] sm:$0xff] %vm1540, %v1454
        %1648 = vst.msk [vmem:[#allocation2 + $0x358] sm:$0xff] %vm1540, %v1457
        %1649 = vst.msk [vmem:[#allocation2 + $0x360] sm:$0xff] %vm1540, %v1462
        %1650 = vst.msk [vmem:[#allocation2 + $0x368] sm:$0xff] %vm1540, %v1465
        %1651 = vst.msk [vmem:[#allocation2 + $0x370] sm:$0xff] %vm1540, %v1470
        %1652 = vst.msk [vmem:[#allocation2 + $0x378] sm:$0xff] %vm1540, %v1473
        %1653 = vst.msk [vmem:[#allocation2 + $0x380] sm:$0xff] %vm1540, %v1478
        %1654 = vst.msk [vmem:[#allocation2 + $0x388] sm:$0xff] %vm1540, %v1481
        %1655 = vst.msk [vmem:[#allocation2 + $0x390] sm:$0xff] %vm1540, %v1486
        %1656 = vst.msk [vmem:[#allocation2 + $0x398] sm:$0xff] %vm1540, %v1489
        %1657 = vst.msk [vmem:[#allocation2 + $0x3a0] sm:$0xff] %vm1540, %v1494
        %1658 = vst.msk [vmem:[#allocation2 + $0x3a8] sm:$0xff] %vm1540, %v1497
        %1659 = vst.msk [vmem:[#allocation2 + $0x3b0] sm:$0xff] %vm1540, %v1502
        %1660 = vst.msk [vmem:[#allocation2 + $0x3b8] sm:$0xff] %vm1540, %v1505
        %1661 = vst.msk [vmem:[#allocation2 + $0x3c0] sm:$0xff] %vm1540, %v1510
        %1662 = vst.msk [vmem:[#allocation2 + $0x3c8] sm:$0xff] %vm1540, %v1513
        %1663 = vst.msk [vmem:[#allocation2 + $0x3d0] sm:$0xff] %vm1540, %v1518
        %1664 = vst.msk [vmem:[#allocation2 + $0x3d8] sm:$0xff] %vm1540, %v1521
        %1665 = vst.msk [vmem:[#allocation2 + $0x3e0] sm:$0xff] %vm1540, %v1526
        %1666 = vst.msk [vmem:[#allocation2 + $0x3e8] sm:$0xff] %vm1540, %v1529
        %1667 = vst.msk [vmem:[#allocation2 + $0x3f0] sm:$0xff] %vm1540, %v1534
        %1668 = vst.msk [vmem:[#allocation2 + $0x3f8] sm:$0xff] %vm1540, %v1537
        %v1669 = vld [vmem:[#allocation2] ss:$2 sm:$0xff]
        %s1670 = scalar_lea.vmem [#allocation2], 16
        %v1671 = vld [vmem:[%s1670] ss:$2 sm:$0xff]
        %s1672 = scalar_lea.vmem [#allocation2], 32
        %v1673 = vld [vmem:[%s1672] ss:$2 sm:$0xff]
        %s1674 = scalar_lea.vmem [#allocation2], 48
        %v1675 = vld [vmem:[%s1674] ss:$2 sm:$0xff]
        %s1676 = scalar_lea.vmem [#allocation2], 64
        %v1677 = vld [vmem:[%s1676] ss:$2 sm:$0xff]
        %s1678 = scalar_lea.vmem [#allocation2], 80
        %v1679 = vld [vmem:[%s1678] ss:$2 sm:$0xff]
        %s1680 = scalar_lea.vmem [#allocation2], 96
        %v1681 = vld [vmem:[%s1680] ss:$2 sm:$0xff]
        %s1682 = scalar_lea.vmem [#allocation2], 112
        %v1683 = vld [vmem:[%s1682] ss:$2 sm:$0xff]
        %s1684 = scalar_lea.vmem [#allocation2], 128
        %v1685 = vld [vmem:[%s1684] ss:$2 sm:$0xff]
        %s1686 = scalar_lea.vmem [#allocation2], 144
        %v1687 = vld [vmem:[%s1686] ss:$2 sm:$0xff]
        %s1688 = scalar_lea.vmem [#allocation2], 160
        %v1689 = vld [vmem:[%s1688] ss:$2 sm:$0xff]
        %s1690 = scalar_lea.vmem [#allocation2], 176
        %v1691 = vld [vmem:[%s1690] ss:$2 sm:$0xff]
        %s1692 = scalar_lea.vmem [#allocation2], 192
        %v1693 = vld [vmem:[%s1692] ss:$2 sm:$0xff]
        %s1694 = scalar_lea.vmem [#allocation2], 208
        %v1695 = vld [vmem:[%s1694] ss:$2 sm:$0xff]
        %s1696 = scalar_lea.vmem [#allocation2], 224
        %v1697 = vld [vmem:[%s1696] ss:$2 sm:$0xff]
        %s1698 = scalar_lea.vmem [#allocation2], 240
        %v1699 = vld [vmem:[%s1698] ss:$2 sm:$0xff]
        %s1700 = scalar_lea.vmem [#allocation2], 256
        %v1701 = vld [vmem:[%s1700] ss:$2 sm:$0xff]
        %s1702 = scalar_lea.vmem [#allocation2], 272
        %v1703 = vld [vmem:[%s1702] ss:$2 sm:$0xff]
        %s1704 = scalar_lea.vmem [#allocation2], 288
        %v1705 = vld [vmem:[%s1704] ss:$2 sm:$0xff]
        %s1706 = scalar_lea.vmem [#allocation2], 304
        %v1707 = vld [vmem:[%s1706] ss:$2 sm:$0xff]
        %s1708 = scalar_lea.vmem [#allocation2], 320
        %v1709 = vld [vmem:[%s1708] ss:$2 sm:$0xff]
        %s1710 = scalar_lea.vmem [#allocation2], 336
        %v1711 = vld [vmem:[%s1710] ss:$2 sm:$0xff]
        %s1712 = scalar_lea.vmem [#allocation2], 352
        %v1713 = vld [vmem:[%s1712] ss:$2 sm:$0xff]
        %s1714 = scalar_lea.vmem [#allocation2], 368
        %v1715 = vld [vmem:[%s1714] ss:$2 sm:$0xff]
        %s1716 = scalar_lea.vmem [#allocation2], 384
        %v1717 = vld [vmem:[%s1716] ss:$2 sm:$0xff]
        %s1718 = scalar_lea.vmem [#allocation2], 400
        %v1719 = vld [vmem:[%s1718] ss:$2 sm:$0xff]
        %s1720 = scalar_lea.vmem [#allocation2], 416
        %v1721 = vld [vmem:[%s1720] ss:$2 sm:$0xff]
        %s1722 = scalar_lea.vmem [#allocation2], 432
        %v1723 = vld [vmem:[%s1722] ss:$2 sm:$0xff]
        %s1724 = scalar_lea.vmem [#allocation2], 448
        %v1725 = vld [vmem:[%s1724] ss:$2 sm:$0xff]
        %s1726 = scalar_lea.vmem [#allocation2], 464
        %v1727 = vld [vmem:[%s1726] ss:$2 sm:$0xff]
        %s1728 = scalar_lea.vmem [#allocation2], 480
        %v1729 = vld [vmem:[%s1728] ss:$2 sm:$0xff]
        %s1730 = scalar_lea.vmem [#allocation2], 496
        %v1731 = vld [vmem:[%s1730] ss:$2 sm:$0xff]
        %s1732 = scalar_lea.vmem [#allocation2], 512
        %v1733 = vld [vmem:[%s1732] ss:$2 sm:$0xff]
        %s1734 = scalar_lea.vmem [#allocation2], 528
        %v1735 = vld [vmem:[%s1734] ss:$2 sm:$0xff]
        %s1736 = scalar_lea.vmem [#allocation2], 544
        %v1737 = vld [vmem:[%s1736] ss:$2 sm:$0xff]
        %s1738 = scalar_lea.vmem [#allocation2], 560
        %v1739 = vld [vmem:[%s1738] ss:$2 sm:$0xff]
        %s1740 = scalar_lea.vmem [#allocation2], 576
        %v1741 = vld [vmem:[%s1740] ss:$2 sm:$0xff]
        %s1742 = scalar_lea.vmem [#allocation2], 592
        %v1743 = vld [vmem:[%s1742] ss:$2 sm:$0xff]
        %s1744 = scalar_lea.vmem [#allocation2], 608
        %v1745 = vld [vmem:[%s1744] ss:$2 sm:$0xff]
        %s1746 = scalar_lea.vmem [#allocation2], 624
        %v1747 = vld [vmem:[%s1746] ss:$2 sm:$0xff]
        %s1748 = scalar_lea.vmem [#allocation2], 640
        %v1749 = vld [vmem:[%s1748] ss:$2 sm:$0xff]
        %s1750 = scalar_lea.vmem [#allocation2], 656
        %v1751 = vld [vmem:[%s1750] ss:$2 sm:$0xff]
        %s1752 = scalar_lea.vmem [#allocation2], 672
        %v1753 = vld [vmem:[%s1752] ss:$2 sm:$0xff]
        %s1754 = scalar_lea.vmem [#allocation2], 688
        %v1755 = vld [vmem:[%s1754] ss:$2 sm:$0xff]
        %s1756 = scalar_lea.vmem [#allocation2], 704
        %v1757 = vld [vmem:[%s1756] ss:$2 sm:$0xff]
        %s1758 = scalar_lea.vmem [#allocation2], 720
        %v1759 = vld [vmem:[%s1758] ss:$2 sm:$0xff]
        %s1760 = scalar_lea.vmem [#allocation2], 736
        %v1761 = vld [vmem:[%s1760] ss:$2 sm:$0xff]
        %s1762 = scalar_lea.vmem [#allocation2], 752
        %v1763 = vld [vmem:[%s1762] ss:$2 sm:$0xff]
        %s1764 = scalar_lea.vmem [#allocation2], 768
        %v1765 = vld [vmem:[%s1764] ss:$2 sm:$0xff]
        %s1766 = scalar_lea.vmem [#allocation2], 784
        %v1767 = vld [vmem:[%s1766] ss:$2 sm:$0xff]
        %s1768 = scalar_lea.vmem [#allocation2], 800
        %v1769 = vld [vmem:[%s1768] ss:$2 sm:$0xff]
        %s1770 = scalar_lea.vmem [#allocation2], 816
        %v1771 = vld [vmem:[%s1770] ss:$2 sm:$0xff]
        %s1772 = scalar_lea.vmem [#allocation2], 832
        %v1773 = vld [vmem:[%s1772] ss:$2 sm:$0xff]
        %s1774 = scalar_lea.vmem [#allocation2], 848
        %v1775 = vld [vmem:[%s1774] ss:$2 sm:$0xff]
        %s1776 = scalar_lea.vmem [#allocation2], 864
        %v1777 = vld [vmem:[%s1776] ss:$2 sm:$0xff]
        %s1778 = scalar_lea.vmem [#allocation2], 880
        %v1779 = vld [vmem:[%s1778] ss:$2 sm:$0xff]
        %s1780 = scalar_lea.vmem [#allocation2], 896
        %v1781 = vld [vmem:[%s1780] ss:$2 sm:$0xff]
        %s1782 = scalar_lea.vmem [#allocation2], 912
        %v1783 = vld [vmem:[%s1782] ss:$2 sm:$0xff]
        %s1784 = scalar_lea.vmem [#allocation2], 928
        %v1785 = vld [vmem:[%s1784] ss:$2 sm:$0xff]
        %s1786 = scalar_lea.vmem [#allocation2], 944
        %v1787 = vld [vmem:[%s1786] ss:$2 sm:$0xff]
        %s1788 = scalar_lea.vmem [#allocation2], 960
        %v1789 = vld [vmem:[%s1788] ss:$2 sm:$0xff]
        %s1790 = scalar_lea.vmem [#allocation2], 976
        %v1791 = vld [vmem:[%s1790] ss:$2 sm:$0xff]
        %s1792 = scalar_lea.vmem [#allocation2], 992
        %v1793 = vld [vmem:[%s1792] ss:$2 sm:$0xff]
        %s1794 = scalar_lea.vmem [#allocation2], 1008
        %v1795 = vld [vmem:[%s1794] ss:$2 sm:$0xff]
        %s1796 = scalar_lea.vmem [#allocation2], 1
        %v1797 = vld [vmem:[%s1796] ss:$2 sm:$0xff]
        %s1798 = scalar_lea.vmem [#allocation2], 17
        %v1799 = vld [vmem:[%s1798] ss:$2 sm:$0xff]
        %s1800 = scalar_lea.vmem [#allocation2], 33
        %v1801 = vld [vmem:[%s1800] ss:$2 sm:$0xff]
        %s1802 = scalar_lea.vmem [#allocation2], 49
        %v1803 = vld [vmem:[%s1802] ss:$2 sm:$0xff]
        %s1804 = scalar_lea.vmem [#allocation2], 65
        %v1805 = vld [vmem:[%s1804] ss:$2 sm:$0xff]
        %s1806 = scalar_lea.vmem [#allocation2], 81
        %v1807 = vld [vmem:[%s1806] ss:$2 sm:$0xff]
        %s1808 = scalar_lea.vmem [#allocation2], 97
        %v1809 = vld [vmem:[%s1808] ss:$2 sm:$0xff]
        %s1810 = scalar_lea.vmem [#allocation2], 113
        %v1811 = vld [vmem:[%s1810] ss:$2 sm:$0xff]
        %s1812 = scalar_lea.vmem [#allocation2], 129
        %v1813 = vld [vmem:[%s1812] ss:$2 sm:$0xff]
        %s1814 = scalar_lea.vmem [#allocation2], 145
        %v1815 = vld [vmem:[%s1814] ss:$2 sm:$0xff]
        %s1816 = scalar_lea.vmem [#allocation2], 161
        %v1817 = vld [vmem:[%s1816] ss:$2 sm:$0xff]
        %s1818 = scalar_lea.vmem [#allocation2], 177
        %v1819 = vld [vmem:[%s1818] ss:$2 sm:$0xff]
        %s1820 = scalar_lea.vmem [#allocation2], 193
        %v1821 = vld [vmem:[%s1820] ss:$2 sm:$0xff]
        %s1822 = scalar_lea.vmem [#allocation2], 209
        %v1823 = vld [vmem:[%s1822] ss:$2 sm:$0xff]
        %s1824 = scalar_lea.vmem [#allocation2], 225
        %v1825 = vld [vmem:[%s1824] ss:$2 sm:$0xff]
        %s1826 = scalar_lea.vmem [#allocation2], 241
        %v1827 = vld [vmem:[%s1826] ss:$2 sm:$0xff]
        %s1828 = scalar_lea.vmem [#allocation2], 257
        %v1829 = vld [vmem:[%s1828] ss:$2 sm:$0xff]
        %s1830 = scalar_lea.vmem [#allocation2], 273
        %v1831 = vld [vmem:[%s1830] ss:$2 sm:$0xff]
        %s1832 = scalar_lea.vmem [#allocation2], 289
        %v1833 = vld [vmem:[%s1832] ss:$2 sm:$0xff]
        %s1834 = scalar_lea.vmem [#allocation2], 305
        %v1835 = vld [vmem:[%s1834] ss:$2 sm:$0xff]
        %s1836 = scalar_lea.vmem [#allocation2], 321
        %v1837 = vld [vmem:[%s1836] ss:$2 sm:$0xff]
        %s1838 = scalar_lea.vmem [#allocation2], 337
        %v1839 = vld [vmem:[%s1838] ss:$2 sm:$0xff]
        %s1840 = scalar_lea.vmem [#allocation2], 353
        %v1841 = vld [vmem:[%s1840] ss:$2 sm:$0xff]
        %s1842 = scalar_lea.vmem [#allocation2], 369
        %v1843 = vld [vmem:[%s1842] ss:$2 sm:$0xff]
        %s1844 = scalar_lea.vmem [#allocation2], 385
        %v1845 = vld [vmem:[%s1844] ss:$2 sm:$0xff]
        %s1846 = scalar_lea.vmem [#allocation2], 401
        %v1847 = vld [vmem:[%s1846] ss:$2 sm:$0xff]
        %s1848 = scalar_lea.vmem [#allocation2], 417
        %v1849 = vld [vmem:[%s1848] ss:$2 sm:$0xff]
        %s1850 = scalar_lea.vmem [#allocation2], 433
        %v1851 = vld [vmem:[%s1850] ss:$2 sm:$0xff]
        %s1852 = scalar_lea.vmem [#allocation2], 449
        %v1853 = vld [vmem:[%s1852] ss:$2 sm:$0xff]
        %s1854 = scalar_lea.vmem [#allocation2], 465
        %v1855 = vld [vmem:[%s1854] ss:$2 sm:$0xff]
        %s1856 = scalar_lea.vmem [#allocation2], 481
        %v1857 = vld [vmem:[%s1856] ss:$2 sm:$0xff]
        %s1858 = scalar_lea.vmem [#allocation2], 497
        %v1859 = vld [vmem:[%s1858] ss:$2 sm:$0xff]
        %s1860 = scalar_lea.vmem [#allocation2], 513
        %v1861 = vld [vmem:[%s1860] ss:$2 sm:$0xff]
        %s1862 = scalar_lea.vmem [#allocation2], 529
        %v1863 = vld [vmem:[%s1862] ss:$2 sm:$0xff]
        %s1864 = scalar_lea.vmem [#allocation2], 545
        %v1865 = vld [vmem:[%s1864] ss:$2 sm:$0xff]
        %s1866 = scalar_lea.vmem [#allocation2], 561
        %v1867 = vld [vmem:[%s1866] ss:$2 sm:$0xff]
        %s1868 = scalar_lea.vmem [#allocation2], 577
        %v1869 = vld [vmem:[%s1868] ss:$2 sm:$0xff]
        %s1870 = scalar_lea.vmem [#allocation2], 593
        %v1871 = vld [vmem:[%s1870] ss:$2 sm:$0xff]
        %s1872 = scalar_lea.vmem [#allocation2], 609
        %v1873 = vld [vmem:[%s1872] ss:$2 sm:$0xff]
        %s1874 = scalar_lea.vmem [#allocation2], 625
        %v1875 = vld [vmem:[%s1874] ss:$2 sm:$0xff]
        %s1876 = scalar_lea.vmem [#allocation2], 641
        %v1877 = vld [vmem:[%s1876] ss:$2 sm:$0xff]
        %s1878 = scalar_lea.vmem [#allocation2], 657
        %v1879 = vld [vmem:[%s1878] ss:$2 sm:$0xff]
        %s1880 = scalar_lea.vmem [#allocation2], 673
        %v1881 = vld [vmem:[%s1880] ss:$2 sm:$0xff]
        %s1882 = scalar_lea.vmem [#allocation2], 689
        %v1883 = vld [vmem:[%s1882] ss:$2 sm:$0xff]
        %s1884 = scalar_lea.vmem [#allocation2], 705
        %v1885 = vld [vmem:[%s1884] ss:$2 sm:$0xff]
        %s1886 = scalar_lea.vmem [#allocation2], 721
        %v1887 = vld [vmem:[%s1886] ss:$2 sm:$0xff]
        %s1888 = scalar_lea.vmem [#allocation2], 737
        %v1889 = vld [vmem:[%s1888] ss:$2 sm:$0xff]
        %s1890 = scalar_lea.vmem [#allocation2], 753
        %v1891 = vld [vmem:[%s1890] ss:$2 sm:$0xff]
        %s1892 = scalar_lea.vmem [#allocation2], 769
        %v1893 = vld [vmem:[%s1892] ss:$2 sm:$0xff]
        %s1894 = scalar_lea.vmem [#allocation2], 785
        %v1895 = vld [vmem:[%s1894] ss:$2 sm:$0xff]
        %s1896 = scalar_lea.vmem [#allocation2], 801
        %v1897 = vld [vmem:[%s1896] ss:$2 sm:$0xff]
        %s1898 = scalar_lea.vmem [#allocation2], 817
        %v1899 = vld [vmem:[%s1898] ss:$2 sm:$0xff]
        %s1900 = scalar_lea.vmem [#allocation2], 833
        %v1901 = vld [vmem:[%s1900] ss:$2 sm:$0xff]
        %s1902 = scalar_lea.vmem [#allocation2], 849
        %v1903 = vld [vmem:[%s1902] ss:$2 sm:$0xff]
        %s1904 = scalar_lea.vmem [#allocation2], 865
        %v1905 = vld [vmem:[%s1904] ss:$2 sm:$0xff]
        %s1906 = scalar_lea.vmem [#allocation2], 881
        %v1907 = vld [vmem:[%s1906] ss:$2 sm:$0xff]
        %s1908 = scalar_lea.vmem [#allocation2], 897
        %v1909 = vld [vmem:[%s1908] ss:$2 sm:$0xff]
        %s1910 = scalar_lea.vmem [#allocation2], 913
        %v1911 = vld [vmem:[%s1910] ss:$2 sm:$0xff]
        %s1912 = scalar_lea.vmem [#allocation2], 929
        %v1913 = vld [vmem:[%s1912] ss:$2 sm:$0xff]
        %s1914 = scalar_lea.vmem [#allocation2], 945
        %v1915 = vld [vmem:[%s1914] ss:$2 sm:$0xff]
        %s1916 = scalar_lea.vmem [#allocation2], 961
        %v1917 = vld [vmem:[%s1916] ss:$2 sm:$0xff]
        %s1918 = scalar_lea.vmem [#allocation2], 977
        %v1919 = vld [vmem:[%s1918] ss:$2 sm:$0xff]
        %s1920 = scalar_lea.vmem [#allocation2], 993
        %v1921 = vld [vmem:[%s1920] ss:$2 sm:$0xff]
        %s1922 = scalar_lea.vmem [#allocation2], 1009
        %v1923 = vld [vmem:[%s1922] ss:$2 sm:$0xff]
        %v1924 = vmax.f32 %v1669, %v1797
        %v1925 = vmax.f32 %v1671, %v1799
        %v1926 = vmax.f32 %v1673, %v1801
        %v1927 = vmax.f32 %v1675, %v1803
        %v1928 = vmax.f32 %v1677, %v1805
        %v1929 = vmax.f32 %v1679, %v1807
        %v1930 = vmax.f32 %v1681, %v1809
        %v1931 = vmax.f32 %v1683, %v1811
        %v1932 = vmax.f32 %v1685, %v1813
        %v1933 = vmax.f32 %v1687, %v1815
        %v1934 = vmax.f32 %v1689, %v1817
        %v1935 = vmax.f32 %v1691, %v1819
        %v1936 = vmax.f32 %v1693, %v1821
        %v1937 = vmax.f32 %v1695, %v1823
        %v1938 = vmax.f32 %v1697, %v1825
        %v1939 = vmax.f32 %v1699, %v1827
        %v1940 = vmax.f32 %v1701, %v1829
        %v1941 = vmax.f32 %v1703, %v1831
        %v1942 = vmax.f32 %v1705, %v1833
        %v1943 = vmax.f32 %v1707, %v1835
        %v1944 = vmax.f32 %v1709, %v1837
        %v1945 = vmax.f32 %v1711, %v1839
        %v1946 = vmax.f32 %v1713, %v1841
        %v1947 = vmax.f32 %v1715, %v1843
        %v1948 = vmax.f32 %v1717, %v1845
        %v1949 = vmax.f32 %v1719, %v1847
        %v1950 = vmax.f32 %v1721, %v1849
        %v1951 = vmax.f32 %v1723, %v1851
        %v1952 = vmax.f32 %v1725, %v1853
        %v1953 = vmax.f32 %v1727, %v1855
        %v1954 = vmax.f32 %v1729, %v1857
        %v1955 = vmax.f32 %v1731, %v1859
        %v1956 = vmax.f32 %v1733, %v1861
        %v1957 = vmax.f32 %v1735, %v1863
        %v1958 = vmax.f32 %v1737, %v1865
        %v1959 = vmax.f32 %v1739, %v1867
        %v1960 = vmax.f32 %v1741, %v1869
        %v1961 = vmax.f32 %v1743, %v1871
        %v1962 = vmax.f32 %v1745, %v1873
        %v1963 = vmax.f32 %v1747, %v1875
        %v1964 = vmax.f32 %v1749, %v1877
        %v1965 = vmax.f32 %v1751, %v1879
        %v1966 = vmax.f32 %v1753, %v1881
        %v1967 = vmax.f32 %v1755, %v1883
        %v1968 = vmax.f32 %v1757, %v1885
        %v1969 = vmax.f32 %v1759, %v1887
        %v1970 = vmax.f32 %v1761, %v1889
        %v1971 = vmax.f32 %v1763, %v1891
        %v1972 = vmax.f32 %v1765, %v1893
        %v1973 = vmax.f32 %v1767, %v1895
        %v1974 = vmax.f32 %v1769, %v1897
        %v1975 = vmax.f32 %v1771, %v1899
        %v1976 = vmax.f32 %v1773, %v1901
        %v1977 = vmax.f32 %v1775, %v1903
        %v1978 = vmax.f32 %v1777, %v1905
        %v1979 = vmax.f32 %v1779, %v1907
        %v1980 = vmax.f32 %v1781, %v1909
        %v1981 = vmax.f32 %v1783, %v1911
        %v1982 = vmax.f32 %v1785, %v1913
        %v1983 = vmax.f32 %v1787, %v1915
        %v1984 = vmax.f32 %v1789, %v1917
        %v1985 = vmax.f32 %v1791, %v1919
        %v1986 = vmax.f32 %v1793, %v1921
        %v1987 = vmax.f32 %v1795, %v1923
        %v1988 = vmax.f32 %v1924, %v1926
        %v1989 = vmax.f32 %v1925, %v1927
        %v1990 = vmax.f32 %v1928, %v1930
        %v1991 = vmax.f32 %v1929, %v1931
        %v1992 = vmax.f32 %v1932, %v1934
        %v1993 = vmax.f32 %v1933, %v1935
        %v1994 = vmax.f32 %v1936, %v1938
        %v1995 = vmax.f32 %v1937, %v1939
        %v1996 = vmax.f32 %v1940, %v1942
        %v1997 = vmax.f32 %v1941, %v1943
        %v1998 = vmax.f32 %v1944, %v1946
        %v1999 = vmax.f32 %v1945, %v1947
        %v2000 = vmax.f32 %v1948, %v1950
        %v2001 = vmax.f32 %v1949, %v1951
        %v2002 = vmax.f32 %v1952, %v1954
        %v2003 = vmax.f32 %v1953, %v1955
        %v2004 = vmax.f32 %v1956, %v1958
        %v2005 = vmax.f32 %v1957, %v1959
        %v2006 = vmax.f32 %v1960, %v1962
        %v2007 = vmax.f32 %v1961, %v1963
        %v2008 = vmax.f32 %v1964, %v1966
        %v2009 = vmax.f32 %v1965, %v1967
        %v2010 = vmax.f32 %v1968, %v1970
        %v2011 = vmax.f32 %v1969, %v1971
        %v2012 = vmax.f32 %v1972, %v1974
        %v2013 = vmax.f32 %v1973, %v1975
        %v2014 = vmax.f32 %v1976, %v1978
        %v2015 = vmax.f32 %v1977, %v1979
        %v2016 = vmax.f32 %v1980, %v1982
        %v2017 = vmax.f32 %v1981, %v1983
        %v2018 = vmax.f32 %v1984, %v1986
        %v2019 = vmax.f32 %v1985, %v1987
        %v2020 = vld [vmem:[%s2] sm:$0x1]
        %v2022 = vlaneseq
        %v2023 = vshrl.u32 %v2022, 7
        %v2024 = vsub.s32 0, %v2023
        %v2025 = vrot.slane %v2020, %v2024
        %v2027 = vadd.f32 %v1988, %v2025
        %v2028 = vadd.f32 %v1989, %v2025
        %v2029 = vadd.f32 %v1990, %v2025
        %v2030 = vadd.f32 %v1991, %v2025
        %v2031 = vadd.f32 %v1992, %v2025
        %v2032 = vadd.f32 %v1993, %v2025
        %v2033 = vadd.f32 %v1994, %v2025
        %v2034 = vadd.f32 %v1995, %v2025
        %v2035 = vadd.f32 %v1996, %v2025
        %v2036 = vadd.f32 %v1997, %v2025
        %v2037 = vadd.f32 %v1998, %v2025
        %v2038 = vadd.f32 %v1999, %v2025
        %v2039 = vadd.f32 %v2000, %v2025
        %v2040 = vadd.f32 %v2001, %v2025
        %v2041 = vadd.f32 %v2002, %v2025
        %v2042 = vadd.f32 %v2003, %v2025
        %v2043 = vadd.f32 %v2004, %v2025
        %v2044 = vadd.f32 %v2005, %v2025
        %v2045 = vadd.f32 %v2006, %v2025
        %v2046 = vadd.f32 %v2007, %v2025
        %v2047 = vadd.f32 %v2008, %v2025
        %v2048 = vadd.f32 %v2009, %v2025
        %v2049 = vadd.f32 %v2010, %v2025
        %v2050 = vadd.f32 %v2011, %v2025
        %v2051 = vadd.f32 %v2012, %v2025
        %v2052 = vadd.f32 %v2013, %v2025
        %v2053 = vadd.f32 %v2014, %v2025
        %v2054 = vadd.f32 %v2015, %v2025
        %v2055 = vadd.f32 %v2016, %v2025
        %v2056 = vadd.f32 %v2017, %v2025
        %v2057 = vadd.f32 %v2018, %v2025
        %v2058 = vadd.f32 %v2019, %v2025
        %v2059 = vmax.f32 %v2027, 0.0
        %v2060 = vmax.f32 %v2028, 0.0
        %v2061 = vmax.f32 %v2029, 0.0
        %v2062 = vmax.f32 %v2030, 0.0
        %v2063 = vmax.f32 %v2031, 0.0
        %v2064 = vmax.f32 %v2032, 0.0
        %v2065 = vmax.f32 %v2033, 0.0
        %v2066 = vmax.f32 %v2034, 0.0
        %v2067 = vmax.f32 %v2035, 0.0
        %v2068 = vmax.f32 %v2036, 0.0
        %v2069 = vmax.f32 %v2037, 0.0
        %v2070 = vmax.f32 %v2038, 0.0
        %v2071 = vmax.f32 %v2039, 0.0
        %v2072 = vmax.f32 %v2040, 0.0
        %v2073 = vmax.f32 %v2041, 0.0
        %v2074 = vmax.f32 %v2042, 0.0
        %v2075 = vmax.f32 %v2043, 0.0
        %v2076 = vmax.f32 %v2044, 0.0
        %v2077 = vmax.f32 %v2045, 0.0
        %v2078 = vmax.f32 %v2046, 0.0
        %v2079 = vmax.f32 %v2047, 0.0
        %v2080 = vmax.f32 %v2048, 0.0
        %v2081 = vmax.f32 %v2049, 0.0
        %v2082 = vmax.f32 %v2050, 0.0
        %v2083 = vmax.f32 %v2051, 0.0
        %v2084 = vmax.f32 %v2052, 0.0
        %v2085 = vmax.f32 %v2053, 0.0
        %v2086 = vmax.f32 %v2054, 0.0
        %v2087 = vmax.f32 %v2055, 0.0
        %v2088 = vmax.f32 %v2056, 0.0
        %v2089 = vmax.f32 %v2057, 0.0
        %v2090 = vmax.f32 %v2058, 0.0
        %2091 = vst.msk [vmem:[#allocation3] sm:$0xff] %vm1540, 0.0
        %2092 = vst.msk [vmem:[#allocation3 + $0x8] sm:$0xff] %vm1540, 0.0
        %vm2093 = vcmask 254976
        %2094 = vst.msk [vmem:[#allocation3 + $0x10] sm:$0x3] %vm2093, 0.0
        %s2095 = scalar_lea.vmem [#allocation3], 408
        %2096 = vst.msk [vmem:[%s2095] sm:$0xff] %vm1540, 0.0
        %2097 = vst.msk [vmem:[%s2095 + $0x8] sm:$0xff] %vm1540, 0.0
        %2098 = vst.msk [vmem:[%s2095 + $0x10] sm:$0x3] %vm2093, 0.0
        %vm2099 = vcmask 253952
        %2100 = vst.msk [vmem:[#allocation3] sm:$0x1] %vm2099, 0.0
        %2101 = vst.msk [vmem:[#allocation3 + $0x18] sm:$0x1] %vm2099, 0.0
        %2102 = vst.msk [vmem:[#allocation3 + $0x30] sm:$0x1] %vm2099, 0.0
        %2103 = vst.msk [vmem:[#allocation3 + $0x48] sm:$0x1] %vm2099, 0.0
        %2104 = vst.msk [vmem:[#allocation3 + $0x60] sm:$0x1] %vm2099, 0.0
        %2105 = vst.msk [vmem:[#allocation3 + $0x78] sm:$0x1] %vm2099, 0.0
        %2106 = vst.msk [vmem:[#allocation3 + $0x90] sm:$0x1] %vm2099, 0.0
        %2107 = vst.msk [vmem:[#allocation3 + $0xa8] sm:$0x1] %vm2099, 0.0
        %2108 = vst.msk [vmem:[#allocation3 + $0xc0] sm:$0x1] %vm2099, 0.0
        %2109 = vst.msk [vmem:[#allocation3 + $0xd8] sm:$0x1] %vm2099, 0.0
        %2110 = vst.msk [vmem:[#allocation3 + $0xf0] sm:$0x1] %vm2099, 0.0
        %2111 = vst.msk [vmem:[#allocation3 + $0x108] sm:$0x1] %vm2099, 0.0
        %2112 = vst.msk [vmem:[#allocation3 + $0x120] sm:$0x1] %vm2099, 0.0
        %2113 = vst.msk [vmem:[#allocation3 + $0x138] sm:$0x1] %vm2099, 0.0
        %2114 = vst.msk [vmem:[#allocation3 + $0x150] sm:$0x1] %vm2099, 0.0
        %2115 = vst.msk [vmem:[#allocation3 + $0x168] sm:$0x1] %vm2099, 0.0
        %2116 = vst.msk [vmem:[#allocation3 + $0x180] sm:$0x1] %vm2099, 0.0
        %2117 = vst.msk [vmem:[#allocation3 + $0x198] sm:$0x1] %vm2099, 0.0
        %2118 = vst.msk [vmem:[#allocation3 + $0x11] sm:$0x1] %vm2099, 0.0
        %2119 = vst.msk [vmem:[#allocation3 + $0x29] sm:$0x1] %vm2099, 0.0
        %2120 = vst.msk [vmem:[#allocation3 + $0x41] sm:$0x1] %vm2099, 0.0
        %2121 = vst.msk [vmem:[#allocation3 + $0x59] sm:$0x1] %vm2099, 0.0
        %2122 = vst.msk [vmem:[#allocation3 + $0x71] sm:$0x1] %vm2099, 0.0
        %2123 = vst.msk [vmem:[#allocation3 + $0x89] sm:$0x1] %vm2099, 0.0
        %2124 = vst.msk [vmem:[#allocation3 + $0xa1] sm:$0x1] %vm2099, 0.0
        %2125 = vst.msk [vmem:[#allocation3 + $0xb9] sm:$0x1] %vm2099, 0.0
        %2126 = vst.msk [vmem:[#allocation3 + $0xd1] sm:$0x1] %vm2099, 0.0
        %2127 = vst.msk [vmem:[#allocation3 + $0xe9] sm:$0x1] %vm2099, 0.0
        %2128 = vst.msk [vmem:[#allocation3 + $0x101] sm:$0x1] %vm2099, 0.0
        %2129 = vst.msk [vmem:[#allocation3 + $0x119] sm:$0x1] %vm2099, 0.0
        %2130 = vst.msk [vmem:[#allocation3 + $0x131] sm:$0x1] %vm2099, 0.0
        %2131 = vst.msk [vmem:[#allocation3 + $0x149] sm:$0x1] %vm2099, 0.0
        %2132 = vst.msk [vmem:[#allocation3 + $0x161] sm:$0x1] %vm2099, 0.0
        %2133 = vst.msk [vmem:[#allocation3 + $0x179] sm:$0x1] %vm2099, 0.0
        %2134 = vst.msk [vmem:[#allocation3 + $0x191] sm:$0x1] %vm2099, 0.0
        %2135 = vst.msk [vmem:[#allocation3 + $0x1a9] sm:$0x1] %vm2099, 0.0
        %s2136 = scalar_lea.vmem [#allocation3], 24
        %2137 = vst.msk [vmem:[%s2136 + $0x1] sm:$0xff] %vm1540, %v2059
        %2138 = vst.msk [vmem:[%s2136 + $0x9] sm:$0xff] %vm1540, %v2060
        %2139 = vst.msk [vmem:[%s2136 + $0x19] sm:$0xff] %vm1540, %v2061
        %2140 = vst.msk [vmem:[%s2136 + $0x21] sm:$0xff] %vm1540, %v2062
        %2141 = vst.msk [vmem:[%s2136 + $0x31] sm:$0xff] %vm1540, %v2063
        %2142 = vst.msk [vmem:[%s2136 + $0x39] sm:$0xff] %vm1540, %v2064
        %2143 = vst.msk [vmem:[%s2136 + $0x49] sm:$0xff] %vm1540, %v2065
        %2144 = vst.msk [vmem:[%s2136 + $0x51] sm:$0xff] %vm1540, %v2066
        %2145 = vst.msk [vmem:[%s2136 + $0x61] sm:$0xff] %vm1540, %v2067
        %2146 = vst.msk [vmem:[%s2136 + $0x69] sm:$0xff] %vm1540, %v2068
        %2147 = vst.msk [vmem:[%s2136 + $0x79] sm:$0xff] %vm1540, %v2069
        %2148 = vst.msk [vmem:[%s2136 + $0x81] sm:$0xff] %vm1540, %v2070
        %2149 = vst.msk [vmem:[%s2136 + $0x91] sm:$0xff] %vm1540, %v2071
        %2150 = vst.msk [vmem:[%s2136 + $0x99] sm:$0xff] %vm1540, %v2072
        %2151 = vst.msk [vmem:[%s2136 + $0xa9] sm:$0xff] %vm1540, %v2073
        %2152 = vst.msk [vmem:[%s2136 + $0xb1] sm:$0xff] %vm1540, %v2074
        %2153 = vst.msk [vmem:[%s2136 + $0xc1] sm:$0xff] %vm1540, %v2075
        %2154 = vst.msk [vmem:[%s2136 + $0xc9] sm:$0xff] %vm1540, %v2076
        %2155 = vst.msk [vmem:[%s2136 + $0xd9] sm:$0xff] %vm1540, %v2077
        %2156 = vst.msk [vmem:[%s2136 + $0xe1] sm:$0xff] %vm1540, %v2078
        %2157 = vst.msk [vmem:[%s2136 + $0xf1] sm:$0xff] %vm1540, %v2079
        %2158 = vst.msk [vmem:[%s2136 + $0xf9] sm:$0xff] %vm1540, %v2080
        %2159 = vst.msk [vmem:[%s2136 + $0x109] sm:$0xff] %vm1540, %v2081
        %2160 = vst.msk [vmem:[%s2136 + $0x111] sm:$0xff] %vm1540, %v2082
        %2161 = vst.msk [vmem:[%s2136 + $0x121] sm:$0xff] %vm1540, %v2083
        %2162 = vst.msk [vmem:[%s2136 + $0x129] sm:$0xff] %vm1540, %v2084
        %2163 = vst.msk [vmem:[%s2136 + $0x139] sm:$0xff] %vm1540, %v2085
        %2164 = vst.msk [vmem:[%s2136 + $0x141] sm:$0xff] %vm1540, %v2086
        %2165 = vst.msk [vmem:[%s2136 + $0x151] sm:$0xff] %vm1540, %v2087
        %2166 = vst.msk [vmem:[%s2136 + $0x159] sm:$0xff] %vm1540, %v2088
        %2167 = vst.msk [vmem:[%s2136 + $0x169] sm:$0xff] %vm1540, %v2089
        %2168 = vst.msk [vmem:[%s2136 + $0x171] sm:$0xff] %vm1540, %v2090
        %v2169 = vld [vmem:[#allocation3] sm:$0xff]
        %v2170 = vld [vmem:[#allocation3 + $0x8] sm:$0xff]
        %v2171 = vld [vmem:[#allocation3 + $0x18] sm:$0xff]
        %v2172 = vld [vmem:[#allocation3 + $0x20] sm:$0xff]
        %v2173 = vld [vmem:[#allocation3 + $0x30] sm:$0xff]
        %v2174 = vld [vmem:[#allocation3 + $0x38] sm:$0xff]
        %v2175 = vld [vmem:[#allocation3 + $0x48] sm:$0xff]
        %v2176 = vld [vmem:[#allocation3 + $0x50] sm:$0xff]
        %v2177 = vld [vmem:[#allocation3 + $0x60] sm:$0xff]
        %v2178 = vld [vmem:[#allocation3 + $0x68] sm:$0xff]
        %v2179 = vld [vmem:[#allocation3 + $0x78] sm:$0xff]
        %v2180 = vld [vmem:[#allocation3 + $0x80] sm:$0xff]
        %v2181 = vld [vmem:[#allocation3 + $0x90] sm:$0xff]
        %v2182 = vld [vmem:[#allocation3 + $0x98] sm:$0xff]
        %v2183 = vld [vmem:[#allocation3 + $0xa8] sm:$0xff]
        %v2184 = vld [vmem:[#allocation3 + $0xb0] sm:$0xff]
        %v2185 = vld [vmem:[#allocation3 + $0xc0] sm:$0xff]
        %v2186 = vld [vmem:[#allocation3 + $0xc8] sm:$0xff]
        %v2187 = vld [vmem:[#allocation3 + $0xd8] sm:$0xff]
        %v2188 = vld [vmem:[#allocation3 + $0xe0] sm:$0xff]
        %v2189 = vld [vmem:[#allocation3 + $0xf0] sm:$0xff]
        %v2190 = vld [vmem:[#allocation3 + $0xf8] sm:$0xff]
        %v2191 = vld [vmem:[#allocation3 + $0x108] sm:$0xff]
        %v2192 = vld [vmem:[#allocation3 + $0x110] sm:$0xff]
        %v2193 = vld [vmem:[#allocation3 + $0x120] sm:$0xff]
        %v2194 = vld [vmem:[#allocation3 + $0x128] sm:$0xff]
        %v2195 = vld [vmem:[#allocation3 + $0x138] sm:$0xff]
        %v2196 = vld [vmem:[#allocation3 + $0x140] sm:$0xff]
        %v2197 = vld [vmem:[#allocation3 + $0x150] sm:$0xff]
        %v2198 = vld [vmem:[#allocation3 + $0x158] sm:$0xff]
        %v2199 = vld [vmem:[#allocation3 + $0x168] sm:$0xff]
        %v2200 = vld [vmem:[#allocation3 + $0x170] sm:$0xff]
        %v2201 = vpack.c.bf16 %v2170, %v2169
        %v2202 = vpack.c.bf16 %v2172, %v2171
        %v2203 = vpack.c.bf16 %v2174, %v2173
        %v2204 = vpack.c.bf16 %v2176, %v2175
        %v2205 = vpack.c.bf16 %v2178, %v2177
        %v2206 = vpack.c.bf16 %v2180, %v2179
        %v2207 = vpack.c.bf16 %v2182, %v2181
        %v2208 = vpack.c.bf16 %v2184, %v2183
        %v2209 = vpack.c.bf16 %v2186, %v2185
        %v2210 = vpack.c.bf16 %v2188, %v2187
        %v2211 = vpack.c.bf16 %v2190, %v2189
        %v2212 = vpack.c.bf16 %v2192, %v2191
        %v2213 = vpack.c.bf16 %v2194, %v2193
        %v2214 = vpack.c.bf16 %v2196, %v2195
        %v2215 = vpack.c.bf16 %v2198, %v2197
        %v2216 = vpack.c.bf16 %v2200, %v2199
        %2217 = vst.msk [vmem:[#allocation4] sm:$0xff] %vm1540, %v2201
        %2218 = vst.msk [vmem:[#allocation4 + $0x18] sm:$0xff] %vm1540, %v2202
        %2219 = vst.msk [vmem:[#allocation4 + $0x30] sm:$0xff] %vm1540, %v2203
        %2220 = vst.msk [vmem:[#allocation4 + $0x48] sm:$0xff] %vm1540, %v2204
        %2221 = vst.msk [vmem:[#allocation4 + $0x60] sm:$0xff] %vm1540, %v2205
        %2222 = vst.msk [vmem:[#allocation4 + $0x78] sm:$0xff] %vm1540, %v2206
        %2223 = vst.msk [vmem:[#allocation4 + $0x90] sm:$0xff] %vm1540, %v2207
        %2224 = vst.msk [vmem:[#allocation4 + $0xa8] sm:$0xff] %vm1540, %v2208
        %2225 = vst.msk [vmem:[#allocation4 + $0xc0] sm:$0xff] %vm1540, %v2209
        %2226 = vst.msk [vmem:[#allocation4 + $0xd8] sm:$0xff] %vm1540, %v2210
        %2227 = vst.msk [vmem:[#allocation4 + $0xf0] sm:$0xff] %vm1540, %v2211
        %2228 = vst.msk [vmem:[#allocation4 + $0x108] sm:$0xff] %vm1540, %v2212
        %2229 = vst.msk [vmem:[#allocation4 + $0x120] sm:$0xff] %vm1540, %v2213
        %2230 = vst.msk [vmem:[#allocation4 + $0x138] sm:$0xff] %vm1540, %v2214
        %2231 = vst.msk [vmem:[#allocation4 + $0x150] sm:$0xff] %vm1540, %v2215
        %2232 = vst.msk [vmem:[#allocation4 + $0x168] sm:$0xff] %vm1540, %v2216
        %v2233 = vld [vmem:[#allocation3 + $0x1] sm:$0xff]
        %v2234 = vld [vmem:[#allocation3 + $0x9] sm:$0xff]
        %v2235 = vld [vmem:[#allocation3 + $0x19] sm:$0xff]
        %v2236 = vld [vmem:[#allocation3 + $0x21] sm:$0xff]
        %v2237 = vld [vmem:[#allocation3 + $0x31] sm:$0xff]
        %v2238 = vld [vmem:[#allocation3 + $0x39] sm:$0xff]
        %v2239 = vld [vmem:[#allocation3 + $0x49] sm:$0xff]
        %v2240 = vld [vmem:[#allocation3 + $0x51] sm:$0xff]
        %v2241 = vld [vmem:[#allocation3 + $0x61] sm:$0xff]
        %v2242 = vld [vmem:[#allocation3 + $0x69] sm:$0xff]
        %v2243 = vld [vmem:[#allocation3 + $0x79] sm:$0xff]
        %v2244 = vld [vmem:[#allocation3 + $0x81] sm:$0xff]
        %v2245 = vld [vmem:[#allocation3 + $0x91] sm:$0xff]
        %v2246 = vld [vmem:[#allocation3 + $0x99] sm:$0xff]
        %v2247 = vld [vmem:[#allocation3 + $0xa9] sm:$0xff]
        %v2248 = vld [vmem:[#allocation3 + $0xb1] sm:$0xff]
        %v2249 = vld [vmem:[#allocation3 + $0xc1] sm:$0xff]
        %v2250 = vld [vmem:[#allocation3 + $0xc9] sm:$0xff]
        %v2251 = vld [vmem:[#allocation3 + $0xd9] sm:$0xff]
        %v2252 = vld [vmem:[#allocation3 + $0xe1] sm:$0xff]
        %v2253 = vld [vmem:[#allocation3 + $0xf1] sm:$0xff]
        %v2254 = vld [vmem:[#allocation3 + $0xf9] sm:$0xff]
        %v2255 = vld [vmem:[#allocation3 + $0x109] sm:$0xff]
        %v2256 = vld [vmem:[#allocation3 + $0x111] sm:$0xff]
        %v2257 = vld [vmem:[#allocation3 + $0x121] sm:$0xff]
        %v2258 = vld [vmem:[#allocation3 + $0x129] sm:$0xff]
        %v2259 = vld [vmem:[#allocation3 + $0x139] sm:$0xff]
        %v2260 = vld [vmem:[#allocation3 + $0x141] sm:$0xff]
        %v2261 = vld [vmem:[#allocation3 + $0x151] sm:$0xff]
        %v2262 = vld [vmem:[#allocation3 + $0x159] sm:$0xff]
        %v2263 = vld [vmem:[#allocation3 + $0x169] sm:$0xff]
        %v2264 = vld [vmem:[#allocation3 + $0x171] sm:$0xff]
        %v2265 = vpack.c.bf16 %v2234, %v2233
        %v2266 = vpack.c.bf16 %v2236, %v2235
        %v2267 = vpack.c.bf16 %v2238, %v2237
        %v2268 = vpack.c.bf16 %v2240, %v2239
        %v2269 = vpack.c.bf16 %v2242, %v2241
        %v2270 = vpack.c.bf16 %v2244, %v2243
        %v2271 = vpack.c.bf16 %v2246, %v2245
        %v2272 = vpack.c.bf16 %v2248, %v2247
        %v2273 = vpack.c.bf16 %v2250, %v2249
        %v2274 = vpack.c.bf16 %v2252, %v2251
        %v2275 = vpack.c.bf16 %v2254, %v2253
        %v2276 = vpack.c.bf16 %v2256, %v2255
        %v2277 = vpack.c.bf16 %v2258, %v2257
        %v2278 = vpack.c.bf16 %v2260, %v2259
        %v2279 = vpack.c.bf16 %v2262, %v2261
        %v2280 = vpack.c.bf16 %v2264, %v2263
        %2297 = vrot.lane.b32.xlu0 %v2265, 32
        %v2298 = vpop.permute.xlu0 %2297
        %2299 = vrot.lane.b32.xlu0 %v2266, 32
        %v2300 = vpop.permute.xlu0 %2299
        %2301 = vrot.lane.b32.xlu0 %v2267, 32
        %v2302 = vpop.permute.xlu0 %2301
        %2303 = vrot.lane.b32.xlu0 %v2268, 32
        %v2304 = vpop.permute.xlu0 %2303
        %2305 = vrot.lane.b32.xlu0 %v2269, 32
        %v2306 = vpop.permute.xlu0 %2305
        %2307 = vrot.lane.b32.xlu0 %v2270, 32
        %v2308 = vpop.permute.xlu0 %2307
        %2309 = vrot.lane.b32.xlu0 %v2271, 32
        %v2310 = vpop.permute.xlu0 %2309
        %2311 = vrot.lane.b32.xlu0 %v2272, 32
        %v2312 = vpop.permute.xlu0 %2311
        %2313 = vrot.lane.b32.xlu0 %v2273, 32
        %v2314 = vpop.permute.xlu0 %2313
        %2315 = vrot.lane.b32.xlu0 %v2274, 32
        %v2316 = vpop.permute.xlu0 %2315
        %2317 = vrot.lane.b32.xlu0 %v2275, 32
        %v2318 = vpop.permute.xlu0 %2317
        %2319 = vrot.lane.b32.xlu0 %v2276, 32
        %v2320 = vpop.permute.xlu0 %2319
        %2321 = vrot.lane.b32.xlu0 %v2277, 32
        %v2322 = vpop.permute.xlu0 %2321
        %2323 = vrot.lane.b32.xlu0 %v2278, 32
        %v2324 = vpop.permute.xlu0 %2323
        %2325 = vrot.lane.b32.xlu0 %v2279, 32
        %v2326 = vpop.permute.xlu0 %2325
        %2327 = vrot.lane.b32.xlu0 %v2280, 32
        %v2328 = vpop.permute.xlu0 %2327
        %vm2345 = vcmask 523520
        %2346 = vst.msk [vmem:[#allocation4] sm:$0xff] %vm2345, %v2298
        %2347 = vst.msk [vmem:[#allocation4 + $0x18] sm:$0xff] %vm2345, %v2300
        %2348 = vst.msk [vmem:[#allocation4 + $0x30] sm:$0xff] %vm2345, %v2302
        %2349 = vst.msk [vmem:[#allocation4 + $0x48] sm:$0xff] %vm2345, %v2304
        %2350 = vst.msk [vmem:[#allocation4 + $0x60] sm:$0xff] %vm2345, %v2306
        %2351 = vst.msk [vmem:[#allocation4 + $0x78] sm:$0xff] %vm2345, %v2308
        %2352 = vst.msk [vmem:[#allocation4 + $0x90] sm:$0xff] %vm2345, %v2310
        %2353 = vst.msk [vmem:[#allocation4 + $0xa8] sm:$0xff] %vm2345, %v2312
        %2354 = vst.msk [vmem:[#allocation4 + $0xc0] sm:$0xff] %vm2345, %v2314
        %2355 = vst.msk [vmem:[#allocation4 + $0xd8] sm:$0xff] %vm2345, %v2316
        %2356 = vst.msk [vmem:[#allocation4 + $0xf0] sm:$0xff] %vm2345, %v2318
        %2357 = vst.msk [vmem:[#allocation4 + $0x108] sm:$0xff] %vm2345, %v2320
        %2358 = vst.msk [vmem:[#allocation4 + $0x120] sm:$0xff] %vm2345, %v2322
        %2359 = vst.msk [vmem:[#allocation4 + $0x138] sm:$0xff] %vm2345, %v2324
        %2360 = vst.msk [vmem:[#allocation4 + $0x150] sm:$0xff] %vm2345, %v2326
        %2361 = vst.msk [vmem:[#allocation4 + $0x168] sm:$0xff] %vm2345, %v2328
        %v2362 = vld [vmem:[#allocation3 + $0x2] sm:$0xff]
        %v2363 = vld [vmem:[#allocation3 + $0xa] sm:$0xff]
        %v2364 = vld [vmem:[#allocation3 + $0x1a] sm:$0xff]
        %v2365 = vld [vmem:[#allocation3 + $0x22] sm:$0xff]
        %v2366 = vld [vmem:[#allocation3 + $0x32] sm:$0xff]
        %v2367 = vld [vmem:[#allocation3 + $0x3a] sm:$0xff]
        %v2368 = vld [vmem:[#allocation3 + $0x4a] sm:$0xff]
        %v2369 = vld [vmem:[#allocation3 + $0x52] sm:$0xff]
        %v2370 = vld [vmem:[#allocation3 + $0x62] sm:$0xff]
        %v2371 = vld [vmem:[#allocation3 + $0x6a] sm:$0xff]
        %v2372 = vld [vmem:[#allocation3 + $0x7a] sm:$0xff]
        %v2373 = vld [vmem:[#allocation3 + $0x82] sm:$0xff]
        %v2374 = vld [vmem:[#allocation3 + $0x92] sm:$0xff]
        %v2375 = vld [vmem:[#allocation3 + $0x9a] sm:$0xff]
        %v2376 = vld [vmem:[#allocation3 + $0xaa] sm:$0xff]
        %v2377 = vld [vmem:[#allocation3 + $0xb2] sm:$0xff]
        %v2378 = vld [vmem:[#allocation3 + $0xc2] sm:$0xff]
        %v2379 = vld [vmem:[#allocation3 + $0xca] sm:$0xff]
        %v2380 = vld [vmem:[#allocation3 + $0xda] sm:$0xff]
        %v2381 = vld [vmem:[#allocation3 + $0xe2] sm:$0xff]
        %v2382 = vld [vmem:[#allocation3 + $0xf2] sm:$0xff]
        %v2383 = vld [vmem:[#allocation3 + $0xfa] sm:$0xff]
        %v2384 = vld [vmem:[#allocation3 + $0x10a] sm:$0xff]
        %v2385 = vld [vmem:[#allocation3 + $0x112] sm:$0xff]
        %v2386 = vld [vmem:[#allocation3 + $0x122] sm:$0xff]
        %v2387 = vld [vmem:[#allocation3 + $0x12a] sm:$0xff]
        %v2388 = vld [vmem:[#allocation3 + $0x13a] sm:$0xff]
        %v2389 = vld [vmem:[#allocation3 + $0x142] sm:$0xff]
        %v2390 = vld [vmem:[#allocation3 + $0x152] sm:$0xff]
        %v2391 = vld [vmem:[#allocation3 + $0x15a] sm:$0xff]
        %v2392 = vld [vmem:[#allocation3 + $0x16a] sm:$0xff]
        %v2393 = vld [vmem:[#allocation3 + $0x172] sm:$0xff]
        %v2394 = vpack.c.bf16 %v2363, %v2362
        %v2395 = vpack.c.bf16 %v2365, %v2364
        %v2396 = vpack.c.bf16 %v2367, %v2366
        %v2397 = vpack.c.bf16 %v2369, %v2368
        %v2398 = vpack.c.bf16 %v2371, %v2370
        %v2399 = vpack.c.bf16 %v2373, %v2372
        %v2400 = vpack.c.bf16 %v2375, %v2374
        %v2401 = vpack.c.bf16 %v2377, %v2376
        %v2402 = vpack.c.bf16 %v2379, %v2378
        %v2403 = vpack.c.bf16 %v2381, %v2380
        %v2404 = vpack.c.bf16 %v2383, %v2382
        %v2405 = vpack.c.bf16 %v2385, %v2384
        %v2406 = vpack.c.bf16 %v2387, %v2386
        %v2407 = vpack.c.bf16 %v2389, %v2388
        %v2408 = vpack.c.bf16 %v2391, %v2390
        %v2409 = vpack.c.bf16 %v2393, %v2392
        %2426 = vrot.lane.b32.xlu0 %v2394, 64
        %v2427 = vpop.permute.xlu0 %2426
        %2428 = vrot.lane.b32.xlu0 %v2395, 64
        %v2429 = vpop.permute.xlu0 %2428
        %2430 = vrot.lane.b32.xlu0 %v2396, 64
        %v2431 = vpop.permute.xlu0 %2430
        %2432 = vrot.lane.b32.xlu0 %v2397, 64
        %v2433 = vpop.permute.xlu0 %2432
        %2434 = vrot.lane.b32.xlu0 %v2398, 64
        %v2435 = vpop.permute.xlu0 %2434
        %2436 = vrot.lane.b32.xlu0 %v2399, 64
        %v2437 = vpop.permute.xlu0 %2436
        %2438 = vrot.lane.b32.xlu0 %v2400, 64
        %v2439 = vpop.permute.xlu0 %2438
        %2440 = vrot.lane.b32.xlu0 %v2401, 64
        %v2441 = vpop.permute.xlu0 %2440
        %2442 = vrot.lane.b32.xlu0 %v2402, 64
        %v2443 = vpop.permute.xlu0 %2442
        %2444 = vrot.lane.b32.xlu0 %v2403, 64
        %v2445 = vpop.permute.xlu0 %2444
        %2446 = vrot.lane.b32.xlu0 %v2404, 64
        %v2447 = vpop.permute.xlu0 %2446
        %2448 = vrot.lane.b32.xlu0 %v2405, 64
        %v2449 = vpop.permute.xlu0 %2448
        %2450 = vrot.lane.b32.xlu0 %v2406, 64
        %v2451 = vpop.permute.xlu0 %2450
        %2452 = vrot.lane.b32.xlu0 %v2407, 64
        %v2453 = vpop.permute.xlu0 %2452
        %2454 = vrot.lane.b32.xlu0 %v2408, 64
        %v2455 = vpop.permute.xlu0 %2454
        %2456 = vrot.lane.b32.xlu0 %v2409, 64
        %v2457 = vpop.permute.xlu0 %2456
        %vm2474 = vcmask 785920
        %2475 = vst.msk [vmem:[#allocation4] sm:$0xff] %vm2474, %v2427
        %2476 = vst.msk [vmem:[#allocation4 + $0x18] sm:$0xff] %vm2474, %v2429
        %2477 = vst.msk [vmem:[#allocation4 + $0x30] sm:$0xff] %vm2474, %v2431
        %2478 = vst.msk [vmem:[#allocation4 + $0x48] sm:$0xff] %vm2474, %v2433
        %2479 = vst.msk [vmem:[#allocation4 + $0x60] sm:$0xff] %vm2474, %v2435
        %2480 = vst.msk [vmem:[#allocation4 + $0x78] sm:$0xff] %vm2474, %v2437
        %2481 = vst.msk [vmem:[#allocation4 + $0x90] sm:$0xff] %vm2474, %v2439
        %2482 = vst.msk [vmem:[#allocation4 + $0xa8] sm:$0xff] %vm2474, %v2441
        %2483 = vst.msk [vmem:[#allocation4 + $0xc0] sm:$0xff] %vm2474, %v2443
        %2484 = vst.msk [vmem:[#allocation4 + $0xd8] sm:$0xff] %vm2474, %v2445
        %2485 = vst.msk [vmem:[#allocation4 + $0xf0] sm:$0xff] %vm2474, %v2447
        %2486 = vst.msk [vmem:[#allocation4 + $0x108] sm:$0xff] %vm2474, %v2449
        %2487 = vst.msk [vmem:[#allocation4 + $0x120] sm:$0xff] %vm2474, %v2451
        %2488 = vst.msk [vmem:[#allocation4 + $0x138] sm:$0xff] %vm2474, %v2453
        %2489 = vst.msk [vmem:[#allocation4 + $0x150] sm:$0xff] %vm2474, %v2455
        %2490 = vst.msk [vmem:[#allocation4 + $0x168] sm:$0xff] %vm2474, %v2457
        %v2491 = vld [vmem:[%s2136] sm:$0xff]
        %v2492 = vld [vmem:[%s2136 + $0x8] sm:$0xff]
        %v2493 = vld [vmem:[%s2136 + $0x18] sm:$0xff]
        %v2494 = vld [vmem:[%s2136 + $0x20] sm:$0xff]
        %v2495 = vld [vmem:[%s2136 + $0x30] sm:$0xff]
        %v2496 = vld [vmem:[%s2136 + $0x38] sm:$0xff]
        %v2497 = vld [vmem:[%s2136 + $0x48] sm:$0xff]
        %v2498 = vld [vmem:[%s2136 + $0x50] sm:$0xff]
        %v2499 = vld [vmem:[%s2136 + $0x60] sm:$0xff]
        %v2500 = vld [vmem:[%s2136 + $0x68] sm:$0xff]
        %v2501 = vld [vmem:[%s2136 + $0x78] sm:$0xff]
        %v2502 = vld [vmem:[%s2136 + $0x80] sm:$0xff]
        %v2503 = vld [vmem:[%s2136 + $0x90] sm:$0xff]
        %v2504 = vld [vmem:[%s2136 + $0x98] sm:$0xff]
        %v2505 = vld [vmem:[%s2136 + $0xa8] sm:$0xff]
        %v2506 = vld [vmem:[%s2136 + $0xb0] sm:$0xff]
        %v2507 = vld [vmem:[%s2136 + $0xc0] sm:$0xff]
        %v2508 = vld [vmem:[%s2136 + $0xc8] sm:$0xff]
        %v2509 = vld [vmem:[%s2136 + $0xd8] sm:$0xff]
        %v2510 = vld [vmem:[%s2136 + $0xe0] sm:$0xff]
        %v2511 = vld [vmem:[%s2136 + $0xf0] sm:$0xff]
        %v2512 = vld [vmem:[%s2136 + $0xf8] sm:$0xff]
        %v2513 = vld [vmem:[%s2136 + $0x108] sm:$0xff]
        %v2514 = vld [vmem:[%s2136 + $0x110] sm:$0xff]
        %v2515 = vld [vmem:[%s2136 + $0x120] sm:$0xff]
        %v2516 = vld [vmem:[%s2136 + $0x128] sm:$0xff]
        %v2517 = vld [vmem:[%s2136 + $0x138] sm:$0xff]
        %v2518 = vld [vmem:[%s2136 + $0x140] sm:$0xff]
        %v2519 = vld [vmem:[%s2136 + $0x150] sm:$0xff]
        %v2520 = vld [vmem:[%s2136 + $0x158] sm:$0xff]
        %v2521 = vld [vmem:[%s2136 + $0x168] sm:$0xff]
        %v2522 = vld [vmem:[%s2136 + $0x170] sm:$0xff]
        %v2523 = vpack.c.bf16 %v2492, %v2491
        %v2524 = vpack.c.bf16 %v2494, %v2493
        %v2525 = vpack.c.bf16 %v2496, %v2495
        %v2526 = vpack.c.bf16 %v2498, %v2497
        %v2527 = vpack.c.bf16 %v2500, %v2499
        %v2528 = vpack.c.bf16 %v2502, %v2501
        %v2529 = vpack.c.bf16 %v2504, %v2503
        %v2530 = vpack.c.bf16 %v2506, %v2505
        %v2531 = vpack.c.bf16 %v2508, %v2507
        %v2532 = vpack.c.bf16 %v2510, %v2509
        %v2533 = vpack.c.bf16 %v2512, %v2511
        %v2534 = vpack.c.bf16 %v2514, %v2513
        %v2535 = vpack.c.bf16 %v2516, %v2515
        %v2536 = vpack.c.bf16 %v2518, %v2517
        %v2537 = vpack.c.bf16 %v2520, %v2519
        %v2538 = vpack.c.bf16 %v2522, %v2521
        %2555 = vrot.lane.b32.xlu0 %v2523, 96
        %v2556 = vpop.permute.xlu0 %2555
        %2557 = vrot.lane.b32.xlu0 %v2524, 96
        %v2558 = vpop.permute.xlu0 %2557
        %2559 = vrot.lane.b32.xlu0 %v2525, 96
        %v2560 = vpop.permute.xlu0 %2559
        %2561 = vrot.lane.b32.xlu0 %v2526, 96
        %v2562 = vpop.permute.xlu0 %2561
        %2563 = vrot.lane.b32.xlu0 %v2527, 96
        %v2564 = vpop.permute.xlu0 %2563
        %2565 = vrot.lane.b32.xlu0 %v2528, 96
        %v2566 = vpop.permute.xlu0 %2565
        %2567 = vrot.lane.b32.xlu0 %v2529, 96
        %v2568 = vpop.permute.xlu0 %2567
        %2569 = vrot.lane.b32.xlu0 %v2530, 96
        %v2570 = vpop.permute.xlu0 %2569
        %2571 = vrot.lane.b32.xlu0 %v2531, 96
        %v2572 = vpop.permute.xlu0 %2571
        %2573 = vrot.lane.b32.xlu0 %v2532, 96
        %v2574 = vpop.permute.xlu0 %2573
        %2575 = vrot.lane.b32.xlu0 %v2533, 96
        %v2576 = vpop.permute.xlu0 %2575
        %2577 = vrot.lane.b32.xlu0 %v2534, 96
        %v2578 = vpop.permute.xlu0 %2577
        %2579 = vrot.lane.b32.xlu0 %v2535, 96
        %v2580 = vpop.permute.xlu0 %2579
        %2581 = vrot.lane.b32.xlu0 %v2536, 96
        %v2582 = vpop.permute.xlu0 %2581
        %2583 = vrot.lane.b32.xlu0 %v2537, 96
        %v2584 = vpop.permute.xlu0 %2583
        %2585 = vrot.lane.b32.xlu0 %v2538, 96
        %v2586 = vpop.permute.xlu0 %2585
        %vm2603 = vcmask 1048320
        %2604 = vst.msk [vmem:[#allocation4] sm:$0xff] %vm2603, %v2556
        %2605 = vst.msk [vmem:[#allocation4 + $0x18] sm:$0xff] %vm2603, %v2558
        %2606 = vst.msk [vmem:[#allocation4 + $0x30] sm:$0xff] %vm2603, %v2560
        %2607 = vst.msk [vmem:[#allocation4 + $0x48] sm:$0xff] %vm2603, %v2562
        %2608 = vst.msk [vmem:[#allocation4 + $0x60] sm:$0xff] %vm2603, %v2564
        %2609 = vst.msk [vmem:[#allocation4 + $0x78] sm:$0xff] %vm2603, %v2566
        %2610 = vst.msk [vmem:[#allocation4 + $0x90] sm:$0xff] %vm2603, %v2568
        %2611 = vst.msk [vmem:[#allocation4 + $0xa8] sm:$0xff] %vm2603, %v2570
        %2612 = vst.msk [vmem:[#allocation4 + $0xc0] sm:$0xff] %vm2603, %v2572
        %2613 = vst.msk [vmem:[#allocation4 + $0xd8] sm:$0xff] %vm2603, %v2574
        %2614 = vst.msk [vmem:[#allocation4 + $0xf0] sm:$0xff] %vm2603, %v2576
        %2615 = vst.msk [vmem:[#allocation4 + $0x108] sm:$0xff] %vm2603, %v2578
        %2616 = vst.msk [vmem:[#allocation4 + $0x120] sm:$0xff] %vm2603, %v2580
        %2617 = vst.msk [vmem:[#allocation4 + $0x138] sm:$0xff] %vm2603, %v2582
        %2618 = vst.msk [vmem:[#allocation4 + $0x150] sm:$0xff] %vm2603, %v2584
        %2619 = vst.msk [vmem:[#allocation4 + $0x168] sm:$0xff] %vm2603, %v2586
        %v2620 = vld [vmem:[%s2136 + $0x1] sm:$0xff]
        %v2621 = vld [vmem:[%s2136 + $0x9] sm:$0xff]
        %v2622 = vld [vmem:[%s2136 + $0x19] sm:$0xff]
        %v2623 = vld [vmem:[%s2136 + $0x21] sm:$0xff]
        %v2624 = vld [vmem:[%s2136 + $0x31] sm:$0xff]
        %v2625 = vld [vmem:[%s2136 + $0x39] sm:$0xff]
        %v2626 = vld [vmem:[%s2136 + $0x49] sm:$0xff]
        %v2627 = vld [vmem:[%s2136 + $0x51] sm:$0xff]
        %v2628 = vld [vmem:[%s2136 + $0x61] sm:$0xff]
        %v2629 = vld [vmem:[%s2136 + $0x69] sm:$0xff]
        %v2630 = vld [vmem:[%s2136 + $0x79] sm:$0xff]
        %v2631 = vld [vmem:[%s2136 + $0x81] sm:$0xff]
        %v2632 = vld [vmem:[%s2136 + $0x91] sm:$0xff]
        %v2633 = vld [vmem:[%s2136 + $0x99] sm:$0xff]
        %v2634 = vld [vmem:[%s2136 + $0xa9] sm:$0xff]
        %v2635 = vld [vmem:[%s2136 + $0xb1] sm:$0xff]
        %v2636 = vld [vmem:[%s2136 + $0xc1] sm:$0xff]
        %v2637 = vld [vmem:[%s2136 + $0xc9] sm:$0xff]
        %v2638 = vld [vmem:[%s2136 + $0xd9] sm:$0xff]
        %v2639 = vld [vmem:[%s2136 + $0xe1] sm:$0xff]
        %v2640 = vld [vmem:[%s2136 + $0xf1] sm:$0xff]
        %v2641 = vld [vmem:[%s2136 + $0xf9] sm:$0xff]
        %v2642 = vld [vmem:[%s2136 + $0x109] sm:$0xff]
        %v2643 = vld [vmem:[%s2136 + $0x111] sm:$0xff]
        %v2644 = vld [vmem:[%s2136 + $0x121] sm:$0xff]
        %v2645 = vld [vmem:[%s2136 + $0x129] sm:$0xff]
        %v2646 = vld [vmem:[%s2136 + $0x139] sm:$0xff]
        %v2647 = vld [vmem:[%s2136 + $0x141] sm:$0xff]
        %v2648 = vld [vmem:[%s2136 + $0x151] sm:$0xff]
        %v2649 = vld [vmem:[%s2136 + $0x159] sm:$0xff]
        %v2650 = vld [vmem:[%s2136 + $0x169] sm:$0xff]
        %v2651 = vld [vmem:[%s2136 + $0x171] sm:$0xff]
        %v2652 = vpack.c.bf16 %v2621, %v2620
        %v2653 = vpack.c.bf16 %v2623, %v2622
        %v2654 = vpack.c.bf16 %v2625, %v2624
        %v2655 = vpack.c.bf16 %v2627, %v2626
        %v2656 = vpack.c.bf16 %v2629, %v2628
        %v2657 = vpack.c.bf16 %v2631, %v2630
        %v2658 = vpack.c.bf16 %v2633, %v2632
        %v2659 = vpack.c.bf16 %v2635, %v2634
        %v2660 = vpack.c.bf16 %v2637, %v2636
        %v2661 = vpack.c.bf16 %v2639, %v2638
        %v2662 = vpack.c.bf16 %v2641, %v2640
        %v2663 = vpack.c.bf16 %v2643, %v2642
        %v2664 = vpack.c.bf16 %v2645, %v2644
        %v2665 = vpack.c.bf16 %v2647, %v2646
        %v2666 = vpack.c.bf16 %v2649, %v2648
        %v2667 = vpack.c.bf16 %v2651, %v2650
        %2668 = vst.msk [vmem:[#allocation4 + $0x8] sm:$0xff] %vm1540, %v2652
        %2669 = vst.msk [vmem:[#allocation4 + $0x20] sm:$0xff] %vm1540, %v2653
        %2670 = vst.msk [vmem:[#allocation4 + $0x38] sm:$0xff] %vm1540, %v2654
        %2671 = vst.msk [vmem:[#allocation4 + $0x50] sm:$0xff] %vm1540, %v2655
        %2672 = vst.msk [vmem:[#allocation4 + $0x68] sm:$0xff] %vm1540, %v2656
        %2673 = vst.msk [vmem:[#allocation4 + $0x80] sm:$0xff] %vm1540, %v2657
        %2674 = vst.msk [vmem:[#allocation4 + $0x98] sm:$0xff] %vm1540, %v2658
        %2675 = vst.msk [vmem:[#allocation4 + $0xb0] sm:$0xff] %vm1540, %v2659
        %2676 = vst.msk [vmem:[#allocation4 + $0xc8] sm:$0xff] %vm1540, %v2660
        %2677 = vst.msk [vmem:[#allocation4 + $0xe0] sm:$0xff] %vm1540, %v2661
        %2678 = vst.msk [vmem:[#allocation4 + $0xf8] sm:$0xff] %vm1540, %v2662
        %2679 = vst.msk [vmem:[#allocation4 + $0x110] sm:$0xff] %vm1540, %v2663
        %2680 = vst.msk [vmem:[#allocation4 + $0x128] sm:$0xff] %vm1540, %v2664
        %2681 = vst.msk [vmem:[#allocation4 + $0x140] sm:$0xff] %vm1540, %v2665
        %2682 = vst.msk [vmem:[#allocation4 + $0x158] sm:$0xff] %vm1540, %v2666
        %2683 = vst.msk [vmem:[#allocation4 + $0x170] sm:$0xff] %vm1540, %v2667
        %v2684 = vld [vmem:[%s2136 + $0x2] sm:$0xff]
        %v2685 = vld [vmem:[%s2136 + $0xa] sm:$0xff]
        %v2686 = vld [vmem:[%s2136 + $0x1a] sm:$0xff]
        %v2687 = vld [vmem:[%s2136 + $0x22] sm:$0xff]
        %v2688 = vld [vmem:[%s2136 + $0x32] sm:$0xff]
        %v2689 = vld [vmem:[%s2136 + $0x3a] sm:$0xff]
        %v2690 = vld [vmem:[%s2136 + $0x4a] sm:$0xff]
        %v2691 = vld [vmem:[%s2136 + $0x52] sm:$0xff]
        %v2692 = vld [vmem:[%s2136 + $0x62] sm:$0xff]
        %v2693 = vld [vmem:[%s2136 + $0x6a] sm:$0xff]
        %v2694 = vld [vmem:[%s2136 + $0x7a] sm:$0xff]
        %v2695 = vld [vmem:[%s2136 + $0x82] sm:$0xff]
        %v2696 = vld [vmem:[%s2136 + $0x92] sm:$0xff]
        %v2697 = vld [vmem:[%s2136 + $0x9a] sm:$0xff]
        %v2698 = vld [vmem:[%s2136 + $0xaa] sm:$0xff]
        %v2699 = vld [vmem:[%s2136 + $0xb2] sm:$0xff]
        %v2700 = vld [vmem:[%s2136 + $0xc2] sm:$0xff]
        %v2701 = vld [vmem:[%s2136 + $0xca] sm:$0xff]
        %v2702 = vld [vmem:[%s2136 + $0xda] sm:$0xff]
        %v2703 = vld [vmem:[%s2136 + $0xe2] sm:$0xff]
        %v2704 = vld [vmem:[%s2136 + $0xf2] sm:$0xff]
        %v2705 = vld [vmem:[%s2136 + $0xfa] sm:$0xff]
        %v2706 = vld [vmem:[%s2136 + $0x10a] sm:$0xff]
        %v2707 = vld [vmem:[%s2136 + $0x112] sm:$0xff]
        %v2708 = vld [vmem:[%s2136 + $0x122] sm:$0xff]
        %v2709 = vld [vmem:[%s2136 + $0x12a] sm:$0xff]
        %v2710 = vld [vmem:[%s2136 + $0x13a] sm:$0xff]
        %v2711 = vld [vmem:[%s2136 + $0x142] sm:$0xff]
        %v2712 = vld [vmem:[%s2136 + $0x152] sm:$0xff]
        %v2713 = vld [vmem:[%s2136 + $0x15a] sm:$0xff]
        %v2714 = vld [vmem:[%s2136 + $0x16a] sm:$0xff]
        %v2715 = vld [vmem:[%s2136 + $0x172] sm:$0xff]
        %v2716 = vpack.c.bf16 %v2685, %v2684
        %v2717 = vpack.c.bf16 %v2687, %v2686
        %v2718 = vpack.c.bf16 %v2689, %v2688
        %v2719 = vpack.c.bf16 %v2691, %v2690
        %v2720 = vpack.c.bf16 %v2693, %v2692
        %v2721 = vpack.c.bf16 %v2695, %v2694
        %v2722 = vpack.c.bf16 %v2697, %v2696
        %v2723 = vpack.c.bf16 %v2699, %v2698
        %v2724 = vpack.c.bf16 %v2701, %v2700
        %v2725 = vpack.c.bf16 %v2703, %v2702
        %v2726 = vpack.c.bf16 %v2705, %v2704
        %v2727 = vpack.c.bf16 %v2707, %v2706
        %v2728 = vpack.c.bf16 %v2709, %v2708
        %v2729 = vpack.c.bf16 %v2711, %v2710
        %v2730 = vpack.c.bf16 %v2713, %v2712
        %v2731 = vpack.c.bf16 %v2715, %v2714
        %2748 = vrot.lane.b32.xlu0 %v2716, 32
        %v2749 = vpop.permute.xlu0 %2748
        %2750 = vrot.lane.b32.xlu0 %v2717, 32
        %v2751 = vpop.permute.xlu0 %2750
        %2752 = vrot.lane.b32.xlu0 %v2718, 32
        %v2753 = vpop.permute.xlu0 %2752
        %2754 = vrot.lane.b32.xlu0 %v2719, 32
        %v2755 = vpop.permute.xlu0 %2754
        %2756 = vrot.lane.b32.xlu0 %v2720, 32
        %v2757 = vpop.permute.xlu0 %2756
        %2758 = vrot.lane.b32.xlu0 %v2721, 32
        %v2759 = vpop.permute.xlu0 %2758
        %2760 = vrot.lane.b32.xlu0 %v2722, 32
        %v2761 = vpop.permute.xlu0 %2760
        %2762 = vrot.lane.b32.xlu0 %v2723, 32
        %v2763 = vpop.permute.xlu0 %2762
        %2764 = vrot.lane.b32.xlu0 %v2724, 32
        %v2765 = vpop.permute.xlu0 %2764
        %2766 = vrot.lane.b32.xlu0 %v2725, 32
        %v2767 = vpop.permute.xlu0 %2766
        %2768 = vrot.lane.b32.xlu0 %v2726, 32
        %v2769 = vpop.permute.xlu0 %2768
        %2770 = vrot.lane.b32.xlu0 %v2727, 32
        %v2771 = vpop.permute.xlu0 %2770
        %2772 = vrot.lane.b32.xlu0 %v2728, 32
        %v2773 = vpop.permute.xlu0 %2772
        %2774 = vrot.lane.b32.xlu0 %v2729, 32
        %v2775 = vpop.permute.xlu0 %2774
        %2776 = vrot.lane.b32.xlu0 %v2730, 32
        %v2777 = vpop.permute.xlu0 %2776
        %2778 = vrot.lane.b32.xlu0 %v2731, 32
        %v2779 = vpop.permute.xlu0 %2778
        %2796 = vst.msk [vmem:[#allocation4 + $0x8] sm:$0xff] %vm2345, %v2749
        %2797 = vst.msk [vmem:[#allocation4 + $0x20] sm:$0xff] %vm2345, %v2751
        %2798 = vst.msk [vmem:[#allocation4 + $0x38] sm:$0xff] %vm2345, %v2753
        %2799 = vst.msk [vmem:[#allocation4 + $0x50] sm:$0xff] %vm2345, %v2755
        %2800 = vst.msk [vmem:[#allocation4 + $0x68] sm:$0xff] %vm2345, %v2757
        %2801 = vst.msk [vmem:[#allocation4 + $0x80] sm:$0xff] %vm2345, %v2759
        %2802 = vst.msk [vmem:[#allocation4 + $0x98] sm:$0xff] %vm2345, %v2761
        %2803 = vst.msk [vmem:[#allocation4 + $0xb0] sm:$0xff] %vm2345, %v2763
        %2804 = vst.msk [vmem:[#allocation4 + $0xc8] sm:$0xff] %vm2345, %v2765
        %2805 = vst.msk [vmem:[#allocation4 + $0xe0] sm:$0xff] %vm2345, %v2767
        %2806 = vst.msk [vmem:[#allocation4 + $0xf8] sm:$0xff] %vm2345, %v2769
        %2807 = vst.msk [vmem:[#allocation4 + $0x110] sm:$0xff] %vm2345, %v2771
        %2808 = vst.msk [vmem:[#allocation4 + $0x128] sm:$0xff] %vm2345, %v2773
        %2809 = vst.msk [vmem:[#allocation4 + $0x140] sm:$0xff] %vm2345, %v2775
        %2810 = vst.msk [vmem:[#allocation4 + $0x158] sm:$0xff] %vm2345, %v2777
        %2811 = vst.msk [vmem:[#allocation4 + $0x170] sm:$0xff] %vm2345, %v2779
        %s2812 = scalar_lea.vmem [#allocation3], 48
        %v2813 = vld [vmem:[%s2812] sm:$0xff]
        %v2814 = vld [vmem:[%s2812 + $0x8] sm:$0xff]
        %v2815 = vld [vmem:[%s2812 + $0x18] sm:$0xff]
        %v2816 = vld [vmem:[%s2812 + $0x20] sm:$0xff]
        %v2817 = vld [vmem:[%s2812 + $0x30] sm:$0xff]
        %v2818 = vld [vmem:[%s2812 + $0x38] sm:$0xff]
        %v2819 = vld [vmem:[%s2812 + $0x48] sm:$0xff]
        %v2820 = vld [vmem:[%s2812 + $0x50] sm:$0xff]
        %v2821 = vld [vmem:[%s2812 + $0x60] sm:$0xff]
        %v2822 = vld [vmem:[%s2812 + $0x68] sm:$0xff]
        %v2823 = vld [vmem:[%s2812 + $0x78] sm:$0xff]
        %v2824 = vld [vmem:[%s2812 + $0x80] sm:$0xff]
        %v2825 = vld [vmem:[%s2812 + $0x90] sm:$0xff]
        %v2826 = vld [vmem:[%s2812 + $0x98] sm:$0xff]
        %v2827 = vld [vmem:[%s2812 + $0xa8] sm:$0xff]
        %v2828 = vld [vmem:[%s2812 + $0xb0] sm:$0xff]
        %v2829 = vld [vmem:[%s2812 + $0xc0] sm:$0xff]
        %v2830 = vld [vmem:[%s2812 + $0xc8] sm:$0xff]
        %v2831 = vld [vmem:[%s2812 + $0xd8] sm:$0xff]
        %v2832 = vld [vmem:[%s2812 + $0xe0] sm:$0xff]
        %v2833 = vld [vmem:[%s2812 + $0xf0] sm:$0xff]
        %v2834 = vld [vmem:[%s2812 + $0xf8] sm:$0xff]
        %v2835 = vld [vmem:[%s2812 + $0x108] sm:$0xff]
        %v2836 = vld [vmem:[%s2812 + $0x110] sm:$0xff]
        %v2837 = vld [vmem:[%s2812 + $0x120] sm:$0xff]
        %v2838 = vld [vmem:[%s2812 + $0x128] sm:$0xff]
        %v2839 = vld [vmem:[%s2812 + $0x138] sm:$0xff]
        %v2840 = vld [vmem:[%s2812 + $0x140] sm:$0xff]
        %v2841 = vld [vmem:[%s2812 + $0x150] sm:$0xff]
        %v2842 = vld [vmem:[%s2812 + $0x158] sm:$0xff]
        %v2843 = vld [vmem:[%s2812 + $0x168] sm:$0xff]
        %v2844 = vld [vmem:[%s2812 + $0x170] sm:$0xff]
        %v2845 = vpack.c.bf16 %v2814, %v2813
        %v2846 = vpack.c.bf16 %v2816, %v2815
        %v2847 = vpack.c.bf16 %v2818, %v2817
        %v2848 = vpack.c.bf16 %v2820, %v2819
        %v2849 = vpack.c.bf16 %v2822, %v2821
        %v2850 = vpack.c.bf16 %v2824, %v2823
        %v2851 = vpack.c.bf16 %v2826, %v2825
        %v2852 = vpack.c.bf16 %v2828, %v2827
        %v2853 = vpack.c.bf16 %v2830, %v2829
        %v2854 = vpack.c.bf16 %v2832, %v2831
        %v2855 = vpack.c.bf16 %v2834, %v2833
        %v2856 = vpack.c.bf16 %v2836, %v2835
        %v2857 = vpack.c.bf16 %v2838, %v2837
        %v2858 = vpack.c.bf16 %v2840, %v2839
        %v2859 = vpack.c.bf16 %v2842, %v2841
        %v2860 = vpack.c.bf16 %v2844, %v2843
        %2877 = vrot.lane.b32.xlu0 %v2845, 64
        %v2878 = vpop.permute.xlu0 %2877
        %2879 = vrot.lane.b32.xlu0 %v2846, 64
        %v2880 = vpop.permute.xlu0 %2879
        %2881 = vrot.lane.b32.xlu0 %v2847, 64
        %v2882 = vpop.permute.xlu0 %2881
        %2883 = vrot.lane.b32.xlu0 %v2848, 64
        %v2884 = vpop.permute.xlu0 %2883
        %2885 = vrot.lane.b32.xlu0 %v2849, 64
        %v2886 = vpop.permute.xlu0 %2885
        %2887 = vrot.lane.b32.xlu0 %v2850, 64
        %v2888 = vpop.permute.xlu0 %2887
        %2889 = vrot.lane.b32.xlu0 %v2851, 64
        %v2890 = vpop.permute.xlu0 %2889
        %2891 = vrot.lane.b32.xlu0 %v2852, 64
        %v2892 = vpop.permute.xlu0 %2891
        %2893 = vrot.lane.b32.xlu0 %v2853, 64
        %v2894 = vpop.permute.xlu0 %2893
        %2895 = vrot.lane.b32.xlu0 %v2854, 64
        %v2896 = vpop.permute.xlu0 %2895
        %2897 = vrot.lane.b32.xlu0 %v2855, 64
        %v2898 = vpop.permute.xlu0 %2897
        %2899 = vrot.lane.b32.xlu0 %v2856, 64
        %v2900 = vpop.permute.xlu0 %2899
        %2901 = vrot.lane.b32.xlu0 %v2857, 64
        %v2902 = vpop.permute.xlu0 %2901
        %2903 = vrot.lane.b32.xlu0 %v2858, 64
        %v2904 = vpop.permute.xlu0 %2903
        %2905 = vrot.lane.b32.xlu0 %v2859, 64
        %v2906 = vpop.permute.xlu0 %2905
        %2907 = vrot.lane.b32.xlu0 %v2860, 64
        %v2908 = vpop.permute.xlu0 %2907
        %2925 = vst.msk [vmem:[#allocation4 + $0x8] sm:$0xff] %vm2474, %v2878
        %2926 = vst.msk [vmem:[#allocation4 + $0x20] sm:$0xff] %vm2474, %v2880
        %2927 = vst.msk [vmem:[#allocation4 + $0x38] sm:$0xff] %vm2474, %v2882
        %2928 = vst.msk [vmem:[#allocation4 + $0x50] sm:$0xff] %vm2474, %v2884
        %2929 = vst.msk [vmem:[#allocation4 + $0x68] sm:$0xff] %vm2474, %v2886
        %2930 = vst.msk [vmem:[#allocation4 + $0x80] sm:$0xff] %vm2474, %v2888
        %2931 = vst.msk [vmem:[#allocation4 + $0x98] sm:$0xff] %vm2474, %v2890
        %2932 = vst.msk [vmem:[#allocation4 + $0xb0] sm:$0xff] %vm2474, %v2892
        %2933 = vst.msk [vmem:[#allocation4 + $0xc8] sm:$0xff] %vm2474, %v2894
        %2934 = vst.msk [vmem:[#allocation4 + $0xe0] sm:$0xff] %vm2474, %v2896
        %2935 = vst.msk [vmem:[#allocation4 + $0xf8] sm:$0xff] %vm2474, %v2898
        %2936 = vst.msk [vmem:[#allocation4 + $0x110] sm:$0xff] %vm2474, %v2900
        %2937 = vst.msk [vmem:[#allocation4 + $0x128] sm:$0xff] %vm2474, %v2902
        %2938 = vst.msk [vmem:[#allocation4 + $0x140] sm:$0xff] %vm2474, %v2904
        %2939 = vst.msk [vmem:[#allocation4 + $0x158] sm:$0xff] %vm2474, %v2906
        %2940 = vst.msk [vmem:[#allocation4 + $0x170] sm:$0xff] %vm2474, %v2908
        %v2941 = vld [vmem:[%s2812 + $0x1] sm:$0xff]
        %v2942 = vld [vmem:[%s2812 + $0x9] sm:$0xff]
        %v2943 = vld [vmem:[%s2812 + $0x19] sm:$0xff]
        %v2944 = vld [vmem:[%s2812 + $0x21] sm:$0xff]
        %v2945 = vld [vmem:[%s2812 + $0x31] sm:$0xff]
        %v2946 = vld [vmem:[%s2812 + $0x39] sm:$0xff]
        %v2947 = vld [vmem:[%s2812 + $0x49] sm:$0xff]
        %v2948 = vld [vmem:[%s2812 + $0x51] sm:$0xff]
        %v2949 = vld [vmem:[%s2812 + $0x61] sm:$0xff]
        %v2950 = vld [vmem:[%s2812 + $0x69] sm:$0xff]
        %v2951 = vld [vmem:[%s2812 + $0x79] sm:$0xff]
        %v2952 = vld [vmem:[%s2812 + $0x81] sm:$0xff]
        %v2953 = vld [vmem:[%s2812 + $0x91] sm:$0xff]
        %v2954 = vld [vmem:[%s2812 + $0x99] sm:$0xff]
        %v2955 = vld [vmem:[%s2812 + $0xa9] sm:$0xff]
        %v2956 = vld [vmem:[%s2812 + $0xb1] sm:$0xff]
        %v2957 = vld [vmem:[%s2812 + $0xc1] sm:$0xff]
        %v2958 = vld [vmem:[%s2812 + $0xc9] sm:$0xff]
        %v2959 = vld [vmem:[%s2812 + $0xd9] sm:$0xff]
        %v2960 = vld [vmem:[%s2812 + $0xe1] sm:$0xff]
        %v2961 = vld [vmem:[%s2812 + $0xf1] sm:$0xff]
        %v2962 = vld [vmem:[%s2812 + $0xf9] sm:$0xff]
        %v2963 = vld [vmem:[%s2812 + $0x109] sm:$0xff]
        %v2964 = vld [vmem:[%s2812 + $0x111] sm:$0xff]
        %v2965 = vld [vmem:[%s2812 + $0x121] sm:$0xff]
        %v2966 = vld [vmem:[%s2812 + $0x129] sm:$0xff]
        %v2967 = vld [vmem:[%s2812 + $0x139] sm:$0xff]
        %v2968 = vld [vmem:[%s2812 + $0x141] sm:$0xff]
        %v2969 = vld [vmem:[%s2812 + $0x151] sm:$0xff]
        %v2970 = vld [vmem:[%s2812 + $0x159] sm:$0xff]
        %v2971 = vld [vmem:[%s2812 + $0x169] sm:$0xff]
        %v2972 = vld [vmem:[%s2812 + $0x171] sm:$0xff]
        %v2973 = vpack.c.bf16 %v2942, %v2941
        %v2974 = vpack.c.bf16 %v2944, %v2943
        %v2975 = vpack.c.bf16 %v2946, %v2945
        %v2976 = vpack.c.bf16 %v2948, %v2947
        %v2977 = vpack.c.bf16 %v2950, %v2949
        %v2978 = vpack.c.bf16 %v2952, %v2951
        %v2979 = vpack.c.bf16 %v2954, %v2953
        %v2980 = vpack.c.bf16 %v2956, %v2955
        %v2981 = vpack.c.bf16 %v2958, %v2957
        %v2982 = vpack.c.bf16 %v2960, %v2959
        %v2983 = vpack.c.bf16 %v2962, %v2961
        %v2984 = vpack.c.bf16 %v2964, %v2963
        %v2985 = vpack.c.bf16 %v2966, %v2965
        %v2986 = vpack.c.bf16 %v2968, %v2967
        %v2987 = vpack.c.bf16 %v2970, %v2969
        %v2988 = vpack.c.bf16 %v2972, %v2971
        %3005 = vrot.lane.b32.xlu0 %v2973, 96
        %v3006 = vpop.permute.xlu0 %3005
        %3007 = vrot.lane.b32.xlu0 %v2974, 96
        %v3008 = vpop.permute.xlu0 %3007
        %3009 = vrot.lane.b32.xlu0 %v2975, 96
        %v3010 = vpop.permute.xlu0 %3009
        %3011 = vrot.lane.b32.xlu0 %v2976, 96
        %v3012 = vpop.permute.xlu0 %3011
        %3013 = vrot.lane.b32.xlu0 %v2977, 96
        %v3014 = vpop.permute.xlu0 %3013
        %3015 = vrot.lane.b32.xlu0 %v2978, 96
        %v3016 = vpop.permute.xlu0 %3015
        %3017 = vrot.lane.b32.xlu0 %v2979, 96
        %v3018 = vpop.permute.xlu0 %3017
        %3019 = vrot.lane.b32.xlu0 %v2980, 96
        %v3020 = vpop.permute.xlu0 %3019
        %3021 = vrot.lane.b32.xlu0 %v2981, 96
        %v3022 = vpop.permute.xlu0 %3021
        %3023 = vrot.lane.b32.xlu0 %v2982, 96
        %v3024 = vpop.permute.xlu0 %3023
        %3025 = vrot.lane.b32.xlu0 %v2983, 96
        %v3026 = vpop.permute.xlu0 %3025
        %3027 = vrot.lane.b32.xlu0 %v2984, 96
        %v3028 = vpop.permute.xlu0 %3027
        %3029 = vrot.lane.b32.xlu0 %v2985, 96
        %v3030 = vpop.permute.xlu0 %3029
        %3031 = vrot.lane.b32.xlu0 %v2986, 96
        %v3032 = vpop.permute.xlu0 %3031
        %3033 = vrot.lane.b32.xlu0 %v2987, 96
        %v3034 = vpop.permute.xlu0 %3033
        %3035 = vrot.lane.b32.xlu0 %v2988, 96
        %v3036 = vpop.permute.xlu0 %3035
        %3053 = vst.msk [vmem:[#allocation4 + $0x8] sm:$0xff] %vm2603, %v3006
        %3054 = vst.msk [vmem:[#allocation4 + $0x20] sm:$0xff] %vm2603, %v3008
        %3055 = vst.msk [vmem:[#allocation4 + $0x38] sm:$0xff] %vm2603, %v3010
        %3056 = vst.msk [vmem:[#allocation4 + $0x50] sm:$0xff] %vm2603, %v3012
        %3057 = vst.msk [vmem:[#allocation4 + $0x68] sm:$0xff] %vm2603, %v3014
        %3058 = vst.msk [vmem:[#allocation4 + $0x80] sm:$0xff] %vm2603, %v3016
        %3059 = vst.msk [vmem:[#allocation4 + $0x98] sm:$0xff] %vm2603, %v3018
        %3060 = vst.msk [vmem:[#allocation4 + $0xb0] sm:$0xff] %vm2603, %v3020
        %3061 = vst.msk [vmem:[#allocation4 + $0xc8] sm:$0xff] %vm2603, %v3022
        %3062 = vst.msk [vmem:[#allocation4 + $0xe0] sm:$0xff] %vm2603, %v3024
        %3063 = vst.msk [vmem:[#allocation4 + $0xf8] sm:$0xff] %vm2603, %v3026
        %3064 = vst.msk [vmem:[#allocation4 + $0x110] sm:$0xff] %vm2603, %v3028
        %3065 = vst.msk [vmem:[#allocation4 + $0x128] sm:$0xff] %vm2603, %v3030
        %3066 = vst.msk [vmem:[#allocation4 + $0x140] sm:$0xff] %vm2603, %v3032
        %3067 = vst.msk [vmem:[#allocation4 + $0x158] sm:$0xff] %vm2603, %v3034
        %3068 = vst.msk [vmem:[#allocation4 + $0x170] sm:$0xff] %vm2603, %v3036
        %v3069 = vld [vmem:[%s2812 + $0x2] sm:$0xff]
        %v3070 = vld [vmem:[%s2812 + $0xa] sm:$0xff]
        %v3071 = vld [vmem:[%s2812 + $0x1a] sm:$0xff]
        %v3072 = vld [vmem:[%s2812 + $0x22] sm:$0xff]
        %v3073 = vld [vmem:[%s2812 + $0x32] sm:$0xff]
        %v3074 = vld [vmem:[%s2812 + $0x3a] sm:$0xff]
        %v3075 = vld [vmem:[%s2812 + $0x4a] sm:$0xff]
        %v3076 = vld [vmem:[%s2812 + $0x52] sm:$0xff]
        %v3077 = vld [vmem:[%s2812 + $0x62] sm:$0xff]
        %v3078 = vld [vmem:[%s2812 + $0x6a] sm:$0xff]
        %v3079 = vld [vmem:[%s2812 + $0x7a] sm:$0xff]
        %v3080 = vld [vmem:[%s2812 + $0x82] sm:$0xff]
        %v3081 = vld [vmem:[%s2812 + $0x92] sm:$0xff]
        %v3082 = vld [vmem:[%s2812 + $0x9a] sm:$0xff]
        %v3083 = vld [vmem:[%s2812 + $0xaa] sm:$0xff]
        %v3084 = vld [vmem:[%s2812 + $0xb2] sm:$0xff]
        %v3085 = vld [vmem:[%s2812 + $0xc2] sm:$0xff]
        %v3086 = vld [vmem:[%s2812 + $0xca] sm:$0xff]
        %v3087 = vld [vmem:[%s2812 + $0xda] sm:$0xff]
        %v3088 = vld [vmem:[%s2812 + $0xe2] sm:$0xff]
        %v3089 = vld [vmem:[%s2812 + $0xf2] sm:$0xff]
        %v3090 = vld [vmem:[%s2812 + $0xfa] sm:$0xff]
        %v3091 = vld [vmem:[%s2812 + $0x10a] sm:$0xff]
        %v3092 = vld [vmem:[%s2812 + $0x112] sm:$0xff]
        %v3093 = vld [vmem:[%s2812 + $0x122] sm:$0xff]
        %v3094 = vld [vmem:[%s2812 + $0x12a] sm:$0xff]
        %v3095 = vld [vmem:[%s2812 + $0x13a] sm:$0xff]
        %v3096 = vld [vmem:[%s2812 + $0x142] sm:$0xff]
        %v3097 = vld [vmem:[%s2812 + $0x152] sm:$0xff]
        %v3098 = vld [vmem:[%s2812 + $0x15a] sm:$0xff]
        %v3099 = vld [vmem:[%s2812 + $0x16a] sm:$0xff]
        %v3100 = vld [vmem:[%s2812 + $0x172] sm:$0xff]
        %v3101 = vpack.c.bf16 %v3070, %v3069
        %v3102 = vpack.c.bf16 %v3072, %v3071
        %v3103 = vpack.c.bf16 %v3074, %v3073
        %v3104 = vpack.c.bf16 %v3076, %v3075
        %v3105 = vpack.c.bf16 %v3078, %v3077
        %v3106 = vpack.c.bf16 %v3080, %v3079
        %v3107 = vpack.c.bf16 %v3082, %v3081
        %v3108 = vpack.c.bf16 %v3084, %v3083
        %v3109 = vpack.c.bf16 %v3086, %v3085
        %v3110 = vpack.c.bf16 %v3088, %v3087
        %v3111 = vpack.c.bf16 %v3090, %v3089
        %v3112 = vpack.c.bf16 %v3092, %v3091
        %v3113 = vpack.c.bf16 %v3094, %v3093
        %v3114 = vpack.c.bf16 %v3096, %v3095
        %v3115 = vpack.c.bf16 %v3098, %v3097
        %v3116 = vpack.c.bf16 %v3100, %v3099
        %3117 = vst.msk [vmem:[#allocation4 + $0x10] sm:$0xff] %vm1540, %v3101
        %3118 = vst.msk [vmem:[#allocation4 + $0x28] sm:$0xff] %vm1540, %v3102
        %3119 = vst.msk [vmem:[#allocation4 + $0x40] sm:$0xff] %vm1540, %v3103
        %3120 = vst.msk [vmem:[#allocation4 + $0x58] sm:$0xff] %vm1540, %v3104
        %3121 = vst.msk [vmem:[#allocation4 + $0x70] sm:$0xff] %vm1540, %v3105
        %3122 = vst.msk [vmem:[#allocation4 + $0x88] sm:$0xff] %vm1540, %v3106
        %3123 = vst.msk [vmem:[#allocation4 + $0xa0] sm:$0xff] %vm1540, %v3107
        %3124 = vst.msk [vmem:[#allocation4 + $0xb8] sm:$0xff] %vm1540, %v3108
        %3125 = vst.msk [vmem:[#allocation4 + $0xd0] sm:$0xff] %vm1540, %v3109
        %3126 = vst.msk [vmem:[#allocation4 + $0xe8] sm:$0xff] %vm1540, %v3110
        %3127 = vst.msk [vmem:[#allocation4 + $0x100] sm:$0xff] %vm1540, %v3111
        %3128 = vst.msk [vmem:[#allocation4 + $0x118] sm:$0xff] %vm1540, %v3112
        %3129 = vst.msk [vmem:[#allocation4 + $0x130] sm:$0xff] %vm1540, %v3113
        %3130 = vst.msk [vmem:[#allocation4 + $0x148] sm:$0xff] %vm1540, %v3114
        %3131 = vst.msk [vmem:[#allocation4 + $0x160] sm:$0xff] %vm1540, %v3115
        %3132 = vst.msk [vmem:[#allocation4 + $0x178] sm:$0xff] %vm1540, %v3116
        %v3133 = vld [vmem:[#allocation4] sm:$0xff]
        %v3134 = vld [vmem:[#allocation4 + $0x8] sm:$0xff]
        %v3135 = vld [vmem:[#allocation4 + $0x10] sm:$0xff]
        %v3136 = vld [vmem:[#allocation4 + $0x18] sm:$0xff]
        %v3137 = vld [vmem:[#allocation4 + $0x20] sm:$0xff]
        %v3138 = vld [vmem:[#allocation4 + $0x28] sm:$0xff]
        %v3139 = vld [vmem:[#allocation4 + $0x30] sm:$0xff]
        %v3140 = vld [vmem:[#allocation4 + $0x38] sm:$0xff]
        %v3141 = vld [vmem:[#allocation4 + $0x40] sm:$0xff]
        %v3142 = vld [vmem:[#allocation4 + $0x48] sm:$0xff]
        %v3143 = vld [vmem:[#allocation4 + $0x50] sm:$0xff]
        %v3144 = vld [vmem:[#allocation4 + $0x58] sm:$0xff]
        %v3145 = vld [vmem:[#allocation4 + $0x60] sm:$0xff]
        %v3146 = vld [vmem:[#allocation4 + $0x68] sm:$0xff]
        %v3147 = vld [vmem:[#allocation4 + $0x70] sm:$0xff]
        %v3148 = vld [vmem:[#allocation4 + $0x78] sm:$0xff]
        %v3149 = vld [vmem:[#allocation4 + $0x80] sm:$0xff]
        %v3150 = vld [vmem:[#allocation4 + $0x88] sm:$0xff]
        %v3151 = vld [vmem:[#allocation4 + $0x90] sm:$0xff]
        %v3152 = vld [vmem:[#allocation4 + $0x98] sm:$0xff]
        %v3153 = vld [vmem:[#allocation4 + $0xa0] sm:$0xff]
        %v3154 = vld [vmem:[#allocation4 + $0xa8] sm:$0xff]
        %v3155 = vld [vmem:[#allocation4 + $0xb0] sm:$0xff]
        %v3156 = vld [vmem:[#allocation4 + $0xb8] sm:$0xff]
        %v3157 = vld [vmem:[#allocation4 + $0xc0] sm:$0xff]
        %v3158 = vld [vmem:[#allocation4 + $0xc8] sm:$0xff]
        %v3159 = vld [vmem:[#allocation4 + $0xd0] sm:$0xff]
        %v3160 = vld [vmem:[#allocation4 + $0xd8] sm:$0xff]
        %v3161 = vld [vmem:[#allocation4 + $0xe0] sm:$0xff]
        %v3162 = vld [vmem:[#allocation4 + $0xe8] sm:$0xff]
        %v3163 = vld [vmem:[#allocation4 + $0xf0] sm:$0xff]
        %v3164 = vld [vmem:[#allocation4 + $0xf8] sm:$0xff]
        %v3165 = vld [vmem:[#allocation4 + $0x100] sm:$0xff]
        %v3166 = vld [vmem:[#allocation4 + $0x108] sm:$0xff]
        %v3167 = vld [vmem:[#allocation4 + $0x110] sm:$0xff]
        %v3168 = vld [vmem:[#allocation4 + $0x118] sm:$0xff]
        %v3169 = vld [vmem:[#allocation4 + $0x120] sm:$0xff]
        %v3170 = vld [vmem:[#allocation4 + $0x128] sm:$0xff]
        %v3171 = vld [vmem:[#allocation4 + $0x130] sm:$0xff]
        %v3172 = vld [vmem:[#allocation4 + $0x138] sm:$0xff]
        %v3173 = vld [vmem:[#allocation4 + $0x140] sm:$0xff]
        %v3174 = vld [vmem:[#allocation4 + $0x148] sm:$0xff]
        %v3175 = vld [vmem:[#allocation4 + $0x150] sm:$0xff]
        %v3176 = vld [vmem:[#allocation4 + $0x158] sm:$0xff]
        %v3177 = vld [vmem:[#allocation4 + $0x160] sm:$0xff]
        %v3178 = vld [vmem:[#allocation4 + $0x168] sm:$0xff]
        %v3179 = vld [vmem:[#allocation4 + $0x170] sm:$0xff]
        %v3180 = vld [vmem:[#allocation4 + $0x178] sm:$0xff]
        %v3181 = vld [vmem:[%s3] sm:$0xf]
        %v3182 = vld [vmem:[%s3 + $0x4] sm:$0xf]
        %v3183 = vld [vmem:[%s3 + $0x8] sm:$0xf]
        %v3184 = vld [vmem:[%s3 + $0xc] sm:$0xf]
        %v3185 = vld [vmem:[%s3 + $0x10] sm:$0xf]
        %v3186 = vld [vmem:[%s3 + $0x14] sm:$0xf]
        %v3187 = vld [vmem:[%s3 + $0x18] sm:$0xf]
        %v3188 = vld [vmem:[%s3 + $0x1c] sm:$0xf]
        %v3189 = vld [vmem:[%s3 + $0x20] sm:$0xf]
        %v3190 = vld [vmem:[%s3 + $0x24] sm:$0xf]
        %v3191 = vld [vmem:[%s3 + $0x28] sm:$0xf]
        %v3192 = vld [vmem:[%s3 + $0x2c] sm:$0xf]
        %v3193 = vld [vmem:[%s3 + $0x30] sm:$0xf]
        %v3194 = vld [vmem:[%s3 + $0x34] sm:$0xf]
        %v3195 = vld [vmem:[%s3 + $0x38] sm:$0xf]
        %v3196 = vld [vmem:[%s3 + $0x3c] sm:$0xf]
        %v3197 = vld [vmem:[%s3 + $0x40] sm:$0xf]
        %v3198 = vld [vmem:[%s3 + $0x44] sm:$0xf]
        %v3199 = vld [vmem:[%s3 + $0x48] sm:$0xf]
        %v3200 = vld [vmem:[%s3 + $0x4c] sm:$0xf]
        %v3201 = vld [vmem:[%s3 + $0x50] sm:$0xf]
        %v3202 = vld [vmem:[%s3 + $0x54] sm:$0xf]
        %v3203 = vld [vmem:[%s3 + $0x58] sm:$0xf]
        %v3204 = vld [vmem:[%s3 + $0x5c] sm:$0xf]
        %v3205 = vld [vmem:[%s3 + $0x60] sm:$0xf]
        %v3206 = vld [vmem:[%s3 + $0x64] sm:$0xf]
        %v3207 = vld [vmem:[%s3 + $0x68] sm:$0xf]
        %v3208 = vld [vmem:[%s3 + $0x6c] sm:$0xf]
        %v3209 = vld [vmem:[%s3 + $0x70] sm:$0xf]
        %v3210 = vld [vmem:[%s3 + $0x74] sm:$0xf]
        %v3211 = vld [vmem:[%s3 + $0x78] sm:$0xf]
        %v3212 = vld [vmem:[%s3 + $0x7c] sm:$0xf]
        %v3213 = vld [vmem:[%s3 + $0x80] sm:$0xf]
        %v3214 = vld [vmem:[%s3 + $0x84] sm:$0xf]
        %v3215 = vld [vmem:[%s3 + $0x88] sm:$0xf]
        %v3216 = vld [vmem:[%s3 + $0x8c] sm:$0xf]
        %v3253 = vunpack.c.l.b16 %v3181
        %v3254 = vunpack.c.l.b16 %v3182
        %v3255 = vunpack.c.l.b16 %v3183
        %v3256 = vunpack.c.l.b16 %v3184
        %v3257 = vunpack.c.l.b16 %v3185
        %v3258 = vunpack.c.l.b16 %v3186
        %v3259 = vunpack.c.l.b16 %v3187
        %v3260 = vunpack.c.l.b16 %v3188
        %v3261 = vunpack.c.l.b16 %v3189
        %v3262 = vunpack.c.l.b16 %v3190
        %v3263 = vunpack.c.l.b16 %v3191
        %v3264 = vunpack.c.l.b16 %v3192
        %v3265 = vunpack.c.l.b16 %v3193
        %v3266 = vunpack.c.l.b16 %v3194
        %v3267 = vunpack.c.l.b16 %v3195
        %v3268 = vunpack.c.l.b16 %v3196
        %v3269 = vunpack.c.l.b16 %v3197
        %v3270 = vunpack.c.l.b16 %v3198
        %v3271 = vunpack.c.l.b16 %v3199
        %v3272 = vunpack.c.l.b16 %v3200
        %v3273 = vunpack.c.l.b16 %v3201
        %v3274 = vunpack.c.l.b16 %v3202
        %v3275 = vunpack.c.l.b16 %v3203
        %v3276 = vunpack.c.l.b16 %v3204
        %v3277 = vunpack.c.l.b16 %v3205
        %v3278 = vunpack.c.l.b16 %v3206
        %v3279 = vunpack.c.l.b16 %v3207
        %v3280 = vunpack.c.l.b16 %v3208
        %v3281 = vunpack.c.l.b16 %v3209
        %v3282 = vunpack.c.l.b16 %v3210
        %v3283 = vunpack.c.l.b16 %v3211
        %v3284 = vunpack.c.l.b16 %v3212
        %v3285 = vunpack.c.l.b16 %v3213
        %v3286 = vunpack.c.l.b16 %v3214
        %v3287 = vunpack.c.l.b16 %v3215
        %v3288 = vunpack.c.l.b16 %v3216
        %v3289 = vpack.c.b16 %v3254, %v3253
        %v3290 = vpack.c.b16 %v3256, %v3255
        %v3291 = vpack.c.b16 %v3258, %v3257
        %v3292 = vpack.c.b16 %v3260, %v3259
        %v3293 = vpack.c.b16 %v3262, %v3261
        %v3294 = vpack.c.b16 %v3264, %v3263
        %v3295 = vpack.c.b16 %v3266, %v3265
        %v3296 = vpack.c.b16 %v3268, %v3267
        %v3297 = vpack.c.b16 %v3270, %v3269
        %v3298 = vpack.c.b16 %v3272, %v3271
        %v3299 = vpack.c.b16 %v3274, %v3273
        %v3300 = vpack.c.b16 %v3276, %v3275
        %v3301 = vpack.c.b16 %v3278, %v3277
        %v3302 = vpack.c.b16 %v3280, %v3279
        %v3303 = vpack.c.b16 %v3282, %v3281
        %v3304 = vpack.c.b16 %v3284, %v3283
        %v3305 = vpack.c.b16 %v3286, %v3285
        %v3306 = vpack.c.b16 %v3288, %v3287
        %v3326 = vsel %vm1540, %v3135, 0
        %v3329 = vsel %vm1540, %v3138, 0
        %v3332 = vsel %vm1540, %v3141, 0
        %v3335 = vsel %vm1540, %v3144, 0
        %v3338 = vsel %vm1540, %v3147, 0
        %v3341 = vsel %vm1540, %v3150, 0
        %v3344 = vsel %vm1540, %v3153, 0
        %v3347 = vsel %vm1540, %v3156, 0
        %v3350 = vsel %vm1540, %v3159, 0
        %v3353 = vsel %vm1540, %v3162, 0
        %v3356 = vsel %vm1540, %v3165, 0
        %v3359 = vsel %vm1540, %v3168, 0
        %v3362 = vsel %vm1540, %v3171, 0
        %v3365 = vsel %vm1540, %v3174, 0
        %v3368 = vsel %vm1540, %v3177, 0
        %v3371 = vsel %vm1540, %v3180, 0
        %3373 = vmatprep.subr.bf16.mxu0 0
        %3374 = vmatpush1.bf16.msra.mxu0 %v3289
        %3375 = vmatprep.subr.bf16.mxu0 0
        %3376 = vmatpush1.bf16.msra.mxu0 %v3290
        %3377 = vmatprep.subr.bf16.mxu0 0
        %3378 = vmatpush1.bf16.msra.mxu0 %v3291
        %3379 = vmatprep.subr.bf16.mxu0 0
        %3380 = vmatpush1.bf16.msra.mxu0 %v3292
        %3381 = vmatprep.subr.bf16.mxu0 0
        %3382 = vmatpush1.bf16.msra.mxu0 %v3293
        %3383 = vmatprep.subr.bf16.mxu0 0
        %3384 = vmatpush1.bf16.msra.mxu0 %v3294
        %3385 = vmatprep.subr.bf16.mxu0 0
        %3386 = vmatpush1.bf16.msra.mxu0 %v3295
        %3387 = vmatprep.subr.bf16.mxu0 0
        %3388 = vmatpush1.bf16.msra.mxu0 %v3296
        %3389 = vmatprep.subr.bf16.mxu0 0
        %3390 = vmatpush1.bf16.msra.mxu0 %v3297
        %3391 = vmatprep.subr.bf16.mxu0 0
        %3392 = vmatpush1.bf16.msra.mxu0 %v3298
        %3393 = vmatprep.subr.bf16.mxu0 0
        %3394 = vmatpush1.bf16.msra.mxu0 %v3299
        %3395 = vmatprep.subr.bf16.mxu0 0
        %3396 = vmatpush1.bf16.msra.mxu0 %v3300
        %3397 = vmatprep.subr.bf16.mxu0 0
        %3398 = vmatpush1.bf16.msra.mxu0 %v3301
        %3399 = vmatprep.subr.bf16.mxu0 0
        %3400 = vmatpush1.bf16.msra.mxu0 %v3302
        %3401 = vmatprep.subr.bf16.mxu0 0
        %3402 = vmatpush1.bf16.msra.mxu0 %v3303
        %3403 = vmatprep.subr.bf16.mxu0 0
        %3404 = vmatpush1.bf16.msra.mxu0 %v3304
        %3405 = vmatprep.mubr.bf16.mxu0 %v3134
        %3406 = vmatmul.mubr.bf16.gmra.mrb[0].mxu0 %v3133
        %v3407 = vpop.f32.mrb[0].mxu0
        %v3408 = vadd.f32 0.0, %v3407
        %v3409 = vpop.f32.mrb[0].mxu0
        %v3410 = vpop.f32.mrb[0].mxu0
        %v3411 = vadd.f32 0.0, %v3410
        %v3412 = vpop.f32.mrb[0].mxu0
        %3413 = vmatprep.mubr.bf16.mxu0 %v3137
        %3414 = vmatmul.mubr.bf16.gmra.mrb[0].mxu0 %v3136
        %v3415 = vpop.f32.mrb[0].mxu0
        %v3416 = vadd.f32 0.0, %v3415
        %v3417 = vpop.f32.mrb[0].mxu0
        %v3418 = vpop.f32.mrb[0].mxu0
        %v3419 = vadd.f32 0.0, %v3418
        %v3420 = vpop.f32.mrb[0].mxu0
        %3421 = vmatprep.mubr.bf16.mxu0 %v3140
        %3422 = vmatmul.mubr.bf16.gmra.mrb[0].mxu0 %v3139
        %v3423 = vpop.f32.mrb[0].mxu0
        %v3424 = vadd.f32 0.0, %v3423
        %v3425 = vpop.f32.mrb[0].mxu0
        %v3426 = vpop.f32.mrb[0].mxu0
        %v3427 = vadd.f32 0.0, %v3426
        %v3428 = vpop.f32.mrb[0].mxu0
        %3429 = vmatprep.mubr.bf16.mxu0 %v3143
        %3430 = vmatmul.mubr.bf16.gmra.mrb[0].mxu0 %v3142
        %v3431 = vpop.f32.mrb[0].mxu0
        %v3432 = vadd.f32 0.0, %v3431
        %v3433 = vpop.f32.mrb[0].mxu0
        %v3434 = vpop.f32.mrb[0].mxu0
        %v3435 = vadd.f32 0.0, %v3434
        %v3436 = vpop.f32.mrb[0].mxu0
        %3437 = vmatprep.mubr.bf16.mxu0 %v3146
        %3438 = vmatmul.mubr.bf16.gmra.mrb[0].mxu0 %v3145
        %v3439 = vpop.f32.mrb[0].mxu0
        %v3440 = vadd.f32 0.0, %v3439
        %v3441 = vpop.f32.mrb[0].mxu0
        %v3442 = vpop.f32.mrb[0].mxu0
        %v3443 = vadd.f32 0.0, %v3442
        %v3444 = vpop.f32.mrb[0].mxu0
        %3445 = vmatprep.mubr.bf16.mxu0 %v3149
        %3446 = vmatmul.mubr.bf16.gmra.mrb[0].mxu0 %v3148
        %v3447 = vpop.f32.mrb[0].mxu0
        %v3448 = vadd.f32 0.0, %v3447
        %v3449 = vpop.f32.mrb[0].mxu0
        %v3450 = vpop.f32.mrb[0].mxu0
        %v3451 = vadd.f32 0.0, %v3450
        %v3452 = vpop.f32.mrb[0].mxu0
        %3453 = vmatprep.mubr.bf16.mxu0 %v3152
        %3454 = vmatmul.mubr.bf16.gmra.mrb[0].mxu0 %v3151
        %v3455 = vpop.f32.mrb[0].mxu0
        %v3456 = vadd.f32 0.0, %v3455
        %v3457 = vpop.f32.mrb[0].mxu0
        %v3458 = vpop.f32.mrb[0].mxu0
        %v3459 = vadd.f32 0.0, %v3458
        %v3460 = vpop.f32.mrb[0].mxu0
        %3461 = vmatprep.mubr.bf16.mxu0 %v3155
        %3462 = vmatmul.mubr.bf16.gmra.mrb[0].mxu0 %v3154
        %v3463 = vpop.f32.mrb[0].mxu0
        %v3464 = vadd.f32 0.0, %v3463
        %v3465 = vpop.f32.mrb[0].mxu0
        %v3466 = vpop.f32.mrb[0].mxu0
        %v3467 = vadd.f32 0.0, %v3466
        %v3468 = vpop.f32.mrb[0].mxu0
        %3469 = vmatprep.mubr.bf16.mxu0 %v3158
        %3470 = vmatmul.mubr.bf16.gmra.mrb[0].mxu0 %v3157
        %v3471 = vpop.f32.mrb[0].mxu0
        %v3472 = vadd.f32 0.0, %v3471
        %v3473 = vpop.f32.mrb[0].mxu0
        %v3474 = vpop.f32.mrb[0].mxu0
        %v3475 = vadd.f32 0.0, %v3474
        %v3476 = vpop.f32.mrb[0].mxu0
        %3477 = vmatprep.mubr.bf16.mxu0 %v3161
        %3478 = vmatmul.mubr.bf16.gmra.mrb[0].mxu0 %v3160
        %v3479 = vpop.f32.mrb[0].mxu0
        %v3480 = vadd.f32 0.0, %v3479
        %v3481 = vpop.f32.mrb[0].mxu0
        %v3482 = vpop.f32.mrb[0].mxu0
        %v3483 = vadd.f32 0.0, %v3482
        %v3484 = vpop.f32.mrb[0].mxu0
        %3485 = vmatprep.mubr.bf16.mxu0 %v3164
        %3486 = vmatmul.mubr.bf16.gmra.mrb[0].mxu0 %v3163
        %v3487 = vpop.f32.mrb[0].mxu0
        %v3488 = vadd.f32 0.0, %v3487
        %v3489 = vpop.f32.mrb[0].mxu0
        %v3490 = vpop.f32.mrb[0].mxu0
        %v3491 = vadd.f32 0.0, %v3490
        %v3492 = vpop.f32.mrb[0].mxu0
        %3493 = vmatprep.mubr.bf16.mxu0 %v3167
        %3494 = vmatmul.mubr.bf16.gmra.mrb[0].mxu0 %v3166
        %v3495 = vpop.f32.mrb[0].mxu0
        %v3496 = vadd.f32 0.0, %v3495
        %v3497 = vpop.f32.mrb[0].mxu0
        %v3498 = vpop.f32.mrb[0].mxu0
        %v3499 = vadd.f32 0.0, %v3498
        %v3500 = vpop.f32.mrb[0].mxu0
        %3501 = vmatprep.mubr.bf16.mxu0 %v3170
        %3502 = vmatmul.mubr.bf16.gmra.mrb[0].mxu0 %v3169
        %v3503 = vpop.f32.mrb[0].mxu0
        %v3504 = vadd.f32 0.0, %v3503
        %v3505 = vpop.f32.mrb[0].mxu0
        %v3506 = vpop.f32.mrb[0].mxu0
        %v3507 = vadd.f32 0.0, %v3506
        %v3508 = vpop.f32.mrb[0].mxu0
        %3509 = vmatprep.mubr.bf16.mxu0 %v3173
        %3510 = vmatmul.mubr.bf16.gmra.mrb[0].mxu0 %v3172
        %v3511 = vpop.f32.mrb[0].mxu0
        %v3512 = vadd.f32 0.0, %v3511
        %v3513 = vpop.f32.mrb[0].mxu0
        %v3514 = vpop.f32.mrb[0].mxu0
        %v3515 = vadd.f32 0.0, %v3514
        %v3516 = vpop.f32.mrb[0].mxu0
        %3517 = vmatprep.mubr.bf16.mxu0 %v3176
        %3518 = vmatmul.mubr.bf16.gmra.mrb[0].mxu0 %v3175
        %v3519 = vpop.f32.mrb[0].mxu0
        %v3520 = vadd.f32 0.0, %v3519
        %v3521 = vpop.f32.mrb[0].mxu0
        %v3522 = vpop.f32.mrb[0].mxu0
        %v3523 = vadd.f32 0.0, %v3522
        %v3524 = vpop.f32.mrb[0].mxu0
        %3525 = vmatprep.mubr.bf16.mxu0 %v3179
        %3526 = vmatmul.mubr.bf16.gmra.mrb[0].mxu0 %v3178
        %v3527 = vpop.f32.mrb[0].mxu0
        %v3528 = vadd.f32 0.0, %v3527
        %v3529 = vpop.f32.mrb[0].mxu0
        %v3530 = vpop.f32.mrb[0].mxu0
        %v3531 = vadd.f32 0.0, %v3530
        %v3532 = vpop.f32.mrb[0].mxu0
        %3533 = vdwg.mxu0
        %3534 = vmatprep.subr.bf16.mxu0 0
        %3535 = vmatpush1.bf16.msra.mxu0 %v3305
        %3536 = vmatprep.subr.bf16.mxu0 0
        %3537 = vmatpush1.bf16.msra.mxu0 %v3306
        %3538 = vmatprep.subr.bf16.mxu0 0
        %3539 = vmatpush1.bf16.msra.mxu0 0
        %3540 = vmatprep.subr.bf16.mxu0 0
        %3541 = vmatpush1.bf16.msra.mxu0 0
        %3542 = vmatprep.subr.bf16.mxu0 0
        %3543 = vmatpush1.bf16.msra.mxu0 0
        %3544 = vmatprep.subr.bf16.mxu0 0
        %3545 = vmatpush1.bf16.msra.mxu0 0
        %3546 = vmatprep.subr.bf16.mxu0 0
        %3547 = vmatpush1.bf16.msra.mxu0 0
        %3548 = vmatprep.subr.bf16.mxu0 0
        %3549 = vmatpush1.bf16.msra.mxu0 0
        %3550 = vmatprep.subr.bf16.mxu0 0
        %3551 = vmatpush1.bf16.msra.mxu0 0
        %3552 = vmatprep.subr.bf16.mxu0 0
        %3553 = vmatpush1.bf16.msra.mxu0 0
        %3554 = vmatprep.subr.bf16.mxu0 0
        %3555 = vmatpush1.bf16.msra.mxu0 0
        %3556 = vmatprep.subr.bf16.mxu0 0
        %3557 = vmatpush1.bf16.msra.mxu0 0
        %3558 = vmatprep.subr.bf16.mxu0 0
        %3559 = vmatpush1.bf16.msra.mxu0 0
        %3560 = vmatprep.subr.bf16.mxu0 0
        %3561 = vmatpush1.bf16.msra.mxu0 0
        %3562 = vmatprep.subr.bf16.mxu0 0
        %3563 = vmatpush1.bf16.msra.mxu0 0
        %3564 = vmatprep.subr.bf16.mxu0 0
        %3565 = vmatpush1.bf16.msra.mxu0 0
        %3566 = vmatprep.mubr.bf16.mxu0 0
        %3567 = vmatmul.mubr.bf16.gmra.mrb[0].mxu0 %v3326
        %v3568 = vpop.f32.mrb[0].mxu0
        %v3569 = vadd.f32 %v3408, %v3568
        %v3570 = vpop.f32.mrb[0].mxu0
        %v3571 = vpop.f32.mrb[0].mxu0
        %v3572 = vadd.f32 %v3411, %v3571
        %v3573 = vpop.f32.mrb[0].mxu0
        %3574 = vmatprep.mubr.bf16.mxu0 0
        %3575 = vmatmul.mubr.bf16.gmra.mrb[0].mxu0 %v3329
        %v3576 = vpop.f32.mrb[0].mxu0
        %v3577 = vadd.f32 %v3416, %v3576
        %v3578 = vpop.f32.mrb[0].mxu0
        %v3579 = vpop.f32.mrb[0].mxu0
        %v3580 = vadd.f32 %v3419, %v3579
        %v3581 = vpop.f32.mrb[0].mxu0
        %3582 = vmatprep.mubr.bf16.mxu0 0
        %3583 = vmatmul.mubr.bf16.gmra.mrb[0].mxu0 %v3332
        %v3584 = vpop.f32.mrb[0].mxu0
        %v3585 = vadd.f32 %v3424, %v3584
        %v3586 = vpop.f32.mrb[0].mxu0
        %v3587 = vpop.f32.mrb[0].mxu0
        %v3588 = vadd.f32 %v3427, %v3587
        %v3589 = vpop.f32.mrb[0].mxu0
        %3590 = vmatprep.mubr.bf16.mxu0 0
        %3591 = vmatmul.mubr.bf16.gmra.mrb[0].mxu0 %v3335
        %v3592 = vpop.f32.mrb[0].mxu0
        %v3593 = vadd.f32 %v3432, %v3592
        %v3594 = vpop.f32.mrb[0].mxu0
        %v3595 = vpop.f32.mrb[0].mxu0
        %v3596 = vadd.f32 %v3435, %v3595
        %v3597 = vpop.f32.mrb[0].mxu0
        %3598 = vmatprep.mubr.bf16.mxu0 0
        %3599 = vmatmul.mubr.bf16.gmra.mrb[0].mxu0 %v3338
        %v3600 = vpop.f32.mrb[0].mxu0
        %v3601 = vadd.f32 %v3440, %v3600
        %v3602 = vpop.f32.mrb[0].mxu0
        %v3603 = vpop.f32.mrb[0].mxu0
        %v3604 = vadd.f32 %v3443, %v3603
        %v3605 = vpop.f32.mrb[0].mxu0
        %3606 = vmatprep.mubr.bf16.mxu0 0
        %3607 = vmatmul.mubr.bf16.gmra.mrb[0].mxu0 %v3341
        %v3608 = vpop.f32.mrb[0].mxu0
        %v3609 = vadd.f32 %v3448, %v3608
        %v3610 = vpop.f32.mrb[0].mxu0
        %v3611 = vpop.f32.mrb[0].mxu0
        %v3612 = vadd.f32 %v3451, %v3611
        %v3613 = vpop.f32.mrb[0].mxu0
        %3614 = vmatprep.mubr.bf16.mxu0 0
        %3615 = vmatmul.mubr.bf16.gmra.mrb[0].mxu0 %v3344
        %v3616 = vpop.f32.mrb[0].mxu0
        %v3617 = vadd.f32 %v3456, %v3616
        %v3618 = vpop.f32.mrb[0].mxu0
        %v3619 = vpop.f32.mrb[0].mxu0
        %v3620 = vadd.f32 %v3459, %v3619
        %v3621 = vpop.f32.mrb[0].mxu0
        %3622 = vmatprep.mubr.bf16.mxu0 0
        %3623 = vmatmul.mubr.bf16.gmra.mrb[0].mxu0 %v3347
        %v3624 = vpop.f32.mrb[0].mxu0
        %v3625 = vadd.f32 %v3464, %v3624
        %v3626 = vpop.f32.mrb[0].mxu0
        %v3627 = vpop.f32.mrb[0].mxu0
        %v3628 = vadd.f32 %v3467, %v3627
        %v3629 = vpop.f32.mrb[0].mxu0
        %3630 = vmatprep.mubr.bf16.mxu0 0
        %3631 = vmatmul.mubr.bf16.gmra.mrb[0].mxu0 %v3350
        %v3632 = vpop.f32.mrb[0].mxu0
        %v3633 = vadd.f32 %v3472, %v3632
        %v3634 = vpop.f32.mrb[0].mxu0
        %v3635 = vpop.f32.mrb[0].mxu0
        %v3636 = vadd.f32 %v3475, %v3635
        %v3637 = vpop.f32.mrb[0].mxu0
        %3638 = vmatprep.mubr.bf16.mxu0 0
        %3639 = vmatmul.mubr.bf16.gmra.mrb[0].mxu0 %v3353
        %v3640 = vpop.f32.mrb[0].mxu0
        %v3641 = vadd.f32 %v3480, %v3640
        %v3642 = vpop.f32.mrb[0].mxu0
        %v3643 = vpop.f32.mrb[0].mxu0
        %v3644 = vadd.f32 %v3483, %v3643
        %v3645 = vpop.f32.mrb[0].mxu0
        %3646 = vmatprep.mubr.bf16.mxu0 0
        %3647 = vmatmul.mubr.bf16.gmra.mrb[0].mxu0 %v3356
        %v3648 = vpop.f32.mrb[0].mxu0
        %v3649 = vadd.f32 %v3488, %v3648
        %v3650 = vpop.f32.mrb[0].mxu0
        %v3651 = vpop.f32.mrb[0].mxu0
        %v3652 = vadd.f32 %v3491, %v3651
        %v3653 = vpop.f32.mrb[0].mxu0
        %3654 = vmatprep.mubr.bf16.mxu0 0
        %3655 = vmatmul.mubr.bf16.gmra.mrb[0].mxu0 %v3359
        %v3656 = vpop.f32.mrb[0].mxu0
        %v3657 = vadd.f32 %v3496, %v3656
        %v3658 = vpop.f32.mrb[0].mxu0
        %v3659 = vpop.f32.mrb[0].mxu0
        %v3660 = vadd.f32 %v3499, %v3659
        %v3661 = vpop.f32.mrb[0].mxu0
        %3662 = vmatprep.mubr.bf16.mxu0 0
        %3663 = vmatmul.mubr.bf16.gmra.mrb[0].mxu0 %v3362
        %v3664 = vpop.f32.mrb[0].mxu0
        %v3665 = vadd.f32 %v3504, %v3664
        %v3666 = vpop.f32.mrb[0].mxu0
        %v3667 = vpop.f32.mrb[0].mxu0
        %v3668 = vadd.f32 %v3507, %v3667
        %v3669 = vpop.f32.mrb[0].mxu0
        %3670 = vmatprep.mubr.bf16.mxu0 0
        %3671 = vmatmul.mubr.bf16.gmra.mrb[0].mxu0 %v3365
        %v3672 = vpop.f32.mrb[0].mxu0
        %v3673 = vadd.f32 %v3512, %v3672
        %v3674 = vpop.f32.mrb[0].mxu0
        %v3675 = vpop.f32.mrb[0].mxu0
        %v3676 = vadd.f32 %v3515, %v3675
        %v3677 = vpop.f32.mrb[0].mxu0
        %3678 = vmatprep.mubr.bf16.mxu0 0
        %3679 = vmatmul.mubr.bf16.gmra.mrb[0].mxu0 %v3368
        %v3680 = vpop.f32.mrb[0].mxu0
        %v3681 = vadd.f32 %v3520, %v3680
        %v3682 = vpop.f32.mrb[0].mxu0
        %v3683 = vpop.f32.mrb[0].mxu0
        %v3684 = vadd.f32 %v3523, %v3683
        %v3685 = vpop.f32.mrb[0].mxu0
        %3686 = vmatprep.mubr.bf16.mxu0 0
        %3687 = vmatmul.mubr.bf16.gmra.mrb[0].mxu0 %v3371
        %v3688 = vpop.f32.mrb[0].mxu0
        %v3689 = vadd.f32 %v3528, %v3688
        %v3690 = vpop.f32.mrb[0].mxu0
        %v3691 = vpop.f32.mrb[0].mxu0
        %v3692 = vadd.f32 %v3531, %v3691
        %v3693 = vpop.f32.mrb[0].mxu0
        %3694 = vdwg.mxu0
        %vm3695 = vcmask 523264
        %3696 = vst.msk [vmem:[#allocation5] sm:$0xff] %vm3695, %v3569
        %3697 = vst.msk [vmem:[#allocation5 + $0x8] sm:$0xff] %vm3695, %v3572
        %3698 = vst.msk [vmem:[#allocation5 + $0x10] sm:$0xff] %vm3695, %v3577
        %3699 = vst.msk [vmem:[#allocation5 + $0x18] sm:$0xff] %vm3695, %v3580
        %3700 = vst.msk [vmem:[#allocation5 + $0x20] sm:$0xff] %vm3695, %v3585
        %3701 = vst.msk [vmem:[#allocation5 + $0x28] sm:$0xff] %vm3695, %v3588
        %3702 = vst.msk [vmem:[#allocation5 + $0x30] sm:$0xff] %vm3695, %v3593
        %3703 = vst.msk [vmem:[#allocation5 + $0x38] sm:$0xff] %vm3695, %v3596
        %3704 = vst.msk [vmem:[#allocation5 + $0x40] sm:$0xff] %vm3695, %v3601
        %3705 = vst.msk [vmem:[#allocation5 + $0x48] sm:$0xff] %vm3695, %v3604
        %3706 = vst.msk [vmem:[#allocation5 + $0x50] sm:$0xff] %vm3695, %v3609
        %3707 = vst.msk [vmem:[#allocation5 + $0x58] sm:$0xff] %vm3695, %v3612
        %3708 = vst.msk [vmem:[#allocation5 + $0x60] sm:$0xff] %vm3695, %v3617
        %3709 = vst.msk [vmem:[#allocation5 + $0x68] sm:$0xff] %vm3695, %v3620
        %3710 = vst.msk [vmem:[#allocation5 + $0x70] sm:$0xff] %vm3695, %v3625
        %3711 = vst.msk [vmem:[#allocation5 + $0x78] sm:$0xff] %vm3695, %v3628
        %3712 = vst.msk [vmem:[#allocation5 + $0x80] sm:$0xff] %vm3695, %v3633
        %3713 = vst.msk [vmem:[#allocation5 + $0x88] sm:$0xff] %vm3695, %v3636
        %3714 = vst.msk [vmem:[#allocation5 + $0x90] sm:$0xff] %vm3695, %v3641
        %3715 = vst.msk [vmem:[#allocation5 + $0x98] sm:$0xff] %vm3695, %v3644
        %3716 = vst.msk [vmem:[#allocation5 + $0xa0] sm:$0xff] %vm3695, %v3649
        %3717 = vst.msk [vmem:[#allocation5 + $0xa8] sm:$0xff] %vm3695, %v3652
        %3718 = vst.msk [vmem:[#allocation5 + $0xb0] sm:$0xff] %vm3695, %v3657
        %3719 = vst.msk [vmem:[#allocation5 + $0xb8] sm:$0xff] %vm3695, %v3660
        %3720 = vst.msk [vmem:[#allocation5 + $0xc0] sm:$0xff] %vm3695, %v3665
        %3721 = vst.msk [vmem:[#allocation5 + $0xc8] sm:$0xff] %vm3695, %v3668
        %3722 = vst.msk [vmem:[#allocation5 + $0xd0] sm:$0xff] %vm3695, %v3673
        %3723 = vst.msk [vmem:[#allocation5 + $0xd8] sm:$0xff] %vm3695, %v3676
        %3724 = vst.msk [vmem:[#allocation5 + $0xe0] sm:$0xff] %vm3695, %v3681
        %3725 = vst.msk [vmem:[#allocation5 + $0xe8] sm:$0xff] %vm3695, %v3684
        %3726 = vst.msk [vmem:[#allocation5 + $0xf0] sm:$0xff] %vm3695, %v3689
        %3727 = vst.msk [vmem:[#allocation5 + $0xf8] sm:$0xff] %vm3695, %v3692
        %v3728 = vld [vmem:[#allocation5] ss:$2 sm:$0xff]
        %s3729 = scalar_lea.vmem [#allocation5], 16
        %v3730 = vld [vmem:[%s3729] ss:$2 sm:$0xff]
        %s3731 = scalar_lea.vmem [#allocation5], 32
        %v3732 = vld [vmem:[%s3731] ss:$2 sm:$0xff]
        %s3733 = scalar_lea.vmem [#allocation5], 48
        %v3734 = vld [vmem:[%s3733] ss:$2 sm:$0xff]
        %s3735 = scalar_lea.vmem [#allocation5], 64
        %v3736 = vld [vmem:[%s3735] ss:$2 sm:$0xff]
        %s3737 = scalar_lea.vmem [#allocation5], 80
        %v3738 = vld [vmem:[%s3737] ss:$2 sm:$0xff]
        %s3739 = scalar_lea.vmem [#allocation5], 96
        %v3740 = vld [vmem:[%s3739] ss:$2 sm:$0xff]
        %s3741 = scalar_lea.vmem [#allocation5], 112
        %v3742 = vld [vmem:[%s3741] ss:$2 sm:$0xff]
        %s3743 = scalar_lea.vmem [#allocation5], 128
        %v3744 = vld [vmem:[%s3743] ss:$2 sm:$0xff]
        %s3745 = scalar_lea.vmem [#allocation5], 144
        %v3746 = vld [vmem:[%s3745] ss:$2 sm:$0xff]
        %s3747 = scalar_lea.vmem [#allocation5], 160
        %v3748 = vld [vmem:[%s3747] ss:$2 sm:$0xff]
        %s3749 = scalar_lea.vmem [#allocation5], 176
        %v3750 = vld [vmem:[%s3749] ss:$2 sm:$0xff]
        %s3751 = scalar_lea.vmem [#allocation5], 192
        %v3752 = vld [vmem:[%s3751] ss:$2 sm:$0xff]
        %s3753 = scalar_lea.vmem [#allocation5], 208
        %v3754 = vld [vmem:[%s3753] ss:$2 sm:$0xff]
        %s3755 = scalar_lea.vmem [#allocation5], 224
        %v3756 = vld [vmem:[%s3755] ss:$2 sm:$0xff]
        %s3757 = scalar_lea.vmem [#allocation5], 240
        %v3758 = vld [vmem:[%s3757] ss:$2 sm:$0xff]
        %s3759 = scalar_lea.vmem [#allocation5], 1
        %v3760 = vld [vmem:[%s3759] ss:$2 sm:$0xff]
        %s3761 = scalar_lea.vmem [#allocation5], 17
        %v3762 = vld [vmem:[%s3761] ss:$2 sm:$0xff]
        %s3763 = scalar_lea.vmem [#allocation5], 33
        %v3764 = vld [vmem:[%s3763] ss:$2 sm:$0xff]
        %s3765 = scalar_lea.vmem [#allocation5], 49
        %v3766 = vld [vmem:[%s3765] ss:$2 sm:$0xff]
        %s3767 = scalar_lea.vmem [#allocation5], 65
        %v3768 = vld [vmem:[%s3767] ss:$2 sm:$0xff]
        %s3769 = scalar_lea.vmem [#allocation5], 81
        %v3770 = vld [vmem:[%s3769] ss:$2 sm:$0xff]
        %s3771 = scalar_lea.vmem [#allocation5], 97
        %v3772 = vld [vmem:[%s3771] ss:$2 sm:$0xff]
        %s3773 = scalar_lea.vmem [#allocation5], 113
        %v3774 = vld [vmem:[%s3773] ss:$2 sm:$0xff]
        %s3775 = scalar_lea.vmem [#allocation5], 129
        %v3776 = vld [vmem:[%s3775] ss:$2 sm:$0xff]
        %s3777 = scalar_lea.vmem [#allocation5], 145
        %v3778 = vld [vmem:[%s3777] ss:$2 sm:$0xff]
        %s3779 = scalar_lea.vmem [#allocation5], 161
        %v3780 = vld [vmem:[%s3779] ss:$2 sm:$0xff]
        %s3781 = scalar_lea.vmem [#allocation5], 177
        %v3782 = vld [vmem:[%s3781] ss:$2 sm:$0xff]
        %s3783 = scalar_lea.vmem [#allocation5], 193
        %v3784 = vld [vmem:[%s3783] ss:$2 sm:$0xff]
        %s3785 = scalar_lea.vmem [#allocation5], 209
        %v3786 = vld [vmem:[%s3785] ss:$2 sm:$0xff]
        %s3787 = scalar_lea.vmem [#allocation5], 225
        %v3788 = vld [vmem:[%s3787] ss:$2 sm:$0xff]
        %s3789 = scalar_lea.vmem [#allocation5], 241
        %v3790 = vld [vmem:[%s3789] ss:$2 sm:$0xff]
        %v3791 = vmax.f32 %v3728, %v3760
        %v3792 = vmax.f32 %v3730, %v3762
        %v3793 = vmax.f32 %v3732, %v3764
        %v3794 = vmax.f32 %v3734, %v3766
        %v3795 = vmax.f32 %v3736, %v3768
        %v3796 = vmax.f32 %v3738, %v3770
        %v3797 = vmax.f32 %v3740, %v3772
        %v3798 = vmax.f32 %v3742, %v3774
        %v3799 = vmax.f32 %v3744, %v3776
        %v3800 = vmax.f32 %v3746, %v3778
        %v3801 = vmax.f32 %v3748, %v3780
        %v3802 = vmax.f32 %v3750, %v3782
        %v3803 = vmax.f32 %v3752, %v3784
        %v3804 = vmax.f32 %v3754, %v3786
        %v3805 = vmax.f32 %v3756, %v3788
        %v3806 = vmax.f32 %v3758, %v3790
        %v3807 = vmax.f32 %v3791, %v3792
        %v3808 = vmax.f32 %v3793, %v3794
        %v3809 = vmax.f32 %v3795, %v3796
        %v3810 = vmax.f32 %v3797, %v3798
        %v3811 = vmax.f32 %v3799, %v3800
        %v3812 = vmax.f32 %v3801, %v3802
        %v3813 = vmax.f32 %v3803, %v3804
        %v3814 = vmax.f32 %v3805, %v3806
        %v3815 = vld [vmem:[%s4] sm:$0x1]
        %v3817 = vlaneseq
        %v3818 = vshrl.u32 %v3817, 7
        %v3819 = vsub.s32 0, %v3818
        %v3820 = vrot.slane %v3815, %v3819
        %v3822 = vadd.f32 %v3807, %v3820
        %v3823 = vadd.f32 %v3808, %v3820
        %v3824 = vadd.f32 %v3809, %v3820
        %v3825 = vadd.f32 %v3810, %v3820
        %v3826 = vadd.f32 %v3811, %v3820
        %v3827 = vadd.f32 %v3812, %v3820
        %v3828 = vadd.f32 %v3813, %v3820
        %v3829 = vadd.f32 %v3814, %v3820
        %v3830 = vmax.f32 %v3822, 0.0
        %v3831 = vmax.f32 %v3823, 0.0
        %v3832 = vmax.f32 %v3824, 0.0
        %v3833 = vmax.f32 %v3825, 0.0
        %v3834 = vmax.f32 %v3826, 0.0
        %v3835 = vmax.f32 %v3827, 0.0
        %v3836 = vmax.f32 %v3828, 0.0
        %v3837 = vmax.f32 %v3829, 0.0
        %v3838 = vpack.c.bf16 %v3830, %v3830
        %v3839 = vpack.c.bf16 %v3831, %v3831
        %v3840 = vpack.c.bf16 %v3832, %v3832
        %v3841 = vpack.c.bf16 %v3833, %v3833
        %v3842 = vpack.c.bf16 %v3834, %v3834
        %v3843 = vpack.c.bf16 %v3835, %v3835
        %v3844 = vpack.c.bf16 %v3836, %v3836
        %v3845 = vpack.c.bf16 %v3837, %v3837
        %vm3846 = vcmask 519168
        %3847 = vst.msk [vmem:[#allocation6] sm:$0xf] %vm3846, %v3838
        %3848 = vst.msk [vmem:[#allocation6 + $0x4] sm:$0xf] %vm3846, %v3839
        %3849 = vst.msk [vmem:[#allocation6 + $0x8] sm:$0xf] %vm3846, %v3840
        %3850 = vst.msk [vmem:[#allocation6 + $0xc] sm:$0xf] %vm3846, %v3841
        %3851 = vst.msk [vmem:[#allocation6 + $0x10] sm:$0xf] %vm3846, %v3842
        %3852 = vst.msk [vmem:[#allocation6 + $0x14] sm:$0xf] %vm3846, %v3843
        %3853 = vst.msk [vmem:[#allocation6 + $0x18] sm:$0xf] %vm3846, %v3844
        %3854 = vst.msk [vmem:[#allocation6 + $0x1c] sm:$0xf] %vm3846, %v3845
        %v3855 = vld [vmem:[#allocation6] sm:$0x1]
        %vm3856 = vcmask 516096
        %vm3857 = vsmask.f32 256
        %vm3858 = vmand %vm3856, %vm3857
        %v3859 = vld [vmem:[#allocation7] sm:$0x1]
        %v3860 = vsel %vm3858, %v3855, %v3859
        %3861 = vst [vmem:[#allocation7] sm:$0x1] %v3860
        %v3862 = vld [vmem:[#allocation6] sm:$0x1]
        %v3865 = vunpack.c.l.s4 1966171168
        %v3866 = vunpack.c.0.s8 %v3865
        %v3867 = vlaneseq
        %v3868 = vshrl.u32 %v3867, 7
        %v3869 = vsub.s32 %v3866, %v3868
        %v3870 = vrot.slane %v3862, %v3869
        %v3872 = vunpack.c.l.s4 1966171168
        %v3873 = vunpack.c.0.s8 %v3872
        %v3874 = vlaneseq
        %v3875 = vshrl.u32 %v3874, 7
        %v3876 = vsub.s32 %v3873, %v3875
        %v3877 = vrot.slane %v3870, %v3876
        %v3879 = vshrl.u32 %v3877, 16
        %v3881 = vrot.slane %v3879, 7
        %v3882 = vrot.slane %v3881, 1
        %3883 = vrot.lane.b32.xlu0 %v3882, 64
        %v3884 = vpop.permute.xlu0 %3883
        %vm3886 = vcmask 1040896
        %vm3887 = vmand %vm3886, %vm3857
        %v3888 = vld [vmem:[#allocation7] sm:$0x1]
        %v3889 = vsel %vm3887, %v3884, %v3888
        %3890 = vst [vmem:[#allocation7] sm:$0x1] %v3889
        %v3891 = vld [vmem:[#allocation6] sm:$0x2]
        %v3894 = vunpack.c.l.s4 1966171168
        %v3895 = vunpack.c.0.s8 %v3894
        %v3896 = vlaneseq
        %v3897 = vshrl.u32 %v3896, 7
        %v3898 = vsub.s32 %v3895, %v3897
        %v3899 = vrot.slane %v3891, %v3898
        %v3900 = vcombine.high %v3899, %v3899
        %v3902 = vunpack.c.l.s4 1966171168
        %v3903 = vunpack.c.0.s8 %v3902
        %v3904 = vlaneseq
        %v3905 = vshrl.u32 %v3904, 7
        %v3906 = vsub.s32 %v3903, %v3905
        %v3907 = vrot.slane %v3900, %v3906
        %v3909 = vld [vmem:[#allocation7 + $0x1] sm:$0x1]
        %v3910 = vsel %vm3858, %v3907, %v3909
        %3911 = vst [vmem:[#allocation7 + $0x1] sm:$0x1] %v3910
        %v3912 = vld [vmem:[#allocation6] sm:$0x2]
        %v3915 = vunpack.c.l.s4 1966171168
        %v3916 = vunpack.c.0.s8 %v3915
        %v3917 = vlaneseq
        %v3918 = vshrl.u32 %v3917, 7
        %v3919 = vsub.s32 %v3916, %v3918
        %v3920 = vrot.slane %v3912, %v3919
        %v3921 = vcombine.high %v3920, %v3920
        %v3923 = vunpack.c.l.s4 1966171168
        %v3924 = vunpack.c.0.s8 %v3923
        %v3925 = vlaneseq
        %v3926 = vshrl.u32 %v3925, 7
        %v3927 = vsub.s32 %v3924, %v3926
        %v3928 = vrot.slane %v3921, %v3927
        %v3930 = vshrl.u32 %v3928, 16
        %v3932 = vrot.slane %v3930, 7
        %v3933 = vrot.slane %v3932, 1
        %3934 = vrot.lane.b32.xlu0 %v3933, 64
        %v3935 = vpop.permute.xlu0 %3934
        %v3937 = vld [vmem:[#allocation7 + $0x1] sm:$0x1]
        %v3938 = vsel %vm3887, %v3935, %v3937
        %3939 = vst [vmem:[#allocation7 + $0x1] sm:$0x1] %v3938
        %v3940 = vld [vmem:[#allocation6] sm:$0x4]
        %v3943 = vunpack.c.l.s4 1966171168
        %v3944 = vunpack.c.0.s8 %v3943
        %v3945 = vlaneseq
        %v3946 = vshrl.u32 %v3945, 7
        %v3947 = vsub.s32 %v3944, %v3946
        %v3948 = vrot.slane %v3940, %v3947
        %v3950 = vunpack.c.l.s4 1966171168
        %v3951 = vunpack.c.0.s8 %v3950
        %v3952 = vlaneseq
        %v3953 = vshrl.u32 %v3952, 7
        %v3954 = vsub.s32 %v3951, %v3953
        %v3955 = vrot.slane %v3948, %v3954
        %v3956 = vcombine.high %v3955, %v3955
        %v3958 = vld [vmem:[#allocation7 + $0x2] sm:$0x1]
        %v3959 = vsel %vm3858, %v3956, %v3958
        %3960 = vst [vmem:[#allocation7 + $0x2] sm:$0x1] %v3959
        %v3961 = vld [vmem:[#allocation6] sm:$0x4]
        %v3964 = vunpack.c.l.s4 1966171168
        %v3965 = vunpack.c.0.s8 %v3964
        %v3966 = vlaneseq
        %v3967 = vshrl.u32 %v3966, 7
        %v3968 = vsub.s32 %v3965, %v3967
        %v3969 = vrot.slane %v3961, %v3968
        %v3971 = vunpack.c.l.s4 1966171168
        %v3972 = vunpack.c.0.s8 %v3971
        %v3973 = vlaneseq
        %v3974 = vshrl.u32 %v3973, 7
        %v3975 = vsub.s32 %v3972, %v3974
        %v3976 = vrot.slane %v3969, %v3975
        %v3977 = vcombine.high %v3976, %v3976
        %v3979 = vshrl.u32 %v3977, 16
        %v3981 = vrot.slane %v3979, 7
        %v3982 = vrot.slane %v3981, 1
        %3983 = vrot.lane.b32.xlu0 %v3982, 64
        %v3984 = vpop.permute.xlu0 %3983
        %v3986 = vld [vmem:[#allocation7 + $0x2] sm:$0x1]
        %v3987 = vsel %vm3887, %v3984, %v3986
        %3988 = vst [vmem:[#allocation7 + $0x2] sm:$0x1] %v3987
        %v3989 = vld [vmem:[#allocation6] sm:$0x8]
        %v3992 = vunpack.c.l.s4 1966171168
        %v3993 = vunpack.c.0.s8 %v3992
        %v3994 = vlaneseq
        %v3995 = vshrl.u32 %v3994, 7
        %v3996 = vsub.s32 %v3993, %v3995
        %v3997 = vrot.slane %v3989, %v3996
        %v3998 = vcombine.high %v3997, %v3997
        %v4000 = vunpack.c.l.s4 1966171168
        %v4001 = vunpack.c.0.s8 %v4000
        %v4002 = vlaneseq
        %v4003 = vshrl.u32 %v4002, 7
        %v4004 = vsub.s32 %v4001, %v4003
        %v4005 = vrot.slane %v3998, %v4004
        %v4006 = vcombine.high %v4005, %v4005
        %v4008 = vld [vmem:[#allocation7 + $0x3] sm:$0x1]
        %v4009 = vsel %vm3858, %v4006, %v4008
        %4010 = vst [vmem:[#allocation7 + $0x3] sm:$0x1] %v4009
        %v4011 = vld [vmem:[#allocation6] sm:$0x8]
        %v4014 = vunpack.c.l.s4 1966171168
        %v4015 = vunpack.c.0.s8 %v4014
        %v4016 = vlaneseq
        %v4017 = vshrl.u32 %v4016, 7
        %v4018 = vsub.s32 %v4015, %v4017
        %v4019 = vrot.slane %v4011, %v4018
        %v4020 = vcombine.high %v4019, %v4019
        %v4022 = vunpack.c.l.s4 1966171168
        %v4023 = vunpack.c.0.s8 %v4022
        %v4024 = vlaneseq
        %v4025 = vshrl.u32 %v4024, 7
        %v4026 = vsub.s32 %v4023, %v4025
        %v4027 = vrot.slane %v4020, %v4026
        %v4028 = vcombine.high %v4027, %v4027
        %v4030 = vshrl.u32 %v4028, 16
        %v4032 = vrot.slane %v4030, 7
        %v4033 = vrot.slane %v4032, 1
        %4034 = vrot.lane.b32.xlu0 %v4033, 64
        %v4035 = vpop.permute.xlu0 %4034
        %v4037 = vld [vmem:[#allocation7 + $0x3] sm:$0x1]
        %v4038 = vsel %vm3887, %v4035, %v4037
        %4039 = vst [vmem:[#allocation7 + $0x3] sm:$0x1] %v4038
        %s4040 = scalar_lea.vmem [#allocation6], 4
        %v4041 = vld [vmem:[%s4040] sm:$0x1]
        %v4042 = vld [vmem:[#allocation7 + $0x4] sm:$0x1]
        %v4043 = vsel %vm3858, %v4041, %v4042
        %4044 = vst [vmem:[#allocation7 + $0x4] sm:$0x1] %v4043
        %v4045 = vld [vmem:[%s4040] sm:$0x1]
        %v4048 = vunpack.c.l.s4 1966171168
        %v4049 = vunpack.c.0.s8 %v4048
        %v4050 = vlaneseq
        %v4051 = vshrl.u32 %v4050, 7
        %v4052 = vsub.s32 %v4049, %v4051
        %v4053 = vrot.slane %v4045, %v4052
        %v4055 = vunpack.c.l.s4 1966171168
        %v4056 = vunpack.c.0.s8 %v4055
        %v4057 = vlaneseq
        %v4058 = vshrl.u32 %v4057, 7
        %v4059 = vsub.s32 %v4056, %v4058
        %v4060 = vrot.slane %v4053, %v4059
        %v4062 = vshrl.u32 %v4060, 16
        %v4064 = vrot.slane %v4062, 7
        %v4065 = vrot.slane %v4064, 1
        %4066 = vrot.lane.b32.xlu0 %v4065, 64
        %v4067 = vpop.permute.xlu0 %4066
        %v4069 = vld [vmem:[#allocation7 + $0x4] sm:$0x1]
        %v4070 = vsel %vm3887, %v4067, %v4069
        %4071 = vst [vmem:[#allocation7 + $0x4] sm:$0x1] %v4070
        %v4072 = vld [vmem:[%s4040] sm:$0x2]
        %v4075 = vunpack.c.l.s4 1966171168
        %v4076 = vunpack.c.0.s8 %v4075
        %v4077 = vlaneseq
        %v4078 = vshrl.u32 %v4077, 7
        %v4079 = vsub.s32 %v4076, %v4078
        %v4080 = vrot.slane %v4072, %v4079
        %v4081 = vcombine.high %v4080, %v4080
        %v4083 = vunpack.c.l.s4 1966171168
        %v4084 = vunpack.c.0.s8 %v4083
        %v4085 = vlaneseq
        %v4086 = vshrl.u32 %v4085, 7
        %v4087 = vsub.s32 %v4084, %v4086
        %v4088 = vrot.slane %v4081, %v4087
        %v4090 = vld [vmem:[#allocation7 + $0x5] sm:$0x1]
        %v4091 = vsel %vm3858, %v4088, %v4090
        %4092 = vst [vmem:[#allocation7 + $0x5] sm:$0x1] %v4091
        %v4093 = vld [vmem:[%s4040] sm:$0x2]
        %v4096 = vunpack.c.l.s4 1966171168
        %v4097 = vunpack.c.0.s8 %v4096
        %v4098 = vlaneseq
        %v4099 = vshrl.u32 %v4098, 7
        %v4100 = vsub.s32 %v4097, %v4099
        %v4101 = vrot.slane %v4093, %v4100
        %v4102 = vcombine.high %v4101, %v4101
        %v4104 = vunpack.c.l.s4 1966171168
        %v4105 = vunpack.c.0.s8 %v4104
        %v4106 = vlaneseq
        %v4107 = vshrl.u32 %v4106, 7
        %v4108 = vsub.s32 %v4105, %v4107
        %v4109 = vrot.slane %v4102, %v4108
        %v4111 = vshrl.u32 %v4109, 16
        %v4113 = vrot.slane %v4111, 7
        %v4114 = vrot.slane %v4113, 1
        %4115 = vrot.lane.b32.xlu0 %v4114, 64
        %v4116 = vpop.permute.xlu0 %4115
        %v4118 = vld [vmem:[#allocation7 + $0x5] sm:$0x1]
        %v4119 = vsel %vm3887, %v4116, %v4118
        %4120 = vst [vmem:[#allocation7 + $0x5] sm:$0x1] %v4119
        %v4121 = vld [vmem:[%s4040] sm:$0x4]
        %v4124 = vunpack.c.l.s4 1966171168
        %v4125 = vunpack.c.0.s8 %v4124
        %v4126 = vlaneseq
        %v4127 = vshrl.u32 %v4126, 7
        %v4128 = vsub.s32 %v4125, %v4127
        %v4129 = vrot.slane %v4121, %v4128
        %v4131 = vunpack.c.l.s4 1966171168
        %v4132 = vunpack.c.0.s8 %v4131
        %v4133 = vlaneseq
        %v4134 = vshrl.u32 %v4133, 7
        %v4135 = vsub.s32 %v4132, %v4134
        %v4136 = vrot.slane %v4129, %v4135
        %v4137 = vcombine.high %v4136, %v4136
        %v4139 = vld [vmem:[#allocation7 + $0x6] sm:$0x1]
        %v4140 = vsel %vm3858, %v4137, %v4139
        %4141 = vst [vmem:[#allocation7 + $0x6] sm:$0x1] %v4140
        %v4142 = vld [vmem:[%s4040] sm:$0x4]
        %v4145 = vunpack.c.l.s4 1966171168
        %v4146 = vunpack.c.0.s8 %v4145
        %v4147 = vlaneseq
        %v4148 = vshrl.u32 %v4147, 7
        %v4149 = vsub.s32 %v4146, %v4148
        %v4150 = vrot.slane %v4142, %v4149
        %v4152 = vunpack.c.l.s4 1966171168
        %v4153 = vunpack.c.0.s8 %v4152
        %v4154 = vlaneseq
        %v4155 = vshrl.u32 %v4154, 7
        %v4156 = vsub.s32 %v4153, %v4155
        %v4157 = vrot.slane %v4150, %v4156
        %v4158 = vcombine.high %v4157, %v4157
        %v4160 = vshrl.u32 %v4158, 16
        %v4162 = vrot.slane %v4160, 7
        %v4163 = vrot.slane %v4162, 1
        %4164 = vrot.lane.b32.xlu0 %v4163, 64
        %v4165 = vpop.permute.xlu0 %4164
        %v4167 = vld [vmem:[#allocation7 + $0x6] sm:$0x1]
        %v4168 = vsel %vm3887, %v4165, %v4167
        %4169 = vst [vmem:[#allocation7 + $0x6] sm:$0x1] %v4168
        %v4170 = vld [vmem:[%s4040] sm:$0x8]
        %v4173 = vunpack.c.l.s4 1966171168
        %v4174 = vunpack.c.0.s8 %v4173
        %v4175 = vlaneseq
        %v4176 = vshrl.u32 %v4175, 7
        %v4177 = vsub.s32 %v4174, %v4176
        %v4178 = vrot.slane %v4170, %v4177
        %v4179 = vcombine.high %v4178, %v4178
        %v4181 = vunpack.c.l.s4 1966171168
        %v4182 = vunpack.c.0.s8 %v4181
        %v4183 = vlaneseq
        %v4184 = vshrl.u32 %v4183, 7
        %v4185 = vsub.s32 %v4182, %v4184
        %v4186 = vrot.slane %v4179, %v4185
        %v4187 = vcombine.high %v4186, %v4186
        %v4189 = vld [vmem:[#allocation7 + $0x7] sm:$0x1]
        %v4190 = vsel %vm3858, %v4187, %v4189
        %4191 = vst [vmem:[#allocation7 + $0x7] sm:$0x1] %v4190
        %v4192 = vld [vmem:[%s4040] sm:$0x8]
        %v4195 = vunpack.c.l.s4 1966171168
        %v4196 = vunpack.c.0.s8 %v4195
        %v4197 = vlaneseq
        %v4198 = vshrl.u32 %v4197, 7
        %v4199 = vsub.s32 %v4196, %v4198
        %v4200 = vrot.slane %v4192, %v4199
        %v4201 = vcombine.high %v4200, %v4200
        %v4203 = vunpack.c.l.s4 1966171168
        %v4204 = vunpack.c.0.s8 %v4203
        %v4205 = vlaneseq
        %v4206 = vshrl.u32 %v4205, 7
        %v4207 = vsub.s32 %v4204, %v4206
        %v4208 = vrot.slane %v4201, %v4207
        %v4209 = vcombine.high %v4208, %v4208
        %v4211 = vshrl.u32 %v4209, 16
        %v4213 = vrot.slane %v4211, 7
        %v4214 = vrot.slane %v4213, 1
        %4215 = vrot.lane.b32.xlu0 %v4214, 64
        %v4216 = vpop.permute.xlu0 %4215
        %v4218 = vld [vmem:[#allocation7 + $0x7] sm:$0x1]
        %v4219 = vsel %vm3887, %v4216, %v4218
        %4220 = vst [vmem:[#allocation7 + $0x7] sm:$0x1] %v4219
        %s4221 = scalar_lea.vmem [#allocation6], 8
        %v4222 = vld [vmem:[%s4221] sm:$0x1]
        %v4223 = vld [vmem:[#allocation7 + $0x8] sm:$0x1]
        %v4224 = vsel %vm3858, %v4222, %v4223
        %4225 = vst [vmem:[#allocation7 + $0x8] sm:$0x1] %v4224
        %v4226 = vld [vmem:[%s4221] sm:$0x1]
        %v4229 = vunpack.c.l.s4 1966171168
        %v4230 = vunpack.c.0.s8 %v4229
        %v4231 = vlaneseq
        %v4232 = vshrl.u32 %v4231, 7
        %v4233 = vsub.s32 %v4230, %v4232
        %v4234 = vrot.slane %v4226, %v4233
        %v4236 = vunpack.c.l.s4 1966171168
        %v4237 = vunpack.c.0.s8 %v4236
        %v4238 = vlaneseq
        %v4239 = vshrl.u32 %v4238, 7
        %v4240 = vsub.s32 %v4237, %v4239
        %v4241 = vrot.slane %v4234, %v4240
        %v4243 = vshrl.u32 %v4241, 16
        %v4245 = vrot.slane %v4243, 7
        %v4246 = vrot.slane %v4245, 1
        %4247 = vrot.lane.b32.xlu0 %v4246, 64
        %v4248 = vpop.permute.xlu0 %4247
        %v4250 = vld [vmem:[#allocation7 + $0x8] sm:$0x1]
        %v4251 = vsel %vm3887, %v4248, %v4250
        %4252 = vst [vmem:[#allocation7 + $0x8] sm:$0x1] %v4251
        %v4253 = vld [vmem:[%s4221] sm:$0x2]
        %v4256 = vunpack.c.l.s4 1966171168
        %v4257 = vunpack.c.0.s8 %v4256
        %v4258 = vlaneseq
        %v4259 = vshrl.u32 %v4258, 7
        %v4260 = vsub.s32 %v4257, %v4259
        %v4261 = vrot.slane %v4253, %v4260
        %v4262 = vcombine.high %v4261, %v4261
        %v4264 = vunpack.c.l.s4 1966171168
        %v4265 = vunpack.c.0.s8 %v4264
        %v4266 = vlaneseq
        %v4267 = vshrl.u32 %v4266, 7
        %v4268 = vsub.s32 %v4265, %v4267
        %v4269 = vrot.slane %v4262, %v4268
        %v4271 = vld [vmem:[#allocation7 + $0x9] sm:$0x1]
        %v4272 = vsel %vm3858, %v4269, %v4271
        %4273 = vst [vmem:[#allocation7 + $0x9] sm:$0x1] %v4272
        %v4274 = vld [vmem:[%s4221] sm:$0x2]
        %v4277 = vunpack.c.l.s4 1966171168
        %v4278 = vunpack.c.0.s8 %v4277
        %v4279 = vlaneseq
        %v4280 = vshrl.u32 %v4279, 7
        %v4281 = vsub.s32 %v4278, %v4280
        %v4282 = vrot.slane %v4274, %v4281
        %v4283 = vcombine.high %v4282, %v4282
        %v4285 = vunpack.c.l.s4 1966171168
        %v4286 = vunpack.c.0.s8 %v4285
        %v4287 = vlaneseq
        %v4288 = vshrl.u32 %v4287, 7
        %v4289 = vsub.s32 %v4286, %v4288
        %v4290 = vrot.slane %v4283, %v4289
        %v4292 = vshrl.u32 %v4290, 16
        %v4294 = vrot.slane %v4292, 7
        %v4295 = vrot.slane %v4294, 1
        %4296 = vrot.lane.b32.xlu0 %v4295, 64
        %v4297 = vpop.permute.xlu0 %4296
        %v4299 = vld [vmem:[#allocation7 + $0x9] sm:$0x1]
        %v4300 = vsel %vm3887, %v4297, %v4299
        %4301 = vst [vmem:[#allocation7 + $0x9] sm:$0x1] %v4300
        %v4302 = vld [vmem:[%s4221] sm:$0x4]
        %v4305 = vunpack.c.l.s4 1966171168
        %v4306 = vunpack.c.0.s8 %v4305
        %v4307 = vlaneseq
        %v4308 = vshrl.u32 %v4307, 7
        %v4309 = vsub.s32 %v4306, %v4308
        %v4310 = vrot.slane %v4302, %v4309
        %v4312 = vunpack.c.l.s4 1966171168
        %v4313 = vunpack.c.0.s8 %v4312
        %v4314 = vlaneseq
        %v4315 = vshrl.u32 %v4314, 7
        %v4316 = vsub.s32 %v4313, %v4315
        %v4317 = vrot.slane %v4310, %v4316
        %v4318 = vcombine.high %v4317, %v4317
        %v4320 = vld [vmem:[#allocation7 + $0xa] sm:$0x1]
        %v4321 = vsel %vm3858, %v4318, %v4320
        %4322 = vst [vmem:[#allocation7 + $0xa] sm:$0x1] %v4321
        %v4323 = vld [vmem:[%s4221] sm:$0x4]
        %v4326 = vunpack.c.l.s4 1966171168
        %v4327 = vunpack.c.0.s8 %v4326
        %v4328 = vlaneseq
        %v4329 = vshrl.u32 %v4328, 7
        %v4330 = vsub.s32 %v4327, %v4329
        %v4331 = vrot.slane %v4323, %v4330
        %v4333 = vunpack.c.l.s4 1966171168
        %v4334 = vunpack.c.0.s8 %v4333
        %v4335 = vlaneseq
        %v4336 = vshrl.u32 %v4335, 7
        %v4337 = vsub.s32 %v4334, %v4336
        %v4338 = vrot.slane %v4331, %v4337
        %v4339 = vcombine.high %v4338, %v4338
        %v4341 = vshrl.u32 %v4339, 16
        %v4343 = vrot.slane %v4341, 7
        %v4344 = vrot.slane %v4343, 1
        %4345 = vrot.lane.b32.xlu0 %v4344, 64
        %v4346 = vpop.permute.xlu0 %4345
        %v4348 = vld [vmem:[#allocation7 + $0xa] sm:$0x1]
        %v4349 = vsel %vm3887, %v4346, %v4348
        %4350 = vst [vmem:[#allocation7 + $0xa] sm:$0x1] %v4349
        %v4351 = vld [vmem:[%s4221] sm:$0x8]
        %v4354 = vunpack.c.l.s4 1966171168
        %v4355 = vunpack.c.0.s8 %v4354
        %v4356 = vlaneseq
        %v4357 = vshrl.u32 %v4356, 7
        %v4358 = vsub.s32 %v4355, %v4357
        %v4359 = vrot.slane %v4351, %v4358
        %v4360 = vcombine.high %v4359, %v4359
        %v4362 = vunpack.c.l.s4 1966171168
        %v4363 = vunpack.c.0.s8 %v4362
        %v4364 = vlaneseq
        %v4365 = vshrl.u32 %v4364, 7
        %v4366 = vsub.s32 %v4363, %v4365
        %v4367 = vrot.slane %v4360, %v4366
        %v4368 = vcombine.high %v4367, %v4367
        %v4370 = vld [vmem:[#allocation7 + $0xb] sm:$0x1]
        %v4371 = vsel %vm3858, %v4368, %v4370
        %4372 = vst [vmem:[#allocation7 + $0xb] sm:$0x1] %v4371
        %v4373 = vld [vmem:[%s4221] sm:$0x8]
        %v4376 = vunpack.c.l.s4 1966171168
        %v4377 = vunpack.c.0.s8 %v4376
        %v4378 = vlaneseq
        %v4379 = vshrl.u32 %v4378, 7
        %v4380 = vsub.s32 %v4377, %v4379
        %v4381 = vrot.slane %v4373, %v4380
        %v4382 = vcombine.high %v4381, %v4381
        %v4384 = vunpack.c.l.s4 1966171168
        %v4385 = vunpack.c.0.s8 %v4384
        %v4386 = vlaneseq
        %v4387 = vshrl.u32 %v4386, 7
        %v4388 = vsub.s32 %v4385, %v4387
        %v4389 = vrot.slane %v4382, %v4388
        %v4390 = vcombine.high %v4389, %v4389
        %v4392 = vshrl.u32 %v4390, 16
        %v4394 = vrot.slane %v4392, 7
        %v4395 = vrot.slane %v4394, 1
        %4396 = vrot.lane.b32.xlu0 %v4395, 64
        %v4397 = vpop.permute.xlu0 %4396
        %v4399 = vld [vmem:[#allocation7 + $0xb] sm:$0x1]
        %v4400 = vsel %vm3887, %v4397, %v4399
        %4401 = vst [vmem:[#allocation7 + $0xb] sm:$0x1] %v4400
        %s4402 = scalar_lea.vmem [#allocation6], 12
        %v4403 = vld [vmem:[%s4402] sm:$0x1]
        %v4404 = vld [vmem:[#allocation7 + $0xc] sm:$0x1]
        %v4405 = vsel %vm3858, %v4403, %v4404
        %4406 = vst [vmem:[#allocation7 + $0xc] sm:$0x1] %v4405
        %v4407 = vld [vmem:[%s4402] sm:$0x1]
        %v4410 = vunpack.c.l.s4 1966171168
        %v4411 = vunpack.c.0.s8 %v4410
        %v4412 = vlaneseq
        %v4413 = vshrl.u32 %v4412, 7
        %v4414 = vsub.s32 %v4411, %v4413
        %v4415 = vrot.slane %v4407, %v4414
        %v4417 = vunpack.c.l.s4 1966171168
        %v4418 = vunpack.c.0.s8 %v4417
        %v4419 = vlaneseq
        %v4420 = vshrl.u32 %v4419, 7
        %v4421 = vsub.s32 %v4418, %v4420
        %v4422 = vrot.slane %v4415, %v4421
        %v4424 = vshrl.u32 %v4422, 16
        %v4426 = vrot.slane %v4424, 7
        %v4427 = vrot.slane %v4426, 1
        %4428 = vrot.lane.b32.xlu0 %v4427, 64
        %v4429 = vpop.permute.xlu0 %4428
        %v4431 = vld [vmem:[#allocation7 + $0xc] sm:$0x1]
        %v4432 = vsel %vm3887, %v4429, %v4431
        %4433 = vst [vmem:[#allocation7 + $0xc] sm:$0x1] %v4432
        %v4434 = vld [vmem:[%s4402] sm:$0x2]
        %v4437 = vunpack.c.l.s4 1966171168
        %v4438 = vunpack.c.0.s8 %v4437
        %v4439 = vlaneseq
        %v4440 = vshrl.u32 %v4439, 7
        %v4441 = vsub.s32 %v4438, %v4440
        %v4442 = vrot.slane %v4434, %v4441
        %v4443 = vcombine.high %v4442, %v4442
        %v4445 = vunpack.c.l.s4 1966171168
        %v4446 = vunpack.c.0.s8 %v4445
        %v4447 = vlaneseq
        %v4448 = vshrl.u32 %v4447, 7
        %v4449 = vsub.s32 %v4446, %v4448
        %v4450 = vrot.slane %v4443, %v4449
        %v4452 = vld [vmem:[#allocation7 + $0xd] sm:$0x1]
        %v4453 = vsel %vm3858, %v4450, %v4452
        %4454 = vst [vmem:[#allocation7 + $0xd] sm:$0x1] %v4453
        %v4455 = vld [vmem:[%s4402] sm:$0x2]
        %v4458 = vunpack.c.l.s4 1966171168
        %v4459 = vunpack.c.0.s8 %v4458
        %v4460 = vlaneseq
        %v4461 = vshrl.u32 %v4460, 7
        %v4462 = vsub.s32 %v4459, %v4461
        %v4463 = vrot.slane %v4455, %v4462
        %v4464 = vcombine.high %v4463, %v4463
        %v4466 = vunpack.c.l.s4 1966171168
        %v4467 = vunpack.c.0.s8 %v4466
        %v4468 = vlaneseq
        %v4469 = vshrl.u32 %v4468, 7
        %v4470 = vsub.s32 %v4467, %v4469
        %v4471 = vrot.slane %v4464, %v4470
        %v4473 = vshrl.u32 %v4471, 16
        %v4475 = vrot.slane %v4473, 7
        %v4476 = vrot.slane %v4475, 1
        %4477 = vrot.lane.b32.xlu0 %v4476, 64
        %v4478 = vpop.permute.xlu0 %4477
        %v4480 = vld [vmem:[#allocation7 + $0xd] sm:$0x1]
        %v4481 = vsel %vm3887, %v4478, %v4480
        %4482 = vst [vmem:[#allocation7 + $0xd] sm:$0x1] %v4481
        %v4483 = vld [vmem:[%s4402] sm:$0x4]
        %v4486 = vunpack.c.l.s4 1966171168
        %v4487 = vunpack.c.0.s8 %v4486
        %v4488 = vlaneseq
        %v4489 = vshrl.u32 %v4488, 7
        %v4490 = vsub.s32 %v4487, %v4489
        %v4491 = vrot.slane %v4483, %v4490
        %v4493 = vunpack.c.l.s4 1966171168
        %v4494 = vunpack.c.0.s8 %v4493
        %v4495 = vlaneseq
        %v4496 = vshrl.u32 %v4495, 7
        %v4497 = vsub.s32 %v4494, %v4496
        %v4498 = vrot.slane %v4491, %v4497
        %v4499 = vcombine.high %v4498, %v4498
        %v4501 = vld [vmem:[#allocation7 + $0xe] sm:$0x1]
        %v4502 = vsel %vm3858, %v4499, %v4501
        %4503 = vst [vmem:[#allocation7 + $0xe] sm:$0x1] %v4502
        %v4504 = vld [vmem:[%s4402] sm:$0x4]
        %v4507 = vunpack.c.l.s4 1966171168
        %v4508 = vunpack.c.0.s8 %v4507
        %v4509 = vlaneseq
        %v4510 = vshrl.u32 %v4509, 7
        %v4511 = vsub.s32 %v4508, %v4510
        %v4512 = vrot.slane %v4504, %v4511
        %v4514 = vunpack.c.l.s4 1966171168
        %v4515 = vunpack.c.0.s8 %v4514
        %v4516 = vlaneseq
        %v4517 = vshrl.u32 %v4516, 7
        %v4518 = vsub.s32 %v4515, %v4517
        %v4519 = vrot.slane %v4512, %v4518
        %v4520 = vcombine.high %v4519, %v4519
        %v4522 = vshrl.u32 %v4520, 16
        %v4524 = vrot.slane %v4522, 7
        %v4525 = vrot.slane %v4524, 1
        %4526 = vrot.lane.b32.xlu0 %v4525, 64
        %v4527 = vpop.permute.xlu0 %4526
        %v4529 = vld [vmem:[#allocation7 + $0xe] sm:$0x1]
        %v4530 = vsel %vm3887, %v4527, %v4529
        %4531 = vst [vmem:[#allocation7 + $0xe] sm:$0x1] %v4530
        %v4532 = vld [vmem:[%s4402] sm:$0x8]
        %v4535 = vunpack.c.l.s4 1966171168
        %v4536 = vunpack.c.0.s8 %v4535
        %v4537 = vlaneseq
        %v4538 = vshrl.u32 %v4537, 7
        %v4539 = vsub.s32 %v4536, %v4538
        %v4540 = vrot.slane %v4532, %v4539
        %v4541 = vcombine.high %v4540, %v4540
        %v4543 = vunpack.c.l.s4 1966171168
        %v4544 = vunpack.c.0.s8 %v4543
        %v4545 = vlaneseq
        %v4546 = vshrl.u32 %v4545, 7
        %v4547 = vsub.s32 %v4544, %v4546
        %v4548 = vrot.slane %v4541, %v4547
        %v4549 = vcombine.high %v4548, %v4548
        %v4551 = vld [vmem:[#allocation7 + $0xf] sm:$0x1]
        %v4552 = vsel %vm3858, %v4549, %v4551
        %4553 = vst [vmem:[#allocation7 + $0xf] sm:$0x1] %v4552
        %v4554 = vld [vmem:[%s4402] sm:$0x8]
        %v4557 = vunpack.c.l.s4 1966171168
        %v4558 = vunpack.c.0.s8 %v4557
        %v4559 = vlaneseq
        %v4560 = vshrl.u32 %v4559, 7
        %v4561 = vsub.s32 %v4558, %v4560
        %v4562 = vrot.slane %v4554, %v4561
        %v4563 = vcombine.high %v4562, %v4562
        %v4565 = vunpack.c.l.s4 1966171168
        %v4566 = vunpack.c.0.s8 %v4565
        %v4567 = vlaneseq
        %v4568 = vshrl.u32 %v4567, 7
        %v4569 = vsub.s32 %v4566, %v4568
        %v4570 = vrot.slane %v4563, %v4569
        %v4571 = vcombine.high %v4570, %v4570
        %v4573 = vshrl.u32 %v4571, 16
        %v4575 = vrot.slane %v4573, 7
        %v4576 = vrot.slane %v4575, 1
        %4577 = vrot.lane.b32.xlu0 %v4576, 64
        %v4578 = vpop.permute.xlu0 %4577
        %v4580 = vld [vmem:[#allocation7 + $0xf] sm:$0x1]
        %v4581 = vsel %vm3887, %v4578, %v4580
        %4582 = vst [vmem:[#allocation7 + $0xf] sm:$0x1] %v4581
        %s4583 = scalar_lea.vmem [#allocation6], 16
        %v4584 = vld [vmem:[%s4583] sm:$0x1]
        %v4585 = vld [vmem:[#allocation7 + $0x10] sm:$0x1]
        %v4586 = vsel %vm3858, %v4584, %v4585
        %4587 = vst [vmem:[#allocation7 + $0x10] sm:$0x1] %v4586
        %v4588 = vld [vmem:[%s4583] sm:$0x1]
        %v4591 = vunpack.c.l.s4 1966171168
        %v4592 = vunpack.c.0.s8 %v4591
        %v4593 = vlaneseq
        %v4594 = vshrl.u32 %v4593, 7
        %v4595 = vsub.s32 %v4592, %v4594
        %v4596 = vrot.slane %v4588, %v4595
        %v4598 = vunpack.c.l.s4 1966171168
        %v4599 = vunpack.c.0.s8 %v4598
        %v4600 = vlaneseq
        %v4601 = vshrl.u32 %v4600, 7
        %v4602 = vsub.s32 %v4599, %v4601
        %v4603 = vrot.slane %v4596, %v4602
        %v4605 = vshrl.u32 %v4603, 16
        %v4607 = vrot.slane %v4605, 7
        %v4608 = vrot.slane %v4607, 1
        %4609 = vrot.lane.b32.xlu0 %v4608, 64
        %v4610 = vpop.permute.xlu0 %4609
        %v4612 = vld [vmem:[#allocation7 + $0x10] sm:$0x1]
        %v4613 = vsel %vm3887, %v4610, %v4612
        %4614 = vst [vmem:[#allocation7 + $0x10] sm:$0x1] %v4613
        %v4615 = vld [vmem:[%s4583] sm:$0x2]
        %v4618 = vunpack.c.l.s4 1966171168
        %v4619 = vunpack.c.0.s8 %v4618
        %v4620 = vlaneseq
        %v4621 = vshrl.u32 %v4620, 7
        %v4622 = vsub.s32 %v4619, %v4621
        %v4623 = vrot.slane %v4615, %v4622
        %v4624 = vcombine.high %v4623, %v4623
        %v4626 = vunpack.c.l.s4 1966171168
        %v4627 = vunpack.c.0.s8 %v4626
        %v4628 = vlaneseq
        %v4629 = vshrl.u32 %v4628, 7
        %v4630 = vsub.s32 %v4627, %v4629
        %v4631 = vrot.slane %v4624, %v4630
        %v4633 = vld [vmem:[#allocation7 + $0x11] sm:$0x1]
        %v4634 = vsel %vm3858, %v4631, %v4633
        %4635 = vst [vmem:[#allocation7 + $0x11] sm:$0x1] %v4634
        %v4636 = vld [vmem:[%s4583] sm:$0x2]
        %v4639 = vunpack.c.l.s4 1966171168
        %v4640 = vunpack.c.0.s8 %v4639
        %v4641 = vlaneseq
        %v4642 = vshrl.u32 %v4641, 7
        %v4643 = vsub.s32 %v4640, %v4642
        %v4644 = vrot.slane %v4636, %v4643
        %v4645 = vcombine.high %v4644, %v4644
        %v4647 = vunpack.c.l.s4 1966171168
        %v4648 = vunpack.c.0.s8 %v4647
        %v4649 = vlaneseq
        %v4650 = vshrl.u32 %v4649, 7
        %v4651 = vsub.s32 %v4648, %v4650
        %v4652 = vrot.slane %v4645, %v4651
        %v4654 = vshrl.u32 %v4652, 16
        %v4656 = vrot.slane %v4654, 7
        %v4657 = vrot.slane %v4656, 1
        %4658 = vrot.lane.b32.xlu0 %v4657, 64
        %v4659 = vpop.permute.xlu0 %4658
        %v4661 = vld [vmem:[#allocation7 + $0x11] sm:$0x1]
        %v4662 = vsel %vm3887, %v4659, %v4661
        %4663 = vst [vmem:[#allocation7 + $0x11] sm:$0x1] %v4662
        %v4664 = vld [vmem:[%s4583] sm:$0x4]
        %v4667 = vunpack.c.l.s4 1966171168
        %v4668 = vunpack.c.0.s8 %v4667
        %v4669 = vlaneseq
        %v4670 = vshrl.u32 %v4669, 7
        %v4671 = vsub.s32 %v4668, %v4670
        %v4672 = vrot.slane %v4664, %v4671
        %v4674 = vunpack.c.l.s4 1966171168
        %v4675 = vunpack.c.0.s8 %v4674
        %v4676 = vlaneseq
        %v4677 = vshrl.u32 %v4676, 7
        %v4678 = vsub.s32 %v4675, %v4677
        %v4679 = vrot.slane %v4672, %v4678
        %v4680 = vcombine.high %v4679, %v4679
        %v4682 = vld [vmem:[#allocation7 + $0x12] sm:$0x1]
        %v4683 = vsel %vm3858, %v4680, %v4682
        %4684 = vst [vmem:[#allocation7 + $0x12] sm:$0x1] %v4683
        %v4685 = vld [vmem:[%s4583] sm:$0x4]
        %v4688 = vunpack.c.l.s4 1966171168
        %v4689 = vunpack.c.0.s8 %v4688
        %v4690 = vlaneseq
        %v4691 = vshrl.u32 %v4690, 7
        %v4692 = vsub.s32 %v4689, %v4691
        %v4693 = vrot.slane %v4685, %v4692
        %v4695 = vunpack.c.l.s4 1966171168
        %v4696 = vunpack.c.0.s8 %v4695
        %v4697 = vlaneseq
        %v4698 = vshrl.u32 %v4697, 7
        %v4699 = vsub.s32 %v4696, %v4698
        %v4700 = vrot.slane %v4693, %v4699
        %v4701 = vcombine.high %v4700, %v4700
        %v4703 = vshrl.u32 %v4701, 16
        %v4705 = vrot.slane %v4703, 7
        %v4706 = vrot.slane %v4705, 1
        %4707 = vrot.lane.b32.xlu0 %v4706, 64
        %v4708 = vpop.permute.xlu0 %4707
        %v4710 = vld [vmem:[#allocation7 + $0x12] sm:$0x1]
        %v4711 = vsel %vm3887, %v4708, %v4710
        %4712 = vst [vmem:[#allocation7 + $0x12] sm:$0x1] %v4711
        %v4713 = vld [vmem:[%s4583] sm:$0x8]
        %v4716 = vunpack.c.l.s4 1966171168
        %v4717 = vunpack.c.0.s8 %v4716
        %v4718 = vlaneseq
        %v4719 = vshrl.u32 %v4718, 7
        %v4720 = vsub.s32 %v4717, %v4719
        %v4721 = vrot.slane %v4713, %v4720
        %v4722 = vcombine.high %v4721, %v4721
        %v4724 = vunpack.c.l.s4 1966171168
        %v4725 = vunpack.c.0.s8 %v4724
        %v4726 = vlaneseq
        %v4727 = vshrl.u32 %v4726, 7
        %v4728 = vsub.s32 %v4725, %v4727
        %v4729 = vrot.slane %v4722, %v4728
        %v4730 = vcombine.high %v4729, %v4729
        %v4732 = vld [vmem:[#allocation7 + $0x13] sm:$0x1]
        %v4733 = vsel %vm3858, %v4730, %v4732
        %4734 = vst [vmem:[#allocation7 + $0x13] sm:$0x1] %v4733
        %v4735 = vld [vmem:[%s4583] sm:$0x8]
        %v4738 = vunpack.c.l.s4 1966171168
        %v4739 = vunpack.c.0.s8 %v4738
        %v4740 = vlaneseq
        %v4741 = vshrl.u32 %v4740, 7
        %v4742 = vsub.s32 %v4739, %v4741
        %v4743 = vrot.slane %v4735, %v4742
        %v4744 = vcombine.high %v4743, %v4743
        %v4746 = vunpack.c.l.s4 1966171168
        %v4747 = vunpack.c.0.s8 %v4746
        %v4748 = vlaneseq
        %v4749 = vshrl.u32 %v4748, 7
        %v4750 = vsub.s32 %v4747, %v4749
        %v4751 = vrot.slane %v4744, %v4750
        %v4752 = vcombine.high %v4751, %v4751
        %v4754 = vshrl.u32 %v4752, 16
        %v4756 = vrot.slane %v4754, 7
        %v4757 = vrot.slane %v4756, 1
        %4758 = vrot.lane.b32.xlu0 %v4757, 64
        %v4759 = vpop.permute.xlu0 %4758
        %v4761 = vld [vmem:[#allocation7 + $0x13] sm:$0x1]
        %v4762 = vsel %vm3887, %v4759, %v4761
        %4763 = vst [vmem:[#allocation7 + $0x13] sm:$0x1] %v4762
        %s4764 = scalar_lea.vmem [#allocation6], 20
        %v4765 = vld [vmem:[%s4764] sm:$0x1]
        %v4766 = vld [vmem:[#allocation7 + $0x14] sm:$0x1]
        %v4767 = vsel %vm3858, %v4765, %v4766
        %4768 = vst [vmem:[#allocation7 + $0x14] sm:$0x1] %v4767
        %v4769 = vld [vmem:[%s4764] sm:$0x1]
        %v4772 = vunpack.c.l.s4 1966171168
        %v4773 = vunpack.c.0.s8 %v4772
        %v4774 = vlaneseq
        %v4775 = vshrl.u32 %v4774, 7
        %v4776 = vsub.s32 %v4773, %v4775
        %v4777 = vrot.slane %v4769, %v4776
        %v4779 = vunpack.c.l.s4 1966171168
        %v4780 = vunpack.c.0.s8 %v4779
        %v4781 = vlaneseq
        %v4782 = vshrl.u32 %v4781, 7
        %v4783 = vsub.s32 %v4780, %v4782
        %v4784 = vrot.slane %v4777, %v4783
        %v4786 = vshrl.u32 %v4784, 16
        %v4788 = vrot.slane %v4786, 7
        %v4789 = vrot.slane %v4788, 1
        %4790 = vrot.lane.b32.xlu0 %v4789, 64
        %v4791 = vpop.permute.xlu0 %4790
        %v4793 = vld [vmem:[#allocation7 + $0x14] sm:$0x1]
        %v4794 = vsel %vm3887, %v4791, %v4793
        %4795 = vst [vmem:[#allocation7 + $0x14] sm:$0x1] %v4794
        %v4796 = vld [vmem:[%s4764] sm:$0x2]
        %v4799 = vunpack.c.l.s4 1966171168
        %v4800 = vunpack.c.0.s8 %v4799
        %v4801 = vlaneseq
        %v4802 = vshrl.u32 %v4801, 7
        %v4803 = vsub.s32 %v4800, %v4802
        %v4804 = vrot.slane %v4796, %v4803
        %v4805 = vcombine.high %v4804, %v4804
        %v4807 = vunpack.c.l.s4 1966171168
        %v4808 = vunpack.c.0.s8 %v4807
        %v4809 = vlaneseq
        %v4810 = vshrl.u32 %v4809, 7
        %v4811 = vsub.s32 %v4808, %v4810
        %v4812 = vrot.slane %v4805, %v4811
        %v4814 = vld [vmem:[#allocation7 + $0x15] sm:$0x1]
        %v4815 = vsel %vm3858, %v4812, %v4814
        %4816 = vst [vmem:[#allocation7 + $0x15] sm:$0x1] %v4815
        %v4817 = vld [vmem:[%s4764] sm:$0x2]
        %v4820 = vunpack.c.l.s4 1966171168
        %v4821 = vunpack.c.0.s8 %v4820
        %v4822 = vlaneseq
        %v4823 = vshrl.u32 %v4822, 7
        %v4824 = vsub.s32 %v4821, %v4823
        %v4825 = vrot.slane %v4817, %v4824
        %v4826 = vcombine.high %v4825, %v4825
        %v4828 = vunpack.c.l.s4 1966171168
        %v4829 = vunpack.c.0.s8 %v4828
        %v4830 = vlaneseq
        %v4831 = vshrl.u32 %v4830, 7
        %v4832 = vsub.s32 %v4829, %v4831
        %v4833 = vrot.slane %v4826, %v4832
        %v4835 = vshrl.u32 %v4833, 16
        %v4837 = vrot.slane %v4835, 7
        %v4838 = vrot.slane %v4837, 1
        %4839 = vrot.lane.b32.xlu0 %v4838, 64
        %v4840 = vpop.permute.xlu0 %4839
        %v4842 = vld [vmem:[#allocation7 + $0x15] sm:$0x1]
        %v4843 = vsel %vm3887, %v4840, %v4842
        %4844 = vst [vmem:[#allocation7 + $0x15] sm:$0x1] %v4843
        %v4845 = vld [vmem:[%s4764] sm:$0x4]
        %v4848 = vunpack.c.l.s4 1966171168
        %v4849 = vunpack.c.0.s8 %v4848
        %v4850 = vlaneseq
        %v4851 = vshrl.u32 %v4850, 7
        %v4852 = vsub.s32 %v4849, %v4851
        %v4853 = vrot.slane %v4845, %v4852
        %v4855 = vunpack.c.l.s4 1966171168
        %v4856 = vunpack.c.0.s8 %v4855
        %v4857 = vlaneseq
        %v4858 = vshrl.u32 %v4857, 7
        %v4859 = vsub.s32 %v4856, %v4858
        %v4860 = vrot.slane %v4853, %v4859
        %v4861 = vcombine.high %v4860, %v4860
        %v4863 = vld [vmem:[#allocation7 + $0x16] sm:$0x1]
        %v4864 = vsel %vm3858, %v4861, %v4863
        %4865 = vst [vmem:[#allocation7 + $0x16] sm:$0x1] %v4864
        %v4866 = vld [vmem:[%s4764] sm:$0x4]
        %v4869 = vunpack.c.l.s4 1966171168
        %v4870 = vunpack.c.0.s8 %v4869
        %v4871 = vlaneseq
        %v4872 = vshrl.u32 %v4871, 7
        %v4873 = vsub.s32 %v4870, %v4872
        %v4874 = vrot.slane %v4866, %v4873
        %v4876 = vunpack.c.l.s4 1966171168
        %v4877 = vunpack.c.0.s8 %v4876
        %v4878 = vlaneseq
        %v4879 = vshrl.u32 %v4878, 7
        %v4880 = vsub.s32 %v4877, %v4879
        %v4881 = vrot.slane %v4874, %v4880
        %v4882 = vcombine.high %v4881, %v4881
        %v4884 = vshrl.u32 %v4882, 16
        %v4886 = vrot.slane %v4884, 7
        %v4887 = vrot.slane %v4886, 1
        %4888 = vrot.lane.b32.xlu0 %v4887, 64
        %v4889 = vpop.permute.xlu0 %4888
        %v4891 = vld [vmem:[#allocation7 + $0x16] sm:$0x1]
        %v4892 = vsel %vm3887, %v4889, %v4891
        %4893 = vst [vmem:[#allocation7 + $0x16] sm:$0x1] %v4892
        %v4894 = vld [vmem:[%s4764] sm:$0x8]
        %v4897 = vunpack.c.l.s4 1966171168
        %v4898 = vunpack.c.0.s8 %v4897
        %v4899 = vlaneseq
        %v4900 = vshrl.u32 %v4899, 7
        %v4901 = vsub.s32 %v4898, %v4900
        %v4902 = vrot.slane %v4894, %v4901
        %v4903 = vcombine.high %v4902, %v4902
        %v4905 = vunpack.c.l.s4 1966171168
        %v4906 = vunpack.c.0.s8 %v4905
        %v4907 = vlaneseq
        %v4908 = vshrl.u32 %v4907, 7
        %v4909 = vsub.s32 %v4906, %v4908
        %v4910 = vrot.slane %v4903, %v4909
        %v4911 = vcombine.high %v4910, %v4910
        %v4913 = vld [vmem:[#allocation7 + $0x17] sm:$0x1]
        %v4914 = vsel %vm3858, %v4911, %v4913
        %4915 = vst [vmem:[#allocation7 + $0x17] sm:$0x1] %v4914
        %v4916 = vld [vmem:[%s4764] sm:$0x8]
        %v4919 = vunpack.c.l.s4 1966171168
        %v4920 = vunpack.c.0.s8 %v4919
        %v4921 = vlaneseq
        %v4922 = vshrl.u32 %v4921, 7
        %v4923 = vsub.s32 %v4920, %v4922
        %v4924 = vrot.slane %v4916, %v4923
        %v4925 = vcombine.high %v4924, %v4924
        %v4927 = vunpack.c.l.s4 1966171168
        %v4928 = vunpack.c.0.s8 %v4927
        %v4929 = vlaneseq
        %v4930 = vshrl.u32 %v4929, 7
        %v4931 = vsub.s32 %v4928, %v4930
        %v4932 = vrot.slane %v4925, %v4931
        %v4933 = vcombine.high %v4932, %v4932
        %v4935 = vshrl.u32 %v4933, 16
        %v4937 = vrot.slane %v4935, 7
        %v4938 = vrot.slane %v4937, 1
        %4939 = vrot.lane.b32.xlu0 %v4938, 64
        %v4940 = vpop.permute.xlu0 %4939
        %v4942 = vld [vmem:[#allocation7 + $0x17] sm:$0x1]
        %v4943 = vsel %vm3887, %v4940, %v4942
        %4944 = vst [vmem:[#allocation7 + $0x17] sm:$0x1] %v4943
        %s4945 = scalar_lea.vmem [#allocation6], 24
        %v4946 = vld [vmem:[%s4945] sm:$0x1]
        %v4947 = vld [vmem:[#allocation7 + $0x18] sm:$0x1]
        %v4948 = vsel %vm3858, %v4946, %v4947
        %4949 = vst [vmem:[#allocation7 + $0x18] sm:$0x1] %v4948
        %v4950 = vld [vmem:[%s4945] sm:$0x1]
        %v4953 = vunpack.c.l.s4 1966171168
        %v4954 = vunpack.c.0.s8 %v4953
        %v4955 = vlaneseq
        %v4956 = vshrl.u32 %v4955, 7
        %v4957 = vsub.s32 %v4954, %v4956
        %v4958 = vrot.slane %v4950, %v4957
        %v4960 = vunpack.c.l.s4 1966171168
        %v4961 = vunpack.c.0.s8 %v4960
        %v4962 = vlaneseq
        %v4963 = vshrl.u32 %v4962, 7
        %v4964 = vsub.s32 %v4961, %v4963
        %v4965 = vrot.slane %v4958, %v4964
        %v4967 = vshrl.u32 %v4965, 16
        %v4969 = vrot.slane %v4967, 7
        %v4970 = vrot.slane %v4969, 1
        %4971 = vrot.lane.b32.xlu0 %v4970, 64
        %v4972 = vpop.permute.xlu0 %4971
        %v4974 = vld [vmem:[#allocation7 + $0x18] sm:$0x1]
        %v4975 = vsel %vm3887, %v4972, %v4974
        %4976 = vst [vmem:[#allocation7 + $0x18] sm:$0x1] %v4975
        %v4977 = vld [vmem:[%s4945] sm:$0x2]
        %v4980 = vunpack.c.l.s4 1966171168
        %v4981 = vunpack.c.0.s8 %v4980
        %v4982 = vlaneseq
        %v4983 = vshrl.u32 %v4982, 7
        %v4984 = vsub.s32 %v4981, %v4983
        %v4985 = vrot.slane %v4977, %v4984
        %v4986 = vcombine.high %v4985, %v4985
        %v4988 = vunpack.c.l.s4 1966171168
        %v4989 = vunpack.c.0.s8 %v4988
        %v4990 = vlaneseq
        %v4991 = vshrl.u32 %v4990, 7
        %v4992 = vsub.s32 %v4989, %v4991
        %v4993 = vrot.slane %v4986, %v4992
        %v4995 = vld [vmem:[#allocation7 + $0x19] sm:$0x1]
        %v4996 = vsel %vm3858, %v4993, %v4995
        %4997 = vst [vmem:[#allocation7 + $0x19] sm:$0x1] %v4996
        %v4998 = vld [vmem:[%s4945] sm:$0x2]
        %v5001 = vunpack.c.l.s4 1966171168
        %v5002 = vunpack.c.0.s8 %v5001
        %v5003 = vlaneseq
        %v5004 = vshrl.u32 %v5003, 7
        %v5005 = vsub.s32 %v5002, %v5004
        %v5006 = vrot.slane %v4998, %v5005
        %v5007 = vcombine.high %v5006, %v5006
        %v5009 = vunpack.c.l.s4 1966171168
        %v5010 = vunpack.c.0.s8 %v5009
        %v5011 = vlaneseq
        %v5012 = vshrl.u32 %v5011, 7
        %v5013 = vsub.s32 %v5010, %v5012
        %v5014 = vrot.slane %v5007, %v5013
        %v5016 = vshrl.u32 %v5014, 16
        %v5018 = vrot.slane %v5016, 7
        %v5019 = vrot.slane %v5018, 1
        %5020 = vrot.lane.b32.xlu0 %v5019, 64
        %v5021 = vpop.permute.xlu0 %5020
        %v5023 = vld [vmem:[#allocation7 + $0x19] sm:$0x1]
        %v5024 = vsel %vm3887, %v5021, %v5023
        %5025 = vst [vmem:[#allocation7 + $0x19] sm:$0x1] %v5024
        %v5026 = vld [vmem:[%s4945] sm:$0x4]
        %v5029 = vunpack.c.l.s4 1966171168
        %v5030 = vunpack.c.0.s8 %v5029
        %v5031 = vlaneseq
        %v5032 = vshrl.u32 %v5031, 7
        %v5033 = vsub.s32 %v5030, %v5032
        %v5034 = vrot.slane %v5026, %v5033
        %v5036 = vunpack.c.l.s4 1966171168
        %v5037 = vunpack.c.0.s8 %v5036
        %v5038 = vlaneseq
        %v5039 = vshrl.u32 %v5038, 7
        %v5040 = vsub.s32 %v5037, %v5039
        %v5041 = vrot.slane %v5034, %v5040
        %v5042 = vcombine.high %v5041, %v5041
        %v5044 = vld [vmem:[#allocation7 + $0x1a] sm:$0x1]
        %v5045 = vsel %vm3858, %v5042, %v5044
        %5046 = vst [vmem:[#allocation7 + $0x1a] sm:$0x1] %v5045
        %v5047 = vld [vmem:[%s4945] sm:$0x4]
        %v5050 = vunpack.c.l.s4 1966171168
        %v5051 = vunpack.c.0.s8 %v5050
        %v5052 = vlaneseq
        %v5053 = vshrl.u32 %v5052, 7
        %v5054 = vsub.s32 %v5051, %v5053
        %v5055 = vrot.slane %v5047, %v5054
        %v5057 = vunpack.c.l.s4 1966171168
        %v5058 = vunpack.c.0.s8 %v5057
        %v5059 = vlaneseq
        %v5060 = vshrl.u32 %v5059, 7
        %v5061 = vsub.s32 %v5058, %v5060
        %v5062 = vrot.slane %v5055, %v5061
        %v5063 = vcombine.high %v5062, %v5062
        %v5065 = vshrl.u32 %v5063, 16
        %v5067 = vrot.slane %v5065, 7
        %v5068 = vrot.slane %v5067, 1
        %5069 = vrot.lane.b32.xlu0 %v5068, 64
        %v5070 = vpop.permute.xlu0 %5069
        %v5072 = vld [vmem:[#allocation7 + $0x1a] sm:$0x1]
        %v5073 = vsel %vm3887, %v5070, %v5072
        %5074 = vst [vmem:[#allocation7 + $0x1a] sm:$0x1] %v5073
        %v5075 = vld [vmem:[%s4945] sm:$0x8]
        %v5078 = vunpack.c.l.s4 1966171168
        %v5079 = vunpack.c.0.s8 %v5078
        %v5080 = vlaneseq
        %v5081 = vshrl.u32 %v5080, 7
        %v5082 = vsub.s32 %v5079, %v5081
        %v5083 = vrot.slane %v5075, %v5082
        %v5084 = vcombine.high %v5083, %v5083
        %v5086 = vunpack.c.l.s4 1966171168
        %v5087 = vunpack.c.0.s8 %v5086
        %v5088 = vlaneseq
        %v5089 = vshrl.u32 %v5088, 7
        %v5090 = vsub.s32 %v5087, %v5089
        %v5091 = vrot.slane %v5084, %v5090
        %v5092 = vcombine.high %v5091, %v5091
        %v5094 = vld [vmem:[#allocation7 + $0x1b] sm:$0x1]
        %v5095 = vsel %vm3858, %v5092, %v5094
        %5096 = vst [vmem:[#allocation7 + $0x1b] sm:$0x1] %v5095
        %v5097 = vld [vmem:[%s4945] sm:$0x8]
        %v5100 = vunpack.c.l.s4 1966171168
        %v5101 = vunpack.c.0.s8 %v5100
        %v5102 = vlaneseq
        %v5103 = vshrl.u32 %v5102, 7
        %v5104 = vsub.s32 %v5101, %v5103
        %v5105 = vrot.slane %v5097, %v5104
        %v5106 = vcombine.high %v5105, %v5105
        %v5108 = vunpack.c.l.s4 1966171168
        %v5109 = vunpack.c.0.s8 %v5108
        %v5110 = vlaneseq
        %v5111 = vshrl.u32 %v5110, 7
        %v5112 = vsub.s32 %v5109, %v5111
        %v5113 = vrot.slane %v5106, %v5112
        %v5114 = vcombine.high %v5113, %v5113
        %v5116 = vshrl.u32 %v5114, 16
        %v5118 = vrot.slane %v5116, 7
        %v5119 = vrot.slane %v5118, 1
        %5120 = vrot.lane.b32.xlu0 %v5119, 64
        %v5121 = vpop.permute.xlu0 %5120
        %v5123 = vld [vmem:[#allocation7 + $0x1b] sm:$0x1]
        %v5124 = vsel %vm3887, %v5121, %v5123
        %5125 = vst [vmem:[#allocation7 + $0x1b] sm:$0x1] %v5124
        %s5126 = scalar_lea.vmem [#allocation6], 28
        %v5127 = vld [vmem:[%s5126] sm:$0x1]
        %v5128 = vld [vmem:[#allocation7 + $0x1c] sm:$0x1]
        %v5129 = vsel %vm3858, %v5127, %v5128
        %5130 = vst [vmem:[#allocation7 + $0x1c] sm:$0x1] %v5129
        %v5131 = vld [vmem:[%s5126] sm:$0x1]
        %v5134 = vunpack.c.l.s4 1966171168
        %v5135 = vunpack.c.0.s8 %v5134
        %v5136 = vlaneseq
        %v5137 = vshrl.u32 %v5136, 7
        %v5138 = vsub.s32 %v5135, %v5137
        %v5139 = vrot.slane %v5131, %v5138
        %v5141 = vunpack.c.l.s4 1966171168
        %v5142 = vunpack.c.0.s8 %v5141
        %v5143 = vlaneseq
        %v5144 = vshrl.u32 %v5143, 7
        %v5145 = vsub.s32 %v5142, %v5144
        %v5146 = vrot.slane %v5139, %v5145
        %v5148 = vshrl.u32 %v5146, 16
        %v5150 = vrot.slane %v5148, 7
        %v5151 = vrot.slane %v5150, 1
        %5152 = vrot.lane.b32.xlu0 %v5151, 64
        %v5153 = vpop.permute.xlu0 %5152
        %v5155 = vld [vmem:[#allocation7 + $0x1c] sm:$0x1]
        %v5156 = vsel %vm3887, %v5153, %v5155
        %5157 = vst [vmem:[#allocation7 + $0x1c] sm:$0x1] %v5156
        %v5158 = vld [vmem:[%s5126] sm:$0x2]
        %v5161 = vunpack.c.l.s4 1966171168
        %v5162 = vunpack.c.0.s8 %v5161
        %v5163 = vlaneseq
        %v5164 = vshrl.u32 %v5163, 7
        %v5165 = vsub.s32 %v5162, %v5164
        %v5166 = vrot.slane %v5158, %v5165
        %v5167 = vcombine.high %v5166, %v5166
        %v5169 = vunpack.c.l.s4 1966171168
        %v5170 = vunpack.c.0.s8 %v5169
        %v5171 = vlaneseq
        %v5172 = vshrl.u32 %v5171, 7
        %v5173 = vsub.s32 %v5170, %v5172
        %v5174 = vrot.slane %v5167, %v5173
        %v5176 = vld [vmem:[#allocation7 + $0x1d] sm:$0x1]
        %v5177 = vsel %vm3858, %v5174, %v5176
        %5178 = vst [vmem:[#allocation7 + $0x1d] sm:$0x1] %v5177
        %v5179 = vld [vmem:[%s5126] sm:$0x2]
        %v5182 = vunpack.c.l.s4 1966171168
        %v5183 = vunpack.c.0.s8 %v5182
        %v5184 = vlaneseq
        %v5185 = vshrl.u32 %v5184, 7
        %v5186 = vsub.s32 %v5183, %v5185
        %v5187 = vrot.slane %v5179, %v5186
        %v5188 = vcombine.high %v5187, %v5187
        %v5190 = vunpack.c.l.s4 1966171168
        %v5191 = vunpack.c.0.s8 %v5190
        %v5192 = vlaneseq
        %v5193 = vshrl.u32 %v5192, 7
        %v5194 = vsub.s32 %v5191, %v5193
        %v5195 = vrot.slane %v5188, %v5194
        %v5197 = vshrl.u32 %v5195, 16
        %v5199 = vrot.slane %v5197, 7
        %v5200 = vrot.slane %v5199, 1
        %5201 = vrot.lane.b32.xlu0 %v5200, 64
        %v5202 = vpop.permute.xlu0 %5201
        %v5204 = vld [vmem:[#allocation7 + $0x1d] sm:$0x1]
        %v5205 = vsel %vm3887, %v5202, %v5204
        %5206 = vst [vmem:[#allocation7 + $0x1d] sm:$0x1] %v5205
        %v5207 = vld [vmem:[%s5126] sm:$0x4]
        %v5210 = vunpack.c.l.s4 1966171168
        %v5211 = vunpack.c.0.s8 %v5210
        %v5212 = vlaneseq
        %v5213 = vshrl.u32 %v5212, 7
        %v5214 = vsub.s32 %v5211, %v5213
        %v5215 = vrot.slane %v5207, %v5214
        %v5217 = vunpack.c.l.s4 1966171168
        %v5218 = vunpack.c.0.s8 %v5217
        %v5219 = vlaneseq
        %v5220 = vshrl.u32 %v5219, 7
        %v5221 = vsub.s32 %v5218, %v5220
        %v5222 = vrot.slane %v5215, %v5221
        %v5223 = vcombine.high %v5222, %v5222
        %v5225 = vld [vmem:[#allocation7 + $0x1e] sm:$0x1]
        %v5226 = vsel %vm3858, %v5223, %v5225
        %5227 = vst [vmem:[#allocation7 + $0x1e] sm:$0x1] %v5226
        %v5228 = vld [vmem:[%s5126] sm:$0x4]
        %v5231 = vunpack.c.l.s4 1966171168
        %v5232 = vunpack.c.0.s8 %v5231
        %v5233 = vlaneseq
        %v5234 = vshrl.u32 %v5233, 7
        %v5235 = vsub.s32 %v5232, %v5234
        %v5236 = vrot.slane %v5228, %v5235
        %v5238 = vunpack.c.l.s4 1966171168
        %v5239 = vunpack.c.0.s8 %v5238
        %v5240 = vlaneseq
        %v5241 = vshrl.u32 %v5240, 7
        %v5242 = vsub.s32 %v5239, %v5241
        %v5243 = vrot.slane %v5236, %v5242
        %v5244 = vcombine.high %v5243, %v5243
        %v5246 = vshrl.u32 %v5244, 16
        %v5248 = vrot.slane %v5246, 7
        %v5249 = vrot.slane %v5248, 1
        %5250 = vrot.lane.b32.xlu0 %v5249, 64
        %v5251 = vpop.permute.xlu0 %5250
        %v5253 = vld [vmem:[#allocation7 + $0x1e] sm:$0x1]
        %v5254 = vsel %vm3887, %v5251, %v5253
        %5255 = vst [vmem:[#allocation7 + $0x1e] sm:$0x1] %v5254
        %v5256 = vld [vmem:[%s5126] sm:$0x8]
        %v5259 = vunpack.c.l.s4 1966171168
        %v5260 = vunpack.c.0.s8 %v5259
        %v5261 = vlaneseq
        %v5262 = vshrl.u32 %v5261, 7
        %v5263 = vsub.s32 %v5260, %v5262
        %v5264 = vrot.slane %v5256, %v5263
        %v5265 = vcombine.high %v5264, %v5264
        %v5267 = vunpack.c.l.s4 1966171168
        %v5268 = vunpack.c.0.s8 %v5267
        %v5269 = vlaneseq
        %v5270 = vshrl.u32 %v5269, 7
        %v5271 = vsub.s32 %v5268, %v5270
        %v5272 = vrot.slane %v5265, %v5271
        %v5273 = vcombine.high %v5272, %v5272
        %v5275 = vld [vmem:[#allocation7 + $0x1f] sm:$0x1]
        %v5276 = vsel %vm3858, %v5273, %v5275
        %5277 = vst [vmem:[#allocation7 + $0x1f] sm:$0x1] %v5276
        %v5278 = vld [vmem:[%s5126] sm:$0x8]
        %v5281 = vunpack.c.l.s4 1966171168
        %v5282 = vunpack.c.0.s8 %v5281
        %v5283 = vlaneseq
        %v5284 = vshrl.u32 %v5283, 7
        %v5285 = vsub.s32 %v5282, %v5284
        %v5286 = vrot.slane %v5278, %v5285
        %v5287 = vcombine.high %v5286, %v5286
        %v5289 = vunpack.c.l.s4 1966171168
        %v5290 = vunpack.c.0.s8 %v5289
        %v5291 = vlaneseq
        %v5292 = vshrl.u32 %v5291, 7
        %v5293 = vsub.s32 %v5290, %v5292
        %v5294 = vrot.slane %v5287, %v5293
        %v5295 = vcombine.high %v5294, %v5294
        %v5297 = vshrl.u32 %v5295, 16
        %v5299 = vrot.slane %v5297, 7
        %v5300 = vrot.slane %v5299, 1
        %5301 = vrot.lane.b32.xlu0 %v5300, 64
        %v5302 = vpop.permute.xlu0 %5301
        %v5304 = vld [vmem:[#allocation7 + $0x1f] sm:$0x1]
        %v5305 = vsel %vm3887, %v5302, %v5304
        %5306 = vst [vmem:[#allocation7 + $0x1f] sm:$0x1] %v5305
        %v5307 = vld [vmem:[#allocation7] sm:$0xff]
        %v5308 = vld [vmem:[#allocation7 + $0x8] sm:$0xff]
        %v5309 = vld [vmem:[#allocation7 + $0x10] sm:$0xff]
        %v5310 = vld [vmem:[#allocation7 + $0x18] sm:$0xff]
        %v5311 = vld [vmem:[#allocation8] sm:$0xf]
        %v5312 = vld [vmem:[#allocation8 + $0x4] sm:$0xf]
        %v5313 = vld [vmem:[#allocation8 + $0x8] sm:$0xf]
        %v5314 = vld [vmem:[#allocation8 + $0xc] sm:$0xf]
        %v5315 = vld [vmem:[#allocation8 + $0x10] sm:$0xf]
        %v5316 = vld [vmem:[#allocation8 + $0x14] sm:$0xf]
        %v5317 = vld [vmem:[#allocation8 + $0x18] sm:$0xf]
        %v5318 = vld [vmem:[#allocation8 + $0x1c] sm:$0xf]
        %v5319 = vld [vmem:[#allocation8 + $0x20] sm:$0xf]
        %v5320 = vld [vmem:[#allocation8 + $0x24] sm:$0xf]
        %v5321 = vld [vmem:[#allocation8 + $0x28] sm:$0xf]
        %v5322 = vld [vmem:[#allocation8 + $0x2c] sm:$0xf]
        %v5323 = vld [vmem:[#allocation8 + $0x30] sm:$0xf]
        %v5324 = vld [vmem:[#allocation8 + $0x34] sm:$0xf]
        %v5325 = vld [vmem:[#allocation8 + $0x38] sm:$0xf]
        %v5326 = vld [vmem:[#allocation8 + $0x3c] sm:$0xf]
        %v5327 = vld [vmem:[#allocation8 + $0x40] sm:$0xf]
        %v5328 = vld [vmem:[#allocation8 + $0x44] sm:$0xf]
        %v5329 = vld [vmem:[#allocation8 + $0x48] sm:$0xf]
        %v5330 = vld [vmem:[#allocation8 + $0x4c] sm:$0xf]
        %v5331 = vld [vmem:[#allocation8 + $0x50] sm:$0xf]
        %v5332 = vld [vmem:[#allocation8 + $0x54] sm:$0xf]
        %v5333 = vld [vmem:[#allocation8 + $0x58] sm:$0xf]
        %v5334 = vld [vmem:[#allocation8 + $0x5c] sm:$0xf]
        %v5335 = vld [vmem:[#allocation8 + $0x60] sm:$0xf]
        %v5336 = vld [vmem:[#allocation8 + $0x64] sm:$0xf]
        %v5337 = vld [vmem:[#allocation8 + $0x68] sm:$0xf]
        %v5338 = vld [vmem:[#allocation8 + $0x6c] sm:$0xf]
        %v5339 = vld [vmem:[#allocation8 + $0x70] sm:$0xf]
        %v5340 = vld [vmem:[#allocation8 + $0x74] sm:$0xf]
        %v5341 = vld [vmem:[#allocation8 + $0x78] sm:$0xf]
        %v5342 = vld [vmem:[#allocation8 + $0x7c] sm:$0xf]
        %v5343 = vld [vmem:[#allocation8 + $0x80] sm:$0xf]
        %v5344 = vld [vmem:[#allocation8 + $0x84] sm:$0xf]
        %v5345 = vld [vmem:[#allocation8 + $0x88] sm:$0xf]
        %v5346 = vld [vmem:[#allocation8 + $0x8c] sm:$0xf]
        %v5347 = vld [vmem:[#allocation8 + $0x90] sm:$0xf]
        %v5348 = vld [vmem:[#allocation8 + $0x94] sm:$0xf]
        %v5349 = vld [vmem:[#allocation8 + $0x98] sm:$0xf]
        %v5350 = vld [vmem:[#allocation8 + $0x9c] sm:$0xf]
        %v5351 = vld [vmem:[#allocation8 + $0xa0] sm:$0xf]
        %v5352 = vld [vmem:[#allocation8 + $0xa4] sm:$0xf]
        %v5353 = vld [vmem:[#allocation8 + $0xa8] sm:$0xf]
        %v5354 = vld [vmem:[#allocation8 + $0xac] sm:$0xf]
        %v5355 = vld [vmem:[#allocation8 + $0xb0] sm:$0xf]
        %v5356 = vld [vmem:[#allocation8 + $0xb4] sm:$0xf]
        %v5357 = vld [vmem:[#allocation8 + $0xb8] sm:$0xf]
        %v5358 = vld [vmem:[#allocation8 + $0xbc] sm:$0xf]
        %v5359 = vld [vmem:[#allocation8 + $0xc0] sm:$0xf]
        %v5360 = vld [vmem:[#allocation8 + $0xc4] sm:$0xf]
        %v5361 = vld [vmem:[#allocation8 + $0xc8] sm:$0xf]
        %v5362 = vld [vmem:[#allocation8 + $0xcc] sm:$0xf]
        %v5363 = vld [vmem:[#allocation8 + $0xd0] sm:$0xf]
        %v5364 = vld [vmem:[#allocation8 + $0xd4] sm:$0xf]
        %v5365 = vld [vmem:[#allocation8 + $0xd8] sm:$0xf]
        %v5366 = vld [vmem:[#allocation8 + $0xdc] sm:$0xf]
        %v5367 = vld [vmem:[#allocation8 + $0xe0] sm:$0xf]
        %v5368 = vld [vmem:[#allocation8 + $0xe4] sm:$0xf]
        %v5369 = vld [vmem:[#allocation8 + $0xe8] sm:$0xf]
        %v5370 = vld [vmem:[#allocation8 + $0xec] sm:$0xf]
        %v5371 = vld [vmem:[#allocation8 + $0xf0] sm:$0xf]
        %v5372 = vld [vmem:[#allocation8 + $0xf4] sm:$0xf]
        %v5373 = vld [vmem:[#allocation8 + $0xf8] sm:$0xf]
        %v5374 = vld [vmem:[#allocation8 + $0xfc] sm:$0xf]
        %v5375 = vld [vmem:[#allocation8 + $0x100] sm:$0xf]
        %v5376 = vld [vmem:[#allocation8 + $0x104] sm:$0xf]
        %v5377 = vld [vmem:[#allocation8 + $0x108] sm:$0xf]
        %v5378 = vld [vmem:[#allocation8 + $0x10c] sm:$0xf]
        %v5379 = vld [vmem:[#allocation8 + $0x110] sm:$0xf]
        %v5380 = vld [vmem:[#allocation8 + $0x114] sm:$0xf]
        %v5381 = vld [vmem:[#allocation8 + $0x118] sm:$0xf]
        %v5382 = vld [vmem:[#allocation8 + $0x11c] sm:$0xf]
        %v5383 = vld [vmem:[#allocation8 + $0x120] sm:$0xf]
        %v5384 = vld [vmem:[#allocation8 + $0x124] sm:$0xf]
        %v5385 = vld [vmem:[#allocation8 + $0x128] sm:$0xf]
        %v5386 = vld [vmem:[#allocation8 + $0x12c] sm:$0xf]
        %v5387 = vld [vmem:[#allocation8 + $0x130] sm:$0xf]
        %v5388 = vld [vmem:[#allocation8 + $0x134] sm:$0xf]
        %v5389 = vld [vmem:[#allocation8 + $0x138] sm:$0xf]
        %v5390 = vld [vmem:[#allocation8 + $0x13c] sm:$0xf]
        %v5391 = vld [vmem:[#allocation8 + $0x140] sm:$0xf]
        %v5392 = vld [vmem:[#allocation8 + $0x144] sm:$0xf]
        %v5393 = vld [vmem:[#allocation8 + $0x148] sm:$0xf]
        %v5394 = vld [vmem:[#allocation8 + $0x14c] sm:$0xf]
        %v5395 = vld [vmem:[#allocation8 + $0x150] sm:$0xf]
        %v5396 = vld [vmem:[#allocation8 + $0x154] sm:$0xf]
        %v5397 = vld [vmem:[#allocation8 + $0x158] sm:$0xf]
        %v5398 = vld [vmem:[#allocation8 + $0x15c] sm:$0xf]
        %v5399 = vld [vmem:[#allocation8 + $0x160] sm:$0xf]
        %v5400 = vld [vmem:[#allocation8 + $0x164] sm:$0xf]
        %v5401 = vld [vmem:[#allocation8 + $0x168] sm:$0xf]
        %v5402 = vld [vmem:[#allocation8 + $0x16c] sm:$0xf]
        %v5403 = vld [vmem:[#allocation8 + $0x170] sm:$0xf]
        %v5404 = vld [vmem:[#allocation8 + $0x174] sm:$0xf]
        %v5405 = vld [vmem:[#allocation8 + $0x178] sm:$0xf]
        %v5406 = vld [vmem:[#allocation8 + $0x17c] sm:$0xf]
        %v5407 = vld [vmem:[#allocation8 + $0x180] sm:$0xf]
        %v5408 = vld [vmem:[#allocation8 + $0x184] sm:$0xf]
        %v5409 = vld [vmem:[#allocation8 + $0x188] sm:$0xf]
        %v5410 = vld [vmem:[#allocation8 + $0x18c] sm:$0xf]
        %v5411 = vld [vmem:[#allocation8 + $0x190] sm:$0xf]
        %v5412 = vld [vmem:[#allocation8 + $0x194] sm:$0xf]
        %v5413 = vld [vmem:[#allocation8 + $0x198] sm:$0xf]
        %v5414 = vld [vmem:[#allocation8 + $0x19c] sm:$0xf]
        %v5415 = vld [vmem:[#allocation8 + $0x1a0] sm:$0xf]
        %v5416 = vld [vmem:[#allocation8 + $0x1a4] sm:$0xf]
        %v5417 = vld [vmem:[#allocation8 + $0x1a8] sm:$0xf]
        %v5418 = vld [vmem:[#allocation8 + $0x1ac] sm:$0xf]
        %v5419 = vld [vmem:[#allocation8 + $0x1b0] sm:$0xf]
        %v5420 = vld [vmem:[#allocation8 + $0x1b4] sm:$0xf]
        %v5421 = vld [vmem:[#allocation8 + $0x1b8] sm:$0xf]
        %v5422 = vld [vmem:[#allocation8 + $0x1bc] sm:$0xf]
        %v5423 = vld [vmem:[#allocation8 + $0x1c0] sm:$0xf]
        %v5424 = vld [vmem:[#allocation8 + $0x1c4] sm:$0xf]
        %v5425 = vld [vmem:[#allocation8 + $0x1c8] sm:$0xf]
        %v5426 = vld [vmem:[#allocation8 + $0x1cc] sm:$0xf]
        %v5427 = vld [vmem:[#allocation8 + $0x1d0] sm:$0xf]
        %v5428 = vld [vmem:[#allocation8 + $0x1d4] sm:$0xf]
        %v5429 = vld [vmem:[#allocation8 + $0x1d8] sm:$0xf]
        %v5430 = vld [vmem:[#allocation8 + $0x1dc] sm:$0xf]
        %v5431 = vld [vmem:[#allocation8 + $0x1e0] sm:$0xf]
        %v5432 = vld [vmem:[#allocation8 + $0x1e4] sm:$0xf]
        %v5433 = vld [vmem:[#allocation8 + $0x1e8] sm:$0xf]
        %v5434 = vld [vmem:[#allocation8 + $0x1ec] sm:$0xf]
        %v5435 = vld [vmem:[#allocation8 + $0x1f0] sm:$0xf]
        %v5436 = vld [vmem:[#allocation8 + $0x1f4] sm:$0xf]
        %v5437 = vld [vmem:[#allocation8 + $0x1f8] sm:$0xf]
        %v5438 = vld [vmem:[#allocation8 + $0x1fc] sm:$0xf]
        %v5439 = vld [vmem:[#allocation8 + $0x200] sm:$0xf]
        %v5440 = vld [vmem:[#allocation8 + $0x204] sm:$0xf]
        %v5441 = vld [vmem:[#allocation8 + $0x208] sm:$0xf]
        %v5442 = vld [vmem:[#allocation8 + $0x20c] sm:$0xf]
        %v5443 = vld [vmem:[#allocation8 + $0x210] sm:$0xf]
        %v5444 = vld [vmem:[#allocation8 + $0x214] sm:$0xf]
        %v5445 = vld [vmem:[#allocation8 + $0x218] sm:$0xf]
        %v5446 = vld [vmem:[#allocation8 + $0x21c] sm:$0xf]
        %v5447 = vld [vmem:[#allocation8 + $0x220] sm:$0xf]
        %v5448 = vld [vmem:[#allocation8 + $0x224] sm:$0xf]
        %v5449 = vld [vmem:[#allocation8 + $0x228] sm:$0xf]
        %v5450 = vld [vmem:[#allocation8 + $0x22c] sm:$0xf]
        %v5451 = vld [vmem:[#allocation8 + $0x230] sm:$0xf]
        %v5452 = vld [vmem:[#allocation8 + $0x234] sm:$0xf]
        %v5453 = vld [vmem:[#allocation8 + $0x238] sm:$0xf]
        %v5454 = vld [vmem:[#allocation8 + $0x23c] sm:$0xf]
        %v5455 = vld [vmem:[#allocation8 + $0x240] sm:$0xf]
        %v5456 = vld [vmem:[#allocation8 + $0x244] sm:$0xf]
        %v5457 = vld [vmem:[#allocation8 + $0x248] sm:$0xf]
        %v5458 = vld [vmem:[#allocation8 + $0x24c] sm:$0xf]
        %v5459 = vld [vmem:[#allocation8 + $0x250] sm:$0xf]
        %v5460 = vld [vmem:[#allocation8 + $0x254] sm:$0xf]
        %v5461 = vld [vmem:[#allocation8 + $0x258] sm:$0xf]
        %v5462 = vld [vmem:[#allocation8 + $0x25c] sm:$0xf]
        %v5463 = vld [vmem:[#allocation8 + $0x260] sm:$0xf]
        %v5464 = vld [vmem:[#allocation8 + $0x264] sm:$0xf]
        %v5465 = vld [vmem:[#allocation8 + $0x268] sm:$0xf]
        %v5466 = vld [vmem:[#allocation8 + $0x26c] sm:$0xf]
        %v5467 = vld [vmem:[#allocation8 + $0x270] sm:$0xf]
        %v5468 = vld [vmem:[#allocation8 + $0x274] sm:$0xf]
        %v5469 = vld [vmem:[#allocation8 + $0x278] sm:$0xf]
        %v5470 = vld [vmem:[#allocation8 + $0x27c] sm:$0xf]
        %v5471 = vld [vmem:[#allocation8 + $0x280] sm:$0xf]
        %v5472 = vld [vmem:[#allocation8 + $0x284] sm:$0xf]
        %v5473 = vld [vmem:[#allocation8 + $0x288] sm:$0xf]
        %v5474 = vld [vmem:[#allocation8 + $0x28c] sm:$0xf]
        %v5475 = vld [vmem:[#allocation8 + $0x290] sm:$0xf]
        %v5476 = vld [vmem:[#allocation8 + $0x294] sm:$0xf]
        %v5477 = vld [vmem:[#allocation8 + $0x298] sm:$0xf]
        %v5478 = vld [vmem:[#allocation8 + $0x29c] sm:$0xf]
        %v5479 = vld [vmem:[#allocation8 + $0x2a0] sm:$0xf]
        %v5480 = vld [vmem:[#allocation8 + $0x2a4] sm:$0xf]
        %v5481 = vld [vmem:[#allocation8 + $0x2a8] sm:$0xf]
        %v5482 = vld [vmem:[#allocation8 + $0x2ac] sm:$0xf]
        %v5483 = vld [vmem:[#allocation8 + $0x2b0] sm:$0xf]
        %v5484 = vld [vmem:[#allocation8 + $0x2b4] sm:$0xf]
        %v5485 = vld [vmem:[#allocation8 + $0x2b8] sm:$0xf]
        %v5486 = vld [vmem:[#allocation8 + $0x2bc] sm:$0xf]
        %v5487 = vld [vmem:[#allocation8 + $0x2c0] sm:$0xf]
        %v5488 = vld [vmem:[#allocation8 + $0x2c4] sm:$0xf]
        %v5489 = vld [vmem:[#allocation8 + $0x2c8] sm:$0xf]
        %v5490 = vld [vmem:[#allocation8 + $0x2cc] sm:$0xf]
        %v5491 = vld [vmem:[#allocation8 + $0x2d0] sm:$0xf]
        %v5492 = vld [vmem:[#allocation8 + $0x2d4] sm:$0xf]
        %v5493 = vld [vmem:[#allocation8 + $0x2d8] sm:$0xf]
        %v5494 = vld [vmem:[#allocation8 + $0x2dc] sm:$0xf]
        %v5495 = vld [vmem:[#allocation8 + $0x2e0] sm:$0xf]
        %v5496 = vld [vmem:[#allocation8 + $0x2e4] sm:$0xf]
        %v5497 = vld [vmem:[#allocation8 + $0x2e8] sm:$0xf]
        %v5498 = vld [vmem:[#allocation8 + $0x2ec] sm:$0xf]
        %v5499 = vld [vmem:[#allocation8 + $0x2f0] sm:$0xf]
        %v5500 = vld [vmem:[#allocation8 + $0x2f4] sm:$0xf]
        %v5501 = vld [vmem:[#allocation8 + $0x2f8] sm:$0xf]
        %v5502 = vld [vmem:[#allocation8 + $0x2fc] sm:$0xf]
        %v5503 = vld [vmem:[#allocation8 + $0x300] sm:$0xf]
        %v5504 = vld [vmem:[#allocation8 + $0x304] sm:$0xf]
        %v5505 = vld [vmem:[#allocation8 + $0x308] sm:$0xf]
        %v5506 = vld [vmem:[#allocation8 + $0x30c] sm:$0xf]
        %v5507 = vld [vmem:[#allocation8 + $0x310] sm:$0xf]
        %v5508 = vld [vmem:[#allocation8 + $0x314] sm:$0xf]
        %v5509 = vld [vmem:[#allocation8 + $0x318] sm:$0xf]
        %v5510 = vld [vmem:[#allocation8 + $0x31c] sm:$0xf]
        %v5511 = vld [vmem:[#allocation8 + $0x320] sm:$0xf]
        %v5512 = vld [vmem:[#allocation8 + $0x324] sm:$0xf]
        %v5513 = vld [vmem:[#allocation8 + $0x328] sm:$0xf]
        %v5514 = vld [vmem:[#allocation8 + $0x32c] sm:$0xf]
        %v5515 = vld [vmem:[#allocation8 + $0x330] sm:$0xf]
        %v5516 = vld [vmem:[#allocation8 + $0x334] sm:$0xf]
        %v5517 = vld [vmem:[#allocation8 + $0x338] sm:$0xf]
        %v5518 = vld [vmem:[#allocation8 + $0x33c] sm:$0xf]
        %v5519 = vld [vmem:[#allocation8 + $0x340] sm:$0xf]
        %v5520 = vld [vmem:[#allocation8 + $0x344] sm:$0xf]
        %v5521 = vld [vmem:[#allocation8 + $0x348] sm:$0xf]
        %v5522 = vld [vmem:[#allocation8 + $0x34c] sm:$0xf]
        %v5523 = vld [vmem:[#allocation8 + $0x350] sm:$0xf]
        %v5524 = vld [vmem:[#allocation8 + $0x354] sm:$0xf]
        %v5525 = vld [vmem:[#allocation8 + $0x358] sm:$0xf]
        %v5526 = vld [vmem:[#allocation8 + $0x35c] sm:$0xf]
        %v5527 = vld [vmem:[#allocation8 + $0x360] sm:$0xf]
        %v5528 = vld [vmem:[#allocation8 + $0x364] sm:$0xf]
        %v5529 = vld [vmem:[#allocation8 + $0x368] sm:$0xf]
        %v5530 = vld [vmem:[#allocation8 + $0x36c] sm:$0xf]
        %v5531 = vld [vmem:[#allocation8 + $0x370] sm:$0xf]
        %v5532 = vld [vmem:[#allocation8 + $0x374] sm:$0xf]
        %v5533 = vld [vmem:[#allocation8 + $0x378] sm:$0xf]
        %v5534 = vld [vmem:[#allocation8 + $0x37c] sm:$0xf]
        %v5535 = vld [vmem:[#allocation8 + $0x380] sm:$0xf]
        %v5536 = vld [vmem:[#allocation8 + $0x384] sm:$0xf]
        %v5537 = vld [vmem:[#allocation8 + $0x388] sm:$0xf]
        %v5538 = vld [vmem:[#allocation8 + $0x38c] sm:$0xf]
        %v5539 = vld [vmem:[#allocation8 + $0x390] sm:$0xf]
        %v5540 = vld [vmem:[#allocation8 + $0x394] sm:$0xf]
        %v5541 = vld [vmem:[#allocation8 + $0x398] sm:$0xf]
        %v5542 = vld [vmem:[#allocation8 + $0x39c] sm:$0xf]
        %v5543 = vld [vmem:[#allocation8 + $0x3a0] sm:$0xf]
        %v5544 = vld [vmem:[#allocation8 + $0x3a4] sm:$0xf]
        %v5545 = vld [vmem:[#allocation8 + $0x3a8] sm:$0xf]
        %v5546 = vld [vmem:[#allocation8 + $0x3ac] sm:$0xf]
        %v5547 = vld [vmem:[#allocation8 + $0x3b0] sm:$0xf]
        %v5548 = vld [vmem:[#allocation8 + $0x3b4] sm:$0xf]
        %v5549 = vld [vmem:[#allocation8 + $0x3b8] sm:$0xf]
        %v5550 = vld [vmem:[#allocation8 + $0x3bc] sm:$0xf]
        %v5551 = vld [vmem:[#allocation8 + $0x3c0] sm:$0xf]
        %v5552 = vld [vmem:[#allocation8 + $0x3c4] sm:$0xf]
        %v5553 = vld [vmem:[#allocation8 + $0x3c8] sm:$0xf]
        %v5554 = vld [vmem:[#allocation8 + $0x3cc] sm:$0xf]
        %v5555 = vld [vmem:[#allocation8 + $0x3d0] sm:$0xf]
        %v5556 = vld [vmem:[#allocation8 + $0x3d4] sm:$0xf]
        %v5557 = vld [vmem:[#allocation8 + $0x3d8] sm:$0xf]
        %v5558 = vld [vmem:[#allocation8 + $0x3dc] sm:$0xf]
        %v5559 = vld [vmem:[#allocation8 + $0x3e0] sm:$0xf]
        %v5560 = vld [vmem:[#allocation8 + $0x3e4] sm:$0xf]
        %v5561 = vld [vmem:[#allocation8 + $0x3e8] sm:$0xf]
        %v5562 = vld [vmem:[#allocation8 + $0x3ec] sm:$0xf]
        %v5563 = vld [vmem:[#allocation8 + $0x3f0] sm:$0xf]
        %v5564 = vld [vmem:[#allocation8 + $0x3f4] sm:$0xf]
        %v5565 = vld [vmem:[#allocation8 + $0x3f8] sm:$0xf]
        %v5566 = vld [vmem:[#allocation8 + $0x3fc] sm:$0xf]
        %v5567 = vld [vmem:[#allocation8 + $0x400] sm:$0xf]
        %v5568 = vld [vmem:[#allocation8 + $0x404] sm:$0xf]
        %v5569 = vld [vmem:[#allocation8 + $0x408] sm:$0xf]
        %v5570 = vld [vmem:[#allocation8 + $0x40c] sm:$0xf]
        %v5571 = vld [vmem:[#allocation8 + $0x410] sm:$0xf]
        %v5572 = vld [vmem:[#allocation8 + $0x414] sm:$0xf]
        %v5573 = vld [vmem:[#allocation8 + $0x418] sm:$0xf]
        %v5574 = vld [vmem:[#allocation8 + $0x41c] sm:$0xf]
        %v5575 = vld [vmem:[#allocation8 + $0x420] sm:$0xf]
        %v5576 = vld [vmem:[#allocation8 + $0x424] sm:$0xf]
        %v5577 = vld [vmem:[#allocation8 + $0x428] sm:$0xf]
        %v5578 = vld [vmem:[#allocation8 + $0x42c] sm:$0xf]
        %v5579 = vld [vmem:[#allocation8 + $0x430] sm:$0xf]
        %v5580 = vld [vmem:[#allocation8 + $0x434] sm:$0xf]
        %v5581 = vld [vmem:[#allocation8 + $0x438] sm:$0xf]
        %v5582 = vld [vmem:[#allocation8 + $0x43c] sm:$0xf]
        %v5583 = vld [vmem:[#allocation8 + $0x440] sm:$0xf]
        %v5584 = vld [vmem:[#allocation8 + $0x444] sm:$0xf]
        %v5585 = vld [vmem:[#allocation8 + $0x448] sm:$0xf]
        %v5586 = vld [vmem:[#allocation8 + $0x44c] sm:$0xf]
        %v5587 = vld [vmem:[#allocation8 + $0x450] sm:$0xf]
        %v5588 = vld [vmem:[#allocation8 + $0x454] sm:$0xf]
        %v5589 = vld [vmem:[#allocation8 + $0x458] sm:$0xf]
        %v5590 = vld [vmem:[#allocation8 + $0x45c] sm:$0xf]
        %v5591 = vld [vmem:[#allocation8 + $0x460] sm:$0xf]
        %v5592 = vld [vmem:[#allocation8 + $0x464] sm:$0xf]
        %v5593 = vld [vmem:[#allocation8 + $0x468] sm:$0xf]
        %v5594 = vld [vmem:[#allocation8 + $0x46c] sm:$0xf]
        %v5595 = vld [vmem:[#allocation8 + $0x470] sm:$0xf]
        %v5596 = vld [vmem:[#allocation8 + $0x474] sm:$0xf]
        %v5597 = vld [vmem:[#allocation8 + $0x478] sm:$0xf]
        %v5598 = vld [vmem:[#allocation8 + $0x47c] sm:$0xf]
        %v5599 = vld [vmem:[#allocation8 + $0x480] sm:$0xf]
        %v5600 = vld [vmem:[#allocation8 + $0x484] sm:$0xf]
        %v5601 = vld [vmem:[#allocation8 + $0x488] sm:$0xf]
        %v5602 = vld [vmem:[#allocation8 + $0x48c] sm:$0xf]
        %v5603 = vld [vmem:[#allocation8 + $0x490] sm:$0xf]
        %v5604 = vld [vmem:[#allocation8 + $0x494] sm:$0xf]
        %v5605 = vld [vmem:[#allocation8 + $0x498] sm:$0xf]
        %v5606 = vld [vmem:[#allocation8 + $0x49c] sm:$0xf]
        %v5607 = vld [vmem:[#allocation8 + $0x4a0] sm:$0xf]
        %v5608 = vld [vmem:[#allocation8 + $0x4a4] sm:$0xf]
        %v5609 = vld [vmem:[#allocation8 + $0x4a8] sm:$0xf]
        %v5610 = vld [vmem:[#allocation8 + $0x4ac] sm:$0xf]
        %v5611 = vld [vmem:[#allocation8 + $0x4b0] sm:$0xf]
        %v5612 = vld [vmem:[#allocation8 + $0x4b4] sm:$0xf]
        %v5613 = vld [vmem:[#allocation8 + $0x4b8] sm:$0xf]
        %v5614 = vld [vmem:[#allocation8 + $0x4bc] sm:$0xf]
        %v5615 = vld [vmem:[#allocation8 + $0x4c0] sm:$0xf]
        %v5616 = vld [vmem:[#allocation8 + $0x4c4] sm:$0xf]
        %v5617 = vld [vmem:[#allocation8 + $0x4c8] sm:$0xf]
        %v5618 = vld [vmem:[#allocation8 + $0x4cc] sm:$0xf]
        %v5619 = vld [vmem:[#allocation8 + $0x4d0] sm:$0xf]
        %v5620 = vld [vmem:[#allocation8 + $0x4d4] sm:$0xf]
        %v5621 = vld [vmem:[#allocation8 + $0x4d8] sm:$0xf]
        %v5622 = vld [vmem:[#allocation8 + $0x4dc] sm:$0xf]
        %v5623 = vld [vmem:[#allocation8 + $0x4e0] sm:$0xf]
        %v5624 = vld [vmem:[#allocation8 + $0x4e4] sm:$0xf]
        %v5625 = vld [vmem:[#allocation8 + $0x4e8] sm:$0xf]
        %v5626 = vld [vmem:[#allocation8 + $0x4ec] sm:$0xf]
        %v5627 = vld [vmem:[#allocation8 + $0x4f0] sm:$0xf]
        %v5628 = vld [vmem:[#allocation8 + $0x4f4] sm:$0xf]
        %v5629 = vld [vmem:[#allocation8 + $0x4f8] sm:$0xf]
        %v5630 = vld [vmem:[#allocation8 + $0x4fc] sm:$0xf]
        %v5631 = vld [vmem:[#allocation8 + $0x500] sm:$0xf]
        %v5632 = vld [vmem:[#allocation8 + $0x504] sm:$0xf]
        %v5633 = vld [vmem:[#allocation8 + $0x508] sm:$0xf]
        %v5634 = vld [vmem:[#allocation8 + $0x50c] sm:$0xf]
        %v5635 = vld [vmem:[#allocation8 + $0x510] sm:$0xf]
        %v5636 = vld [vmem:[#allocation8 + $0x514] sm:$0xf]
        %v5637 = vld [vmem:[#allocation8 + $0x518] sm:$0xf]
        %v5638 = vld [vmem:[#allocation8 + $0x51c] sm:$0xf]
        %v5639 = vld [vmem:[#allocation8 + $0x520] sm:$0xf]
        %v5640 = vld [vmem:[#allocation8 + $0x524] sm:$0xf]
        %v5641 = vld [vmem:[#allocation8 + $0x528] sm:$0xf]
        %v5642 = vld [vmem:[#allocation8 + $0x52c] sm:$0xf]
        %v5643 = vld [vmem:[#allocation8 + $0x530] sm:$0xf]
        %v5644 = vld [vmem:[#allocation8 + $0x534] sm:$0xf]
        %v5645 = vld [vmem:[#allocation8 + $0x538] sm:$0xf]
        %v5646 = vld [vmem:[#allocation8 + $0x53c] sm:$0xf]
        %v5647 = vld [vmem:[#allocation8 + $0x540] sm:$0xf]
        %v5648 = vld [vmem:[#allocation8 + $0x544] sm:$0xf]
        %v5649 = vld [vmem:[#allocation8 + $0x548] sm:$0xf]
        %v5650 = vld [vmem:[#allocation8 + $0x54c] sm:$0xf]
        %v5651 = vld [vmem:[#allocation8 + $0x550] sm:$0xf]
        %v5652 = vld [vmem:[#allocation8 + $0x554] sm:$0xf]
        %v5653 = vld [vmem:[#allocation8 + $0x558] sm:$0xf]
        %v5654 = vld [vmem:[#allocation8 + $0x55c] sm:$0xf]
        %v5655 = vld [vmem:[#allocation8 + $0x560] sm:$0xf]
        %v5656 = vld [vmem:[#allocation8 + $0x564] sm:$0xf]
        %v5657 = vld [vmem:[#allocation8 + $0x568] sm:$0xf]
        %v5658 = vld [vmem:[#allocation8 + $0x56c] sm:$0xf]
        %v5659 = vld [vmem:[#allocation8 + $0x570] sm:$0xf]
        %v5660 = vld [vmem:[#allocation8 + $0x574] sm:$0xf]
        %v5661 = vld [vmem:[#allocation8 + $0x578] sm:$0xf]
        %v5662 = vld [vmem:[#allocation8 + $0x57c] sm:$0xf]
        %v5663 = vld [vmem:[#allocation8 + $0x580] sm:$0xf]
        %v5664 = vld [vmem:[#allocation8 + $0x584] sm:$0xf]
        %v5665 = vld [vmem:[#allocation8 + $0x588] sm:$0xf]
        %v5666 = vld [vmem:[#allocation8 + $0x58c] sm:$0xf]
        %v5667 = vld [vmem:[#allocation8 + $0x590] sm:$0xf]
        %v5668 = vld [vmem:[#allocation8 + $0x594] sm:$0xf]
        %v5669 = vld [vmem:[#allocation8 + $0x598] sm:$0xf]
        %v5670 = vld [vmem:[#allocation8 + $0x59c] sm:$0xf]
        %v5671 = vld [vmem:[#allocation8 + $0x5a0] sm:$0xf]
        %v5672 = vld [vmem:[#allocation8 + $0x5a4] sm:$0xf]
        %v5673 = vld [vmem:[#allocation8 + $0x5a8] sm:$0xf]
        %v5674 = vld [vmem:[#allocation8 + $0x5ac] sm:$0xf]
        %v5675 = vld [vmem:[#allocation8 + $0x5b0] sm:$0xf]
        %v5676 = vld [vmem:[#allocation8 + $0x5b4] sm:$0xf]
        %v5677 = vld [vmem:[#allocation8 + $0x5b8] sm:$0xf]
        %v5678 = vld [vmem:[#allocation8 + $0x5bc] sm:$0xf]
        %v5679 = vld [vmem:[#allocation8 + $0x5c0] sm:$0xf]
        %v5680 = vld [vmem:[#allocation8 + $0x5c4] sm:$0xf]
        %v5681 = vld [vmem:[#allocation8 + $0x5c8] sm:$0xf]
        %v5682 = vld [vmem:[#allocation8 + $0x5cc] sm:$0xf]
        %v5683 = vld [vmem:[#allocation8 + $0x5d0] sm:$0xf]
        %v5684 = vld [vmem:[#allocation8 + $0x5d4] sm:$0xf]
        %v5685 = vld [vmem:[#allocation8 + $0x5d8] sm:$0xf]
        %v5686 = vld [vmem:[#allocation8 + $0x5dc] sm:$0xf]
        %v5687 = vld [vmem:[#allocation8 + $0x5e0] sm:$0xf]
        %v5688 = vld [vmem:[#allocation8 + $0x5e4] sm:$0xf]
        %v5689 = vld [vmem:[#allocation8 + $0x5e8] sm:$0xf]
        %v5690 = vld [vmem:[#allocation8 + $0x5ec] sm:$0xf]
        %v5691 = vld [vmem:[#allocation8 + $0x5f0] sm:$0xf]
        %v5692 = vld [vmem:[#allocation8 + $0x5f4] sm:$0xf]
        %v5693 = vld [vmem:[#allocation8 + $0x5f8] sm:$0xf]
        %v5694 = vld [vmem:[#allocation8 + $0x5fc] sm:$0xf]
        %v5695 = vld [vmem:[#allocation8 + $0x600] sm:$0xf]
        %v5696 = vld [vmem:[#allocation8 + $0x604] sm:$0xf]
        %v5697 = vld [vmem:[#allocation8 + $0x608] sm:$0xf]
        %v5698 = vld [vmem:[#allocation8 + $0x60c] sm:$0xf]
        %v5699 = vld [vmem:[#allocation8 + $0x610] sm:$0xf]
        %v5700 = vld [vmem:[#allocation8 + $0x614] sm:$0xf]
        %v5701 = vld [vmem:[#allocation8 + $0x618] sm:$0xf]
        %v5702 = vld [vmem:[#allocation8 + $0x61c] sm:$0xf]
        %v5703 = vld [vmem:[#allocation8 + $0x620] sm:$0xf]
        %v5704 = vld [vmem:[#allocation8 + $0x624] sm:$0xf]
        %v5705 = vld [vmem:[#allocation8 + $0x628] sm:$0xf]
        %v5706 = vld [vmem:[#allocation8 + $0x62c] sm:$0xf]
        %v5707 = vld [vmem:[#allocation8 + $0x630] sm:$0xf]
        %v5708 = vld [vmem:[#allocation8 + $0x634] sm:$0xf]
        %v5709 = vld [vmem:[#allocation8 + $0x638] sm:$0xf]
        %v5710 = vld [vmem:[#allocation8 + $0x63c] sm:$0xf]
        %v5711 = vld [vmem:[#allocation8 + $0x640] sm:$0xf]
        %v5712 = vld [vmem:[#allocation8 + $0x644] sm:$0xf]
        %v5713 = vld [vmem:[#allocation8 + $0x648] sm:$0xf]
        %v5714 = vld [vmem:[#allocation8 + $0x64c] sm:$0xf]
        %v5715 = vld [vmem:[#allocation8 + $0x650] sm:$0xf]
        %v5716 = vld [vmem:[#allocation8 + $0x654] sm:$0xf]
        %v5717 = vld [vmem:[#allocation8 + $0x658] sm:$0xf]
        %v5718 = vld [vmem:[#allocation8 + $0x65c] sm:$0xf]
        %v5719 = vld [vmem:[#allocation8 + $0x660] sm:$0xf]
        %v5720 = vld [vmem:[#allocation8 + $0x664] sm:$0xf]
        %v5721 = vld [vmem:[#allocation8 + $0x668] sm:$0xf]
        %v5722 = vld [vmem:[#allocation8 + $0x66c] sm:$0xf]
        %v5723 = vld [vmem:[#allocation8 + $0x670] sm:$0xf]
        %v5724 = vld [vmem:[#allocation8 + $0x674] sm:$0xf]
        %v5725 = vld [vmem:[#allocation8 + $0x678] sm:$0xf]
        %v5726 = vld [vmem:[#allocation8 + $0x67c] sm:$0xf]
        %v5727 = vld [vmem:[#allocation8 + $0x680] sm:$0xf]
        %v5728 = vld [vmem:[#allocation8 + $0x684] sm:$0xf]
        %v5729 = vld [vmem:[#allocation8 + $0x688] sm:$0xf]
        %v5730 = vld [vmem:[#allocation8 + $0x68c] sm:$0xf]
        %v5731 = vld [vmem:[#allocation8 + $0x690] sm:$0xf]
        %v5732 = vld [vmem:[#allocation8 + $0x694] sm:$0xf]
        %v5733 = vld [vmem:[#allocation8 + $0x698] sm:$0xf]
        %v5734 = vld [vmem:[#allocation8 + $0x69c] sm:$0xf]
        %v5735 = vld [vmem:[#allocation8 + $0x6a0] sm:$0xf]
        %v5736 = vld [vmem:[#allocation8 + $0x6a4] sm:$0xf]
        %v5737 = vld [vmem:[#allocation8 + $0x6a8] sm:$0xf]
        %v5738 = vld [vmem:[#allocation8 + $0x6ac] sm:$0xf]
        %v5739 = vld [vmem:[#allocation8 + $0x6b0] sm:$0xf]
        %v5740 = vld [vmem:[#allocation8 + $0x6b4] sm:$0xf]
        %v5741 = vld [vmem:[#allocation8 + $0x6b8] sm:$0xf]
        %v5742 = vld [vmem:[#allocation8 + $0x6bc] sm:$0xf]
        %v5743 = vld [vmem:[#allocation8 + $0x6c0] sm:$0xf]
        %v5744 = vld [vmem:[#allocation8 + $0x6c4] sm:$0xf]
        %v5745 = vld [vmem:[#allocation8 + $0x6c8] sm:$0xf]
        %v5746 = vld [vmem:[#allocation8 + $0x6cc] sm:$0xf]
        %v5747 = vld [vmem:[#allocation8 + $0x6d0] sm:$0xf]
        %v5748 = vld [vmem:[#allocation8 + $0x6d4] sm:$0xf]
        %v5749 = vld [vmem:[#allocation8 + $0x6d8] sm:$0xf]
        %v5750 = vld [vmem:[#allocation8 + $0x6dc] sm:$0xf]
        %v5751 = vld [vmem:[#allocation8 + $0x6e0] sm:$0xf]
        %v5752 = vld [vmem:[#allocation8 + $0x6e4] sm:$0xf]
        %v5753 = vld [vmem:[#allocation8 + $0x6e8] sm:$0xf]
        %v5754 = vld [vmem:[#allocation8 + $0x6ec] sm:$0xf]
        %v5755 = vld [vmem:[#allocation8 + $0x6f0] sm:$0xf]
        %v5756 = vld [vmem:[#allocation8 + $0x6f4] sm:$0xf]
        %v5757 = vld [vmem:[#allocation8 + $0x6f8] sm:$0xf]
        %v5758 = vld [vmem:[#allocation8 + $0x6fc] sm:$0xf]
        %v5759 = vld [vmem:[#allocation8 + $0x700] sm:$0xf]
        %v5760 = vld [vmem:[#allocation8 + $0x704] sm:$0xf]
        %v5761 = vld [vmem:[#allocation8 + $0x708] sm:$0xf]
        %v5762 = vld [vmem:[#allocation8 + $0x70c] sm:$0xf]
        %v5763 = vld [vmem:[#allocation8 + $0x710] sm:$0xf]
        %v5764 = vld [vmem:[#allocation8 + $0x714] sm:$0xf]
        %v5765 = vld [vmem:[#allocation8 + $0x718] sm:$0xf]
        %v5766 = vld [vmem:[#allocation8 + $0x71c] sm:$0xf]
        %v5767 = vld [vmem:[#allocation8 + $0x720] sm:$0xf]
        %v5768 = vld [vmem:[#allocation8 + $0x724] sm:$0xf]
        %v5769 = vld [vmem:[#allocation8 + $0x728] sm:$0xf]
        %v5770 = vld [vmem:[#allocation8 + $0x72c] sm:$0xf]
        %v5771 = vld [vmem:[#allocation8 + $0x730] sm:$0xf]
        %v5772 = vld [vmem:[#allocation8 + $0x734] sm:$0xf]
        %v5773 = vld [vmem:[#allocation8 + $0x738] sm:$0xf]
        %v5774 = vld [vmem:[#allocation8 + $0x73c] sm:$0xf]
        %v5775 = vld [vmem:[#allocation8 + $0x740] sm:$0xf]
        %v5776 = vld [vmem:[#allocation8 + $0x744] sm:$0xf]
        %v5777 = vld [vmem:[#allocation8 + $0x748] sm:$0xf]
        %v5778 = vld [vmem:[#allocation8 + $0x74c] sm:$0xf]
        %v5779 = vld [vmem:[#allocation8 + $0x750] sm:$0xf]
        %v5780 = vld [vmem:[#allocation8 + $0x754] sm:$0xf]
        %v5781 = vld [vmem:[#allocation8 + $0x758] sm:$0xf]
        %v5782 = vld [vmem:[#allocation8 + $0x75c] sm:$0xf]
        %v5783 = vld [vmem:[#allocation8 + $0x760] sm:$0xf]
        %v5784 = vld [vmem:[#allocation8 + $0x764] sm:$0xf]
        %v5785 = vld [vmem:[#allocation8 + $0x768] sm:$0xf]
        %v5786 = vld [vmem:[#allocation8 + $0x76c] sm:$0xf]
        %v5787 = vld [vmem:[#allocation8 + $0x770] sm:$0xf]
        %v5788 = vld [vmem:[#allocation8 + $0x774] sm:$0xf]
        %v5789 = vld [vmem:[#allocation8 + $0x778] sm:$0xf]
        %v5790 = vld [vmem:[#allocation8 + $0x77c] sm:$0xf]
        %v5791 = vld [vmem:[#allocation8 + $0x780] sm:$0xf]
        %v5792 = vld [vmem:[#allocation8 + $0x784] sm:$0xf]
        %v5793 = vld [vmem:[#allocation8 + $0x788] sm:$0xf]
        %v5794 = vld [vmem:[#allocation8 + $0x78c] sm:$0xf]
        %v5795 = vld [vmem:[#allocation8 + $0x790] sm:$0xf]
        %v5796 = vld [vmem:[#allocation8 + $0x794] sm:$0xf]
        %v5797 = vld [vmem:[#allocation8 + $0x798] sm:$0xf]
        %v5798 = vld [vmem:[#allocation8 + $0x79c] sm:$0xf]
        %v5799 = vld [vmem:[#allocation8 + $0x7a0] sm:$0xf]
        %v5800 = vld [vmem:[#allocation8 + $0x7a4] sm:$0xf]
        %v5801 = vld [vmem:[#allocation8 + $0x7a8] sm:$0xf]
        %v5802 = vld [vmem:[#allocation8 + $0x7ac] sm:$0xf]
        %v5803 = vld [vmem:[#allocation8 + $0x7b0] sm:$0xf]
        %v5804 = vld [vmem:[#allocation8 + $0x7b4] sm:$0xf]
        %v5805 = vld [vmem:[#allocation8 + $0x7b8] sm:$0xf]
        %v5806 = vld [vmem:[#allocation8 + $0x7bc] sm:$0xf]
        %v5807 = vld [vmem:[#allocation8 + $0x7c0] sm:$0xf]
        %v5808 = vld [vmem:[#allocation8 + $0x7c4] sm:$0xf]
        %v5809 = vld [vmem:[#allocation8 + $0x7c8] sm:$0xf]
        %v5810 = vld [vmem:[#allocation8 + $0x7cc] sm:$0xf]
        %v5811 = vld [vmem:[#allocation8 + $0x7d0] sm:$0xf]
        %v5812 = vld [vmem:[#allocation8 + $0x7d4] sm:$0xf]
        %v5813 = vld [vmem:[#allocation8 + $0x7d8] sm:$0xf]
        %v5814 = vld [vmem:[#allocation8 + $0x7dc] sm:$0xf]
        %v5815 = vld [vmem:[#allocation8 + $0x7e0] sm:$0xf]
        %v5816 = vld [vmem:[#allocation8 + $0x7e4] sm:$0xf]
        %v5817 = vld [vmem:[#allocation8 + $0x7e8] sm:$0xf]
        %v5818 = vld [vmem:[#allocation8 + $0x7ec] sm:$0xf]
        %v5819 = vld [vmem:[#allocation8 + $0x7f0] sm:$0xf]
        %v5820 = vld [vmem:[#allocation8 + $0x7f4] sm:$0xf]
        %v5821 = vld [vmem:[#allocation8 + $0x7f8] sm:$0xf]
        %v5822 = vld [vmem:[#allocation8 + $0x7fc] sm:$0xf]
        %v5823 = vld [vmem:[%s6] sm:$0x1]
        %v5828 = vcombine.high %v5307, %v5307
        %v5830 = vunpack.c.l.s4 1966171168
        %v5831 = vunpack.c.0.s8 %v5830
        %v5832 = vlaneseq
        %v5833 = vshrl.u32 %v5832, 7
        %v5834 = vsub.s32 %v5831, %v5833
        %v5835 = vrot.slane %v5307, %v5834
        %v5837 = vunpack.c.l.s4 1966171168
        %v5838 = vunpack.c.0.s8 %v5837
        %v5839 = vlaneseq
        %v5840 = vshrl.u32 %v5839, 7
        %v5841 = vsub.s32 %v5838, %v5840
        %v5842 = vrot.slane %v5828, %v5841
        %v5843 = vcombine.high %v5835, %v5835
        %v5844 = vcombine.high %v5842, %v5842
        %v5846 = vunpack.c.l.s4 1966171168
        %v5847 = vunpack.c.0.s8 %v5846
        %v5848 = vlaneseq
        %v5849 = vshrl.u32 %v5848, 7
        %v5850 = vsub.s32 %v5847, %v5849
        %v5851 = vrot.slane %v5835, %v5850
        %v5853 = vunpack.c.l.s4 1966171168
        %v5854 = vunpack.c.0.s8 %v5853
        %v5855 = vlaneseq
        %v5856 = vshrl.u32 %v5855, 7
        %v5857 = vsub.s32 %v5854, %v5856
        %v5858 = vrot.slane %v5842, %v5857
        %v5860 = vunpack.c.l.s4 1966171168
        %v5861 = vunpack.c.0.s8 %v5860
        %v5862 = vlaneseq
        %v5863 = vshrl.u32 %v5862, 7
        %v5864 = vsub.s32 %v5861, %v5863
        %v5865 = vrot.slane %v5843, %v5864
        %v5867 = vunpack.c.l.s4 1966171168
        %v5868 = vunpack.c.0.s8 %v5867
        %v5869 = vlaneseq
        %v5870 = vshrl.u32 %v5869, 7
        %v5871 = vsub.s32 %v5868, %v5870
        %v5872 = vrot.slane %v5844, %v5871
        %v5873 = vcombine.high %v5851, %v5851
        %v5874 = vcombine.high %v5858, %v5858
        %v5875 = vcombine.high %v5865, %v5865
        %v5876 = vcombine.high %v5872, %v5872
        %v5877 = vcombine.high %v5308, %v5308
        %v5879 = vunpack.c.l.s4 1966171168
        %v5880 = vunpack.c.0.s8 %v5879
        %v5881 = vlaneseq
        %v5882 = vshrl.u32 %v5881, 7
        %v5883 = vsub.s32 %v5880, %v5882
        %v5884 = vrot.slane %v5308, %v5883
        %v5886 = vunpack.c.l.s4 1966171168
        %v5887 = vunpack.c.0.s8 %v5886
        %v5888 = vlaneseq
        %v5889 = vshrl.u32 %v5888, 7
        %v5890 = vsub.s32 %v5887, %v5889
        %v5891 = vrot.slane %v5877, %v5890
        %v5892 = vcombine.high %v5884, %v5884
        %v5893 = vcombine.high %v5891, %v5891
        %v5895 = vunpack.c.l.s4 1966171168
        %v5896 = vunpack.c.0.s8 %v5895
        %v5897 = vlaneseq
        %v5898 = vshrl.u32 %v5897, 7
        %v5899 = vsub.s32 %v5896, %v5898
        %v5900 = vrot.slane %v5884, %v5899
        %v5902 = vunpack.c.l.s4 1966171168
        %v5903 = vunpack.c.0.s8 %v5902
        %v5904 = vlaneseq
        %v5905 = vshrl.u32 %v5904, 7
        %v5906 = vsub.s32 %v5903, %v5905
        %v5907 = vrot.slane %v5891, %v5906
        %v5909 = vunpack.c.l.s4 1966171168
        %v5910 = vunpack.c.0.s8 %v5909
        %v5911 = vlaneseq
        %v5912 = vshrl.u32 %v5911, 7
        %v5913 = vsub.s32 %v5910, %v5912
        %v5914 = vrot.slane %v5892, %v5913
        %v5916 = vunpack.c.l.s4 1966171168
        %v5917 = vunpack.c.0.s8 %v5916
        %v5918 = vlaneseq
        %v5919 = vshrl.u32 %v5918, 7
        %v5920 = vsub.s32 %v5917, %v5919
        %v5921 = vrot.slane %v5893, %v5920
        %v5922 = vcombine.high %v5900, %v5900
        %v5923 = vcombine.high %v5907, %v5907
        %v5924 = vcombine.high %v5914, %v5914
        %v5925 = vcombine.high %v5921, %v5921
        %v5926 = vcombine.high %v5309, %v5309
        %v5928 = vunpack.c.l.s4 1966171168
        %v5929 = vunpack.c.0.s8 %v5928
        %v5930 = vlaneseq
        %v5931 = vshrl.u32 %v5930, 7
        %v5932 = vsub.s32 %v5929, %v5931
        %v5933 = vrot.slane %v5309, %v5932
        %v5935 = vunpack.c.l.s4 1966171168
        %v5936 = vunpack.c.0.s8 %v5935
        %v5937 = vlaneseq
        %v5938 = vshrl.u32 %v5937, 7
        %v5939 = vsub.s32 %v5936, %v5938
        %v5940 = vrot.slane %v5926, %v5939
        %v5941 = vcombine.high %v5933, %v5933
        %v5942 = vcombine.high %v5940, %v5940
        %v5944 = vunpack.c.l.s4 1966171168
        %v5945 = vunpack.c.0.s8 %v5944
        %v5946 = vlaneseq
        %v5947 = vshrl.u32 %v5946, 7
        %v5948 = vsub.s32 %v5945, %v5947
        %v5949 = vrot.slane %v5933, %v5948
        %v5951 = vunpack.c.l.s4 1966171168
        %v5952 = vunpack.c.0.s8 %v5951
        %v5953 = vlaneseq
        %v5954 = vshrl.u32 %v5953, 7
        %v5955 = vsub.s32 %v5952, %v5954
        %v5956 = vrot.slane %v5940, %v5955
        %v5958 = vunpack.c.l.s4 1966171168
        %v5959 = vunpack.c.0.s8 %v5958
        %v5960 = vlaneseq
        %v5961 = vshrl.u32 %v5960, 7
        %v5962 = vsub.s32 %v5959, %v5961
        %v5963 = vrot.slane %v5941, %v5962
        %v5965 = vunpack.c.l.s4 1966171168
        %v5966 = vunpack.c.0.s8 %v5965
        %v5967 = vlaneseq
        %v5968 = vshrl.u32 %v5967, 7
        %v5969 = vsub.s32 %v5966, %v5968
        %v5970 = vrot.slane %v5942, %v5969
        %v5971 = vcombine.high %v5949, %v5949
        %v5972 = vcombine.high %v5956, %v5956
        %v5973 = vcombine.high %v5963, %v5963
        %v5974 = vcombine.high %v5970, %v5970
        %v5975 = vcombine.high %v5310, %v5310
        %v5977 = vunpack.c.l.s4 1966171168
        %v5978 = vunpack.c.0.s8 %v5977
        %v5979 = vlaneseq
        %v5980 = vshrl.u32 %v5979, 7
        %v5981 = vsub.s32 %v5978, %v5980
        %v5982 = vrot.slane %v5310, %v5981
        %v5984 = vunpack.c.l.s4 1966171168
        %v5985 = vunpack.c.0.s8 %v5984
        %v5986 = vlaneseq
        %v5987 = vshrl.u32 %v5986, 7
        %v5988 = vsub.s32 %v5985, %v5987
        %v5989 = vrot.slane %v5975, %v5988
        %v5990 = vcombine.high %v5982, %v5982
        %v5991 = vcombine.high %v5989, %v5989
        %v5993 = vunpack.c.l.s4 1966171168
        %v5994 = vunpack.c.0.s8 %v5993
        %v5995 = vlaneseq
        %v5996 = vshrl.u32 %v5995, 7
        %v5997 = vsub.s32 %v5994, %v5996
        %v5998 = vrot.slane %v5982, %v5997
        %v6000 = vunpack.c.l.s4 1966171168
        %v6001 = vunpack.c.0.s8 %v6000
        %v6002 = vlaneseq
        %v6003 = vshrl.u32 %v6002, 7
        %v6004 = vsub.s32 %v6001, %v6003
        %v6005 = vrot.slane %v5989, %v6004
        %v6007 = vunpack.c.l.s4 1966171168
        %v6008 = vunpack.c.0.s8 %v6007
        %v6009 = vlaneseq
        %v6010 = vshrl.u32 %v6009, 7
        %v6011 = vsub.s32 %v6008, %v6010
        %v6012 = vrot.slane %v5990, %v6011
        %v6014 = vunpack.c.l.s4 1966171168
        %v6015 = vunpack.c.0.s8 %v6014
        %v6016 = vlaneseq
        %v6017 = vshrl.u32 %v6016, 7
        %v6018 = vsub.s32 %v6015, %v6017
        %v6019 = vrot.slane %v5991, %v6018
        %v6020 = vcombine.high %v5998, %v5998
        %v6021 = vcombine.high %v6005, %v6005
        %v6022 = vcombine.high %v6012, %v6012
        %v6023 = vcombine.high %v6019, %v6019
        %v6568 = vunpack.c.l.b16 %v5311
        %v6569 = vunpack.c.l.b16 %v5312
        %v6570 = vunpack.c.l.b16 %v5313
        %v6571 = vunpack.c.l.b16 %v5314
        %v6572 = vunpack.c.l.b16 %v5315
        %v6573 = vunpack.c.l.b16 %v5316
        %v6574 = vunpack.c.l.b16 %v5317
        %v6575 = vunpack.c.l.b16 %v5318
        %v6576 = vunpack.c.l.b16 %v5319
        %v6577 = vunpack.c.l.b16 %v5320
        %v6578 = vunpack.c.l.b16 %v5321
        %v6579 = vunpack.c.l.b16 %v5322
        %v6580 = vunpack.c.l.b16 %v5323
        %v6581 = vunpack.c.l.b16 %v5324
        %v6582 = vunpack.c.l.b16 %v5325
        %v6583 = vunpack.c.l.b16 %v5326
        %v6584 = vunpack.c.l.b16 %v5327
        %v6585 = vunpack.c.l.b16 %v5328
        %v6586 = vunpack.c.l.b16 %v5329
        %v6587 = vunpack.c.l.b16 %v5330
        %v6588 = vunpack.c.l.b16 %v5331
        %v6589 = vunpack.c.l.b16 %v5332
        %v6590 = vunpack.c.l.b16 %v5333
        %v6591 = vunpack.c.l.b16 %v5334
        %v6592 = vunpack.c.l.b16 %v5335
        %v6593 = vunpack.c.l.b16 %v5336
        %v6594 = vunpack.c.l.b16 %v5337
        %v6595 = vunpack.c.l.b16 %v5338
        %v6596 = vunpack.c.l.b16 %v5339
        %v6597 = vunpack.c.l.b16 %v5340
        %v6598 = vunpack.c.l.b16 %v5341
        %v6599 = vunpack.c.l.b16 %v5342
        %v6600 = vunpack.c.l.b16 %v5343
        %v6601 = vunpack.c.l.b16 %v5344
        %v6602 = vunpack.c.l.b16 %v5345
        %v6603 = vunpack.c.l.b16 %v5346
        %v6604 = vunpack.c.l.b16 %v5347
        %v6605 = vunpack.c.l.b16 %v5348
        %v6606 = vunpack.c.l.b16 %v5349
        %v6607 = vunpack.c.l.b16 %v5350
        %v6608 = vunpack.c.l.b16 %v5351
        %v6609 = vunpack.c.l.b16 %v5352
        %v6610 = vunpack.c.l.b16 %v5353
        %v6611 = vunpack.c.l.b16 %v5354
        %v6612 = vunpack.c.l.b16 %v5355
        %v6613 = vunpack.c.l.b16 %v5356
        %v6614 = vunpack.c.l.b16 %v5357
        %v6615 = vunpack.c.l.b16 %v5358
        %v6616 = vunpack.c.l.b16 %v5359
        %v6617 = vunpack.c.l.b16 %v5360
        %v6618 = vunpack.c.l.b16 %v5361
        %v6619 = vunpack.c.l.b16 %v5362
        %v6620 = vunpack.c.l.b16 %v5363
        %v6621 = vunpack.c.l.b16 %v5364
        %v6622 = vunpack.c.l.b16 %v5365
        %v6623 = vunpack.c.l.b16 %v5366
        %v6624 = vunpack.c.l.b16 %v5367
        %v6625 = vunpack.c.l.b16 %v5368
        %v6626 = vunpack.c.l.b16 %v5369
        %v6627 = vunpack.c.l.b16 %v5370
        %v6628 = vunpack.c.l.b16 %v5371
        %v6629 = vunpack.c.l.b16 %v5372
        %v6630 = vunpack.c.l.b16 %v5373
        %v6631 = vunpack.c.l.b16 %v5374
        %v6632 = vunpack.c.l.b16 %v5375
        %v6633 = vunpack.c.l.b16 %v5376
        %v6634 = vunpack.c.l.b16 %v5377
        %v6635 = vunpack.c.l.b16 %v5378
        %v6636 = vunpack.c.l.b16 %v5379
        %v6637 = vunpack.c.l.b16 %v5380
        %v6638 = vunpack.c.l.b16 %v5381
        %v6639 = vunpack.c.l.b16 %v5382
        %v6640 = vunpack.c.l.b16 %v5383
        %v6641 = vunpack.c.l.b16 %v5384
        %v6642 = vunpack.c.l.b16 %v5385
        %v6643 = vunpack.c.l.b16 %v5386
        %v6644 = vunpack.c.l.b16 %v5387
        %v6645 = vunpack.c.l.b16 %v5388
        %v6646 = vunpack.c.l.b16 %v5389
        %v6647 = vunpack.c.l.b16 %v5390
        %v6648 = vunpack.c.l.b16 %v5391
        %v6649 = vunpack.c.l.b16 %v5392
        %v6650 = vunpack.c.l.b16 %v5393
        %v6651 = vunpack.c.l.b16 %v5394
        %v6652 = vunpack.c.l.b16 %v5395
        %v6653 = vunpack.c.l.b16 %v5396
        %v6654 = vunpack.c.l.b16 %v5397
        %v6655 = vunpack.c.l.b16 %v5398
        %v6656 = vunpack.c.l.b16 %v5399
        %v6657 = vunpack.c.l.b16 %v5400
        %v6658 = vunpack.c.l.b16 %v5401
        %v6659 = vunpack.c.l.b16 %v5402
        %v6660 = vunpack.c.l.b16 %v5403
        %v6661 = vunpack.c.l.b16 %v5404
        %v6662 = vunpack.c.l.b16 %v5405
        %v6663 = vunpack.c.l.b16 %v5406
        %v6664 = vunpack.c.l.b16 %v5407
        %v6665 = vunpack.c.l.b16 %v5408
        %v6666 = vunpack.c.l.b16 %v5409
        %v6667 = vunpack.c.l.b16 %v5410
        %v6668 = vunpack.c.l.b16 %v5411
        %v6669 = vunpack.c.l.b16 %v5412
        %v6670 = vunpack.c.l.b16 %v5413
        %v6671 = vunpack.c.l.b16 %v5414
        %v6672 = vunpack.c.l.b16 %v5415
        %v6673 = vunpack.c.l.b16 %v5416
        %v6674 = vunpack.c.l.b16 %v5417
        %v6675 = vunpack.c.l.b16 %v5418
        %v6676 = vunpack.c.l.b16 %v5419
        %v6677 = vunpack.c.l.b16 %v5420
        %v6678 = vunpack.c.l.b16 %v5421
        %v6679 = vunpack.c.l.b16 %v5422
        %v6680 = vunpack.c.l.b16 %v5423
        %v6681 = vunpack.c.l.b16 %v5424
        %v6682 = vunpack.c.l.b16 %v5425
        %v6683 = vunpack.c.l.b16 %v5426
        %v6684 = vunpack.c.l.b16 %v5427
        %v6685 = vunpack.c.l.b16 %v5428
        %v6686 = vunpack.c.l.b16 %v5429
        %v6687 = vunpack.c.l.b16 %v5430
        %v6688 = vunpack.c.l.b16 %v5431
        %v6689 = vunpack.c.l.b16 %v5432
        %v6690 = vunpack.c.l.b16 %v5433
        %v6691 = vunpack.c.l.b16 %v5434
        %v6692 = vunpack.c.l.b16 %v5435
        %v6693 = vunpack.c.l.b16 %v5436
        %v6694 = vunpack.c.l.b16 %v5437
        %v6695 = vunpack.c.l.b16 %v5438
        %v6696 = vunpack.c.l.b16 %v5439
        %v6697 = vunpack.c.l.b16 %v5440
        %v6698 = vunpack.c.l.b16 %v5441
        %v6699 = vunpack.c.l.b16 %v5442
        %v6700 = vunpack.c.l.b16 %v5443
        %v6701 = vunpack.c.l.b16 %v5444
        %v6702 = vunpack.c.l.b16 %v5445
        %v6703 = vunpack.c.l.b16 %v5446
        %v6704 = vunpack.c.l.b16 %v5447
        %v6705 = vunpack.c.l.b16 %v5448
        %v6706 = vunpack.c.l.b16 %v5449
        %v6707 = vunpack.c.l.b16 %v5450
        %v6708 = vunpack.c.l.b16 %v5451
        %v6709 = vunpack.c.l.b16 %v5452
        %v6710 = vunpack.c.l.b16 %v5453
        %v6711 = vunpack.c.l.b16 %v5454
        %v6712 = vunpack.c.l.b16 %v5455
        %v6713 = vunpack.c.l.b16 %v5456
        %v6714 = vunpack.c.l.b16 %v5457
        %v6715 = vunpack.c.l.b16 %v5458
        %v6716 = vunpack.c.l.b16 %v5459
        %v6717 = vunpack.c.l.b16 %v5460
        %v6718 = vunpack.c.l.b16 %v5461
        %v6719 = vunpack.c.l.b16 %v5462
        %v6720 = vunpack.c.l.b16 %v5463
        %v6721 = vunpack.c.l.b16 %v5464
        %v6722 = vunpack.c.l.b16 %v5465
        %v6723 = vunpack.c.l.b16 %v5466
        %v6724 = vunpack.c.l.b16 %v5467
        %v6725 = vunpack.c.l.b16 %v5468
        %v6726 = vunpack.c.l.b16 %v5469
        %v6727 = vunpack.c.l.b16 %v5470
        %v6728 = vunpack.c.l.b16 %v5471
        %v6729 = vunpack.c.l.b16 %v5472
        %v6730 = vunpack.c.l.b16 %v5473
        %v6731 = vunpack.c.l.b16 %v5474
        %v6732 = vunpack.c.l.b16 %v5475
        %v6733 = vunpack.c.l.b16 %v5476
        %v6734 = vunpack.c.l.b16 %v5477
        %v6735 = vunpack.c.l.b16 %v5478
        %v6736 = vunpack.c.l.b16 %v5479
        %v6737 = vunpack.c.l.b16 %v5480
        %v6738 = vunpack.c.l.b16 %v5481
        %v6739 = vunpack.c.l.b16 %v5482
        %v6740 = vunpack.c.l.b16 %v5483
        %v6741 = vunpack.c.l.b16 %v5484
        %v6742 = vunpack.c.l.b16 %v5485
        %v6743 = vunpack.c.l.b16 %v5486
        %v6744 = vunpack.c.l.b16 %v5487
        %v6745 = vunpack.c.l.b16 %v5488
        %v6746 = vunpack.c.l.b16 %v5489
        %v6747 = vunpack.c.l.b16 %v5490
        %v6748 = vunpack.c.l.b16 %v5491
        %v6749 = vunpack.c.l.b16 %v5492
        %v6750 = vunpack.c.l.b16 %v5493
        %v6751 = vunpack.c.l.b16 %v5494
        %v6752 = vunpack.c.l.b16 %v5495
        %v6753 = vunpack.c.l.b16 %v5496
        %v6754 = vunpack.c.l.b16 %v5497
        %v6755 = vunpack.c.l.b16 %v5498
        %v6756 = vunpack.c.l.b16 %v5499
        %v6757 = vunpack.c.l.b16 %v5500
        %v6758 = vunpack.c.l.b16 %v5501
        %v6759 = vunpack.c.l.b16 %v5502
        %v6760 = vunpack.c.l.b16 %v5503
        %v6761 = vunpack.c.l.b16 %v5504
        %v6762 = vunpack.c.l.b16 %v5505
        %v6763 = vunpack.c.l.b16 %v5506
        %v6764 = vunpack.c.l.b16 %v5507
        %v6765 = vunpack.c.l.b16 %v5508
        %v6766 = vunpack.c.l.b16 %v5509
        %v6767 = vunpack.c.l.b16 %v5510
        %v6768 = vunpack.c.l.b16 %v5511
        %v6769 = vunpack.c.l.b16 %v5512
        %v6770 = vunpack.c.l.b16 %v5513
        %v6771 = vunpack.c.l.b16 %v5514
        %v6772 = vunpack.c.l.b16 %v5515
        %v6773 = vunpack.c.l.b16 %v5516
        %v6774 = vunpack.c.l.b16 %v5517
        %v6775 = vunpack.c.l.b16 %v5518
        %v6776 = vunpack.c.l.b16 %v5519
        %v6777 = vunpack.c.l.b16 %v5520
        %v6778 = vunpack.c.l.b16 %v5521
        %v6779 = vunpack.c.l.b16 %v5522
        %v6780 = vunpack.c.l.b16 %v5523
        %v6781 = vunpack.c.l.b16 %v5524
        %v6782 = vunpack.c.l.b16 %v5525
        %v6783 = vunpack.c.l.b16 %v5526
        %v6784 = vunpack.c.l.b16 %v5527
        %v6785 = vunpack.c.l.b16 %v5528
        %v6786 = vunpack.c.l.b16 %v5529
        %v6787 = vunpack.c.l.b16 %v5530
        %v6788 = vunpack.c.l.b16 %v5531
        %v6789 = vunpack.c.l.b16 %v5532
        %v6790 = vunpack.c.l.b16 %v5533
        %v6791 = vunpack.c.l.b16 %v5534
        %v6792 = vunpack.c.l.b16 %v5535
        %v6793 = vunpack.c.l.b16 %v5536
        %v6794 = vunpack.c.l.b16 %v5537
        %v6795 = vunpack.c.l.b16 %v5538
        %v6796 = vunpack.c.l.b16 %v5539
        %v6797 = vunpack.c.l.b16 %v5540
        %v6798 = vunpack.c.l.b16 %v5541
        %v6799 = vunpack.c.l.b16 %v5542
        %v6800 = vunpack.c.l.b16 %v5543
        %v6801 = vunpack.c.l.b16 %v5544
        %v6802 = vunpack.c.l.b16 %v5545
        %v6803 = vunpack.c.l.b16 %v5546
        %v6804 = vunpack.c.l.b16 %v5547
        %v6805 = vunpack.c.l.b16 %v5548
        %v6806 = vunpack.c.l.b16 %v5549
        %v6807 = vunpack.c.l.b16 %v5550
        %v6808 = vunpack.c.l.b16 %v5551
        %v6809 = vunpack.c.l.b16 %v5552
        %v6810 = vunpack.c.l.b16 %v5553
        %v6811 = vunpack.c.l.b16 %v5554
        %v6812 = vunpack.c.l.b16 %v5555
        %v6813 = vunpack.c.l.b16 %v5556
        %v6814 = vunpack.c.l.b16 %v5557
        %v6815 = vunpack.c.l.b16 %v5558
        %v6816 = vunpack.c.l.b16 %v5559
        %v6817 = vunpack.c.l.b16 %v5560
        %v6818 = vunpack.c.l.b16 %v5561
        %v6819 = vunpack.c.l.b16 %v5562
        %v6820 = vunpack.c.l.b16 %v5563
        %v6821 = vunpack.c.l.b16 %v5564
        %v6822 = vunpack.c.l.b16 %v5565
        %v6823 = vunpack.c.l.b16 %v5566
        %v6824 = vunpack.c.l.b16 %v5567
        %v6825 = vunpack.c.l.b16 %v5568
        %v6826 = vunpack.c.l.b16 %v5569
        %v6827 = vunpack.c.l.b16 %v5570
        %v6828 = vunpack.c.l.b16 %v5571
        %v6829 = vunpack.c.l.b16 %v5572
        %v6830 = vunpack.c.l.b16 %v5573
        %v6831 = vunpack.c.l.b16 %v5574
        %v6832 = vunpack.c.l.b16 %v5575
        %v6833 = vunpack.c.l.b16 %v5576
        %v6834 = vunpack.c.l.b16 %v5577
        %v6835 = vunpack.c.l.b16 %v5578
        %v6836 = vunpack.c.l.b16 %v5579
        %v6837 = vunpack.c.l.b16 %v5580
        %v6838 = vunpack.c.l.b16 %v5581
        %v6839 = vunpack.c.l.b16 %v5582
        %v6840 = vunpack.c.l.b16 %v5583
        %v6841 = vunpack.c.l.b16 %v5584
        %v6842 = vunpack.c.l.b16 %v5585
        %v6843 = vunpack.c.l.b16 %v5586
        %v6844 = vunpack.c.l.b16 %v5587
        %v6845 = vunpack.c.l.b16 %v5588
        %v6846 = vunpack.c.l.b16 %v5589
        %v6847 = vunpack.c.l.b16 %v5590
        %v6848 = vunpack.c.l.b16 %v5591
        %v6849 = vunpack.c.l.b16 %v5592
        %v6850 = vunpack.c.l.b16 %v5593
        %v6851 = vunpack.c.l.b16 %v5594
        %v6852 = vunpack.c.l.b16 %v5595
        %v6853 = vunpack.c.l.b16 %v5596
        %v6854 = vunpack.c.l.b16 %v5597
        %v6855 = vunpack.c.l.b16 %v5598
        %v6856 = vunpack.c.l.b16 %v5599
        %v6857 = vunpack.c.l.b16 %v5600
        %v6858 = vunpack.c.l.b16 %v5601
        %v6859 = vunpack.c.l.b16 %v5602
        %v6860 = vunpack.c.l.b16 %v5603
        %v6861 = vunpack.c.l.b16 %v5604
        %v6862 = vunpack.c.l.b16 %v5605
        %v6863 = vunpack.c.l.b16 %v5606
        %v6864 = vunpack.c.l.b16 %v5607
        %v6865 = vunpack.c.l.b16 %v5608
        %v6866 = vunpack.c.l.b16 %v5609
        %v6867 = vunpack.c.l.b16 %v5610
        %v6868 = vunpack.c.l.b16 %v5611
        %v6869 = vunpack.c.l.b16 %v5612
        %v6870 = vunpack.c.l.b16 %v5613
        %v6871 = vunpack.c.l.b16 %v5614
        %v6872 = vunpack.c.l.b16 %v5615
        %v6873 = vunpack.c.l.b16 %v5616
        %v6874 = vunpack.c.l.b16 %v5617
        %v6875 = vunpack.c.l.b16 %v5618
        %v6876 = vunpack.c.l.b16 %v5619
        %v6877 = vunpack.c.l.b16 %v5620
        %v6878 = vunpack.c.l.b16 %v5621
        %v6879 = vunpack.c.l.b16 %v5622
        %v6880 = vunpack.c.l.b16 %v5623
        %v6881 = vunpack.c.l.b16 %v5624
        %v6882 = vunpack.c.l.b16 %v5625
        %v6883 = vunpack.c.l.b16 %v5626
        %v6884 = vunpack.c.l.b16 %v5627
        %v6885 = vunpack.c.l.b16 %v5628
        %v6886 = vunpack.c.l.b16 %v5629
        %v6887 = vunpack.c.l.b16 %v5630
        %v6888 = vunpack.c.l.b16 %v5631
        %v6889 = vunpack.c.l.b16 %v5632
        %v6890 = vunpack.c.l.b16 %v5633
        %v6891 = vunpack.c.l.b16 %v5634
        %v6892 = vunpack.c.l.b16 %v5635
        %v6893 = vunpack.c.l.b16 %v5636
        %v6894 = vunpack.c.l.b16 %v5637
        %v6895 = vunpack.c.l.b16 %v5638
        %v6896 = vunpack.c.l.b16 %v5639
        %v6897 = vunpack.c.l.b16 %v5640
        %v6898 = vunpack.c.l.b16 %v5641
        %v6899 = vunpack.c.l.b16 %v5642
        %v6900 = vunpack.c.l.b16 %v5643
        %v6901 = vunpack.c.l.b16 %v5644
        %v6902 = vunpack.c.l.b16 %v5645
        %v6903 = vunpack.c.l.b16 %v5646
        %v6904 = vunpack.c.l.b16 %v5647
        %v6905 = vunpack.c.l.b16 %v5648
        %v6906 = vunpack.c.l.b16 %v5649
        %v6907 = vunpack.c.l.b16 %v5650
        %v6908 = vunpack.c.l.b16 %v5651
        %v6909 = vunpack.c.l.b16 %v5652
        %v6910 = vunpack.c.l.b16 %v5653
        %v6911 = vunpack.c.l.b16 %v5654
        %v6912 = vunpack.c.l.b16 %v5655
        %v6913 = vunpack.c.l.b16 %v5656
        %v6914 = vunpack.c.l.b16 %v5657
        %v6915 = vunpack.c.l.b16 %v5658
        %v6916 = vunpack.c.l.b16 %v5659
        %v6917 = vunpack.c.l.b16 %v5660
        %v6918 = vunpack.c.l.b16 %v5661
        %v6919 = vunpack.c.l.b16 %v5662
        %v6920 = vunpack.c.l.b16 %v5663
        %v6921 = vunpack.c.l.b16 %v5664
        %v6922 = vunpack.c.l.b16 %v5665
        %v6923 = vunpack.c.l.b16 %v5666
        %v6924 = vunpack.c.l.b16 %v5667
        %v6925 = vunpack.c.l.b16 %v5668
        %v6926 = vunpack.c.l.b16 %v5669
        %v6927 = vunpack.c.l.b16 %v5670
        %v6928 = vunpack.c.l.b16 %v5671
        %v6929 = vunpack.c.l.b16 %v5672
        %v6930 = vunpack.c.l.b16 %v5673
        %v6931 = vunpack.c.l.b16 %v5674
        %v6932 = vunpack.c.l.b16 %v5675
        %v6933 = vunpack.c.l.b16 %v5676
        %v6934 = vunpack.c.l.b16 %v5677
        %v6935 = vunpack.c.l.b16 %v5678
        %v6936 = vunpack.c.l.b16 %v5679
        %v6937 = vunpack.c.l.b16 %v5680
        %v6938 = vunpack.c.l.b16 %v5681
        %v6939 = vunpack.c.l.b16 %v5682
        %v6940 = vunpack.c.l.b16 %v5683
        %v6941 = vunpack.c.l.b16 %v5684
        %v6942 = vunpack.c.l.b16 %v5685
        %v6943 = vunpack.c.l.b16 %v5686
        %v6944 = vunpack.c.l.b16 %v5687
        %v6945 = vunpack.c.l.b16 %v5688
        %v6946 = vunpack.c.l.b16 %v5689
        %v6947 = vunpack.c.l.b16 %v5690
        %v6948 = vunpack.c.l.b16 %v5691
        %v6949 = vunpack.c.l.b16 %v5692
        %v6950 = vunpack.c.l.b16 %v5693
        %v6951 = vunpack.c.l.b16 %v5694
        %v6952 = vunpack.c.l.b16 %v5695
        %v6953 = vunpack.c.l.b16 %v5696
        %v6954 = vunpack.c.l.b16 %v5697
        %v6955 = vunpack.c.l.b16 %v5698
        %v6956 = vunpack.c.l.b16 %v5699
        %v6957 = vunpack.c.l.b16 %v5700
        %v6958 = vunpack.c.l.b16 %v5701
        %v6959 = vunpack.c.l.b16 %v5702
        %v6960 = vunpack.c.l.b16 %v5703
        %v6961 = vunpack.c.l.b16 %v5704
        %v6962 = vunpack.c.l.b16 %v5705
        %v6963 = vunpack.c.l.b16 %v5706
        %v6964 = vunpack.c.l.b16 %v5707
        %v6965 = vunpack.c.l.b16 %v5708
        %v6966 = vunpack.c.l.b16 %v5709
        %v6967 = vunpack.c.l.b16 %v5710
        %v6968 = vunpack.c.l.b16 %v5711
        %v6969 = vunpack.c.l.b16 %v5712
        %v6970 = vunpack.c.l.b16 %v5713
        %v6971 = vunpack.c.l.b16 %v5714
        %v6972 = vunpack.c.l.b16 %v5715
        %v6973 = vunpack.c.l.b16 %v5716
        %v6974 = vunpack.c.l.b16 %v5717
        %v6975 = vunpack.c.l.b16 %v5718
        %v6976 = vunpack.c.l.b16 %v5719
        %v6977 = vunpack.c.l.b16 %v5720
        %v6978 = vunpack.c.l.b16 %v5721
        %v6979 = vunpack.c.l.b16 %v5722
        %v6980 = vunpack.c.l.b16 %v5723
        %v6981 = vunpack.c.l.b16 %v5724
        %v6982 = vunpack.c.l.b16 %v5725
        %v6983 = vunpack.c.l.b16 %v5726
        %v6984 = vunpack.c.l.b16 %v5727
        %v6985 = vunpack.c.l.b16 %v5728
        %v6986 = vunpack.c.l.b16 %v5729
        %v6987 = vunpack.c.l.b16 %v5730
        %v6988 = vunpack.c.l.b16 %v5731
        %v6989 = vunpack.c.l.b16 %v5732
        %v6990 = vunpack.c.l.b16 %v5733
        %v6991 = vunpack.c.l.b16 %v5734
        %v6992 = vunpack.c.l.b16 %v5735
        %v6993 = vunpack.c.l.b16 %v5736
        %v6994 = vunpack.c.l.b16 %v5737
        %v6995 = vunpack.c.l.b16 %v5738
        %v6996 = vunpack.c.l.b16 %v5739
        %v6997 = vunpack.c.l.b16 %v5740
        %v6998 = vunpack.c.l.b16 %v5741
        %v6999 = vunpack.c.l.b16 %v5742
        %v7000 = vunpack.c.l.b16 %v5743
        %v7001 = vunpack.c.l.b16 %v5744
        %v7002 = vunpack.c.l.b16 %v5745
        %v7003 = vunpack.c.l.b16 %v5746
        %v7004 = vunpack.c.l.b16 %v5747
        %v7005 = vunpack.c.l.b16 %v5748
        %v7006 = vunpack.c.l.b16 %v5749
        %v7007 = vunpack.c.l.b16 %v5750
        %v7008 = vunpack.c.l.b16 %v5751
        %v7009 = vunpack.c.l.b16 %v5752
        %v7010 = vunpack.c.l.b16 %v5753
        %v7011 = vunpack.c.l.b16 %v5754
        %v7012 = vunpack.c.l.b16 %v5755
        %v7013 = vunpack.c.l.b16 %v5756
        %v7014 = vunpack.c.l.b16 %v5757
        %v7015 = vunpack.c.l.b16 %v5758
        %v7016 = vunpack.c.l.b16 %v5759
        %v7017 = vunpack.c.l.b16 %v5760
        %v7018 = vunpack.c.l.b16 %v5761
        %v7019 = vunpack.c.l.b16 %v5762
        %v7020 = vunpack.c.l.b16 %v5763
        %v7021 = vunpack.c.l.b16 %v5764
        %v7022 = vunpack.c.l.b16 %v5765
        %v7023 = vunpack.c.l.b16 %v5766
        %v7024 = vunpack.c.l.b16 %v5767
        %v7025 = vunpack.c.l.b16 %v5768
        %v7026 = vunpack.c.l.b16 %v5769
        %v7027 = vunpack.c.l.b16 %v5770
        %v7028 = vunpack.c.l.b16 %v5771
        %v7029 = vunpack.c.l.b16 %v5772
        %v7030 = vunpack.c.l.b16 %v5773
        %v7031 = vunpack.c.l.b16 %v5774
        %v7032 = vunpack.c.l.b16 %v5775
        %v7033 = vunpack.c.l.b16 %v5776
        %v7034 = vunpack.c.l.b16 %v5777
        %v7035 = vunpack.c.l.b16 %v5778
        %v7036 = vunpack.c.l.b16 %v5779
        %v7037 = vunpack.c.l.b16 %v5780
        %v7038 = vunpack.c.l.b16 %v5781
        %v7039 = vunpack.c.l.b16 %v5782
        %v7040 = vunpack.c.l.b16 %v5783
        %v7041 = vunpack.c.l.b16 %v5784
        %v7042 = vunpack.c.l.b16 %v5785
        %v7043 = vunpack.c.l.b16 %v5786
        %v7044 = vunpack.c.l.b16 %v5787
        %v7045 = vunpack.c.l.b16 %v5788
        %v7046 = vunpack.c.l.b16 %v5789
        %v7047 = vunpack.c.l.b16 %v5790
        %v7048 = vunpack.c.l.b16 %v5791
        %v7049 = vunpack.c.l.b16 %v5792
        %v7050 = vunpack.c.l.b16 %v5793
        %v7051 = vunpack.c.l.b16 %v5794
        %v7052 = vunpack.c.l.b16 %v5795
        %v7053 = vunpack.c.l.b16 %v5796
        %v7054 = vunpack.c.l.b16 %v5797
        %v7055 = vunpack.c.l.b16 %v5798
        %v7056 = vunpack.c.l.b16 %v5799
        %v7057 = vunpack.c.l.b16 %v5800
        %v7058 = vunpack.c.l.b16 %v5801
        %v7059 = vunpack.c.l.b16 %v5802
        %v7060 = vunpack.c.l.b16 %v5803
        %v7061 = vunpack.c.l.b16 %v5804
        %v7062 = vunpack.c.l.b16 %v5805
        %v7063 = vunpack.c.l.b16 %v5806
        %v7064 = vunpack.c.l.b16 %v5807
        %v7065 = vunpack.c.l.b16 %v5808
        %v7066 = vunpack.c.l.b16 %v5809
        %v7067 = vunpack.c.l.b16 %v5810
        %v7068 = vunpack.c.l.b16 %v5811
        %v7069 = vunpack.c.l.b16 %v5812
        %v7070 = vunpack.c.l.b16 %v5813
        %v7071 = vunpack.c.l.b16 %v5814
        %v7072 = vunpack.c.l.b16 %v5815
        %v7073 = vunpack.c.l.b16 %v5816
        %v7074 = vunpack.c.l.b16 %v5817
        %v7075 = vunpack.c.l.b16 %v5818
        %v7076 = vunpack.c.l.b16 %v5819
        %v7077 = vunpack.c.l.b16 %v5820
        %v7078 = vunpack.c.l.b16 %v5821
        %v7079 = vunpack.c.l.b16 %v5822
        %v7080 = vpack.c.b16 %v6569, %v6568
        %v7081 = vpack.c.b16 %v6571, %v6570
        %v7082 = vpack.c.b16 %v6573, %v6572
        %v7083 = vpack.c.b16 %v6575, %v6574
        %v7084 = vpack.c.b16 %v6577, %v6576
        %v7085 = vpack.c.b16 %v6579, %v6578
        %v7086 = vpack.c.b16 %v6581, %v6580
        %v7087 = vpack.c.b16 %v6583, %v6582
        %v7088 = vpack.c.b16 %v6585, %v6584
        %v7089 = vpack.c.b16 %v6587, %v6586
        %v7090 = vpack.c.b16 %v6589, %v6588
        %v7091 = vpack.c.b16 %v6591, %v6590
        %v7092 = vpack.c.b16 %v6593, %v6592
        %v7093 = vpack.c.b16 %v6595, %v6594
        %v7094 = vpack.c.b16 %v6597, %v6596
        %v7095 = vpack.c.b16 %v6599, %v6598
        %v7096 = vpack.c.b16 %v6601, %v6600
        %v7097 = vpack.c.b16 %v6603, %v6602
        %v7098 = vpack.c.b16 %v6605, %v6604
        %v7099 = vpack.c.b16 %v6607, %v6606
        %v7100 = vpack.c.b16 %v6609, %v6608
        %v7101 = vpack.c.b16 %v6611, %v6610
        %v7102 = vpack.c.b16 %v6613, %v6612
        %v7103 = vpack.c.b16 %v6615, %v6614
        %v7104 = vpack.c.b16 %v6617, %v6616
        %v7105 = vpack.c.b16 %v6619, %v6618
        %v7106 = vpack.c.b16 %v6621, %v6620
        %v7107 = vpack.c.b16 %v6623, %v6622
        %v7108 = vpack.c.b16 %v6625, %v6624
        %v7109 = vpack.c.b16 %v6627, %v6626
        %v7110 = vpack.c.b16 %v6629, %v6628
        %v7111 = vpack.c.b16 %v6631, %v6630
        %v7112 = vpack.c.b16 %v6633, %v6632
        %v7113 = vpack.c.b16 %v6635, %v6634
        %v7114 = vpack.c.b16 %v6637, %v6636
        %v7115 = vpack.c.b16 %v6639, %v6638
        %v7116 = vpack.c.b16 %v6641, %v6640
        %v7117 = vpack.c.b16 %v6643, %v6642
        %v7118 = vpack.c.b16 %v6645, %v6644
        %v7119 = vpack.c.b16 %v6647, %v6646
        %v7120 = vpack.c.b16 %v6649, %v6648
        %v7121 = vpack.c.b16 %v6651, %v6650
        %v7122 = vpack.c.b16 %v6653, %v6652
        %v7123 = vpack.c.b16 %v6655, %v6654
        %v7124 = vpack.c.b16 %v6657, %v6656
        %v7125 = vpack.c.b16 %v6659, %v6658
        %v7126 = vpack.c.b16 %v6661, %v6660
        %v7127 = vpack.c.b16 %v6663, %v6662
        %v7128 = vpack.c.b16 %v6665, %v6664
        %v7129 = vpack.c.b16 %v6667, %v6666
        %v7130 = vpack.c.b16 %v6669, %v6668
        %v7131 = vpack.c.b16 %v6671, %v6670
        %v7132 = vpack.c.b16 %v6673, %v6672
        %v7133 = vpack.c.b16 %v6675, %v6674
        %v7134 = vpack.c.b16 %v6677, %v6676
        %v7135 = vpack.c.b16 %v6679, %v6678
        %v7136 = vpack.c.b16 %v6681, %v6680
        %v7137 = vpack.c.b16 %v6683, %v6682
        %v7138 = vpack.c.b16 %v6685, %v6684
        %v7139 = vpack.c.b16 %v6687, %v6686
        %v7140 = vpack.c.b16 %v6689, %v6688
        %v7141 = vpack.c.b16 %v6691, %v6690
        %v7142 = vpack.c.b16 %v6693, %v6692
        %v7143 = vpack.c.b16 %v6695, %v6694
        %v7144 = vpack.c.b16 %v6697, %v6696
        %v7145 = vpack.c.b16 %v6699, %v6698
        %v7146 = vpack.c.b16 %v6701, %v6700
        %v7147 = vpack.c.b16 %v6703, %v6702
        %v7148 = vpack.c.b16 %v6705, %v6704
        %v7149 = vpack.c.b16 %v6707, %v6706
        %v7150 = vpack.c.b16 %v6709, %v6708
        %v7151 = vpack.c.b16 %v6711, %v6710
        %v7152 = vpack.c.b16 %v6713, %v6712
        %v7153 = vpack.c.b16 %v6715, %v6714
        %v7154 = vpack.c.b16 %v6717, %v6716
        %v7155 = vpack.c.b16 %v6719, %v6718
        %v7156 = vpack.c.b16 %v6721, %v6720
        %v7157 = vpack.c.b16 %v6723, %v6722
        %v7158 = vpack.c.b16 %v6725, %v6724
        %v7159 = vpack.c.b16 %v6727, %v6726
        %v7160 = vpack.c.b16 %v6729, %v6728
        %v7161 = vpack.c.b16 %v6731, %v6730
        %v7162 = vpack.c.b16 %v6733, %v6732
        %v7163 = vpack.c.b16 %v6735, %v6734
        %v7164 = vpack.c.b16 %v6737, %v6736
        %v7165 = vpack.c.b16 %v6739, %v6738
        %v7166 = vpack.c.b16 %v6741, %v6740
        %v7167 = vpack.c.b16 %v6743, %v6742
        %v7168 = vpack.c.b16 %v6745, %v6744
        %v7169 = vpack.c.b16 %v6747, %v6746
        %v7170 = vpack.c.b16 %v6749, %v6748
        %v7171 = vpack.c.b16 %v6751, %v6750
        %v7172 = vpack.c.b16 %v6753, %v6752
        %v7173 = vpack.c.b16 %v6755, %v6754
        %v7174 = vpack.c.b16 %v6757, %v6756
        %v7175 = vpack.c.b16 %v6759, %v6758
        %v7176 = vpack.c.b16 %v6761, %v6760
        %v7177 = vpack.c.b16 %v6763, %v6762
        %v7178 = vpack.c.b16 %v6765, %v6764
        %v7179 = vpack.c.b16 %v6767, %v6766
        %v7180 = vpack.c.b16 %v6769, %v6768
        %v7181 = vpack.c.b16 %v6771, %v6770
        %v7182 = vpack.c.b16 %v6773, %v6772
        %v7183 = vpack.c.b16 %v6775, %v6774
        %v7184 = vpack.c.b16 %v6777, %v6776
        %v7185 = vpack.c.b16 %v6779, %v6778
        %v7186 = vpack.c.b16 %v6781, %v6780
        %v7187 = vpack.c.b16 %v6783, %v6782
        %v7188 = vpack.c.b16 %v6785, %v6784
        %v7189 = vpack.c.b16 %v6787, %v6786
        %v7190 = vpack.c.b16 %v6789, %v6788
        %v7191 = vpack.c.b16 %v6791, %v6790
        %v7192 = vpack.c.b16 %v6793, %v6792
        %v7193 = vpack.c.b16 %v6795, %v6794
        %v7194 = vpack.c.b16 %v6797, %v6796
        %v7195 = vpack.c.b16 %v6799, %v6798
        %v7196 = vpack.c.b16 %v6801, %v6800
        %v7197 = vpack.c.b16 %v6803, %v6802
        %v7198 = vpack.c.b16 %v6805, %v6804
        %v7199 = vpack.c.b16 %v6807, %v6806
        %v7200 = vpack.c.b16 %v6809, %v6808
        %v7201 = vpack.c.b16 %v6811, %v6810
        %v7202 = vpack.c.b16 %v6813, %v6812
        %v7203 = vpack.c.b16 %v6815, %v6814
        %v7204 = vpack.c.b16 %v6817, %v6816
        %v7205 = vpack.c.b16 %v6819, %v6818
        %v7206 = vpack.c.b16 %v6821, %v6820
        %v7207 = vpack.c.b16 %v6823, %v6822
        %v7208 = vpack.c.b16 %v6825, %v6824
        %v7209 = vpack.c.b16 %v6827, %v6826
        %v7210 = vpack.c.b16 %v6829, %v6828
        %v7211 = vpack.c.b16 %v6831, %v6830
        %v7212 = vpack.c.b16 %v6833, %v6832
        %v7213 = vpack.c.b16 %v6835, %v6834
        %v7214 = vpack.c.b16 %v6837, %v6836
        %v7215 = vpack.c.b16 %v6839, %v6838
        %v7216 = vpack.c.b16 %v6841, %v6840
        %v7217 = vpack.c.b16 %v6843, %v6842
        %v7218 = vpack.c.b16 %v6845, %v6844
        %v7219 = vpack.c.b16 %v6847, %v6846
        %v7220 = vpack.c.b16 %v6849, %v6848
        %v7221 = vpack.c.b16 %v6851, %v6850
        %v7222 = vpack.c.b16 %v6853, %v6852
        %v7223 = vpack.c.b16 %v6855, %v6854
        %v7224 = vpack.c.b16 %v6857, %v6856
        %v7225 = vpack.c.b16 %v6859, %v6858
        %v7226 = vpack.c.b16 %v6861, %v6860
        %v7227 = vpack.c.b16 %v6863, %v6862
        %v7228 = vpack.c.b16 %v6865, %v6864
        %v7229 = vpack.c.b16 %v6867, %v6866
        %v7230 = vpack.c.b16 %v6869, %v6868
        %v7231 = vpack.c.b16 %v6871, %v6870
        %v7232 = vpack.c.b16 %v6873, %v6872
        %v7233 = vpack.c.b16 %v6875, %v6874
        %v7234 = vpack.c.b16 %v6877, %v6876
        %v7235 = vpack.c.b16 %v6879, %v6878
        %v7236 = vpack.c.b16 %v6881, %v6880
        %v7237 = vpack.c.b16 %v6883, %v6882
        %v7238 = vpack.c.b16 %v6885, %v6884
        %v7239 = vpack.c.b16 %v6887, %v6886
        %v7240 = vpack.c.b16 %v6889, %v6888
        %v7241 = vpack.c.b16 %v6891, %v6890
        %v7242 = vpack.c.b16 %v6893, %v6892
        %v7243 = vpack.c.b16 %v6895, %v6894
        %v7244 = vpack.c.b16 %v6897, %v6896
        %v7245 = vpack.c.b16 %v6899, %v6898
        %v7246 = vpack.c.b16 %v6901, %v6900
        %v7247 = vpack.c.b16 %v6903, %v6902
        %v7248 = vpack.c.b16 %v6905, %v6904
        %v7249 = vpack.c.b16 %v6907, %v6906
        %v7250 = vpack.c.b16 %v6909, %v6908
        %v7251 = vpack.c.b16 %v6911, %v6910
        %v7252 = vpack.c.b16 %v6913, %v6912
        %v7253 = vpack.c.b16 %v6915, %v6914
        %v7254 = vpack.c.b16 %v6917, %v6916
        %v7255 = vpack.c.b16 %v6919, %v6918
        %v7256 = vpack.c.b16 %v6921, %v6920
        %v7257 = vpack.c.b16 %v6923, %v6922
        %v7258 = vpack.c.b16 %v6925, %v6924
        %v7259 = vpack.c.b16 %v6927, %v6926
        %v7260 = vpack.c.b16 %v6929, %v6928
        %v7261 = vpack.c.b16 %v6931, %v6930
        %v7262 = vpack.c.b16 %v6933, %v6932
        %v7263 = vpack.c.b16 %v6935, %v6934
        %v7264 = vpack.c.b16 %v6937, %v6936
        %v7265 = vpack.c.b16 %v6939, %v6938
        %v7266 = vpack.c.b16 %v6941, %v6940
        %v7267 = vpack.c.b16 %v6943, %v6942
        %v7268 = vpack.c.b16 %v6945, %v6944
        %v7269 = vpack.c.b16 %v6947, %v6946
        %v7270 = vpack.c.b16 %v6949, %v6948
        %v7271 = vpack.c.b16 %v6951, %v6950
        %v7272 = vpack.c.b16 %v6953, %v6952
        %v7273 = vpack.c.b16 %v6955, %v6954
        %v7274 = vpack.c.b16 %v6957, %v6956
        %v7275 = vpack.c.b16 %v6959, %v6958
        %v7276 = vpack.c.b16 %v6961, %v6960
        %v7277 = vpack.c.b16 %v6963, %v6962
        %v7278 = vpack.c.b16 %v6965, %v6964
        %v7279 = vpack.c.b16 %v6967, %v6966
        %v7280 = vpack.c.b16 %v6969, %v6968
        %v7281 = vpack.c.b16 %v6971, %v6970
        %v7282 = vpack.c.b16 %v6973, %v6972
        %v7283 = vpack.c.b16 %v6975, %v6974
        %v7284 = vpack.c.b16 %v6977, %v6976
        %v7285 = vpack.c.b16 %v6979, %v6978
        %v7286 = vpack.c.b16 %v6981, %v6980
        %v7287 = vpack.c.b16 %v6983, %v6982
        %v7288 = vpack.c.b16 %v6985, %v6984
        %v7289 = vpack.c.b16 %v6987, %v6986
        %v7290 = vpack.c.b16 %v6989, %v6988
        %v7291 = vpack.c.b16 %v6991, %v6990
        %v7292 = vpack.c.b16 %v6993, %v6992
        %v7293 = vpack.c.b16 %v6995, %v6994
        %v7294 = vpack.c.b16 %v6997, %v6996
        %v7295 = vpack.c.b16 %v6999, %v6998
        %v7296 = vpack.c.b16 %v7001, %v7000
        %v7297 = vpack.c.b16 %v7003, %v7002
        %v7298 = vpack.c.b16 %v7005, %v7004
        %v7299 = vpack.c.b16 %v7007, %v7006
        %v7300 = vpack.c.b16 %v7009, %v7008
        %v7301 = vpack.c.b16 %v7011, %v7010
        %v7302 = vpack.c.b16 %v7013, %v7012
        %v7303 = vpack.c.b16 %v7015, %v7014
        %v7304 = vpack.c.b16 %v7017, %v7016
        %v7305 = vpack.c.b16 %v7019, %v7018
        %v7306 = vpack.c.b16 %v7021, %v7020
        %v7307 = vpack.c.b16 %v7023, %v7022
        %v7308 = vpack.c.b16 %v7025, %v7024
        %v7309 = vpack.c.b16 %v7027, %v7026
        %v7310 = vpack.c.b16 %v7029, %v7028
        %v7311 = vpack.c.b16 %v7031, %v7030
        %v7312 = vpack.c.b16 %v7033, %v7032
        %v7313 = vpack.c.b16 %v7035, %v7034
        %v7314 = vpack.c.b16 %v7037, %v7036
        %v7315 = vpack.c.b16 %v7039, %v7038
        %v7316 = vpack.c.b16 %v7041, %v7040
        %v7317 = vpack.c.b16 %v7043, %v7042
        %v7318 = vpack.c.b16 %v7045, %v7044
        %v7319 = vpack.c.b16 %v7047, %v7046
        %v7320 = vpack.c.b16 %v7049, %v7048
        %v7321 = vpack.c.b16 %v7051, %v7050
        %v7322 = vpack.c.b16 %v7053, %v7052
        %v7323 = vpack.c.b16 %v7055, %v7054
        %v7324 = vpack.c.b16 %v7057, %v7056
        %v7325 = vpack.c.b16 %v7059, %v7058
        %v7326 = vpack.c.b16 %v7061, %v7060
        %v7327 = vpack.c.b16 %v7063, %v7062
        %v7328 = vpack.c.b16 %v7065, %v7064
        %v7329 = vpack.c.b16 %v7067, %v7066
        %v7330 = vpack.c.b16 %v7069, %v7068
        %v7331 = vpack.c.b16 %v7071, %v7070
        %v7332 = vpack.c.b16 %v7073, %v7072
        %v7333 = vpack.c.b16 %v7075, %v7074
        %v7334 = vpack.c.b16 %v7077, %v7076
        %v7335 = vpack.c.b16 %v7079, %v7078
        %7592 = vmatprep.subr.bf16.mxu0 0
        %7593 = vmatpush1.bf16.msra.mxu0 %v7080
        %7594 = vmatprep.subr.bf16.mxu0 0
        %7595 = vmatpush1.bf16.msra.mxu0 %v7081
        %7596 = vmatprep.subr.bf16.mxu0 0
        %7597 = vmatpush1.bf16.msra.mxu0 %v7082
        %7598 = vmatprep.subr.bf16.mxu0 0
        %7599 = vmatpush1.bf16.msra.mxu0 %v7083
        %7600 = vmatprep.subr.bf16.mxu0 0
        %7601 = vmatpush1.bf16.msra.mxu0 %v7084
        %7602 = vmatprep.subr.bf16.mxu0 0
        %7603 = vmatpush1.bf16.msra.mxu0 %v7085
        %7604 = vmatprep.subr.bf16.mxu0 0
        %7605 = vmatpush1.bf16.msra.mxu0 %v7086
        %7606 = vmatprep.subr.bf16.mxu0 0
        %7607 = vmatpush1.bf16.msra.mxu0 %v7087
        %7608 = vmatprep.subr.bf16.mxu0 0
        %7609 = vmatpush1.bf16.msra.mxu0 %v7088
        %7610 = vmatprep.subr.bf16.mxu0 0
        %7611 = vmatpush1.bf16.msra.mxu0 %v7089
        %7612 = vmatprep.subr.bf16.mxu0 0
        %7613 = vmatpush1.bf16.msra.mxu0 %v7090
        %7614 = vmatprep.subr.bf16.mxu0 0
        %7615 = vmatpush1.bf16.msra.mxu0 %v7091
        %7616 = vmatprep.subr.bf16.mxu0 0
        %7617 = vmatpush1.bf16.msra.mxu0 %v7092
        %7618 = vmatprep.subr.bf16.mxu0 0
        %7619 = vmatpush1.bf16.msra.mxu0 %v7093
        %7620 = vmatprep.subr.bf16.mxu0 0
        %7621 = vmatpush1.bf16.msra.mxu0 %v7094
        %7622 = vmatprep.subr.bf16.mxu0 0
        %7623 = vmatpush1.bf16.msra.mxu0 %v7095
        %7624 = vmatprep.mubr.bf16.mxu0 %v5865
        %7625 = vmatmul.mubr.bf16.gmra.mrb[0].mxu0 %v5851
        %v7626 = vpop.f32.mrb[0].mxu0
        %v7627 = vadd.f32 %v5823, %v7626
        %v7628 = vpop.f32.mrb[0].mxu0
        %v7629 = vpop.f32.mrb[0].mxu0
        %v7630 = vpop.f32.mrb[0].mxu0
        %7631 = vdwg.mxu0
        %7632 = vmatprep.subr.bf16.mxu0 0
        %7633 = vmatpush1.bf16.msra.mxu0 %v7096
        %7634 = vmatprep.subr.bf16.mxu0 0
        %7635 = vmatpush1.bf16.msra.mxu0 %v7097
        %7636 = vmatprep.subr.bf16.mxu0 0
        %7637 = vmatpush1.bf16.msra.mxu0 %v7098
        %7638 = vmatprep.subr.bf16.mxu0 0
        %7639 = vmatpush1.bf16.msra.mxu0 %v7099
        %7640 = vmatprep.subr.bf16.mxu0 0
        %7641 = vmatpush1.bf16.msra.mxu0 %v7100
        %7642 = vmatprep.subr.bf16.mxu0 0
        %7643 = vmatpush1.bf16.msra.mxu0 %v7101
        %7644 = vmatprep.subr.bf16.mxu0 0
        %7645 = vmatpush1.bf16.msra.mxu0 %v7102
        %7646 = vmatprep.subr.bf16.mxu0 0
        %7647 = vmatpush1.bf16.msra.mxu0 %v7103
        %7648 = vmatprep.subr.bf16.mxu0 0
        %7649 = vmatpush1.bf16.msra.mxu0 %v7104
        %7650 = vmatprep.subr.bf16.mxu0 0
        %7651 = vmatpush1.bf16.msra.mxu0 %v7105
        %7652 = vmatprep.subr.bf16.mxu0 0
        %7653 = vmatpush1.bf16.msra.mxu0 %v7106
        %7654 = vmatprep.subr.bf16.mxu0 0
        %7655 = vmatpush1.bf16.msra.mxu0 %v7107
        %7656 = vmatprep.subr.bf16.mxu0 0
        %7657 = vmatpush1.bf16.msra.mxu0 %v7108
        %7658 = vmatprep.subr.bf16.mxu0 0
        %7659 = vmatpush1.bf16.msra.mxu0 %v7109
        %7660 = vmatprep.subr.bf16.mxu0 0
        %7661 = vmatpush1.bf16.msra.mxu0 %v7110
        %7662 = vmatprep.subr.bf16.mxu0 0
        %7663 = vmatpush1.bf16.msra.mxu0 %v7111
        %7664 = vmatprep.mubr.bf16.mxu0 %v5875
        %7665 = vmatmul.mubr.bf16.gmra.mrb[0].mxu0 %v5873
        %v7666 = vpop.f32.mrb[0].mxu0
        %v7667 = vadd.f32 %v7627, %v7666
        %v7668 = vpop.f32.mrb[0].mxu0
        %v7669 = vpop.f32.mrb[0].mxu0
        %v7670 = vpop.f32.mrb[0].mxu0
        %7671 = vdwg.mxu0
        %7672 = vmatprep.subr.bf16.mxu0 0
        %7673 = vmatpush1.bf16.msra.mxu0 %v7112
        %7674 = vmatprep.subr.bf16.mxu0 0
        %7675 = vmatpush1.bf16.msra.mxu0 %v7113
        %7676 = vmatprep.subr.bf16.mxu0 0
        %7677 = vmatpush1.bf16.msra.mxu0 %v7114
        %7678 = vmatprep.subr.bf16.mxu0 0
        %7679 = vmatpush1.bf16.msra.mxu0 %v7115
        %7680 = vmatprep.subr.bf16.mxu0 0
        %7681 = vmatpush1.bf16.msra.mxu0 %v7116
        %7682 = vmatprep.subr.bf16.mxu0 0
        %7683 = vmatpush1.bf16.msra.mxu0 %v7117
        %7684 = vmatprep.subr.bf16.mxu0 0
        %7685 = vmatpush1.bf16.msra.mxu0 %v7118
        %7686 = vmatprep.subr.bf16.mxu0 0
        %7687 = vmatpush1.bf16.msra.mxu0 %v7119
        %7688 = vmatprep.subr.bf16.mxu0 0
        %7689 = vmatpush1.bf16.msra.mxu0 %v7120
        %7690 = vmatprep.subr.bf16.mxu0 0
        %7691 = vmatpush1.bf16.msra.mxu0 %v7121
        %7692 = vmatprep.subr.bf16.mxu0 0
        %7693 = vmatpush1.bf16.msra.mxu0 %v7122
        %7694 = vmatprep.subr.bf16.mxu0 0
        %7695 = vmatpush1.bf16.msra.mxu0 %v7123
        %7696 = vmatprep.subr.bf16.mxu0 0
        %7697 = vmatpush1.bf16.msra.mxu0 %v7124
        %7698 = vmatprep.subr.bf16.mxu0 0
        %7699 = vmatpush1.bf16.msra.mxu0 %v7125
        %7700 = vmatprep.subr.bf16.mxu0 0
        %7701 = vmatpush1.bf16.msra.mxu0 %v7126
        %7702 = vmatprep.subr.bf16.mxu0 0
        %7703 = vmatpush1.bf16.msra.mxu0 %v7127
        %7704 = vmatprep.mubr.bf16.mxu0 %v5872
        %7705 = vmatmul.mubr.bf16.gmra.mrb[0].mxu0 %v5858
        %v7706 = vpop.f32.mrb[0].mxu0
        %v7707 = vadd.f32 %v7667, %v7706
        %v7708 = vpop.f32.mrb[0].mxu0
        %v7709 = vpop.f32.mrb[0].mxu0
        %v7710 = vpop.f32.mrb[0].mxu0
        %7711 = vdwg.mxu0
        %7712 = vmatprep.subr.bf16.mxu0 0
        %7713 = vmatpush1.bf16.msra.mxu0 %v7128
        %7714 = vmatprep.subr.bf16.mxu0 0
        %7715 = vmatpush1.bf16.msra.mxu0 %v7129
        %7716 = vmatprep.subr.bf16.mxu0 0
        %7717 = vmatpush1.bf16.msra.mxu0 %v7130
        %7718 = vmatprep.subr.bf16.mxu0 0
        %7719 = vmatpush1.bf16.msra.mxu0 %v7131
        %7720 = vmatprep.subr.bf16.mxu0 0
        %7721 = vmatpush1.bf16.msra.mxu0 %v7132
        %7722 = vmatprep.subr.bf16.mxu0 0
        %7723 = vmatpush1.bf16.msra.mxu0 %v7133
        %7724 = vmatprep.subr.bf16.mxu0 0
        %7725 = vmatpush1.bf16.msra.mxu0 %v7134
        %7726 = vmatprep.subr.bf16.mxu0 0
        %7727 = vmatpush1.bf16.msra.mxu0 %v7135
        %7728 = vmatprep.subr.bf16.mxu0 0
        %7729 = vmatpush1.bf16.msra.mxu0 %v7136
        %7730 = vmatprep.subr.bf16.mxu0 0
        %7731 = vmatpush1.bf16.msra.mxu0 %v7137
        %7732 = vmatprep.subr.bf16.mxu0 0
        %7733 = vmatpush1.bf16.msra.mxu0 %v7138
        %7734 = vmatprep.subr.bf16.mxu0 0
        %7735 = vmatpush1.bf16.msra.mxu0 %v7139
        %7736 = vmatprep.subr.bf16.mxu0 0
        %7737 = vmatpush1.bf16.msra.mxu0 %v7140
        %7738 = vmatprep.subr.bf16.mxu0 0
        %7739 = vmatpush1.bf16.msra.mxu0 %v7141
        %7740 = vmatprep.subr.bf16.mxu0 0
        %7741 = vmatpush1.bf16.msra.mxu0 %v7142
        %7742 = vmatprep.subr.bf16.mxu0 0
        %7743 = vmatpush1.bf16.msra.mxu0 %v7143
        %7744 = vmatprep.mubr.bf16.mxu0 %v5876
        %7745 = vmatmul.mubr.bf16.gmra.mrb[0].mxu0 %v5874
        %v7746 = vpop.f32.mrb[0].mxu0
        %v7747 = vadd.f32 %v7707, %v7746
        %v7748 = vpop.f32.mrb[0].mxu0
        %v7749 = vpop.f32.mrb[0].mxu0
        %v7750 = vpop.f32.mrb[0].mxu0
        %7751 = vdwg.mxu0
        %7752 = vmatprep.subr.bf16.mxu0 0
        %7753 = vmatpush1.bf16.msra.mxu0 %v7144
        %7754 = vmatprep.subr.bf16.mxu0 0
        %7755 = vmatpush1.bf16.msra.mxu0 %v7145
        %7756 = vmatprep.subr.bf16.mxu0 0
        %7757 = vmatpush1.bf16.msra.mxu0 %v7146
        %7758 = vmatprep.subr.bf16.mxu0 0
        %7759 = vmatpush1.bf16.msra.mxu0 %v7147
        %7760 = vmatprep.subr.bf16.mxu0 0
        %7761 = vmatpush1.bf16.msra.mxu0 %v7148
        %7762 = vmatprep.subr.bf16.mxu0 0
        %7763 = vmatpush1.bf16.msra.mxu0 %v7149
        %7764 = vmatprep.subr.bf16.mxu0 0
        %7765 = vmatpush1.bf16.msra.mxu0 %v7150
        %7766 = vmatprep.subr.bf16.mxu0 0
        %7767 = vmatpush1.bf16.msra.mxu0 %v7151
        %7768 = vmatprep.subr.bf16.mxu0 0
        %7769 = vmatpush1.bf16.msra.mxu0 %v7152
        %7770 = vmatprep.subr.bf16.mxu0 0
        %7771 = vmatpush1.bf16.msra.mxu0 %v7153
        %7772 = vmatprep.subr.bf16.mxu0 0
        %7773 = vmatpush1.bf16.msra.mxu0 %v7154
        %7774 = vmatprep.subr.bf16.mxu0 0
        %7775 = vmatpush1.bf16.msra.mxu0 %v7155
        %7776 = vmatprep.subr.bf16.mxu0 0
        %7777 = vmatpush1.bf16.msra.mxu0 %v7156
        %7778 = vmatprep.subr.bf16.mxu0 0
        %7779 = vmatpush1.bf16.msra.mxu0 %v7157
        %7780 = vmatprep.subr.bf16.mxu0 0
        %7781 = vmatpush1.bf16.msra.mxu0 %v7158
        %7782 = vmatprep.subr.bf16.mxu0 0
        %7783 = vmatpush1.bf16.msra.mxu0 %v7159
        %7784 = vmatprep.mubr.bf16.mxu0 %v5914
        %7785 = vmatmul.mubr.bf16.gmra.mrb[0].mxu0 %v5900
        %v7786 = vpop.f32.mrb[0].mxu0
        %v7787 = vadd.f32 %v7747, %v7786
        %v7788 = vpop.f32.mrb[0].mxu0
        %v7789 = vpop.f32.mrb[0].mxu0
        %v7790 = vpop.f32.mrb[0].mxu0
        %7791 = vdwg.mxu0
        %7792 = vmatprep.subr.bf16.mxu0 0
        %7793 = vmatpush1.bf16.msra.mxu0 %v7160
        %7794 = vmatprep.subr.bf16.mxu0 0
        %7795 = vmatpush1.bf16.msra.mxu0 %v7161
        %7796 = vmatprep.subr.bf16.mxu0 0
        %7797 = vmatpush1.bf16.msra.mxu0 %v7162
        %7798 = vmatprep.subr.bf16.mxu0 0
        %7799 = vmatpush1.bf16.msra.mxu0 %v7163
        %7800 = vmatprep.subr.bf16.mxu0 0
        %7801 = vmatpush1.bf16.msra.mxu0 %v7164
        %7802 = vmatprep.subr.bf16.mxu0 0
        %7803 = vmatpush1.bf16.msra.mxu0 %v7165
        %7804 = vmatprep.subr.bf16.mxu0 0
        %7805 = vmatpush1.bf16.msra.mxu0 %v7166
        %7806 = vmatprep.subr.bf16.mxu0 0
        %7807 = vmatpush1.bf16.msra.mxu0 %v7167
        %7808 = vmatprep.subr.bf16.mxu0 0
        %7809 = vmatpush1.bf16.msra.mxu0 %v7168
        %7810 = vmatprep.subr.bf16.mxu0 0
        %7811 = vmatpush1.bf16.msra.mxu0 %v7169
        %7812 = vmatprep.subr.bf16.mxu0 0
        %7813 = vmatpush1.bf16.msra.mxu0 %v7170
        %7814 = vmatprep.subr.bf16.mxu0 0
        %7815 = vmatpush1.bf16.msra.mxu0 %v7171
        %7816 = vmatprep.subr.bf16.mxu0 0
        %7817 = vmatpush1.bf16.msra.mxu0 %v7172
        %7818 = vmatprep.subr.bf16.mxu0 0
        %7819 = vmatpush1.bf16.msra.mxu0 %v7173
        %7820 = vmatprep.subr.bf16.mxu0 0
        %7821 = vmatpush1.bf16.msra.mxu0 %v7174
        %7822 = vmatprep.subr.bf16.mxu0 0
        %7823 = vmatpush1.bf16.msra.mxu0 %v7175
        %7824 = vmatprep.mubr.bf16.mxu0 %v5924
        %7825 = vmatmul.mubr.bf16.gmra.mrb[0].mxu0 %v5922
        %v7826 = vpop.f32.mrb[0].mxu0
        %v7827 = vadd.f32 %v7787, %v7826
        %v7828 = vpop.f32.mrb[0].mxu0
        %v7829 = vpop.f32.mrb[0].mxu0
        %v7830 = vpop.f32.mrb[0].mxu0
        %7831 = vdwg.mxu0
        %7832 = vmatprep.subr.bf16.mxu0 0
        %7833 = vmatpush1.bf16.msra.mxu0 %v7176
        %7834 = vmatprep.subr.bf16.mxu0 0
        %7835 = vmatpush1.bf16.msra.mxu0 %v7177
        %7836 = vmatprep.subr.bf16.mxu0 0
        %7837 = vmatpush1.bf16.msra.mxu0 %v7178
        %7838 = vmatprep.subr.bf16.mxu0 0
        %7839 = vmatpush1.bf16.msra.mxu0 %v7179
        %7840 = vmatprep.subr.bf16.mxu0 0
        %7841 = vmatpush1.bf16.msra.mxu0 %v7180
        %7842 = vmatprep.subr.bf16.mxu0 0
        %7843 = vmatpush1.bf16.msra.mxu0 %v7181
        %7844 = vmatprep.subr.bf16.mxu0 0
        %7845 = vmatpush1.bf16.msra.mxu0 %v7182
        %7846 = vmatprep.subr.bf16.mxu0 0
        %7847 = vmatpush1.bf16.msra.mxu0 %v7183
        %7848 = vmatprep.subr.bf16.mxu0 0
        %7849 = vmatpush1.bf16.msra.mxu0 %v7184
        %7850 = vmatprep.subr.bf16.mxu0 0
        %7851 = vmatpush1.bf16.msra.mxu0 %v7185
        %7852 = vmatprep.subr.bf16.mxu0 0
        %7853 = vmatpush1.bf16.msra.mxu0 %v7186
        %7854 = vmatprep.subr.bf16.mxu0 0
        %7855 = vmatpush1.bf16.msra.mxu0 %v7187
        %7856 = vmatprep.subr.bf16.mxu0 0
        %7857 = vmatpush1.bf16.msra.mxu0 %v7188
        %7858 = vmatprep.subr.bf16.mxu0 0
        %7859 = vmatpush1.bf16.msra.mxu0 %v7189
        %7860 = vmatprep.subr.bf16.mxu0 0
        %7861 = vmatpush1.bf16.msra.mxu0 %v7190
        %7862 = vmatprep.subr.bf16.mxu0 0
        %7863 = vmatpush1.bf16.msra.mxu0 %v7191
        %7864 = vmatprep.mubr.bf16.mxu0 %v5921
        %7865 = vmatmul.mubr.bf16.gmra.mrb[0].mxu0 %v5907
        %v7866 = vpop.f32.mrb[0].mxu0
        %v7867 = vadd.f32 %v7827, %v7866
        %v7868 = vpop.f32.mrb[0].mxu0
        %v7869 = vpop.f32.mrb[0].mxu0
        %v7870 = vpop.f32.mrb[0].mxu0
        %7871 = vdwg.mxu0
        %7872 = vmatprep.subr.bf16.mxu0 0
        %7873 = vmatpush1.bf16.msra.mxu0 %v7192
        %7874 = vmatprep.subr.bf16.mxu0 0
        %7875 = vmatpush1.bf16.msra.mxu0 %v7193
        %7876 = vmatprep.subr.bf16.mxu0 0
        %7877 = vmatpush1.bf16.msra.mxu0 %v7194
        %7878 = vmatprep.subr.bf16.mxu0 0
        %7879 = vmatpush1.bf16.msra.mxu0 %v7195
        %7880 = vmatprep.subr.bf16.mxu0 0
        %7881 = vmatpush1.bf16.msra.mxu0 %v7196
        %7882 = vmatprep.subr.bf16.mxu0 0
        %7883 = vmatpush1.bf16.msra.mxu0 %v7197
        %7884 = vmatprep.subr.bf16.mxu0 0
        %7885 = vmatpush1.bf16.msra.mxu0 %v7198
        %7886 = vmatprep.subr.bf16.mxu0 0
        %7887 = vmatpush1.bf16.msra.mxu0 %v7199
        %7888 = vmatprep.subr.bf16.mxu0 0
        %7889 = vmatpush1.bf16.msra.mxu0 %v7200
        %7890 = vmatprep.subr.bf16.mxu0 0
        %7891 = vmatpush1.bf16.msra.mxu0 %v7201
        %7892 = vmatprep.subr.bf16.mxu0 0
        %7893 = vmatpush1.bf16.msra.mxu0 %v7202
        %7894 = vmatprep.subr.bf16.mxu0 0
        %7895 = vmatpush1.bf16.msra.mxu0 %v7203
        %7896 = vmatprep.subr.bf16.mxu0 0
        %7897 = vmatpush1.bf16.msra.mxu0 %v7204
        %7898 = vmatprep.subr.bf16.mxu0 0
        %7899 = vmatpush1.bf16.msra.mxu0 %v7205
        %7900 = vmatprep.subr.bf16.mxu0 0
        %7901 = vmatpush1.bf16.msra.mxu0 %v7206
        %7902 = vmatprep.subr.bf16.mxu0 0
        %7903 = vmatpush1.bf16.msra.mxu0 %v7207
        %7904 = vmatprep.mubr.bf16.mxu0 %v5925
        %7905 = vmatmul.mubr.bf16.gmra.mrb[0].mxu0 %v5923
        %v7906 = vpop.f32.mrb[0].mxu0
        %v7907 = vadd.f32 %v7867, %v7906
        %v7908 = vpop.f32.mrb[0].mxu0
        %v7909 = vpop.f32.mrb[0].mxu0
        %v7910 = vpop.f32.mrb[0].mxu0
        %7911 = vdwg.mxu0
        %7912 = vmatprep.subr.bf16.mxu0 0
        %7913 = vmatpush1.bf16.msra.mxu0 %v7208
        %7914 = vmatprep.subr.bf16.mxu0 0
        %7915 = vmatpush1.bf16.msra.mxu0 %v7209
        %7916 = vmatprep.subr.bf16.mxu0 0
        %7917 = vmatpush1.bf16.msra.mxu0 %v7210
        %7918 = vmatprep.subr.bf16.mxu0 0
        %7919 = vmatpush1.bf16.msra.mxu0 %v7211
        %7920 = vmatprep.subr.bf16.mxu0 0
        %7921 = vmatpush1.bf16.msra.mxu0 %v7212
        %7922 = vmatprep.subr.bf16.mxu0 0
        %7923 = vmatpush1.bf16.msra.mxu0 %v7213
        %7924 = vmatprep.subr.bf16.mxu0 0
        %7925 = vmatpush1.bf16.msra.mxu0 %v7214
        %7926 = vmatprep.subr.bf16.mxu0 0
        %7927 = vmatpush1.bf16.msra.mxu0 %v7215
        %7928 = vmatprep.subr.bf16.mxu0 0
        %7929 = vmatpush1.bf16.msra.mxu0 %v7216
        %7930 = vmatprep.subr.bf16.mxu0 0
        %7931 = vmatpush1.bf16.msra.mxu0 %v7217
        %7932 = vmatprep.subr.bf16.mxu0 0
        %7933 = vmatpush1.bf16.msra.mxu0 %v7218
        %7934 = vmatprep.subr.bf16.mxu0 0
        %7935 = vmatpush1.bf16.msra.mxu0 %v7219
        %7936 = vmatprep.subr.bf16.mxu0 0
        %7937 = vmatpush1.bf16.msra.mxu0 %v7220
        %7938 = vmatprep.subr.bf16.mxu0 0
        %7939 = vmatpush1.bf16.msra.mxu0 %v7221
        %7940 = vmatprep.subr.bf16.mxu0 0
        %7941 = vmatpush1.bf16.msra.mxu0 %v7222
        %7942 = vmatprep.subr.bf16.mxu0 0
        %7943 = vmatpush1.bf16.msra.mxu0 %v7223
        %7944 = vmatprep.mubr.bf16.mxu0 %v5963
        %7945 = vmatmul.mubr.bf16.gmra.mrb[0].mxu0 %v5949
        %v7946 = vpop.f32.mrb[0].mxu0
        %v7947 = vadd.f32 %v7907, %v7946
        %v7948 = vpop.f32.mrb[0].mxu0
        %v7949 = vpop.f32.mrb[0].mxu0
        %v7950 = vpop.f32.mrb[0].mxu0
        %7951 = vdwg.mxu0
        %7952 = vmatprep.subr.bf16.mxu0 0
        %7953 = vmatpush1.bf16.msra.mxu0 %v7224
        %7954 = vmatprep.subr.bf16.mxu0 0
        %7955 = vmatpush1.bf16.msra.mxu0 %v7225
        %7956 = vmatprep.subr.bf16.mxu0 0
        %7957 = vmatpush1.bf16.msra.mxu0 %v7226
        %7958 = vmatprep.subr.bf16.mxu0 0
        %7959 = vmatpush1.bf16.msra.mxu0 %v7227
        %7960 = vmatprep.subr.bf16.mxu0 0
        %7961 = vmatpush1.bf16.msra.mxu0 %v7228
        %7962 = vmatprep.subr.bf16.mxu0 0
        %7963 = vmatpush1.bf16.msra.mxu0 %v7229
        %7964 = vmatprep.subr.bf16.mxu0 0
        %7965 = vmatpush1.bf16.msra.mxu0 %v7230
        %7966 = vmatprep.subr.bf16.mxu0 0
        %7967 = vmatpush1.bf16.msra.mxu0 %v7231
        %7968 = vmatprep.subr.bf16.mxu0 0
        %7969 = vmatpush1.bf16.msra.mxu0 %v7232
        %7970 = vmatprep.subr.bf16.mxu0 0
        %7971 = vmatpush1.bf16.msra.mxu0 %v7233
        %7972 = vmatprep.subr.bf16.mxu0 0
        %7973 = vmatpush1.bf16.msra.mxu0 %v7234
        %7974 = vmatprep.subr.bf16.mxu0 0
        %7975 = vmatpush1.bf16.msra.mxu0 %v7235
        %7976 = vmatprep.subr.bf16.mxu0 0
        %7977 = vmatpush1.bf16.msra.mxu0 %v7236
        %7978 = vmatprep.subr.bf16.mxu0 0
        %7979 = vmatpush1.bf16.msra.mxu0 %v7237
        %7980 = vmatprep.subr.bf16.mxu0 0
        %7981 = vmatpush1.bf16.msra.mxu0 %v7238
        %7982 = vmatprep.subr.bf16.mxu0 0
        %7983 = vmatpush1.bf16.msra.mxu0 %v7239
        %7984 = vmatprep.mubr.bf16.mxu0 %v5973
        %7985 = vmatmul.mubr.bf16.gmra.mrb[0].mxu0 %v5971
        %v7986 = vpop.f32.mrb[0].mxu0
        %v7987 = vadd.f32 %v7947, %v7986
        %v7988 = vpop.f32.mrb[0].mxu0
        %v7989 = vpop.f32.mrb[0].mxu0
        %v7990 = vpop.f32.mrb[0].mxu0
        %7991 = vdwg.mxu0
        %7992 = vmatprep.subr.bf16.mxu0 0
        %7993 = vmatpush1.bf16.msra.mxu0 %v7240
        %7994 = vmatprep.subr.bf16.mxu0 0
        %7995 = vmatpush1.bf16.msra.mxu0 %v7241
        %7996 = vmatprep.subr.bf16.mxu0 0
        %7997 = vmatpush1.bf16.msra.mxu0 %v7242
        %7998 = vmatprep.subr.bf16.mxu0 0
        %7999 = vmatpush1.bf16.msra.mxu0 %v7243
        %8000 = vmatprep.subr.bf16.mxu0 0
        %8001 = vmatpush1.bf16.msra.mxu0 %v7244
        %8002 = vmatprep.subr.bf16.mxu0 0
        %8003 = vmatpush1.bf16.msra.mxu0 %v7245
        %8004 = vmatprep.subr.bf16.mxu0 0
        %8005 = vmatpush1.bf16.msra.mxu0 %v7246
        %8006 = vmatprep.subr.bf16.mxu0 0
        %8007 = vmatpush1.bf16.msra.mxu0 %v7247
        %8008 = vmatprep.subr.bf16.mxu0 0
        %8009 = vmatpush1.bf16.msra.mxu0 %v7248
        %8010 = vmatprep.subr.bf16.mxu0 0
        %8011 = vmatpush1.bf16.msra.mxu0 %v7249
        %8012 = vmatprep.subr.bf16.mxu0 0
        %8013 = vmatpush1.bf16.msra.mxu0 %v7250
        %8014 = vmatprep.subr.bf16.mxu0 0
        %8015 = vmatpush1.bf16.msra.mxu0 %v7251
        %8016 = vmatprep.subr.bf16.mxu0 0
        %8017 = vmatpush1.bf16.msra.mxu0 %v7252
        %8018 = vmatprep.subr.bf16.mxu0 0
        %8019 = vmatpush1.bf16.msra.mxu0 %v7253
        %8020 = vmatprep.subr.bf16.mxu0 0
        %8021 = vmatpush1.bf16.msra.mxu0 %v7254
        %8022 = vmatprep.subr.bf16.mxu0 0
        %8023 = vmatpush1.bf16.msra.mxu0 %v7255
        %8024 = vmatprep.mubr.bf16.mxu0 %v5970
        %8025 = vmatmul.mubr.bf16.gmra.mrb[0].mxu0 %v5956
        %v8026 = vpop.f32.mrb[0].mxu0
        %v8027 = vadd.f32 %v7987, %v8026
        %v8028 = vpop.f32.mrb[0].mxu0
        %v8029 = vpop.f32.mrb[0].mxu0
        %v8030 = vpop.f32.mrb[0].mxu0
        %8031 = vdwg.mxu0
        %8032 = vmatprep.subr.bf16.mxu0 0
        %8033 = vmatpush1.bf16.msra.mxu0 %v7256
        %8034 = vmatprep.subr.bf16.mxu0 0
        %8035 = vmatpush1.bf16.msra.mxu0 %v7257
        %8036 = vmatprep.subr.bf16.mxu0 0
        %8037 = vmatpush1.bf16.msra.mxu0 %v7258
        %8038 = vmatprep.subr.bf16.mxu0 0
        %8039 = vmatpush1.bf16.msra.mxu0 %v7259
        %8040 = vmatprep.subr.bf16.mxu0 0
        %8041 = vmatpush1.bf16.msra.mxu0 %v7260
        %8042 = vmatprep.subr.bf16.mxu0 0
        %8043 = vmatpush1.bf16.msra.mxu0 %v7261
        %8044 = vmatprep.subr.bf16.mxu0 0
        %8045 = vmatpush1.bf16.msra.mxu0 %v7262
        %8046 = vmatprep.subr.bf16.mxu0 0
        %8047 = vmatpush1.bf16.msra.mxu0 %v7263
        %8048 = vmatprep.subr.bf16.mxu0 0
        %8049 = vmatpush1.bf16.msra.mxu0 %v7264
        %8050 = vmatprep.subr.bf16.mxu0 0
        %8051 = vmatpush1.bf16.msra.mxu0 %v7265
        %8052 = vmatprep.subr.bf16.mxu0 0
        %8053 = vmatpush1.bf16.msra.mxu0 %v7266
        %8054 = vmatprep.subr.bf16.mxu0 0
        %8055 = vmatpush1.bf16.msra.mxu0 %v7267
        %8056 = vmatprep.subr.bf16.mxu0 0
        %8057 = vmatpush1.bf16.msra.mxu0 %v7268
        %8058 = vmatprep.subr.bf16.mxu0 0
        %8059 = vmatpush1.bf16.msra.mxu0 %v7269
        %8060 = vmatprep.subr.bf16.mxu0 0
        %8061 = vmatpush1.bf16.msra.mxu0 %v7270
        %8062 = vmatprep.subr.bf16.mxu0 0
        %8063 = vmatpush1.bf16.msra.mxu0 %v7271
        %8064 = vmatprep.mubr.bf16.mxu0 %v5974
        %8065 = vmatmul.mubr.bf16.gmra.mrb[0].mxu0 %v5972
        %v8066 = vpop.f32.mrb[0].mxu0
        %v8067 = vadd.f32 %v8027, %v8066
        %v8068 = vpop.f32.mrb[0].mxu0
        %v8069 = vpop.f32.mrb[0].mxu0
        %v8070 = vpop.f32.mrb[0].mxu0
        %8071 = vdwg.mxu0
        %8072 = vmatprep.subr.bf16.mxu0 0
        %8073 = vmatpush1.bf16.msra.mxu0 %v7272
        %8074 = vmatprep.subr.bf16.mxu0 0
        %8075 = vmatpush1.bf16.msra.mxu0 %v7273
        %8076 = vmatprep.subr.bf16.mxu0 0
        %8077 = vmatpush1.bf16.msra.mxu0 %v7274
        %8078 = vmatprep.subr.bf16.mxu0 0
        %8079 = vmatpush1.bf16.msra.mxu0 %v7275
        %8080 = vmatprep.subr.bf16.mxu0 0
        %8081 = vmatpush1.bf16.msra.mxu0 %v7276
        %8082 = vmatprep.subr.bf16.mxu0 0
        %8083 = vmatpush1.bf16.msra.mxu0 %v7277
        %8084 = vmatprep.subr.bf16.mxu0 0
        %8085 = vmatpush1.bf16.msra.mxu0 %v7278
        %8086 = vmatprep.subr.bf16.mxu0 0
        %8087 = vmatpush1.bf16.msra.mxu0 %v7279
        %8088 = vmatprep.subr.bf16.mxu0 0
        %8089 = vmatpush1.bf16.msra.mxu0 %v7280
        %8090 = vmatprep.subr.bf16.mxu0 0
        %8091 = vmatpush1.bf16.msra.mxu0 %v7281
        %8092 = vmatprep.subr.bf16.mxu0 0
        %8093 = vmatpush1.bf16.msra.mxu0 %v7282
        %8094 = vmatprep.subr.bf16.mxu0 0
        %8095 = vmatpush1.bf16.msra.mxu0 %v7283
        %8096 = vmatprep.subr.bf16.mxu0 0
        %8097 = vmatpush1.bf16.msra.mxu0 %v7284
        %8098 = vmatprep.subr.bf16.mxu0 0
        %8099 = vmatpush1.bf16.msra.mxu0 %v7285
        %8100 = vmatprep.subr.bf16.mxu0 0
        %8101 = vmatpush1.bf16.msra.mxu0 %v7286
        %8102 = vmatprep.subr.bf16.mxu0 0
        %8103 = vmatpush1.bf16.msra.mxu0 %v7287
        %8104 = vmatprep.mubr.bf16.mxu0 %v6012
        %8105 = vmatmul.mubr.bf16.gmra.mrb[0].mxu0 %v5998
        %v8106 = vpop.f32.mrb[0].mxu0
        %v8107 = vadd.f32 %v8067, %v8106
        %v8108 = vpop.f32.mrb[0].mxu0
        %v8109 = vpop.f32.mrb[0].mxu0
        %v8110 = vpop.f32.mrb[0].mxu0
        %8111 = vdwg.mxu0
        %8112 = vmatprep.subr.bf16.mxu0 0
        %8113 = vmatpush1.bf16.msra.mxu0 %v7288
        %8114 = vmatprep.subr.bf16.mxu0 0
        %8115 = vmatpush1.bf16.msra.mxu0 %v7289
        %8116 = vmatprep.subr.bf16.mxu0 0
        %8117 = vmatpush1.bf16.msra.mxu0 %v7290
        %8118 = vmatprep.subr.bf16.mxu0 0
        %8119 = vmatpush1.bf16.msra.mxu0 %v7291
        %8120 = vmatprep.subr.bf16.mxu0 0
        %8121 = vmatpush1.bf16.msra.mxu0 %v7292
        %8122 = vmatprep.subr.bf16.mxu0 0
        %8123 = vmatpush1.bf16.msra.mxu0 %v7293
        %8124 = vmatprep.subr.bf16.mxu0 0
        %8125 = vmatpush1.bf16.msra.mxu0 %v7294
        %8126 = vmatprep.subr.bf16.mxu0 0
        %8127 = vmatpush1.bf16.msra.mxu0 %v7295
        %8128 = vmatprep.subr.bf16.mxu0 0
        %8129 = vmatpush1.bf16.msra.mxu0 %v7296
        %8130 = vmatprep.subr.bf16.mxu0 0
        %8131 = vmatpush1.bf16.msra.mxu0 %v7297
        %8132 = vmatprep.subr.bf16.mxu0 0
        %8133 = vmatpush1.bf16.msra.mxu0 %v7298
        %8134 = vmatprep.subr.bf16.mxu0 0
        %8135 = vmatpush1.bf16.msra.mxu0 %v7299
        %8136 = vmatprep.subr.bf16.mxu0 0
        %8137 = vmatpush1.bf16.msra.mxu0 %v7300
        %8138 = vmatprep.subr.bf16.mxu0 0
        %8139 = vmatpush1.bf16.msra.mxu0 %v7301
        %8140 = vmatprep.subr.bf16.mxu0 0
        %8141 = vmatpush1.bf16.msra.mxu0 %v7302
        %8142 = vmatprep.subr.bf16.mxu0 0
        %8143 = vmatpush1.bf16.msra.mxu0 %v7303
        %8144 = vmatprep.mubr.bf16.mxu0 %v6022
        %8145 = vmatmul.mubr.bf16.gmra.mrb[0].mxu0 %v6020
        %v8146 = vpop.f32.mrb[0].mxu0
        %v8147 = vadd.f32 %v8107, %v8146
        %v8148 = vpop.f32.mrb[0].mxu0
        %v8149 = vpop.f32.mrb[0].mxu0
        %v8150 = vpop.f32.mrb[0].mxu0
        %8151 = vdwg.mxu0
        %8152 = vmatprep.subr.bf16.mxu0 0
        %8153 = vmatpush1.bf16.msra.mxu0 %v7304
        %8154 = vmatprep.subr.bf16.mxu0 0
        %8155 = vmatpush1.bf16.msra.mxu0 %v7305
        %8156 = vmatprep.subr.bf16.mxu0 0
        %8157 = vmatpush1.bf16.msra.mxu0 %v7306
        %8158 = vmatprep.subr.bf16.mxu0 0
        %8159 = vmatpush1.bf16.msra.mxu0 %v7307
        %8160 = vmatprep.subr.bf16.mxu0 0
        %8161 = vmatpush1.bf16.msra.mxu0 %v7308
        %8162 = vmatprep.subr.bf16.mxu0 0
        %8163 = vmatpush1.bf16.msra.mxu0 %v7309
        %8164 = vmatprep.subr.bf16.mxu0 0
        %8165 = vmatpush1.bf16.msra.mxu0 %v7310
        %8166 = vmatprep.subr.bf16.mxu0 0
        %8167 = vmatpush1.bf16.msra.mxu0 %v7311
        %8168 = vmatprep.subr.bf16.mxu0 0
        %8169 = vmatpush1.bf16.msra.mxu0 %v7312
        %8170 = vmatprep.subr.bf16.mxu0 0
        %8171 = vmatpush1.bf16.msra.mxu0 %v7313
        %8172 = vmatprep.subr.bf16.mxu0 0
        %8173 = vmatpush1.bf16.msra.mxu0 %v7314
        %8174 = vmatprep.subr.bf16.mxu0 0
        %8175 = vmatpush1.bf16.msra.mxu0 %v7315
        %8176 = vmatprep.subr.bf16.mxu0 0
        %8177 = vmatpush1.bf16.msra.mxu0 %v7316
        %8178 = vmatprep.subr.bf16.mxu0 0
        %8179 = vmatpush1.bf16.msra.mxu0 %v7317
        %8180 = vmatprep.subr.bf16.mxu0 0
        %8181 = vmatpush1.bf16.msra.mxu0 %v7318
        %8182 = vmatprep.subr.bf16.mxu0 0
        %8183 = vmatpush1.bf16.msra.mxu0 %v7319
        %8184 = vmatprep.mubr.bf16.mxu0 %v6019
        %8185 = vmatmul.mubr.bf16.gmra.mrb[0].mxu0 %v6005
        %v8186 = vpop.f32.mrb[0].mxu0
        %v8187 = vadd.f32 %v8147, %v8186
        %v8188 = vpop.f32.mrb[0].mxu0
        %v8189 = vpop.f32.mrb[0].mxu0
        %v8190 = vpop.f32.mrb[0].mxu0
        %8191 = vdwg.mxu0
        %8192 = vmatprep.subr.bf16.mxu0 0
        %8193 = vmatpush1.bf16.msra.mxu0 %v7320
        %8194 = vmatprep.subr.bf16.mxu0 0
        %8195 = vmatpush1.bf16.msra.mxu0 %v7321
        %8196 = vmatprep.subr.bf16.mxu0 0
        %8197 = vmatpush1.bf16.msra.mxu0 %v7322
        %8198 = vmatprep.subr.bf16.mxu0 0
        %8199 = vmatpush1.bf16.msra.mxu0 %v7323
        %8200 = vmatprep.subr.bf16.mxu0 0
        %8201 = vmatpush1.bf16.msra.mxu0 %v7324
        %8202 = vmatprep.subr.bf16.mxu0 0
        %8203 = vmatpush1.bf16.msra.mxu0 %v7325
        %8204 = vmatprep.subr.bf16.mxu0 0
        %8205 = vmatpush1.bf16.msra.mxu0 %v7326
        %8206 = vmatprep.subr.bf16.mxu0 0
        %8207 = vmatpush1.bf16.msra.mxu0 %v7327
        %8208 = vmatprep.subr.bf16.mxu0 0
        %8209 = vmatpush1.bf16.msra.mxu0 %v7328
        %8210 = vmatprep.subr.bf16.mxu0 0
        %8211 = vmatpush1.bf16.msra.mxu0 %v7329
        %8212 = vmatprep.subr.bf16.mxu0 0
        %8213 = vmatpush1.bf16.msra.mxu0 %v7330
        %8214 = vmatprep.subr.bf16.mxu0 0
        %8215 = vmatpush1.bf16.msra.mxu0 %v7331
        %8216 = vmatprep.subr.bf16.mxu0 0
        %8217 = vmatpush1.bf16.msra.mxu0 %v7332
        %8218 = vmatprep.subr.bf16.mxu0 0
        %8219 = vmatpush1.bf16.msra.mxu0 %v7333
        %8220 = vmatprep.subr.bf16.mxu0 0
        %8221 = vmatpush1.bf16.msra.mxu0 %v7334
        %8222 = vmatprep.subr.bf16.mxu0 0
        %8223 = vmatpush1.bf16.msra.mxu0 %v7335
        %8224 = vmatprep.mubr.bf16.mxu0 %v6023
        %8225 = vmatmul.mubr.bf16.gmra.mrb[0].mxu0 %v6021
        %v8226 = vpop.f32.mrb[0].mxu0
        %v8227 = vadd.f32 %v8187, %v8226
        %v8228 = vpop.f32.mrb[0].mxu0
        %v8229 = vpop.f32.mrb[0].mxu0
        %v8230 = vpop.f32.mrb[0].mxu0
        %8231 = vdwg.mxu0
        %v8232 = vmax.f32 %v8227, 0.0
        %v8233 = vpack.c.bf16 %v8232, %v8232
        %v8234 = vld [vmem:[%s7] sm:$0xf]
        %v8235 = vld [vmem:[%s7 + $0x4] sm:$0xf]
        %v8236 = vld [vmem:[%s7 + $0x8] sm:$0xf]
        %v8237 = vld [vmem:[%s7 + $0xc] sm:$0xf]
        %v8238 = vld [vmem:[%s7 + $0x10] sm:$0xf]
        %v8239 = vld [vmem:[%s7 + $0x14] sm:$0xf]
        %v8240 = vld [vmem:[%s7 + $0x18] sm:$0xf]
        %v8241 = vld [vmem:[%s7 + $0x1c] sm:$0xf]
        %v8242 = vld [vmem:[%s7 + $0x20] sm:$0xf]
        %v8243 = vld [vmem:[%s7 + $0x24] sm:$0xf]
        %v8244 = vld [vmem:[%s7 + $0x28] sm:$0xf]
        %v8245 = vld [vmem:[%s7 + $0x2c] sm:$0xf]
        %v8246 = vld [vmem:[%s7 + $0x30] sm:$0xf]
        %v8247 = vld [vmem:[%s7 + $0x34] sm:$0xf]
        %v8248 = vld [vmem:[%s7 + $0x38] sm:$0xf]
        %v8249 = vld [vmem:[%s7 + $0x3c] sm:$0xf]
        %v8250 = vld [vmem:[%s8] sm:$0x1]
        %v8267 = vunpack.c.l.b16 %v8234
        %v8268 = vunpack.c.l.b16 %v8235
        %v8269 = vunpack.c.l.b16 %v8236
        %v8270 = vunpack.c.l.b16 %v8237
        %v8271 = vunpack.c.l.b16 %v8238
        %v8272 = vunpack.c.l.b16 %v8239
        %v8273 = vunpack.c.l.b16 %v8240
        %v8274 = vunpack.c.l.b16 %v8241
        %v8275 = vunpack.c.l.b16 %v8242
        %v8276 = vunpack.c.l.b16 %v8243
        %v8277 = vunpack.c.l.b16 %v8244
        %v8278 = vunpack.c.l.b16 %v8245
        %v8279 = vunpack.c.l.b16 %v8246
        %v8280 = vunpack.c.l.b16 %v8247
        %v8281 = vunpack.c.l.b16 %v8248
        %v8282 = vunpack.c.l.b16 %v8249
        %v8283 = vpack.c.b16 %v8268, %v8267
        %v8284 = vpack.c.b16 %v8270, %v8269
        %v8285 = vpack.c.b16 %v8272, %v8271
        %v8286 = vpack.c.b16 %v8274, %v8273
        %v8287 = vpack.c.b16 %v8276, %v8275
        %v8288 = vpack.c.b16 %v8278, %v8277
        %v8289 = vpack.c.b16 %v8280, %v8279
        %v8290 = vpack.c.b16 %v8282, %v8281
        %8299 = vmatprep.subr.bf16.mxu0 0
        %8300 = vmatpush1.bf16.msra.mxu0 %v8283
        %8301 = vmatprep.subr.bf16.mxu0 0
        %8302 = vmatpush1.bf16.msra.mxu0 %v8284
        %8303 = vmatprep.subr.bf16.mxu0 0
        %8304 = vmatpush1.bf16.msra.mxu0 %v8285
        %8305 = vmatprep.subr.bf16.mxu0 0
        %8306 = vmatpush1.bf16.msra.mxu0 %v8286
        %8307 = vmatprep.subr.bf16.mxu0 0
        %8308 = vmatpush1.bf16.msra.mxu0 %v8287
        %8309 = vmatprep.subr.bf16.mxu0 0
        %8310 = vmatpush1.bf16.msra.mxu0 %v8288
        %8311 = vmatprep.subr.bf16.mxu0 0
        %8312 = vmatpush1.bf16.msra.mxu0 %v8289
        %8313 = vmatprep.subr.bf16.mxu0 0
        %8314 = vmatpush1.bf16.msra.mxu0 %v8290
        %8315 = vmatprep.subr.bf16.mxu0 0
        %8316 = vmatpush1.bf16.msra.mxu0 0
        %8317 = vmatprep.subr.bf16.mxu0 0
        %8318 = vmatpush1.bf16.msra.mxu0 0
        %8319 = vmatprep.subr.bf16.mxu0 0
        %8320 = vmatpush1.bf16.msra.mxu0 0
        %8321 = vmatprep.subr.bf16.mxu0 0
        %8322 = vmatpush1.bf16.msra.mxu0 0
        %8323 = vmatprep.subr.bf16.mxu0 0
        %8324 = vmatpush1.bf16.msra.mxu0 0
        %8325 = vmatprep.subr.bf16.mxu0 0
        %8326 = vmatpush1.bf16.msra.mxu0 0
        %8327 = vmatprep.subr.bf16.mxu0 0
        %8328 = vmatpush1.bf16.msra.mxu0 0
        %8329 = vmatprep.subr.bf16.mxu0 0
        %8330 = vmatpush1.bf16.msra.mxu0 0
        %8331 = vmatprep.mubr.bf16.mxu0 0
        %8332 = vmatmul.mubr.bf16.gmra.mrb[0].mxu0 %v8233
        %v8333 = vpop.f32.mrb[0].mxu0
        %v8334 = vadd.f32 %v8250, %v8333
        %v8335 = vpop.f32.mrb[0].mxu0
        %v8336 = vpop.f32.mrb[0].mxu0
        %v8337 = vpop.f32.mrb[0].mxu0
        %8338 = vdwg.mxu0
        %8339 = vst [vmem:[%s339] sm:$0x1] %v8334
        %s8340 = sand.u32 %s226, 1
        %s8341 = scalar_lea.sflag [#allocation10], %s8340
        %s8342 = sand.u32 %s226, 1
        %s8343 = scalar_lea.vmem [#allocation11], %s8342
        // Predicated region
        $region61: #{tpu_custom_call.1} parent=55 // pred_check
          %p8344 = pneg %p236
        $region62: #{tpu_custom_call.1} parent=55 // pred_check_branch
          %8346 = sbr.rel (%p8344) target = $region64
        $region63: #{tpu_custom_call.1} parent=55 // pred_region
          %s8348 = ssub.s32 16, 16
          %8349 = vsyncadd %s8341, %s8348
          %s8350 = smul.addr %s24, 16
          %s8351 = scalar_lea.hbm %s9, %s8350
          %s8353 = sshll.u32 %s8343, 4
          %s8354 = int_to_ptr.vmem [resolvable:$true] %s8353
          %8356 = dma.vmem_to_hbm [thread:$0]  %s8354, 16, %s8351, %s8341
        $region64: #{tpu_custom_call.1} parent=55 // pred_fallthru
          _
      $region56: #{tpu_custom_call.1} parent=5 // pred_fallthru
        _
      %p8357 = scmp.le.s32.totalorder 2, %s19
      // Predicated region
      $region65: #{tpu_custom_call.1} parent=5 // pred_check
        %p8358 = pneg %p8357
      $region66: #{tpu_custom_call.1} parent=5 // pred_check_branch
        %8360 = sbr.rel (%p8358) target = $region68
      $region67: #{tpu_custom_call.1} parent=5 // pred_region
        %s8361 = ssub.s32 %s19, 2
        // Predicated region
        $region69: #{tpu_custom_call.1} parent=67 // pred_check
          %p8362 = pneg %p242
        $region70: #{tpu_custom_call.1} parent=67 // pred_check_branch
          %8364 = sbr.rel (%p8362) target = $region72
        $region71: #{tpu_custom_call.1} parent=67 // pred_region
          %s8365 = sand.u32 %s227, 1
          %s8366 = scalar_lea.sflag [#allocation10], %s8365
          %s8367 = sand.u32 %s227, 1
          %s8368 = scalar_lea.vmem [#allocation11], %s8367
          %8369 = dma.done %s8366, 16
        $region72: #{tpu_custom_call.1} parent=67 // pred_fallthru
          _
      $region68: #{tpu_custom_call.1} parent=5 // pred_fallthru
        _
    $region6: #{tpu_custom_call.1} parent=1 // loop_footer
      %s23 = sadd.s32 1, %s19
    $region7: #{tpu_custom_call.1} parent=1 // loop_footer_branch
      %18 = sbr.rel target = $region3
    $region8: #{tpu_custom_call.1} parent=1 // loop_exit
      _
    %8370 = vsyncpa [#allocation9], 1
    %s8371 = scalar_lea.sflag [#allocation9], 1
    %8372 = vsyncpa %s8371, 1
    %8373 = vsyncpa [#allocation10], 1
    %s8374 = scalar_lea.sflag [#allocation10], 1
    %8375 = vsyncpa %s8374, 1

</llo_original>
